<compile_context>
chip_gen: v7x
topology: tpu7x:2x2x1
jax: 0.10.0
libtpu: 0.0.40
codegen_flags: <defaults>
</compile_context>

<pallas_src>
import jax
import jax.numpy as jnp
from jax import lax
from jax.experimental import pallas as pl
from jax.experimental.pallas import tpu as pltpu


# ---------------------------------------------------------------------------
# Fused kernel factory.
# ---------------------------------------------------------------------------
def _make_fused_kernel(C2, Cout, W2, L, PAD):
    Cc = C2 + Cout
    HI = lax.Precision.HIGHEST

    def kernel(x2_ref, x1_ref, wup_ref, s_ref, bup_ref,
               s1_ref, t1_ref, w1_ref, b1_ref,
               s2_ref, t2_ref, w2_ref, b2_ref,
               ss_ref, ts_ref, ws_ref, bs_ref,
               out_ref, a1_scr, sc_scr):
        f32 = jnp.float32

        # ---- zero ONLY the lane halos (interior is fully rewritten below) ----
        zpad = jnp.zeros((Cc, PAD), f32)
        a1_scr[:, 0:PAD] = zpad
        a1_scr[:, PAD + L:PAD + L + PAD] = zpad
        sc_scr[:, 0:PAD] = zpad
        sc_scr[:, PAD + L:PAD + L + PAD] = zpad

        # ---- ConvTranspose2d(k=2,s=2) fused in: weight apply + pixel-shuffle
        #      scatter via the constant one-hot matrices S[q] (idle MXU work). ----
        y = jnp.dot(wup_ref[:, :], x1_ref[0], precision=HI,
                    preferred_element_type=f32)                      # (4*Cout, L1)
        parts = []
        for q in range(4):
            parts.append(jnp.dot(y[q * Cout:(q + 1) * Cout, :], s_ref[q],
                                 precision=HI, preferred_element_type=f32))
        up = (parts[0] + parts[1]) + (parts[2] + parts[3]) + bup_ref[...]  # (Cout, L)

        x2v = x2_ref[0].astype(f32)                                  # (C2, L)

        # ---- concat([x2, up]) + BN + ReLU for both paths, lane-aligned stores ----
        a1_scr[0:C2, PAD:PAD + L] = jnp.maximum(x2v * s1_ref[0:C2, :] + t1_ref[0:C2, :], 0.0)
        a1_scr[C2:Cc, PAD:PAD + L] = jnp.maximum(up * s1_ref[C2:Cc, :] + t1_ref[C2:Cc, :], 0.0)
        sc_scr[0:C2, PAD:PAD + L] = jnp.maximum(x2v * ss_ref[0:C2, :] + ts_ref[0:C2, :], 0.0)
        sc_scr[C2:Cc, PAD:PAD + L] = jnp.maximum(up * ss_ref[C2:Cc, :] + ts_ref[C2:Cc, :], 0.0)

        # Hoisted W-border masks (the row border is handled by the zero halos).
        col = lax.broadcasted_iota(jnp.int32, (1, L), 1) % W2
        col_ok = {-1: col >= 1, 0: None, 1: col <= W2 - 2}

        def conv3x3(src_scr, cin, w_ref, b_ref):
            """3x3 conv in the flattened (cin, L) layout: per-tap lane-offset load,
            hoisted column mask, per-channel weight column MAC, sublane reduce."""
            accs = [jnp.zeros((cin, L), f32) for _ in range(Cout)]
            t = 0
            for di in (-1, 0, 1):
                for dj in (-1, 0, 1):
                    off = PAD + di * W2 + dj
                    tap = src_scr[0:cin, off:off + L]                # (cin, L)
                    if col_ok[dj] is not None:
                        tap = jnp.where(col_ok[dj], tap, 0.0)
                    for o in range(Cout):
                        idx = t * Cout + o
                        wcol = w_ref[:, idx:idx + 1]                 # (cin, 1)
                        accs[o] = accs[o] + tap * wcol
                    t += 1
            rows = [jnp.sum(accs[o], axis=0, keepdims=True) for o in range(Cout)]
            return jnp.concatenate(rows, axis=0) + b_ref[...]        # (Cout, L)

        c1 = conv3x3(a1_scr, Cc, w1_ref, b1_ref)
        a2 = jnp.maximum(c1 * s2_ref[...] + t2_ref[...], 0.0)
        a1_scr[0:Cout, PAD:PAD + L] = a2          # reuse a1 scratch as the a2 buffer
        c2 = conv3x3(a1_scr, Cout, w2_ref, b2_ref)
        cs = conv3x3(sc_scr, Cc, ws_ref, bs_ref)

        out_ref[0] = (c2 + cs).astype(out_ref.dtype)                 # lane-dense store

    return kernel


# ---------------------------------------------------------------------------
# Wrapper.
# ---------------------------------------------------------------------------
def _fold_bn(gamma, beta, mean, var, eps):
    # TODO(synk): training-mode BatchNorm2d (batch statistics + running-stat
    # updates) is not implemented; inference-mode affine fold only.
    scale = gamma * lax.rsqrt(var + eps)
    shift = beta - mean * scale
    return scale.reshape(-1, 1), shift.reshape(-1, 1)


def _conv_cols(w):
    # (Cout, cin, 3, 3) -> (cin, 9*Cout); column index t*Cout+o, t = (di+1)*3+(dj+1).
    cout, cin = w.shape[0], w.shape[1]
    return jnp.transpose(w, (1, 2, 3, 0)).reshape(cin, 9 * cout)


def de_up_pallas(x1, x2, p, *, eps=1e-5, core_parallel=False):
    """Forward of `de_up`: up(x1) -> cat([x2, up]) -> Conv_residual.  NCHW f32."""
    N, Cin, H1, W1 = x1.shape
    N2, C2, H2, W2 = x2.shape
    Cout = p["w_up"].shape[1]
    Cc = C2 + Cout
    assert N2 == N and H2 == 2 * H1 and W2 == 2 * W1
    L1, L = H1 * W1, H2 * W2
    PAD = ((W2 + 1 + 127) // 128) * 128   # zero halo, multiple of 128 -> aligned stores

    # Contiguous (free) reshapes to the lane-dense flattened-spatial layout.
    x1f = x1.reshape(N, Cin, L1)
    x2f = x2.reshape(N, C2, L)

    # ConvTranspose weights as a (4*Cout, Cin) matrix: row (di*2+dj)*Cout + o.
    wup = jnp.transpose(p["w_up"], (2, 3, 1, 0)).reshape(4 * Cout, Cin)
    bup = p["b_up"].reshape(Cout, 1)

    # One-hot pixel-shuffle scatter matrices S[q] (L1, L); shape-only, XLA folds them.
    # TODO(synk): replace with a per-row-tile scatter at large spatial sizes.
    l = jnp.arange(L)
    i2, j2 = l // W2, l % W2
    src = (i2 // 2) * W1 + (j2 // 2)
    qsel = (i2 % 2) * 2 + (j2 % 2)
    S = ((src[None, None, :] == jnp.arange(L1)[None, :, None]) &
         (qsel[None, None, :] == jnp.arange(4)[:, None, None])).astype(x1.dtype)

    # Folded BN params and conv weights as per-channel columns (all VMEM residents).
    s1, t1 = _fold_bn(p["g1"], p["be1"], p["m1"], p["v1"], eps)
    s2, t2 = _fold_bn(p["g2"], p["be2"], p["m2"], p["v2"], eps)
    ss, ts = _fold_bn(p["gs"], p["bes"], p["ms"], p["vs"], eps)
    w1c, w2c, wsc = _conv_cols(p["w1"]), _conv_cols(p["w2"]), _conv_cols(p["ws"])
    b1c = p["b1"].reshape(Cout, 1)
    b2c = p["b2"].reshape(Cout, 1)
    bsc = p["bs"].reshape(Cout, 1)

    kernel = _make_fused_kernel(C2, Cout, W2, L, PAD)

    def const_spec(arr):
        nd = arr.ndim
        return pl.BlockSpec(arr.shape, lambda n: (0,) * nd)

    in_specs = [
        pl.BlockSpec((1, C2, L), lambda n: (n, 0, 0)),
        pl.BlockSpec((1, Cin, L1), lambda n: (n, 0, 0)),
        const_spec(wup), const_spec(S), const_spec(bup),
        const_spec(s1), const_spec(t1), const_spec(w1c), const_spec(b1c),
        const_spec(s2), const_spec(t2), const_spec(w2c), const_spec(b2c),
        const_spec(ss), const_spec(ts), const_spec(wsc), const_spec(bsc),
    ]

    flops = 2 * N * L * (Cout * Cin + 9 * (Cc * Cout + Cout * Cout + Cc * Cout))
    param_bytes = 4 * sum(int(a.size) for a in
                          (wup, S, bup, s1, t1, w1c, b1c, s2, t2, w2c, b2c, ss, ts, wsc, bsc))
    bytes_accessed = 4 * N * (C2 * L + Cin * L1 + Cout * L) + param_bytes

    # On v7x pass core_parallel=True so the batch grid is split across both
    # TensorCores; plain "parallel" is kept as the portable default.
    dim_sem = (pltpu.CORE_PARALLEL,) if core_parallel else ("parallel",)

    # TODO(synk): for realistic UNet shapes (large H2*W2, Cc) add a row-tile grid
    # axis with a 1-row halo so the working set stays within v7x's 64 MiB VMEM.
    out_flat = pl.pallas_call(
        kernel,
        out_shape=jax.ShapeDtypeStruct((N, Cout, L), x2.dtype),
        grid_spec=pltpu.PrefetchScalarGridSpec(
            num_scalar_prefetch=0,
            grid=(N,),
            in_specs=in_specs,
            out_specs=pl.BlockSpec((1, Cout, L), lambda n: (n, 0, 0)),
            scratch_shapes=[
                pltpu.VMEM((Cc, 2 * PAD + L), jnp.float32),   # a1 (reused for a2)
                pltpu.VMEM((Cc, 2 * PAD + L), jnp.float32),   # shortcut activation
            ],
        ),
        compiler_params=pltpu.CompilerParams(
            dimension_semantics=dim_sem,
            vmem_limit_bytes=32 * 1024 * 1024,
        ),
        cost_estimate=pl.CostEstimate(flops=flops, transcendentals=0,
                                      bytes_accessed=bytes_accessed),
    )(x2f, x1f, wup, S, bup, s1, t1, w1c, b1c, s2, t2, w2c, b2c, ss, ts, wsc, bsc)

    return out_flat.reshape(N, Cout, H2, W2)


# ---------------------------------------------------------------------------
# Pure-JAX reference (inference-mode BN) for validation.
# ---------------------------------------------------------------------------
def de_up_reference(x1, x2, p, eps=1e-5):
    hi = lax.Precision.HIGHEST
    N, Cin, H1, W1 = x1.shape
    Cout = p["w_up"].shape[1]
    up = jnp.einsum("ncij,cohw->noihjw", x1, p["w_up"], precision=hi)
    up = up.reshape(N, Cout, 2 * H1, 2 * W1) + p["b_up"][None, :, None, None]
    cat = jnp.concatenate([x2, up], axis=1)

    def bn_relu(x, g, b, m, v):
        s = g * lax.rsqrt(v + eps)
        t = b - m * s
        return jnp.maximum(x * s[None, :, None, None] + t[None, :, None, None], 0.0)

    def conv3x3(x, w, b):
        y = lax.conv_general_dilated(
            x, w, window_strides=(1, 1), padding=((1, 1), (1, 1)),
            dimension_numbers=("NCHW", "OIHW", "NCHW"), precision=hi)
        return y + b[None, :, None, None]

    a1 = bn_relu(cat, p["g1"], p["be1"], p["m1"], p["v1"])
    c1 = conv3x3(a1, p["w1"], p["b1"])
    a2 = bn_relu(c1, p["g2"], p["be2"], p["m2"], p["v2"])
    c2 = conv3x3(a2, p["w2"], p["b2"])
    sc = bn_relu(cat, p["gs"], p["bes"], p["ms"], p["vs"])
    cs = conv3x3(sc, p["ws"], p["bs"])
    return c2 + cs


if __name__ == "__main__":
    key = jax.random.PRNGKey(0)
    ks = iter(jax.random.split(key, 24))
    nk = lambda: next(ks)

    N, Cin, Cout, C2 = 2, 4, 4, 4          # up_channels = C2 + Cout = 8
    H1 = W1 = 8
    H2, W2 = 2 * H1, 2 * W1                # 16 x 16 output spatial
    Cc = C2 + Cout

    x1 = jax.random.normal(nk(), (N, Cin, H1, W1), jnp.float32)
    x2 = jax.random.normal(nk(), (N, C2, H2, W2), jnp.float32)

    p = dict(
        # nn.ConvTranspose2d(Cin, Cout, kernel_size=2, stride=2)
        w_up=0.25 * jax.random.normal(nk(), (Cin, Cout, 2, 2), jnp.float32),
        b_up=0.10 * jax.random.normal(nk(), (Cout,), jnp.float32),
        # Conv_residual.double_conv
        g1=1.0 + 0.1 * jax.random.normal(nk(), (Cc,), jnp.float32),
        be1=0.10 * jax.random.normal(nk(), (Cc,), jnp.float32),
        m1=0.10 * jax.random.normal(nk(), (Cc,), jnp.float32),
        v1=0.5 + jax.random.uniform(nk(), (Cc,), jnp.float32),
        w1=0.15 * jax.random.normal(nk(), (Cout, Cc, 3, 3), jnp.float32),
        b1=0.10 * jax.random.normal(nk(), (Cout,), jnp.float32),
        g2=1.0 + 0.1 * jax.random.normal(nk(), (Cout,), jnp.float32),
        be2=0.10 * jax.random.normal(nk(), (Cout,), jnp.float32),
        m2=0.10 * jax.random.normal(nk(), (Cout,), jnp.float32),
        v2=0.5 + jax.random.uniform(nk(), (Cout,), jnp.float32),
        w2=0.15 * jax.random.normal(nk(), (Cout, Cout, 3, 3), jnp.float32),
        b2=0.10 * jax.random.normal(nk(), (Cout,), jnp.float32),
        # Conv_residual.shortcut
        gs=1.0 + 0.1 * jax.random.normal(nk(), (Cc,), jnp.float32),
        bes=0.10 * jax.random.normal(nk(), (Cc,), jnp.float32),
        ms=0.10 * jax.random.normal(nk(), (Cc,), jnp.float32),
        vs=0.5 + jax.random.uniform(nk(), (Cc,), jnp.float32),
        ws=0.15 * jax.random.normal(nk(), (Cout, Cc, 3, 3), jnp.float32),
        bs=0.10 * jax.random.normal(nk(), (Cout,), jnp.float32),
    )

    out = jax.jit(de_up_pallas)(x1, x2, p)
    out = jax.block_until_ready(out)

    ref = de_up_reference(x1, x2, p)
    assert out.shape == (N, Cout, H2, W2)
    err = jnp.max(jnp.abs(out - ref))
    assert jnp.allclose(out, ref, atol=2e-3, rtol=2e-3), f"max abs err {err}"

    print("KERNEL_OK")
</pallas_src>

<mosaic_0001>
module attributes {stable_mosaic.version = 11 : i64} {
  func.func @kernel(%arg0: i32, %arg1: memref<1x4x256xf32, #tpu.memory_space<vmem>>, %arg2: memref<1x4x64xf32, #tpu.memory_space<vmem>>, %arg3: memref<16x4xf32, #tpu.memory_space<vmem>>, %arg4: memref<4x64x256xf32, #tpu.memory_space<vmem>>, %arg5: memref<4x1xf32, #tpu.memory_space<vmem>>, %arg6: memref<8x1xf32, #tpu.memory_space<vmem>>, %arg7: memref<8x1xf32, #tpu.memory_space<vmem>>, %arg8: memref<8x36xf32, #tpu.memory_space<vmem>>, %arg9: memref<4x1xf32, #tpu.memory_space<vmem>>, %arg10: memref<4x1xf32, #tpu.memory_space<vmem>>, %arg11: memref<4x1xf32, #tpu.memory_space<vmem>>, %arg12: memref<4x36xf32, #tpu.memory_space<vmem>>, %arg13: memref<4x1xf32, #tpu.memory_space<vmem>>, %arg14: memref<8x1xf32, #tpu.memory_space<vmem>>, %arg15: memref<8x1xf32, #tpu.memory_space<vmem>>, %arg16: memref<8x36xf32, #tpu.memory_space<vmem>>, %arg17: memref<4x1xf32, #tpu.memory_space<vmem>>, %arg18: memref<1x4x256xf32, #tpu.memory_space<vmem>>, %arg19: memref<8x512xf32, #tpu.memory_space<vmem>>, %arg20: memref<8x512xf32, #tpu.memory_space<vmem>>) attributes {dimension_semantics = [#tpu.dimension_semantics<parallel>], iteration_bounds = array<i64: 2>, scalar_prefetch = 0 : i64, scratch_operands = 2 : i64, tpu.core_type = #tpu.core_type<tc>, window_params = [{transform_indices = @transform_0, window_bounds = array<i64: 1, 4, 256>}, {transform_indices = @transform_1, window_bounds = array<i64: 1, 4, 64>}, {pipeline_mode = #tpu.pipeline_mode<synchronous>, transform_indices = @transform_2, window_bounds = array<i64: 16, 4>}, {pipeline_mode = #tpu.pipeline_mode<synchronous>, transform_indices = @transform_3, window_bounds = array<i64: 4, 64, 256>}, {pipeline_mode = #tpu.pipeline_mode<synchronous>, transform_indices = @transform_4, window_bounds = array<i64: 4, 1>}, {pipeline_mode = #tpu.pipeline_mode<synchronous>, transform_indices = @transform_5, window_bounds = array<i64: 8, 1>}, {pipeline_mode = #tpu.pipeline_mode<synchronous>, transform_indices = @transform_6, window_bounds = array<i64: 8, 1>}, {pipeline_mode = #tpu.pipeline_mode<synchronous>, transform_indices = @transform_7, window_bounds = array<i64: 8, 36>}, {pipeline_mode = #tpu.pipeline_mode<synchronous>, transform_indices = @transform_8, window_bounds = array<i64: 4, 1>}, {pipeline_mode = #tpu.pipeline_mode<synchronous>, transform_indices = @transform_9, window_bounds = array<i64: 4, 1>}, {pipeline_mode = #tpu.pipeline_mode<synchronous>, transform_indices = @transform_10, window_bounds = array<i64: 4, 1>}, {pipeline_mode = #tpu.pipeline_mode<synchronous>, transform_indices = @transform_11, window_bounds = array<i64: 4, 36>}, {pipeline_mode = #tpu.pipeline_mode<synchronous>, transform_indices = @transform_12, window_bounds = array<i64: 4, 1>}, {pipeline_mode = #tpu.pipeline_mode<synchronous>, transform_indices = @transform_13, window_bounds = array<i64: 8, 1>}, {pipeline_mode = #tpu.pipeline_mode<synchronous>, transform_indices = @transform_14, window_bounds = array<i64: 8, 1>}, {pipeline_mode = #tpu.pipeline_mode<synchronous>, transform_indices = @transform_15, window_bounds = array<i64: 8, 36>}, {pipeline_mode = #tpu.pipeline_mode<synchronous>, transform_indices = @transform_16, window_bounds = array<i64: 4, 1>}, {transform_indices = @transform_17, window_bounds = array<i64: 1, 4, 256>}]} {
    %cst = arith.constant 0.000000e+00 : f32
    %0 = vector.broadcast %cst : f32 to vector<8x128xf32>
    %c0 = arith.constant 0 : index
    %c0_0 = arith.constant 0 : index
    %1 = vector.load %arg19[%c0, %c0_0] : memref<8x512xf32, #tpu.memory_space<vmem>>, vector<8x128xf32>
    tpu.vector_store %arg19[%c0, %c0_0], %0 {strides = array<i32>} : memref<8x512xf32, #tpu.memory_space<vmem>>, vector<8x128xf32>,
    %c0_1 = arith.constant 0 : index
    %c384 = arith.constant 384 : index
    %2 = vector.load %arg19[%c0_1, %c384] : memref<8x512xf32, #tpu.memory_space<vmem>>, vector<8x128xf32>
    tpu.vector_store %arg19[%c0_1, %c384], %0 {strides = array<i32>} : memref<8x512xf32, #tpu.memory_space<vmem>>, vector<8x128xf32>,
    %c0_2 = arith.constant 0 : index
    %c0_3 = arith.constant 0 : index
    %3 = vector.load %arg20[%c0_2, %c0_3] : memref<8x512xf32, #tpu.memory_space<vmem>>, vector<8x128xf32>
    tpu.vector_store %arg20[%c0_2, %c0_3], %0 {strides = array<i32>} : memref<8x512xf32, #tpu.memory_space<vmem>>, vector<8x128xf32>,
    %c0_4 = arith.constant 0 : index
    %c384_5 = arith.constant 384 : index
    %4 = vector.load %arg20[%c0_4, %c384_5] : memref<8x512xf32, #tpu.memory_space<vmem>>, vector<8x128xf32>
    tpu.vector_store %arg20[%c0_4, %c384_5], %0 {strides = array<i32>} : memref<8x512xf32, #tpu.memory_space<vmem>>, vector<8x128xf32>,
    %c0_6 = arith.constant 0 : index
    %c0_7 = arith.constant 0 : index
    %5 = vector.load %arg3[%c0_6, %c0_7] : memref<16x4xf32, #tpu.memory_space<vmem>>, vector<16x4xf32>
    %c0_8 = arith.constant 0 : index
    %c0_9 = arith.constant 0 : index
    %c0_10 = arith.constant 0 : index
    %6 = vector.load %arg2[%c0_8, %c0_9, %c0_10] : memref<1x4x64xf32, #tpu.memory_space<vmem>>, vector<1x4x64xf32>
    %7 = vector.shape_cast %6 : vector<1x4x64xf32> to vector<4x64xf32>
    %cst_11 = arith.constant dense<0.000000e+00> : vector<16x64xf32>
    %8 = tpu.matmul %5, %7, %cst_11 {dimension_numbers = #tpu.dot_dimension_numbers<[1], [0], [0], [1], [0, 0, 1, 1], [], []>, precision = #tpu.contract_precision<fp32>} : vector<16x4xf32>, vector<4x64xf32>, vector<16x64xf32> -> vector<16x64xf32>
    %9 = vector.extract_strided_slice %8 {offsets = [0, 0], sizes = [4, 64], strides = [1, 1]} : vector<16x64xf32> to vector<4x64xf32>
    %c0_12 = arith.constant 0 : index
    %c0_13 = arith.constant 0 : index
    %c0_14 = arith.constant 0 : index
    %10 = vector.load %arg4[%c0_12, %c0_13, %c0_14] : memref<4x64x256xf32, #tpu.memory_space<vmem>>, vector<1x64x256xf32>
    %11 = vector.shape_cast %10 : vector<1x64x256xf32> to vector<64x256xf32>
    %cst_15 = arith.constant dense<0.000000e+00> : vector<4x256xf32>
    %12 = tpu.matmul %9, %11, %cst_15 {dimension_numbers = #tpu.dot_dimension_numbers<[1], [0], [0], [1], [0, 0, 1, 1], [], []>, precision = #tpu.contract_precision<fp32>} : vector<4x64xf32>, vector<64x256xf32>, vector<4x256xf32> -> vector<4x256xf32>
    %13 = vector.extract_strided_slice %8 {offsets = [4, 0], sizes = [4, 64], strides = [1, 1]} : vector<16x64xf32> to vector<4x64xf32>
    %c1 = arith.constant 1 : index
    %c0_16 = arith.constant 0 : index
    %c0_17 = arith.constant 0 : index
    %14 = vector.load %arg4[%c1, %c0_16, %c0_17] : memref<4x64x256xf32, #tpu.memory_space<vmem>>, vector<1x64x256xf32>
    %15 = vector.shape_cast %14 : vector<1x64x256xf32> to vector<64x256xf32>
    %cst_18 = arith.constant dense<0.000000e+00> : vector<4x256xf32>
    %16 = tpu.matmul %13, %15, %cst_18 {dimension_numbers = #tpu.dot_dimension_numbers<[1], [0], [0], [1], [0, 0, 1, 1], [], []>, precision = #tpu.contract_precision<fp32>} : vector<4x64xf32>, vector<64x256xf32>, vector<4x256xf32> -> vector<4x256xf32>
    %17 = vector.extract_strided_slice %8 {offsets = [8, 0], sizes = [4, 64], strides = [1, 1]} : vector<16x64xf32> to vector<4x64xf32>
    %c2 = arith.constant 2 : index
    %c0_19 = arith.constant 0 : index
    %c0_20 = arith.constant 0 : index
    %18 = vector.load %arg4[%c2, %c0_19, %c0_20] : memref<4x64x256xf32, #tpu.memory_space<vmem>>, vector<1x64x256xf32>
    %19 = vector.shape_cast %18 : vector<1x64x256xf32> to vector<64x256xf32>
    %cst_21 = arith.constant dense<0.000000e+00> : vector<4x256xf32>
    %20 = tpu.matmul %17, %19, %cst_21 {dimension_numbers = #tpu.dot_dimension_numbers<[1], [0], [0], [1], [0, 0, 1, 1], [], []>, precision = #tpu.contract_precision<fp32>} : vector<4x64xf32>, vector<64x256xf32>, vector<4x256xf32> -> vector<4x256xf32>
    %21 = vector.extract_strided_slice %8 {offsets = [12, 0], sizes = [4, 64], strides = [1, 1]} : vector<16x64xf32> to vector<4x64xf32>
    %c3 = arith.constant 3 : index
    %c0_22 = arith.constant 0 : index
    %c0_23 = arith.constant 0 : index
    %22 = vector.load %arg4[%c3, %c0_22, %c0_23] : memref<4x64x256xf32, #tpu.memory_space<vmem>>, vector<1x64x256xf32>
    %23 = vector.shape_cast %22 : vector<1x64x256xf32> to vector<64x256xf32>
    %cst_24 = arith.constant dense<0.000000e+00> : vector<4x256xf32>
    %24 = tpu.matmul %21, %23, %cst_24 {dimension_numbers = #tpu.dot_dimension_numbers<[1], [0], [0], [1], [0, 0, 1, 1], [], []>, precision = #tpu.contract_precision<fp32>} : vector<4x64xf32>, vector<64x256xf32>, vector<4x256xf32> -> vector<4x256xf32>
    %25 = arith.addf %12, %16 : vector<4x256xf32>
    %26 = arith.addf %20, %24 : vector<4x256xf32>
    %27 = arith.addf %25, %26 : vector<4x256xf32>
    %c0_25 = arith.constant 0 : index
    %c0_26 = arith.constant 0 : index
    %28 = vector.load %arg5[%c0_25, %c0_26] : memref<4x1xf32, #tpu.memory_space<vmem>>, vector<4x1xf32>
    %29 = vector.broadcast %28 : vector<4x1xf32> to vector<4x256xf32>
    %30 = arith.addf %27, %29 : vector<4x256xf32>
    %c0_27 = arith.constant 0 : index
    %c0_28 = arith.constant 0 : index
    %c0_29 = arith.constant 0 : index
    %31 = vector.load %arg1[%c0_27, %c0_28, %c0_29] : memref<1x4x256xf32, #tpu.memory_space<vmem>>, vector<1x4x256xf32>
    %32 = vector.shape_cast %31 : vector<1x4x256xf32> to vector<4x256xf32>
    %c0_30 = arith.constant 0 : index
    %c0_31 = arith.constant 0 : index
    %33 = vector.load %arg6[%c0_30, %c0_31] : memref<8x1xf32, #tpu.memory_space<vmem>>, vector<4x1xf32>
    %34 = vector.broadcast %33 : vector<4x1xf32> to vector<4x256xf32>
    %35 = arith.mulf %32, %34 : vector<4x256xf32>
    %c0_32 = arith.constant 0 : index
    %c0_33 = arith.constant 0 : index
    %36 = vector.load %arg7[%c0_32, %c0_33] : memref<8x1xf32, #tpu.memory_space<vmem>>, vector<4x1xf32>
    %37 = vector.broadcast %36 : vector<4x1xf32> to vector<4x256xf32>
    %38 = arith.addf %35, %37 : vector<4x256xf32>
    %cst_34 = arith.constant 0.000000e+00 : f32
    %39 = vector.broadcast %cst_34 : f32 to vector<4x256xf32>
    %40 = arith.maximumf %38, %39 : vector<4x256xf32>
    %c0_35 = arith.constant 0 : index
    %c128 = arith.constant 128 : index
    %41 = vector.load %arg19[%c0_35, %c128] : memref<8x512xf32, #tpu.memory_space<vmem>>, vector<4x256xf32>
    tpu.vector_store %arg19[%c0_35, %c128], %40 {strides = array<i32>} : memref<8x512xf32, #tpu.memory_space<vmem>>, vector<4x256xf32>,
    %c4 = arith.constant 4 : index
    %c0_36 = arith.constant 0 : index
    %42 = vector.load %arg6[%c4, %c0_36] : memref<8x1xf32, #tpu.memory_space<vmem>>, vector<4x1xf32>
    %43 = vector.broadcast %42 : vector<4x1xf32> to vector<4x256xf32>
    %44 = arith.mulf %30, %43 : vector<4x256xf32>
    %c4_37 = arith.constant 4 : index
    %c0_38 = arith.constant 0 : index
    %45 = vector.load %arg7[%c4_37, %c0_38] : memref<8x1xf32, #tpu.memory_space<vmem>>, vector<4x1xf32>
    %46 = vector.broadcast %45 : vector<4x1xf32> to vector<4x256xf32>
    %47 = arith.addf %44, %46 : vector<4x256xf32>
    %cst_39 = arith.constant 0.000000e+00 : f32
    %48 = vector.broadcast %cst_39 : f32 to vector<4x256xf32>
    %49 = arith.maximumf %47, %48 : vector<4x256xf32>
    %c4_40 = arith.constant 4 : index
    %c128_41 = arith.constant 128 : index
    %50 = vector.load %arg19[%c4_40, %c128_41] : memref<8x512xf32, #tpu.memory_space<vmem>>, vector<4x256xf32>
    tpu.vector_store %arg19[%c4_40, %c128_41], %49 {strides = array<i32>} : memref<8x512xf32, #tpu.memory_space<vmem>>, vector<4x256xf32>,
    %c0_42 = arith.constant 0 : index
    %c0_43 = arith.constant 0 : index
    %51 = vector.load %arg14[%c0_42, %c0_43] : memref<8x1xf32, #tpu.memory_space<vmem>>, vector<4x1xf32>
    %52 = vector.broadcast %51 : vector<4x1xf32> to vector<4x256xf32>
    %53 = arith.mulf %32, %52 : vector<4x256xf32>
    %c0_44 = arith.constant 0 : index
    %c0_45 = arith.constant 0 : index
    %54 = vector.load %arg15[%c0_44, %c0_45] : memref<8x1xf32, #tpu.memory_space<vmem>>, vector<4x1xf32>
    %55 = vector.broadcast %54 : vector<4x1xf32> to vector<4x256xf32>
    %56 = arith.addf %53, %55 : vector<4x256xf32>
    %cst_46 = arith.constant 0.000000e+00 : f32
    %57 = vector.broadcast %cst_46 : f32 to vector<4x256xf32>
    %58 = arith.maximumf %56, %57 : vector<4x256xf32>
    %c0_47 = arith.constant 0 : index
    %c128_48 = arith.constant 128 : index
    %59 = vector.load %arg20[%c0_47, %c128_48] : memref<8x512xf32, #tpu.memory_space<vmem>>, vector<4x256xf32>
    tpu.vector_store %arg20[%c0_47, %c128_48], %58 {strides = array<i32>} : memref<8x512xf32, #tpu.memory_space<vmem>>, vector<4x256xf32>,
    %c4_49 = arith.constant 4 : index
    %c0_50 = arith.constant 0 : index
    %60 = vector.load %arg14[%c4_49, %c0_50] : memref<8x1xf32, #tpu.memory_space<vmem>>, vector<4x1xf32>
    %61 = vector.broadcast %60 : vector<4x1xf32> to vector<4x256xf32>
    %62 = arith.mulf %30, %61 : vector<4x256xf32>
    %c4_51 = arith.constant 4 : index
    %c0_52 = arith.constant 0 : index
    %63 = vector.load %arg15[%c4_51, %c0_52] : memref<8x1xf32, #tpu.memory_space<vmem>>, vector<4x1xf32>
    %64 = vector.broadcast %63 : vector<4x1xf32> to vector<4x256xf32>
    %65 = arith.addf %62, %64 : vector<4x256xf32>
    %cst_53 = arith.constant 0.000000e+00 : f32
    %66 = vector.broadcast %cst_53 : f32 to vector<4x256xf32>
    %67 = arith.maximumf %65, %66 : vector<4x256xf32>
    %c4_54 = arith.constant 4 : index
    %c128_55 = arith.constant 128 : index
    %68 = vector.load %arg20[%c4_54, %c128_55] : memref<8x512xf32, #tpu.memory_space<vmem>>, vector<4x256xf32>
    tpu.vector_store %arg20[%c4_54, %c128_55], %67 {strides = array<i32>} : memref<8x512xf32, #tpu.memory_space<vmem>>, vector<4x256xf32>,
    %69 = tpu.iota {dimensions = array<i32: 1>} : vector<1x256xi32>
    %c16_i32 = arith.constant 16 : i32
    %c0_i32 = arith.constant 0 : i32
    %70 = arith.cmpi eq, %c16_i32, %c0_i32 : i32
    %c1_i32 = arith.constant 1 : i32
    %71 = arith.select %70, %c1_i32, %c16_i32 : i32
    %72 = vector.broadcast %71 : i32 to vector<1x256xi32>
    %73 = arith.remsi %69, %72 : vector<1x256xi32>
    %c0_i32_56 = arith.constant 0 : i32
    %74 = vector.broadcast %c0_i32_56 : i32 to vector<1x256xi32>
    %75 = arith.cmpi ne, %73, %74 : vector<1x256xi32>
    %c0_i32_57 = arith.constant 0 : i32
    %76 = vector.broadcast %c0_i32_57 : i32 to vector<1x256xi32>
    %77 = arith.cmpi slt, %73, %76 : vector<1x256xi32>
    %c0_i32_58 = arith.constant 0 : i32
    %78 = arith.cmpi slt, %71, %c0_i32_58 : i32
    %79 = vector.broadcast %78 : i1 to vector<1x256xi1>
    %80 = vector.broadcast %79 : vector<1x256xi1> to vector<1x256xi1>
    %81 = arith.xori %77, %80 : vector<1x256xi1>
    %82 = arith.andi %81, %75 : vector<1x256xi1>
    %83 = vector.broadcast %71 : i32 to vector<1x256xi32>
    %84 = arith.addi %73, %83 : vector<1x256xi32>
    %85 = arith.select %82, %84, %73 : vector<1x256xi1>, vector<1x256xi32>
    %c1_i32_59 = arith.constant 1 : i32
    %86 = vector.broadcast %c1_i32_59 : i32 to vector<1x256xi32>
    %87 = arith.cmpi sge, %85, %86 : vector<1x256xi32>
    %c14_i32 = arith.constant 14 : i32
    %88 = vector.broadcast %c14_i32 : i32 to vector<1x256xi32>
    %89 = arith.cmpi sle, %85, %88 : vector<1x256xi32>
    %cst_60 = arith.constant 0.000000e+00 : f32
    %90 = vector.broadcast %cst_60 : f32 to vector<8x256xf32>
    %cst_61 = arith.constant 0.000000e+00 : f32
    %91 = vector.broadcast %cst_61 : f32 to vector<8x256xf32>
    %cst_62 = arith.constant 0.000000e+00 : f32
    %92 = vector.broadcast %cst_62 : f32 to vector<8x256xf32>
    %cst_63 = arith.constant 0.000000e+00 : f32
    %93 = vector.broadcast %cst_63 : f32 to vector<8x256xf32>
    %c0_64 = arith.constant 0 : index
    %c111 = arith.constant 111 : index
    %94 = vector.load %arg19[%c0_64, %c111] : memref<8x512xf32, #tpu.memory_space<vmem>>, vector<8x256xf32>
    %cst_65 = arith.constant 0.000000e+00 : f32
    %95 = vector.shape_cast %87 : vector<1x256xi1> to vector<1x256xi1>
    %96 = vector.broadcast %95 : vector<1x256xi1> to vector<8x256xi1>
    %97 = vector.broadcast %cst_65 : f32 to vector<8x256xf32>
    %98 = arith.select %96, %94, %97 : vector<8x256xi1>, vector<8x256xf32>
    %c0_66 = arith.constant 0 : index
    %c0_67 = arith.constant 0 : index
    %99 = vector.load %arg8[%c0_66, %c0_67] : memref<8x36xf32, #tpu.memory_space<vmem>>, vector<8x1xf32>
    %100 = vector.broadcast %99 : vector<8x1xf32> to vector<8x256xf32>
    %101 = arith.mulf %98, %100 : vector<8x256xf32>
    %102 = arith.addf %90, %101 : vector<8x256xf32>
    %c0_68 = arith.constant 0 : index
    %c1_69 = arith.constant 1 : index
    %103 = vector.load %arg8[%c0_68, %c1_69] : memref<8x36xf32, #tpu.memory_space<vmem>>, vector<8x1xf32>
    %104 = vector.broadcast %103 : vector<8x1xf32> to vector<8x256xf32>
    %105 = arith.mulf %98, %104 : vector<8x256xf32>
    %106 = arith.addf %91, %105 : vector<8x256xf32>
    %c0_70 = arith.constant 0 : index
    %c2_71 = arith.constant 2 : index
    %107 = vector.load %arg8[%c0_70, %c2_71] : memref<8x36xf32, #tpu.memory_space<vmem>>, vector<8x1xf32>
    %108 = vector.broadcast %107 : vector<8x1xf32> to vector<8x256xf32>
    %109 = arith.mulf %98, %108 : vector<8x256xf32>
    %110 = arith.addf %92, %109 : vector<8x256xf32>
    %c0_72 = arith.constant 0 : index
    %c3_73 = arith.constant 3 : index
    %111 = vector.load %arg8[%c0_72, %c3_73] : memref<8x36xf32, #tpu.memory_space<vmem>>, vector<8x1xf32>
    %112 = vector.broadcast %111 : vector<8x1xf32> to vector<8x256xf32>
    %113 = arith.mulf %98, %112 : vector<8x256xf32>
    %114 = arith.addf %93, %113 : vector<8x256xf32>
    %c0_74 = arith.constant 0 : index
    %c112 = arith.constant 112 : index
    %115 = vector.load %arg19[%c0_74, %c112] : memref<8x512xf32, #tpu.memory_space<vmem>>, vector<8x256xf32>
    %c0_75 = arith.constant 0 : index
    %c4_76 = arith.constant 4 : index
    %116 = vector.load %arg8[%c0_75, %c4_76] : memref<8x36xf32, #tpu.memory_space<vmem>>, vector<8x1xf32>
    %117 = vector.broadcast %116 : vector<8x1xf32> to vector<8x256xf32>
    %118 = arith.mulf %115, %117 : vector<8x256xf32>
    %119 = arith.addf %102, %118 : vector<8x256xf32>
    %c0_77 = arith.constant 0 : index
    %c5 = arith.constant 5 : index
    %120 = vector.load %arg8[%c0_77, %c5] : memref<8x36xf32, #tpu.memory_space<vmem>>, vector<8x1xf32>
    %121 = vector.broadcast %120 : vector<8x1xf32> to vector<8x256xf32>
    %122 = arith.mulf %115, %121 : vector<8x256xf32>
    %123 = arith.addf %106, %122 : vector<8x256xf32>
    %c0_78 = arith.constant 0 : index
    %c6 = arith.constant 6 : index
    %124 = vector.load %arg8[%c0_78, %c6] : memref<8x36xf32, #tpu.memory_space<vmem>>, vector<8x1xf32>
    %125 = vector.broadcast %124 : vector<8x1xf32> to vector<8x256xf32>
    %126 = arith.mulf %115, %125 : vector<8x256xf32>
    %127 = arith.addf %110, %126 : vector<8x256xf32>
    %c0_79 = arith.constant 0 : index
    %c7 = arith.constant 7 : index
    %128 = vector.load %arg8[%c0_79, %c7] : memref<8x36xf32, #tpu.memory_space<vmem>>, vector<8x1xf32>
    %129 = vector.broadcast %128 : vector<8x1xf32> to vector<8x256xf32>
    %130 = arith.mulf %115, %129 : vector<8x256xf32>
    %131 = arith.addf %114, %130 : vector<8x256xf32>
    %c0_80 = arith.constant 0 : index
    %c113 = arith.constant 113 : index
    %132 = vector.load %arg19[%c0_80, %c113] : memref<8x512xf32, #tpu.memory_space<vmem>>, vector<8x256xf32>
    %cst_81 = arith.constant 0.000000e+00 : f32
    %133 = vector.shape_cast %89 : vector<1x256xi1> to vector<1x256xi1>
    %134 = vector.broadcast %133 : vector<1x256xi1> to vector<8x256xi1>
    %135 = vector.broadcast %cst_81 : f32 to vector<8x256xf32>
    %136 = arith.select %134, %132, %135 : vector<8x256xi1>, vector<8x256xf32>
    %c0_82 = arith.constant 0 : index
    %c8 = arith.constant 8 : index
    %137 = vector.load %arg8[%c0_82, %c8] : memref<8x36xf32, #tpu.memory_space<vmem>>, vector<8x1xf32>
    %138 = vector.broadcast %137 : vector<8x1xf32> to vector<8x256xf32>
    %139 = arith.mulf %136, %138 : vector<8x256xf32>
    %140 = arith.addf %119, %139 : vector<8x256xf32>
    %c0_83 = arith.constant 0 : index
    %c9 = arith.constant 9 : index
    %141 = vector.load %arg8[%c0_83, %c9] : memref<8x36xf32, #tpu.memory_space<vmem>>, vector<8x1xf32>
    %142 = vector.broadcast %141 : vector<8x1xf32> to vector<8x256xf32>
    %143 = arith.mulf %136, %142 : vector<8x256xf32>
    %144 = arith.addf %123, %143 : vector<8x256xf32>
    %c0_84 = arith.constant 0 : index
    %c10 = arith.constant 10 : index
    %145 = vector.load %arg8[%c0_84, %c10] : memref<8x36xf32, #tpu.memory_space<vmem>>, vector<8x1xf32>
    %146 = vector.broadcast %145 : vector<8x1xf32> to vector<8x256xf32>
    %147 = arith.mulf %136, %146 : vector<8x256xf32>
    %148 = arith.addf %127, %147 : vector<8x256xf32>
    %c0_85 = arith.constant 0 : index
    %c11 = arith.constant 11 : index
    %149 = vector.load %arg8[%c0_85, %c11] : memref<8x36xf32, #tpu.memory_space<vmem>>, vector<8x1xf32>
    %150 = vector.broadcast %149 : vector<8x1xf32> to vector<8x256xf32>
    %151 = arith.mulf %136, %150 : vector<8x256xf32>
    %152 = arith.addf %131, %151 : vector<8x256xf32>
    %c0_86 = arith.constant 0 : index
    %c127 = arith.constant 127 : index
    %153 = vector.load %arg19[%c0_86, %c127] : memref<8x512xf32, #tpu.memory_space<vmem>>, vector<8x256xf32>
    %cst_87 = arith.constant 0.000000e+00 : f32
    %154 = vector.shape_cast %87 : vector<1x256xi1> to vector<1x256xi1>
    %155 = vector.broadcast %154 : vector<1x256xi1> to vector<8x256xi1>
    %156 = vector.broadcast %cst_87 : f32 to vector<8x256xf32>
    %157 = arith.select %155, %153, %156 : vector<8x256xi1>, vector<8x256xf32>
    %c0_88 = arith.constant 0 : index
    %c12 = arith.constant 12 : index
    %158 = vector.load %arg8[%c0_88, %c12] : memref<8x36xf32, #tpu.memory_space<vmem>>, vector<8x1xf32>
    %159 = vector.broadcast %158 : vector<8x1xf32> to vector<8x256xf32>
    %160 = arith.mulf %157, %159 : vector<8x256xf32>
    %161 = arith.addf %140, %160 : vector<8x256xf32>
    %c0_89 = arith.constant 0 : index
    %c13 = arith.constant 13 : index
    %162 = vector.load %arg8[%c0_89, %c13] : memref<8x36xf32, #tpu.memory_space<vmem>>, vector<8x1xf32>
    %163 = vector.broadcast %162 : vector<8x1xf32> to vector<8x256xf32>
    %164 = arith.mulf %157, %163 : vector<8x256xf32>
    %165 = arith.addf %144, %164 : vector<8x256xf32>
    %c0_90 = arith.constant 0 : index
    %c14 = arith.constant 14 : index
    %166 = vector.load %arg8[%c0_90, %c14] : memref<8x36xf32, #tpu.memory_space<vmem>>, vector<8x1xf32>
    %167 = vector.broadcast %166 : vector<8x1xf32> to vector<8x256xf32>
    %168 = arith.mulf %157, %167 : vector<8x256xf32>
    %169 = arith.addf %148, %168 : vector<8x256xf32>
    %c0_91 = arith.constant 0 : index
    %c15 = arith.constant 15 : index
    %170 = vector.load %arg8[%c0_91, %c15] : memref<8x36xf32, #tpu.memory_space<vmem>>, vector<8x1xf32>
    %171 = vector.broadcast %170 : vector<8x1xf32> to vector<8x256xf32>
    %172 = arith.mulf %157, %171 : vector<8x256xf32>
    %173 = arith.addf %152, %172 : vector<8x256xf32>
    %c0_92 = arith.constant 0 : index
    %c128_93 = arith.constant 128 : index
    %174 = vector.load %arg19[%c0_92, %c128_93] : memref<8x512xf32, #tpu.memory_space<vmem>>, vector<8x256xf32>
    %c0_94 = arith.constant 0 : index
    %c16 = arith.constant 16 : index
    %175 = vector.load %arg8[%c0_94, %c16] : memref<8x36xf32, #tpu.memory_space<vmem>>, vector<8x1xf32>
    %176 = vector.broadcast %175 : vector<8x1xf32> to vector<8x256xf32>
    %177 = arith.mulf %174, %176 : vector<8x256xf32>
    %178 = arith.addf %161, %177 : vector<8x256xf32>
    %c0_95 = arith.constant 0 : index
    %c17 = arith.constant 17 : index
    %179 = vector.load %arg8[%c0_95, %c17] : memref<8x36xf32, #tpu.memory_space<vmem>>, vector<8x1xf32>
    %180 = vector.broadcast %179 : vector<8x1xf32> to vector<8x256xf32>
    %181 = arith.mulf %174, %180 : vector<8x256xf32>
    %182 = arith.addf %165, %181 : vector<8x256xf32>
    %c0_96 = arith.constant 0 : index
    %c18 = arith.constant 18 : index
    %183 = vector.load %arg8[%c0_96, %c18] : memref<8x36xf32, #tpu.memory_space<vmem>>, vector<8x1xf32>
    %184 = vector.broadcast %183 : vector<8x1xf32> to vector<8x256xf32>
    %185 = arith.mulf %174, %184 : vector<8x256xf32>
    %186 = arith.addf %169, %185 : vector<8x256xf32>
    %c0_97 = arith.constant 0 : index
    %c19 = arith.constant 19 : index
    %187 = vector.load %arg8[%c0_97, %c19] : memref<8x36xf32, #tpu.memory_space<vmem>>, vector<8x1xf32>
    %188 = vector.broadcast %187 : vector<8x1xf32> to vector<8x256xf32>
    %189 = arith.mulf %174, %188 : vector<8x256xf32>
    %190 = arith.addf %173, %189 : vector<8x256xf32>
    %c0_98 = arith.constant 0 : index
    %c129 = arith.constant 129 : index
    %191 = vector.load %arg19[%c0_98, %c129] : memref<8x512xf32, #tpu.memory_space<vmem>>, vector<8x256xf32>
    %cst_99 = arith.constant 0.000000e+00 : f32
    %192 = vector.shape_cast %89 : vector<1x256xi1> to vector<1x256xi1>
    %193 = vector.broadcast %192 : vector<1x256xi1> to vector<8x256xi1>
    %194 = vector.broadcast %cst_99 : f32 to vector<8x256xf32>
    %195 = arith.select %193, %191, %194 : vector<8x256xi1>, vector<8x256xf32>
    %c0_100 = arith.constant 0 : index
    %c20 = arith.constant 20 : index
    %196 = vector.load %arg8[%c0_100, %c20] : memref<8x36xf32, #tpu.memory_space<vmem>>, vector<8x1xf32>
    %197 = vector.broadcast %196 : vector<8x1xf32> to vector<8x256xf32>
    %198 = arith.mulf %195, %197 : vector<8x256xf32>
    %199 = arith.addf %178, %198 : vector<8x256xf32>
    %c0_101 = arith.constant 0 : index
    %c21 = arith.constant 21 : index
    %200 = vector.load %arg8[%c0_101, %c21] : memref<8x36xf32, #tpu.memory_space<vmem>>, vector<8x1xf32>
    %201 = vector.broadcast %200 : vector<8x1xf32> to vector<8x256xf32>
    %202 = arith.mulf %195, %201 : vector<8x256xf32>
    %203 = arith.addf %182, %202 : vector<8x256xf32>
    %c0_102 = arith.constant 0 : index
    %c22 = arith.constant 22 : index
    %204 = vector.load %arg8[%c0_102, %c22] : memref<8x36xf32, #tpu.memory_space<vmem>>, vector<8x1xf32>
    %205 = vector.broadcast %204 : vector<8x1xf32> to vector<8x256xf32>
    %206 = arith.mulf %195, %205 : vector<8x256xf32>
    %207 = arith.addf %186, %206 : vector<8x256xf32>
    %c0_103 = arith.constant 0 : index
    %c23 = arith.constant 23 : index
    %208 = vector.load %arg8[%c0_103, %c23] : memref<8x36xf32, #tpu.memory_space<vmem>>, vector<8x1xf32>
    %209 = vector.broadcast %208 : vector<8x1xf32> to vector<8x256xf32>
    %210 = arith.mulf %195, %209 : vector<8x256xf32>
    %211 = arith.addf %190, %210 : vector<8x256xf32>
    %c0_104 = arith.constant 0 : index
    %c143 = arith.constant 143 : index
    %212 = vector.load %arg19[%c0_104, %c143] : memref<8x512xf32, #tpu.memory_space<vmem>>, vector<8x256xf32>
    %cst_105 = arith.constant 0.000000e+00 : f32
    %213 = vector.shape_cast %87 : vector<1x256xi1> to vector<1x256xi1>
    %214 = vector.broadcast %213 : vector<1x256xi1> to vector<8x256xi1>
    %215 = vector.broadcast %cst_105 : f32 to vector<8x256xf32>
    %216 = arith.select %214, %212, %215 : vector<8x256xi1>, vector<8x256xf32>
    %c0_106 = arith.constant 0 : index
    %c24 = arith.constant 24 : index
    %217 = vector.load %arg8[%c0_106, %c24] : memref<8x36xf32, #tpu.memory_space<vmem>>, vector<8x1xf32>
    %218 = vector.broadcast %217 : vector<8x1xf32> to vector<8x256xf32>
    %219 = arith.mulf %216, %218 : vector<8x256xf32>
    %220 = arith.addf %199, %219 : vector<8x256xf32>
    %c0_107 = arith.constant 0 : index
    %c25 = arith.constant 25 : index
    %221 = vector.load %arg8[%c0_107, %c25] : memref<8x36xf32, #tpu.memory_space<vmem>>, vector<8x1xf32>
    %222 = vector.broadcast %221 : vector<8x1xf32> to vector<8x256xf32>
    %223 = arith.mulf %216, %222 : vector<8x256xf32>
    %224 = arith.addf %203, %223 : vector<8x256xf32>
    %c0_108 = arith.constant 0 : index
    %c26 = arith.constant 26 : index
    %225 = vector.load %arg8[%c0_108, %c26] : memref<8x36xf32, #tpu.memory_space<vmem>>, vector<8x1xf32>
    %226 = vector.broadcast %225 : vector<8x1xf32> to vector<8x256xf32>
    %227 = arith.mulf %216, %226 : vector<8x256xf32>
    %228 = arith.addf %207, %227 : vector<8x256xf32>
    %c0_109 = arith.constant 0 : index
    %c27 = arith.constant 27 : index
    %229 = vector.load %arg8[%c0_109, %c27] : memref<8x36xf32, #tpu.memory_space<vmem>>, vector<8x1xf32>
    %230 = vector.broadcast %229 : vector<8x1xf32> to vector<8x256xf32>
    %231 = arith.mulf %216, %230 : vector<8x256xf32>
    %232 = arith.addf %211, %231 : vector<8x256xf32>
    %c0_110 = arith.constant 0 : index
    %c144 = arith.constant 144 : index
    %233 = vector.load %arg19[%c0_110, %c144] : memref<8x512xf32, #tpu.memory_space<vmem>>, vector<8x256xf32>
    %c0_111 = arith.constant 0 : index
    %c28 = arith.constant 28 : index
    %234 = vector.load %arg8[%c0_111, %c28] : memref<8x36xf32, #tpu.memory_space<vmem>>, vector<8x1xf32>
    %235 = vector.broadcast %234 : vector<8x1xf32> to vector<8x256xf32>
    %236 = arith.mulf %233, %235 : vector<8x256xf32>
    %237 = arith.addf %220, %236 : vector<8x256xf32>
    %c0_112 = arith.constant 0 : index
    %c29 = arith.constant 29 : index
    %238 = vector.load %arg8[%c0_112, %c29] : memref<8x36xf32, #tpu.memory_space<vmem>>, vector<8x1xf32>
    %239 = vector.broadcast %238 : vector<8x1xf32> to vector<8x256xf32>
    %240 = arith.mulf %233, %239 : vector<8x256xf32>
    %241 = arith.addf %224, %240 : vector<8x256xf32>
    %c0_113 = arith.constant 0 : index
    %c30 = arith.constant 30 : index
    %242 = vector.load %arg8[%c0_113, %c30] : memref<8x36xf32, #tpu.memory_space<vmem>>, vector<8x1xf32>
    %243 = vector.broadcast %242 : vector<8x1xf32> to vector<8x256xf32>
    %244 = arith.mulf %233, %243 : vector<8x256xf32>
    %245 = arith.addf %228, %244 : vector<8x256xf32>
    %c0_114 = arith.constant 0 : index
    %c31 = arith.constant 31 : index
    %246 = vector.load %arg8[%c0_114, %c31] : memref<8x36xf32, #tpu.memory_space<vmem>>, vector<8x1xf32>
    %247 = vector.broadcast %246 : vector<8x1xf32> to vector<8x256xf32>
    %248 = arith.mulf %233, %247 : vector<8x256xf32>
    %249 = arith.addf %232, %248 : vector<8x256xf32>
    %c0_115 = arith.constant 0 : index
    %c145 = arith.constant 145 : index
    %250 = vector.load %arg19[%c0_115, %c145] : memref<8x512xf32, #tpu.memory_space<vmem>>, vector<8x256xf32>
    %cst_116 = arith.constant 0.000000e+00 : f32
    %251 = vector.shape_cast %89 : vector<1x256xi1> to vector<1x256xi1>
    %252 = vector.broadcast %251 : vector<1x256xi1> to vector<8x256xi1>
    %253 = vector.broadcast %cst_116 : f32 to vector<8x256xf32>
    %254 = arith.select %252, %250, %253 : vector<8x256xi1>, vector<8x256xf32>
    %c0_117 = arith.constant 0 : index
    %c32 = arith.constant 32 : index
    %255 = vector.load %arg8[%c0_117, %c32] : memref<8x36xf32, #tpu.memory_space<vmem>>, vector<8x1xf32>
    %256 = vector.broadcast %255 : vector<8x1xf32> to vector<8x256xf32>
    %257 = arith.mulf %254, %256 : vector<8x256xf32>
    %258 = arith.addf %237, %257 : vector<8x256xf32>
    %c0_118 = arith.constant 0 : index
    %c33 = arith.constant 33 : index
    %259 = vector.load %arg8[%c0_118, %c33] : memref<8x36xf32, #tpu.memory_space<vmem>>, vector<8x1xf32>
    %260 = vector.broadcast %259 : vector<8x1xf32> to vector<8x256xf32>
    %261 = arith.mulf %254, %260 : vector<8x256xf32>
    %262 = arith.addf %241, %261 : vector<8x256xf32>
    %c0_119 = arith.constant 0 : index
    %c34 = arith.constant 34 : index
    %263 = vector.load %arg8[%c0_119, %c34] : memref<8x36xf32, #tpu.memory_space<vmem>>, vector<8x1xf32>
    %264 = vector.broadcast %263 : vector<8x1xf32> to vector<8x256xf32>
    %265 = arith.mulf %254, %264 : vector<8x256xf32>
    %266 = arith.addf %245, %265 : vector<8x256xf32>
    %c0_120 = arith.constant 0 : index
    %c35 = arith.constant 35 : index
    %267 = vector.load %arg8[%c0_120, %c35] : memref<8x36xf32, #tpu.memory_space<vmem>>, vector<8x1xf32>
    %268 = vector.broadcast %267 : vector<8x1xf32> to vector<8x256xf32>
    %269 = arith.mulf %254, %268 : vector<8x256xf32>
    %270 = arith.addf %249, %269 : vector<8x256xf32>
    %cst_121 = arith.constant dense<0.000000e+00> : vector<256xf32>
    %271 = vector.multi_reduction <add>, %258, %cst_121 [0] : vector<8x256xf32> to vector<256xf32>
    %272 = vector.shape_cast %271 : vector<256xf32> to vector<1x256xf32>
    %cst_122 = arith.constant dense<0.000000e+00> : vector<256xf32>
    %273 = vector.multi_reduction <add>, %262, %cst_122 [0] : vector<8x256xf32> to vector<256xf32>
    %274 = vector.shape_cast %273 : vector<256xf32> to vector<1x256xf32>
    %cst_123 = arith.constant dense<0.000000e+00> : vector<256xf32>
    %275 = vector.multi_reduction <add>, %266, %cst_123 [0] : vector<8x256xf32> to vector<256xf32>
    %276 = vector.shape_cast %275 : vector<256xf32> to vector<1x256xf32>
    %cst_124 = arith.constant dense<0.000000e+00> : vector<256xf32>
    %277 = vector.multi_reduction <add>, %270, %cst_124 [0] : vector<8x256xf32> to vector<256xf32>
    %278 = vector.shape_cast %277 : vector<256xf32> to vector<1x256xf32>
    %279 = tpu.concatenate %272, %274, %276, %278 in 0 : vector<1x256xf32>, vector<1x256xf32>, vector<1x256xf32>, vector<1x256xf32> -> vector<4x256xf32>
    %c0_125 = arith.constant 0 : index
    %c0_126 = arith.constant 0 : index
    %280 = vector.load %arg9[%c0_125, %c0_126] : memref<4x1xf32, #tpu.memory_space<vmem>>, vector<4x1xf32>
    %281 = vector.broadcast %280 : vector<4x1xf32> to vector<4x256xf32>
    %282 = arith.addf %279, %281 : vector<4x256xf32>
    %c0_127 = arith.constant 0 : index
    %c0_128 = arith.constant 0 : index
    %283 = vector.load %arg10[%c0_127, %c0_128] : memref<4x1xf32, #tpu.memory_space<vmem>>, vector<4x1xf32>
    %284 = vector.broadcast %283 : vector<4x1xf32> to vector<4x256xf32>
    %285 = arith.mulf %282, %284 : vector<4x256xf32>
    %c0_129 = arith.constant 0 : index
    %c0_130 = arith.constant 0 : index
    %286 = vector.load %arg11[%c0_129, %c0_130] : memref<4x1xf32, #tpu.memory_space<vmem>>, vector<4x1xf32>
    %287 = vector.broadcast %286 : vector<4x1xf32> to vector<4x256xf32>
    %288 = arith.addf %285, %287 : vector<4x256xf32>
    %cst_131 = arith.constant 0.000000e+00 : f32
    %289 = vector.broadcast %cst_131 : f32 to vector<4x256xf32>
    %290 = arith.maximumf %288, %289 : vector<4x256xf32>
    %c0_132 = arith.constant 0 : index
    %c128_133 = arith.constant 128 : index
    %291 = vector.load %arg19[%c0_132, %c128_133] : memref<8x512xf32, #tpu.memory_space<vmem>>, vector<4x256xf32>
    tpu.vector_store %arg19[%c0_132, %c128_133], %290 {strides = array<i32>} : memref<8x512xf32, #tpu.memory_space<vmem>>, vector<4x256xf32>,
    %cst_134 = arith.constant 0.000000e+00 : f32
    %292 = vector.broadcast %cst_134 : f32 to vector<4x256xf32>
    %cst_135 = arith.constant 0.000000e+00 : f32
    %293 = vector.broadcast %cst_135 : f32 to vector<4x256xf32>
    %cst_136 = arith.constant 0.000000e+00 : f32
    %294 = vector.broadcast %cst_136 : f32 to vector<4x256xf32>
    %cst_137 = arith.constant 0.000000e+00 : f32
    %295 = vector.broadcast %cst_137 : f32 to vector<4x256xf32>
    %c0_138 = arith.constant 0 : index
    %c111_139 = arith.constant 111 : index
    %296 = vector.load %arg19[%c0_138, %c111_139] : memref<8x512xf32, #tpu.memory_space<vmem>>, vector<4x256xf32>
    %cst_140 = arith.constant 0.000000e+00 : f32
    %297 = vector.shape_cast %87 : vector<1x256xi1> to vector<1x256xi1>
    %298 = vector.broadcast %297 : vector<1x256xi1> to vector<4x256xi1>
    %299 = vector.broadcast %cst_140 : f32 to vector<4x256xf32>
    %300 = arith.select %298, %296, %299 : vector<4x256xi1>, vector<4x256xf32>
    %c0_141 = arith.constant 0 : index
    %c0_142 = arith.constant 0 : index
    %301 = vector.load %arg12[%c0_141, %c0_142] : memref<4x36xf32, #tpu.memory_space<vmem>>, vector<4x1xf32>
    %302 = vector.broadcast %301 : vector<4x1xf32> to vector<4x256xf32>
    %303 = arith.mulf %300, %302 : vector<4x256xf32>
    %304 = arith.addf %292, %303 : vector<4x256xf32>
    %c0_143 = arith.constant 0 : index
    %c1_144 = arith.constant 1 : index
    %305 = vector.load %arg12[%c0_143, %c1_144] : memref<4x36xf32, #tpu.memory_space<vmem>>, vector<4x1xf32>
    %306 = vector.broadcast %305 : vector<4x1xf32> to vector<4x256xf32>
    %307 = arith.mulf %300, %306 : vector<4x256xf32>
    %308 = arith.addf %293, %307 : vector<4x256xf32>
    %c0_145 = arith.constant 0 : index
    %c2_146 = arith.constant 2 : index
    %309 = vector.load %arg12[%c0_145, %c2_146] : memref<4x36xf32, #tpu.memory_space<vmem>>, vector<4x1xf32>
    %310 = vector.broadcast %309 : vector<4x1xf32> to vector<4x256xf32>
    %311 = arith.mulf %300, %310 : vector<4x256xf32>
    %312 = arith.addf %294, %311 : vector<4x256xf32>
    %c0_147 = arith.constant 0 : index
    %c3_148 = arith.constant 3 : index
    %313 = vector.load %arg12[%c0_147, %c3_148] : memref<4x36xf32, #tpu.memory_space<vmem>>, vector<4x1xf32>
    %314 = vector.broadcast %313 : vector<4x1xf32> to vector<4x256xf32>
    %315 = arith.mulf %300, %314 : vector<4x256xf32>
    %316 = arith.addf %295, %315 : vector<4x256xf32>
    %c0_149 = arith.constant 0 : index
    %c112_150 = arith.constant 112 : index
    %317 = vector.load %arg19[%c0_149, %c112_150] : memref<8x512xf32, #tpu.memory_space<vmem>>, vector<4x256xf32>
    %c0_151 = arith.constant 0 : index
    %c4_152 = arith.constant 4 : index
    %318 = vector.load %arg12[%c0_151, %c4_152] : memref<4x36xf32, #tpu.memory_space<vmem>>, vector<4x1xf32>
    %319 = vector.broadcast %318 : vector<4x1xf32> to vector<4x256xf32>
    %320 = arith.mulf %317, %319 : vector<4x256xf32>
    %321 = arith.addf %304, %320 : vector<4x256xf32>
    %c0_153 = arith.constant 0 : index
    %c5_154 = arith.constant 5 : index
    %322 = vector.load %arg12[%c0_153, %c5_154] : memref<4x36xf32, #tpu.memory_space<vmem>>, vector<4x1xf32>
    %323 = vector.broadcast %322 : vector<4x1xf32> to vector<4x256xf32>
    %324 = arith.mulf %317, %323 : vector<4x256xf32>
    %325 = arith.addf %308, %324 : vector<4x256xf32>
    %c0_155 = arith.constant 0 : index
    %c6_156 = arith.constant 6 : index
    %326 = vector.load %arg12[%c0_155, %c6_156] : memref<4x36xf32, #tpu.memory_space<vmem>>, vector<4x1xf32>
    %327 = vector.broadcast %326 : vector<4x1xf32> to vector<4x256xf32>
    %328 = arith.mulf %317, %327 : vector<4x256xf32>
    %329 = arith.addf %312, %328 : vector<4x256xf32>
    %c0_157 = arith.constant 0 : index
    %c7_158 = arith.constant 7 : index
    %330 = vector.load %arg12[%c0_157, %c7_158] : memref<4x36xf32, #tpu.memory_space<vmem>>, vector<4x1xf32>
    %331 = vector.broadcast %330 : vector<4x1xf32> to vector<4x256xf32>
    %332 = arith.mulf %317, %331 : vector<4x256xf32>
    %333 = arith.addf %316, %332 : vector<4x256xf32>
    %c0_159 = arith.constant 0 : index
    %c113_160 = arith.constant 113 : index
    %334 = vector.load %arg19[%c0_159, %c113_160] : memref<8x512xf32, #tpu.memory_space<vmem>>, vector<4x256xf32>
    %cst_161 = arith.constant 0.000000e+00 : f32
    %335 = vector.shape_cast %89 : vector<1x256xi1> to vector<1x256xi1>
    %336 = vector.broadcast %335 : vector<1x256xi1> to vector<4x256xi1>
    %337 = vector.broadcast %cst_161 : f32 to vector<4x256xf32>
    %338 = arith.select %336, %334, %337 : vector<4x256xi1>, vector<4x256xf32>
    %c0_162 = arith.constant 0 : index
    %c8_163 = arith.constant 8 : index
    %339 = vector.load %arg12[%c0_162, %c8_163] : memref<4x36xf32, #tpu.memory_space<vmem>>, vector<4x1xf32>
    %340 = vector.broadcast %339 : vector<4x1xf32> to vector<4x256xf32>
    %341 = arith.mulf %338, %340 : vector<4x256xf32>
    %342 = arith.addf %321, %341 : vector<4x256xf32>
    %c0_164 = arith.constant 0 : index
    %c9_165 = arith.constant 9 : index
    %343 = vector.load %arg12[%c0_164, %c9_165] : memref<4x36xf32, #tpu.memory_space<vmem>>, vector<4x1xf32>
    %344 = vector.broadcast %343 : vector<4x1xf32> to vector<4x256xf32>
    %345 = arith.mulf %338, %344 : vector<4x256xf32>
    %346 = arith.addf %325, %345 : vector<4x256xf32>
    %c0_166 = arith.constant 0 : index
    %c10_167 = arith.constant 10 : index
    %347 = vector.load %arg12[%c0_166, %c10_167] : memref<4x36xf32, #tpu.memory_space<vmem>>, vector<4x1xf32>
    %348 = vector.broadcast %347 : vector<4x1xf32> to vector<4x256xf32>
    %349 = arith.mulf %338, %348 : vector<4x256xf32>
    %350 = arith.addf %329, %349 : vector<4x256xf32>
    %c0_168 = arith.constant 0 : index
    %c11_169 = arith.constant 11 : index
    %351 = vector.load %arg12[%c0_168, %c11_169] : memref<4x36xf32, #tpu.memory_space<vmem>>, vector<4x1xf32>
    %352 = vector.broadcast %351 : vector<4x1xf32> to vector<4x256xf32>
    %353 = arith.mulf %338, %352 : vector<4x256xf32>
    %354 = arith.addf %333, %353 : vector<4x256xf32>
    %c0_170 = arith.constant 0 : index
    %c127_171 = arith.constant 127 : index
    %355 = vector.load %arg19[%c0_170, %c127_171] : memref<8x512xf32, #tpu.memory_space<vmem>>, vector<4x256xf32>
    %cst_172 = arith.constant 0.000000e+00 : f32
    %356 = vector.shape_cast %87 : vector<1x256xi1> to vector<1x256xi1>
    %357 = vector.broadcast %356 : vector<1x256xi1> to vector<4x256xi1>
    %358 = vector.broadcast %cst_172 : f32 to vector<4x256xf32>
    %359 = arith.select %357, %355, %358 : vector<4x256xi1>, vector<4x256xf32>
    %c0_173 = arith.constant 0 : index
    %c12_174 = arith.constant 12 : index
    %360 = vector.load %arg12[%c0_173, %c12_174] : memref<4x36xf32, #tpu.memory_space<vmem>>, vector<4x1xf32>
    %361 = vector.broadcast %360 : vector<4x1xf32> to vector<4x256xf32>
    %362 = arith.mulf %359, %361 : vector<4x256xf32>
    %363 = arith.addf %342, %362 : vector<4x256xf32>
    %c0_175 = arith.constant 0 : index
    %c13_176 = arith.constant 13 : index
    %364 = vector.load %arg12[%c0_175, %c13_176] : memref<4x36xf32, #tpu.memory_space<vmem>>, vector<4x1xf32>
    %365 = vector.broadcast %364 : vector<4x1xf32> to vector<4x256xf32>
    %366 = arith.mulf %359, %365 : vector<4x256xf32>
    %367 = arith.addf %346, %366 : vector<4x256xf32>
    %c0_177 = arith.constant 0 : index
    %c14_178 = arith.constant 14 : index
    %368 = vector.load %arg12[%c0_177, %c14_178] : memref<4x36xf32, #tpu.memory_space<vmem>>, vector<4x1xf32>
    %369 = vector.broadcast %368 : vector<4x1xf32> to vector<4x256xf32>
    %370 = arith.mulf %359, %369 : vector<4x256xf32>
    %371 = arith.addf %350, %370 : vector<4x256xf32>
    %c0_179 = arith.constant 0 : index
    %c15_180 = arith.constant 15 : index
    %372 = vector.load %arg12[%c0_179, %c15_180] : memref<4x36xf32, #tpu.memory_space<vmem>>, vector<4x1xf32>
    %373 = vector.broadcast %372 : vector<4x1xf32> to vector<4x256xf32>
    %374 = arith.mulf %359, %373 : vector<4x256xf32>
    %375 = arith.addf %354, %374 : vector<4x256xf32>
    %c0_181 = arith.constant 0 : index
    %c128_182 = arith.constant 128 : index
    %376 = vector.load %arg19[%c0_181, %c128_182] : memref<8x512xf32, #tpu.memory_space<vmem>>, vector<4x256xf32>
    %c0_183 = arith.constant 0 : index
    %c16_184 = arith.constant 16 : index
    %377 = vector.load %arg12[%c0_183, %c16_184] : memref<4x36xf32, #tpu.memory_space<vmem>>, vector<4x1xf32>
    %378 = vector.broadcast %377 : vector<4x1xf32> to vector<4x256xf32>
    %379 = arith.mulf %376, %378 : vector<4x256xf32>
    %380 = arith.addf %363, %379 : vector<4x256xf32>
    %c0_185 = arith.constant 0 : index
    %c17_186 = arith.constant 17 : index
    %381 = vector.load %arg12[%c0_185, %c17_186] : memref<4x36xf32, #tpu.memory_space<vmem>>, vector<4x1xf32>
    %382 = vector.broadcast %381 : vector<4x1xf32> to vector<4x256xf32>
    %383 = arith.mulf %376, %382 : vector<4x256xf32>
    %384 = arith.addf %367, %383 : vector<4x256xf32>
    %c0_187 = arith.constant 0 : index
    %c18_188 = arith.constant 18 : index
    %385 = vector.load %arg12[%c0_187, %c18_188] : memref<4x36xf32, #tpu.memory_space<vmem>>, vector<4x1xf32>
    %386 = vector.broadcast %385 : vector<4x1xf32> to vector<4x256xf32>
    %387 = arith.mulf %376, %386 : vector<4x256xf32>
    %388 = arith.addf %371, %387 : vector<4x256xf32>
    %c0_189 = arith.constant 0 : index
    %c19_190 = arith.constant 19 : index
    %389 = vector.load %arg12[%c0_189, %c19_190] : memref<4x36xf32, #tpu.memory_space<vmem>>, vector<4x1xf32>
    %390 = vector.broadcast %389 : vector<4x1xf32> to vector<4x256xf32>
    %391 = arith.mulf %376, %390 : vector<4x256xf32>
    %392 = arith.addf %375, %391 : vector<4x256xf32>
    %c0_191 = arith.constant 0 : index
    %c129_192 = arith.constant 129 : index
    %393 = vector.load %arg19[%c0_191, %c129_192] : memref<8x512xf32, #tpu.memory_space<vmem>>, vector<4x256xf32>
    %cst_193 = arith.constant 0.000000e+00 : f32
    %394 = vector.shape_cast %89 : vector<1x256xi1> to vector<1x256xi1>
    %395 = vector.broadcast %394 : vector<1x256xi1> to vector<4x256xi1>
    %396 = vector.broadcast %cst_193 : f32 to vector<4x256xf32>
    %397 = arith.select %395, %393, %396 : vector<4x256xi1>, vector<4x256xf32>
    %c0_194 = arith.constant 0 : index
    %c20_195 = arith.constant 20 : index
    %398 = vector.load %arg12[%c0_194, %c20_195] : memref<4x36xf32, #tpu.memory_space<vmem>>, vector<4x1xf32>
    %399 = vector.broadcast %398 : vector<4x1xf32> to vector<4x256xf32>
    %400 = arith.mulf %397, %399 : vector<4x256xf32>
    %401 = arith.addf %380, %400 : vector<4x256xf32>
    %c0_196 = arith.constant 0 : index
    %c21_197 = arith.constant 21 : index
    %402 = vector.load %arg12[%c0_196, %c21_197] : memref<4x36xf32, #tpu.memory_space<vmem>>, vector<4x1xf32>
    %403 = vector.broadcast %402 : vector<4x1xf32> to vector<4x256xf32>
    %404 = arith.mulf %397, %403 : vector<4x256xf32>
    %405 = arith.addf %384, %404 : vector<4x256xf32>
    %c0_198 = arith.constant 0 : index
    %c22_199 = arith.constant 22 : index
    %406 = vector.load %arg12[%c0_198, %c22_199] : memref<4x36xf32, #tpu.memory_space<vmem>>, vector<4x1xf32>
    %407 = vector.broadcast %406 : vector<4x1xf32> to vector<4x256xf32>
    %408 = arith.mulf %397, %407 : vector<4x256xf32>
    %409 = arith.addf %388, %408 : vector<4x256xf32>
    %c0_200 = arith.constant 0 : index
    %c23_201 = arith.constant 23 : index
    %410 = vector.load %arg12[%c0_200, %c23_201] : memref<4x36xf32, #tpu.memory_space<vmem>>, vector<4x1xf32>
    %411 = vector.broadcast %410 : vector<4x1xf32> to vector<4x256xf32>
    %412 = arith.mulf %397, %411 : vector<4x256xf32>
    %413 = arith.addf %392, %412 : vector<4x256xf32>
    %c0_202 = arith.constant 0 : index
    %c143_203 = arith.constant 143 : index
    %414 = vector.load %arg19[%c0_202, %c143_203] : memref<8x512xf32, #tpu.memory_space<vmem>>, vector<4x256xf32>
    %cst_204 = arith.constant 0.000000e+00 : f32
    %415 = vector.shape_cast %87 : vector<1x256xi1> to vector<1x256xi1>
    %416 = vector.broadcast %415 : vector<1x256xi1> to vector<4x256xi1>
    %417 = vector.broadcast %cst_204 : f32 to vector<4x256xf32>
    %418 = arith.select %416, %414, %417 : vector<4x256xi1>, vector<4x256xf32>
    %c0_205 = arith.constant 0 : index
    %c24_206 = arith.constant 24 : index
    %419 = vector.load %arg12[%c0_205, %c24_206] : memref<4x36xf32, #tpu.memory_space<vmem>>, vector<4x1xf32>
    %420 = vector.broadcast %419 : vector<4x1xf32> to vector<4x256xf32>
    %421 = arith.mulf %418, %420 : vector<4x256xf32>
    %422 = arith.addf %401, %421 : vector<4x256xf32>
    %c0_207 = arith.constant 0 : index
    %c25_208 = arith.constant 25 : index
    %423 = vector.load %arg12[%c0_207, %c25_208] : memref<4x36xf32, #tpu.memory_space<vmem>>, vector<4x1xf32>
    %424 = vector.broadcast %423 : vector<4x1xf32> to vector<4x256xf32>
    %425 = arith.mulf %418, %424 : vector<4x256xf32>
    %426 = arith.addf %405, %425 : vector<4x256xf32>
    %c0_209 = arith.constant 0 : index
    %c26_210 = arith.constant 26 : index
    %427 = vector.load %arg12[%c0_209, %c26_210] : memref<4x36xf32, #tpu.memory_space<vmem>>, vector<4x1xf32>
    %428 = vector.broadcast %427 : vector<4x1xf32> to vector<4x256xf32>
    %429 = arith.mulf %418, %428 : vector<4x256xf32>
    %430 = arith.addf %409, %429 : vector<4x256xf32>
    %c0_211 = arith.constant 0 : index
    %c27_212 = arith.constant 27 : index
    %431 = vector.load %arg12[%c0_211, %c27_212] : memref<4x36xf32, #tpu.memory_space<vmem>>, vector<4x1xf32>
    %432 = vector.broadcast %431 : vector<4x1xf32> to vector<4x256xf32>
    %433 = arith.mulf %418, %432 : vector<4x256xf32>
    %434 = arith.addf %413, %433 : vector<4x256xf32>
    %c0_213 = arith.constant 0 : index
    %c144_214 = arith.constant 144 : index
    %435 = vector.load %arg19[%c0_213, %c144_214] : memref<8x512xf32, #tpu.memory_space<vmem>>, vector<4x256xf32>
    %c0_215 = arith.constant 0 : index
    %c28_216 = arith.constant 28 : index
    %436 = vector.load %arg12[%c0_215, %c28_216] : memref<4x36xf32, #tpu.memory_space<vmem>>, vector<4x1xf32>
    %437 = vector.broadcast %436 : vector<4x1xf32> to vector<4x256xf32>
    %438 = arith.mulf %435, %437 : vector<4x256xf32>
    %439 = arith.addf %422, %438 : vector<4x256xf32>
    %c0_217 = arith.constant 0 : index
    %c29_218 = arith.constant 29 : index
    %440 = vector.load %arg12[%c0_217, %c29_218] : memref<4x36xf32, #tpu.memory_space<vmem>>, vector<4x1xf32>
    %441 = vector.broadcast %440 : vector<4x1xf32> to vector<4x256xf32>
    %442 = arith.mulf %435, %441 : vector<4x256xf32>
    %443 = arith.addf %426, %442 : vector<4x256xf32>
    %c0_219 = arith.constant 0 : index
    %c30_220 = arith.constant 30 : index
    %444 = vector.load %arg12[%c0_219, %c30_220] : memref<4x36xf32, #tpu.memory_space<vmem>>, vector<4x1xf32>
    %445 = vector.broadcast %444 : vector<4x1xf32> to vector<4x256xf32>
    %446 = arith.mulf %435, %445 : vector<4x256xf32>
    %447 = arith.addf %430, %446 : vector<4x256xf32>
    %c0_221 = arith.constant 0 : index
    %c31_222 = arith.constant 31 : index
    %448 = vector.load %arg12[%c0_221, %c31_222] : memref<4x36xf32, #tpu.memory_space<vmem>>, vector<4x1xf32>
    %449 = vector.broadcast %448 : vector<4x1xf32> to vector<4x256xf32>
    %450 = arith.mulf %435, %449 : vector<4x256xf32>
    %451 = arith.addf %434, %450 : vector<4x256xf32>
    %c0_223 = arith.constant 0 : index
    %c145_224 = arith.constant 145 : index
    %452 = vector.load %arg19[%c0_223, %c145_224] : memref<8x512xf32, #tpu.memory_space<vmem>>, vector<4x256xf32>
    %cst_225 = arith.constant 0.000000e+00 : f32
    %453 = vector.shape_cast %89 : vector<1x256xi1> to vector<1x256xi1>
    %454 = vector.broadcast %453 : vector<1x256xi1> to vector<4x256xi1>
    %455 = vector.broadcast %cst_225 : f32 to vector<4x256xf32>
    %456 = arith.select %454, %452, %455 : vector<4x256xi1>, vector<4x256xf32>
    %c0_226 = arith.constant 0 : index
    %c32_227 = arith.constant 32 : index
    %457 = vector.load %arg12[%c0_226, %c32_227] : memref<4x36xf32, #tpu.memory_space<vmem>>, vector<4x1xf32>
    %458 = vector.broadcast %457 : vector<4x1xf32> to vector<4x256xf32>
    %459 = arith.mulf %456, %458 : vector<4x256xf32>
    %460 = arith.addf %439, %459 : vector<4x256xf32>
    %c0_228 = arith.constant 0 : index
    %c33_229 = arith.constant 33 : index
    %461 = vector.load %arg12[%c0_228, %c33_229] : memref<4x36xf32, #tpu.memory_space<vmem>>, vector<4x1xf32>
    %462 = vector.broadcast %461 : vector<4x1xf32> to vector<4x256xf32>
    %463 = arith.mulf %456, %462 : vector<4x256xf32>
    %464 = arith.addf %443, %463 : vector<4x256xf32>
    %c0_230 = arith.constant 0 : index
    %c34_231 = arith.constant 34 : index
    %465 = vector.load %arg12[%c0_230, %c34_231] : memref<4x36xf32, #tpu.memory_space<vmem>>, vector<4x1xf32>
    %466 = vector.broadcast %465 : vector<4x1xf32> to vector<4x256xf32>
    %467 = arith.mulf %456, %466 : vector<4x256xf32>
    %468 = arith.addf %447, %467 : vector<4x256xf32>
    %c0_232 = arith.constant 0 : index
    %c35_233 = arith.constant 35 : index
    %469 = vector.load %arg12[%c0_232, %c35_233] : memref<4x36xf32, #tpu.memory_space<vmem>>, vector<4x1xf32>
    %470 = vector.broadcast %469 : vector<4x1xf32> to vector<4x256xf32>
    %471 = arith.mulf %456, %470 : vector<4x256xf32>
    %472 = arith.addf %451, %471 : vector<4x256xf32>
    %cst_234 = arith.constant dense<0.000000e+00> : vector<256xf32>
    %473 = vector.multi_reduction <add>, %460, %cst_234 [0] : vector<4x256xf32> to vector<256xf32>
    %474 = vector.shape_cast %473 : vector<256xf32> to vector<1x256xf32>
    %cst_235 = arith.constant dense<0.000000e+00> : vector<256xf32>
    %475 = vector.multi_reduction <add>, %464, %cst_235 [0] : vector<4x256xf32> to vector<256xf32>
    %476 = vector.shape_cast %475 : vector<256xf32> to vector<1x256xf32>
    %cst_236 = arith.constant dense<0.000000e+00> : vector<256xf32>
    %477 = vector.multi_reduction <add>, %468, %cst_236 [0] : vector<4x256xf32> to vector<256xf32>
    %478 = vector.shape_cast %477 : vector<256xf32> to vector<1x256xf32>
    %cst_237 = arith.constant dense<0.000000e+00> : vector<256xf32>
    %479 = vector.multi_reduction <add>, %472, %cst_237 [0] : vector<4x256xf32> to vector<256xf32>
    %480 = vector.shape_cast %479 : vector<256xf32> to vector<1x256xf32>
    %481 = tpu.concatenate %474, %476, %478, %480 in 0 : vector<1x256xf32>, vector<1x256xf32>, vector<1x256xf32>, vector<1x256xf32> -> vector<4x256xf32>
    %c0_238 = arith.constant 0 : index
    %c0_239 = arith.constant 0 : index
    %482 = vector.load %arg13[%c0_238, %c0_239] : memref<4x1xf32, #tpu.memory_space<vmem>>, vector<4x1xf32>
    %483 = vector.broadcast %482 : vector<4x1xf32> to vector<4x256xf32>
    %484 = arith.addf %481, %483 : vector<4x256xf32>
    %cst_240 = arith.constant 0.000000e+00 : f32
    %485 = vector.broadcast %cst_240 : f32 to vector<8x256xf32>
    %cst_241 = arith.constant 0.000000e+00 : f32
    %486 = vector.broadcast %cst_241 : f32 to vector<8x256xf32>
    %cst_242 = arith.constant 0.000000e+00 : f32
    %487 = vector.broadcast %cst_242 : f32 to vector<8x256xf32>
    %cst_243 = arith.constant 0.000000e+00 : f32
    %488 = vector.broadcast %cst_243 : f32 to vector<8x256xf32>
    %c0_244 = arith.constant 0 : index
    %c111_245 = arith.constant 111 : index
    %489 = vector.load %arg20[%c0_244, %c111_245] : memref<8x512xf32, #tpu.memory_space<vmem>>, vector<8x256xf32>
    %cst_246 = arith.constant 0.000000e+00 : f32
    %490 = vector.shape_cast %87 : vector<1x256xi1> to vector<1x256xi1>
    %491 = vector.broadcast %490 : vector<1x256xi1> to vector<8x256xi1>
    %492 = vector.broadcast %cst_246 : f32 to vector<8x256xf32>
    %493 = arith.select %491, %489, %492 : vector<8x256xi1>, vector<8x256xf32>
    %c0_247 = arith.constant 0 : index
    %c0_248 = arith.constant 0 : index
    %494 = vector.load %arg16[%c0_247, %c0_248] : memref<8x36xf32, #tpu.memory_space<vmem>>, vector<8x1xf32>
    %495 = vector.broadcast %494 : vector<8x1xf32> to vector<8x256xf32>
    %496 = arith.mulf %493, %495 : vector<8x256xf32>
    %497 = arith.addf %485, %496 : vector<8x256xf32>
    %c0_249 = arith.constant 0 : index
    %c1_250 = arith.constant 1 : index
    %498 = vector.load %arg16[%c0_249, %c1_250] : memref<8x36xf32, #tpu.memory_space<vmem>>, vector<8x1xf32>
    %499 = vector.broadcast %498 : vector<8x1xf32> to vector<8x256xf32>
    %500 = arith.mulf %493, %499 : vector<8x256xf32>
    %501 = arith.addf %486, %500 : vector<8x256xf32>
    %c0_251 = arith.constant 0 : index
    %c2_252 = arith.constant 2 : index
    %502 = vector.load %arg16[%c0_251, %c2_252] : memref<8x36xf32, #tpu.memory_space<vmem>>, vector<8x1xf32>
    %503 = vector.broadcast %502 : vector<8x1xf32> to vector<8x256xf32>
    %504 = arith.mulf %493, %503 : vector<8x256xf32>
    %505 = arith.addf %487, %504 : vector<8x256xf32>
    %c0_253 = arith.constant 0 : index
    %c3_254 = arith.constant 3 : index
    %506 = vector.load %arg16[%c0_253, %c3_254] : memref<8x36xf32, #tpu.memory_space<vmem>>, vector<8x1xf32>
    %507 = vector.broadcast %506 : vector<8x1xf32> to vector<8x256xf32>
    %508 = arith.mulf %493, %507 : vector<8x256xf32>
    %509 = arith.addf %488, %508 : vector<8x256xf32>
    %c0_255 = arith.constant 0 : index
    %c112_256 = arith.constant 112 : index
    %510 = vector.load %arg20[%c0_255, %c112_256] : memref<8x512xf32, #tpu.memory_space<vmem>>, vector<8x256xf32>
    %c0_257 = arith.constant 0 : index
    %c4_258 = arith.constant 4 : index
    %511 = vector.load %arg16[%c0_257, %c4_258] : memref<8x36xf32, #tpu.memory_space<vmem>>, vector<8x1xf32>
    %512 = vector.broadcast %511 : vector<8x1xf32> to vector<8x256xf32>
    %513 = arith.mulf %510, %512 : vector<8x256xf32>
    %514 = arith.addf %497, %513 : vector<8x256xf32>
    %c0_259 = arith.constant 0 : index
    %c5_260 = arith.constant 5 : index
    %515 = vector.load %arg16[%c0_259, %c5_260] : memref<8x36xf32, #tpu.memory_space<vmem>>, vector<8x1xf32>
    %516 = vector.broadcast %515 : vector<8x1xf32> to vector<8x256xf32>
    %517 = arith.mulf %510, %516 : vector<8x256xf32>
    %518 = arith.addf %501, %517 : vector<8x256xf32>
    %c0_261 = arith.constant 0 : index
    %c6_262 = arith.constant 6 : index
    %519 = vector.load %arg16[%c0_261, %c6_262] : memref<8x36xf32, #tpu.memory_space<vmem>>, vector<8x1xf32>
    %520 = vector.broadcast %519 : vector<8x1xf32> to vector<8x256xf32>
    %521 = arith.mulf %510, %520 : vector<8x256xf32>
    %522 = arith.addf %505, %521 : vector<8x256xf32>
    %c0_263 = arith.constant 0 : index
    %c7_264 = arith.constant 7 : index
    %523 = vector.load %arg16[%c0_263, %c7_264] : memref<8x36xf32, #tpu.memory_space<vmem>>, vector<8x1xf32>
    %524 = vector.broadcast %523 : vector<8x1xf32> to vector<8x256xf32>
    %525 = arith.mulf %510, %524 : vector<8x256xf32>
    %526 = arith.addf %509, %525 : vector<8x256xf32>
    %c0_265 = arith.constant 0 : index
    %c113_266 = arith.constant 113 : index
    %527 = vector.load %arg20[%c0_265, %c113_266] : memref<8x512xf32, #tpu.memory_space<vmem>>, vector<8x256xf32>
    %cst_267 = arith.constant 0.000000e+00 : f32
    %528 = vector.shape_cast %89 : vector<1x256xi1> to vector<1x256xi1>
    %529 = vector.broadcast %528 : vector<1x256xi1> to vector<8x256xi1>
    %530 = vector.broadcast %cst_267 : f32 to vector<8x256xf32>
    %531 = arith.select %529, %527, %530 : vector<8x256xi1>, vector<8x256xf32>
    %c0_268 = arith.constant 0 : index
    %c8_269 = arith.constant 8 : index
    %532 = vector.load %arg16[%c0_268, %c8_269] : memref<8x36xf32, #tpu.memory_space<vmem>>, vector<8x1xf32>
    %533 = vector.broadcast %532 : vector<8x1xf32> to vector<8x256xf32>
    %534 = arith.mulf %531, %533 : vector<8x256xf32>
    %535 = arith.addf %514, %534 : vector<8x256xf32>
    %c0_270 = arith.constant 0 : index
    %c9_271 = arith.constant 9 : index
    %536 = vector.load %arg16[%c0_270, %c9_271] : memref<8x36xf32, #tpu.memory_space<vmem>>, vector<8x1xf32>
    %537 = vector.broadcast %536 : vector<8x1xf32> to vector<8x256xf32>
    %538 = arith.mulf %531, %537 : vector<8x256xf32>
    %539 = arith.addf %518, %538 : vector<8x256xf32>
    %c0_272 = arith.constant 0 : index
    %c10_273 = arith.constant 10 : index
    %540 = vector.load %arg16[%c0_272, %c10_273] : memref<8x36xf32, #tpu.memory_space<vmem>>, vector<8x1xf32>
    %541 = vector.broadcast %540 : vector<8x1xf32> to vector<8x256xf32>
    %542 = arith.mulf %531, %541 : vector<8x256xf32>
    %543 = arith.addf %522, %542 : vector<8x256xf32>
    %c0_274 = arith.constant 0 : index
    %c11_275 = arith.constant 11 : index
    %544 = vector.load %arg16[%c0_274, %c11_275] : memref<8x36xf32, #tpu.memory_space<vmem>>, vector<8x1xf32>
    %545 = vector.broadcast %544 : vector<8x1xf32> to vector<8x256xf32>
    %546 = arith.mulf %531, %545 : vector<8x256xf32>
    %547 = arith.addf %526, %546 : vector<8x256xf32>
    %c0_276 = arith.constant 0 : index
    %c127_277 = arith.constant 127 : index
    %548 = vector.load %arg20[%c0_276, %c127_277] : memref<8x512xf32, #tpu.memory_space<vmem>>, vector<8x256xf32>
    %cst_278 = arith.constant 0.000000e+00 : f32
    %549 = vector.shape_cast %87 : vector<1x256xi1> to vector<1x256xi1>
    %550 = vector.broadcast %549 : vector<1x256xi1> to vector<8x256xi1>
    %551 = vector.broadcast %cst_278 : f32 to vector<8x256xf32>
    %552 = arith.select %550, %548, %551 : vector<8x256xi1>, vector<8x256xf32>
    %c0_279 = arith.constant 0 : index
    %c12_280 = arith.constant 12 : index
    %553 = vector.load %arg16[%c0_279, %c12_280] : memref<8x36xf32, #tpu.memory_space<vmem>>, vector<8x1xf32>
    %554 = vector.broadcast %553 : vector<8x1xf32> to vector<8x256xf32>
    %555 = arith.mulf %552, %554 : vector<8x256xf32>
    %556 = arith.addf %535, %555 : vector<8x256xf32>
    %c0_281 = arith.constant 0 : index
    %c13_282 = arith.constant 13 : index
    %557 = vector.load %arg16[%c0_281, %c13_282] : memref<8x36xf32, #tpu.memory_space<vmem>>, vector<8x1xf32>
    %558 = vector.broadcast %557 : vector<8x1xf32> to vector<8x256xf32>
    %559 = arith.mulf %552, %558 : vector<8x256xf32>
    %560 = arith.addf %539, %559 : vector<8x256xf32>
    %c0_283 = arith.constant 0 : index
    %c14_284 = arith.constant 14 : index
    %561 = vector.load %arg16[%c0_283, %c14_284] : memref<8x36xf32, #tpu.memory_space<vmem>>, vector<8x1xf32>
    %562 = vector.broadcast %561 : vector<8x1xf32> to vector<8x256xf32>
    %563 = arith.mulf %552, %562 : vector<8x256xf32>
    %564 = arith.addf %543, %563 : vector<8x256xf32>
    %c0_285 = arith.constant 0 : index
    %c15_286 = arith.constant 15 : index
    %565 = vector.load %arg16[%c0_285, %c15_286] : memref<8x36xf32, #tpu.memory_space<vmem>>, vector<8x1xf32>
    %566 = vector.broadcast %565 : vector<8x1xf32> to vector<8x256xf32>
    %567 = arith.mulf %552, %566 : vector<8x256xf32>
    %568 = arith.addf %547, %567 : vector<8x256xf32>
    %c0_287 = arith.constant 0 : index
    %c128_288 = arith.constant 128 : index
    %569 = vector.load %arg20[%c0_287, %c128_288] : memref<8x512xf32, #tpu.memory_space<vmem>>, vector<8x256xf32>
    %c0_289 = arith.constant 0 : index
    %c16_290 = arith.constant 16 : index
    %570 = vector.load %arg16[%c0_289, %c16_290] : memref<8x36xf32, #tpu.memory_space<vmem>>, vector<8x1xf32>
    %571 = vector.broadcast %570 : vector<8x1xf32> to vector<8x256xf32>
    %572 = arith.mulf %569, %571 : vector<8x256xf32>
    %573 = arith.addf %556, %572 : vector<8x256xf32>
    %c0_291 = arith.constant 0 : index
    %c17_292 = arith.constant 17 : index
    %574 = vector.load %arg16[%c0_291, %c17_292] : memref<8x36xf32, #tpu.memory_space<vmem>>, vector<8x1xf32>
    %575 = vector.broadcast %574 : vector<8x1xf32> to vector<8x256xf32>
    %576 = arith.mulf %569, %575 : vector<8x256xf32>
    %577 = arith.addf %560, %576 : vector<8x256xf32>
    %c0_293 = arith.constant 0 : index
    %c18_294 = arith.constant 18 : index
    %578 = vector.load %arg16[%c0_293, %c18_294] : memref<8x36xf32, #tpu.memory_space<vmem>>, vector<8x1xf32>
    %579 = vector.broadcast %578 : vector<8x1xf32> to vector<8x256xf32>
    %580 = arith.mulf %569, %579 : vector<8x256xf32>
    %581 = arith.addf %564, %580 : vector<8x256xf32>
    %c0_295 = arith.constant 0 : index
    %c19_296 = arith.constant 19 : index
    %582 = vector.load %arg16[%c0_295, %c19_296] : memref<8x36xf32, #tpu.memory_space<vmem>>, vector<8x1xf32>
    %583 = vector.broadcast %582 : vector<8x1xf32> to vector<8x256xf32>
    %584 = arith.mulf %569, %583 : vector<8x256xf32>
    %585 = arith.addf %568, %584 : vector<8x256xf32>
    %c0_297 = arith.constant 0 : index
    %c129_298 = arith.constant 129 : index
    %586 = vector.load %arg20[%c0_297, %c129_298] : memref<8x512xf32, #tpu.memory_space<vmem>>, vector<8x256xf32>
    %cst_299 = arith.constant 0.000000e+00 : f32
    %587 = vector.shape_cast %89 : vector<1x256xi1> to vector<1x256xi1>
    %588 = vector.broadcast %587 : vector<1x256xi1> to vector<8x256xi1>
    %589 = vector.broadcast %cst_299 : f32 to vector<8x256xf32>
    %590 = arith.select %588, %586, %589 : vector<8x256xi1>, vector<8x256xf32>
    %c0_300 = arith.constant 0 : index
    %c20_301 = arith.constant 20 : index
    %591 = vector.load %arg16[%c0_300, %c20_301] : memref<8x36xf32, #tpu.memory_space<vmem>>, vector<8x1xf32>
    %592 = vector.broadcast %591 : vector<8x1xf32> to vector<8x256xf32>
    %593 = arith.mulf %590, %592 : vector<8x256xf32>
    %594 = arith.addf %573, %593 : vector<8x256xf32>
    %c0_302 = arith.constant 0 : index
    %c21_303 = arith.constant 21 : index
    %595 = vector.load %arg16[%c0_302, %c21_303] : memref<8x36xf32, #tpu.memory_space<vmem>>, vector<8x1xf32>
    %596 = vector.broadcast %595 : vector<8x1xf32> to vector<8x256xf32>
    %597 = arith.mulf %590, %596 : vector<8x256xf32>
    %598 = arith.addf %577, %597 : vector<8x256xf32>
    %c0_304 = arith.constant 0 : index
    %c22_305 = arith.constant 22 : index
    %599 = vector.load %arg16[%c0_304, %c22_305] : memref<8x36xf32, #tpu.memory_space<vmem>>, vector<8x1xf32>
    %600 = vector.broadcast %599 : vector<8x1xf32> to vector<8x256xf32>
    %601 = arith.mulf %590, %600 : vector<8x256xf32>
    %602 = arith.addf %581, %601 : vector<8x256xf32>
    %c0_306 = arith.constant 0 : index
    %c23_307 = arith.constant 23 : index
    %603 = vector.load %arg16[%c0_306, %c23_307] : memref<8x36xf32, #tpu.memory_space<vmem>>, vector<8x1xf32>
    %604 = vector.broadcast %603 : vector<8x1xf32> to vector<8x256xf32>
    %605 = arith.mulf %590, %604 : vector<8x256xf32>
    %606 = arith.addf %585, %605 : vector<8x256xf32>
    %c0_308 = arith.constant 0 : index
    %c143_309 = arith.constant 143 : index
    %607 = vector.load %arg20[%c0_308, %c143_309] : memref<8x512xf32, #tpu.memory_space<vmem>>, vector<8x256xf32>
    %cst_310 = arith.constant 0.000000e+00 : f32
    %608 = vector.shape_cast %87 : vector<1x256xi1> to vector<1x256xi1>
    %609 = vector.broadcast %608 : vector<1x256xi1> to vector<8x256xi1>
    %610 = vector.broadcast %cst_310 : f32 to vector<8x256xf32>
    %611 = arith.select %609, %607, %610 : vector<8x256xi1>, vector<8x256xf32>
    %c0_311 = arith.constant 0 : index
    %c24_312 = arith.constant 24 : index
    %612 = vector.load %arg16[%c0_311, %c24_312] : memref<8x36xf32, #tpu.memory_space<vmem>>, vector<8x1xf32>
    %613 = vector.broadcast %612 : vector<8x1xf32> to vector<8x256xf32>
    %614 = arith.mulf %611, %613 : vector<8x256xf32>
    %615 = arith.addf %594, %614 : vector<8x256xf32>
    %c0_313 = arith.constant 0 : index
    %c25_314 = arith.constant 25 : index
    %616 = vector.load %arg16[%c0_313, %c25_314] : memref<8x36xf32, #tpu.memory_space<vmem>>, vector<8x1xf32>
    %617 = vector.broadcast %616 : vector<8x1xf32> to vector<8x256xf32>
    %618 = arith.mulf %611, %617 : vector<8x256xf32>
    %619 = arith.addf %598, %618 : vector<8x256xf32>
    %c0_315 = arith.constant 0 : index
    %c26_316 = arith.constant 26 : index
    %620 = vector.load %arg16[%c0_315, %c26_316] : memref<8x36xf32, #tpu.memory_space<vmem>>, vector<8x1xf32>
    %621 = vector.broadcast %620 : vector<8x1xf32> to vector<8x256xf32>
    %622 = arith.mulf %611, %621 : vector<8x256xf32>
    %623 = arith.addf %602, %622 : vector<8x256xf32>
    %c0_317 = arith.constant 0 : index
    %c27_318 = arith.constant 27 : index
    %624 = vector.load %arg16[%c0_317, %c27_318] : memref<8x36xf32, #tpu.memory_space<vmem>>, vector<8x1xf32>
    %625 = vector.broadcast %624 : vector<8x1xf32> to vector<8x256xf32>
    %626 = arith.mulf %611, %625 : vector<8x256xf32>
    %627 = arith.addf %606, %626 : vector<8x256xf32>
    %c0_319 = arith.constant 0 : index
    %c144_320 = arith.constant 144 : index
    %628 = vector.load %arg20[%c0_319, %c144_320] : memref<8x512xf32, #tpu.memory_space<vmem>>, vector<8x256xf32>
    %c0_321 = arith.constant 0 : index
    %c28_322 = arith.constant 28 : index
    %629 = vector.load %arg16[%c0_321, %c28_322] : memref<8x36xf32, #tpu.memory_space<vmem>>, vector<8x1xf32>
    %630 = vector.broadcast %629 : vector<8x1xf32> to vector<8x256xf32>
    %631 = arith.mulf %628, %630 : vector<8x256xf32>
    %632 = arith.addf %615, %631 : vector<8x256xf32>
    %c0_323 = arith.constant 0 : index
    %c29_324 = arith.constant 29 : index
    %633 = vector.load %arg16[%c0_323, %c29_324] : memref<8x36xf32, #tpu.memory_space<vmem>>, vector<8x1xf32>
    %634 = vector.broadcast %633 : vector<8x1xf32> to vector<8x256xf32>
    %635 = arith.mulf %628, %634 : vector<8x256xf32>
    %636 = arith.addf %619, %635 : vector<8x256xf32>
    %c0_325 = arith.constant 0 : index
    %c30_326 = arith.constant 30 : index
    %637 = vector.load %arg16[%c0_325, %c30_326] : memref<8x36xf32, #tpu.memory_space<vmem>>, vector<8x1xf32>
    %638 = vector.broadcast %637 : vector<8x1xf32> to vector<8x256xf32>
    %639 = arith.mulf %628, %638 : vector<8x256xf32>
    %640 = arith.addf %623, %639 : vector<8x256xf32>
    %c0_327 = arith.constant 0 : index
    %c31_328 = arith.constant 31 : index
    %641 = vector.load %arg16[%c0_327, %c31_328] : memref<8x36xf32, #tpu.memory_space<vmem>>, vector<8x1xf32>
    %642 = vector.broadcast %641 : vector<8x1xf32> to vector<8x256xf32>
    %643 = arith.mulf %628, %642 : vector<8x256xf32>
    %644 = arith.addf %627, %643 : vector<8x256xf32>
    %c0_329 = arith.constant 0 : index
    %c145_330 = arith.constant 145 : index
    %645 = vector.load %arg20[%c0_329, %c145_330] : memref<8x512xf32, #tpu.memory_space<vmem>>, vector<8x256xf32>
    %cst_331 = arith.constant 0.000000e+00 : f32
    %646 = vector.shape_cast %89 : vector<1x256xi1> to vector<1x256xi1>
    %647 = vector.broadcast %646 : vector<1x256xi1> to vector<8x256xi1>
    %648 = vector.broadcast %cst_331 : f32 to vector<8x256xf32>
    %649 = arith.select %647, %645, %648 : vector<8x256xi1>, vector<8x256xf32>
    %c0_332 = arith.constant 0 : index
    %c32_333 = arith.constant 32 : index
    %650 = vector.load %arg16[%c0_332, %c32_333] : memref<8x36xf32, #tpu.memory_space<vmem>>, vector<8x1xf32>
    %651 = vector.broadcast %650 : vector<8x1xf32> to vector<8x256xf32>
    %652 = arith.mulf %649, %651 : vector<8x256xf32>
    %653 = arith.addf %632, %652 : vector<8x256xf32>
    %c0_334 = arith.constant 0 : index
    %c33_335 = arith.constant 33 : index
    %654 = vector.load %arg16[%c0_334, %c33_335] : memref<8x36xf32, #tpu.memory_space<vmem>>, vector<8x1xf32>
    %655 = vector.broadcast %654 : vector<8x1xf32> to vector<8x256xf32>
    %656 = arith.mulf %649, %655 : vector<8x256xf32>
    %657 = arith.addf %636, %656 : vector<8x256xf32>
    %c0_336 = arith.constant 0 : index
    %c34_337 = arith.constant 34 : index
    %658 = vector.load %arg16[%c0_336, %c34_337] : memref<8x36xf32, #tpu.memory_space<vmem>>, vector<8x1xf32>
    %659 = vector.broadcast %658 : vector<8x1xf32> to vector<8x256xf32>
    %660 = arith.mulf %649, %659 : vector<8x256xf32>
    %661 = arith.addf %640, %660 : vector<8x256xf32>
    %c0_338 = arith.constant 0 : index
    %c35_339 = arith.constant 35 : index
    %662 = vector.load %arg16[%c0_338, %c35_339] : memref<8x36xf32, #tpu.memory_space<vmem>>, vector<8x1xf32>
    %663 = vector.broadcast %662 : vector<8x1xf32> to vector<8x256xf32>
    %664 = arith.mulf %649, %663 : vector<8x256xf32>
    %665 = arith.addf %644, %664 : vector<8x256xf32>
    %cst_340 = arith.constant dense<0.000000e+00> : vector<256xf32>
    %666 = vector.multi_reduction <add>, %653, %cst_340 [0] : vector<8x256xf32> to vector<256xf32>
    %667 = vector.shape_cast %666 : vector<256xf32> to vector<1x256xf32>
    %cst_341 = arith.constant dense<0.000000e+00> : vector<256xf32>
    %668 = vector.multi_reduction <add>, %657, %cst_341 [0] : vector<8x256xf32> to vector<256xf32>
    %669 = vector.shape_cast %668 : vector<256xf32> to vector<1x256xf32>
    %cst_342 = arith.constant dense<0.000000e+00> : vector<256xf32>
    %670 = vector.multi_reduction <add>, %661, %cst_342 [0] : vector<8x256xf32> to vector<256xf32>
    %671 = vector.shape_cast %670 : vector<256xf32> to vector<1x256xf32>
    %cst_343 = arith.constant dense<0.000000e+00> : vector<256xf32>
    %672 = vector.multi_reduction <add>, %665, %cst_343 [0] : vector<8x256xf32> to vector<256xf32>
    %673 = vector.shape_cast %672 : vector<256xf32> to vector<1x256xf32>
    %674 = tpu.concatenate %667, %669, %671, %673 in 0 : vector<1x256xf32>, vector<1x256xf32>, vector<1x256xf32>, vector<1x256xf32> -> vector<4x256xf32>
    %c0_344 = arith.constant 0 : index
    %c0_345 = arith.constant 0 : index
    %675 = vector.load %arg17[%c0_344, %c0_345] : memref<4x1xf32, #tpu.memory_space<vmem>>, vector<4x1xf32>
    %676 = vector.broadcast %675 : vector<4x1xf32> to vector<4x256xf32>
    %677 = arith.addf %674, %676 : vector<4x256xf32>
    %678 = arith.addf %484, %677 : vector<4x256xf32>
    %c0_346 = arith.constant 0 : index
    %c0_347 = arith.constant 0 : index
    %c0_348 = arith.constant 0 : index
    %679 = vector.load %arg18[%c0_346, %c0_347, %c0_348] : memref<1x4x256xf32, #tpu.memory_space<vmem>>, vector<1x4x256xf32>
    %680 = vector.shape_cast %679 : vector<1x4x256xf32> to vector<4x256xf32>
    %681 = vector.shape_cast %678 : vector<4x256xf32> to vector<1x4x256xf32>
    tpu.vector_store %arg18[%c0_346, %c0_347, %c0_348], %681 {strides = array<i32>} : memref<1x4x256xf32, #tpu.memory_space<vmem>>, vector<1x4x256xf32>,
    return
  }
  func.func @transform_0(%arg0: i32) -> (i32, i32, i32) {
    %c0_i32 = arith.constant 0 : i32
    %c0_i32_0 = arith.constant 0 : i32
    %c0_i32_1 = arith.constant 0 : i32
    return %arg0, %c0_i32, %c0_i32_0 : i32, i32, i32
  }
  func.func @transform_1(%arg0: i32) -> (i32, i32, i32) {
    %c0_i32 = arith.constant 0 : i32
    %c0_i32_0 = arith.constant 0 : i32
    %c0_i32_1 = arith.constant 0 : i32
    return %arg0, %c0_i32, %c0_i32_0 : i32, i32, i32
  }
  func.func @transform_2(%arg0: i32) -> (i32, i32) {
    %c0_i32 = arith.constant 0 : i32
    %c0_i32_0 = arith.constant 0 : i32
    %c0_i32_1 = arith.constant 0 : i32
    return %c0_i32, %c0_i32_0 : i32, i32
  }
  func.func @transform_3(%arg0: i32) -> (i32, i32, i32) {
    %c0_i32 = arith.constant 0 : i32
    %c0_i32_0 = arith.constant 0 : i32
    %c0_i32_1 = arith.constant 0 : i32
    %c0_i32_2 = arith.constant 0 : i32
    return %c0_i32, %c0_i32_0, %c0_i32_1 : i32, i32, i32
  }
  func.func @transform_4(%arg0: i32) -> (i32, i32) {
    %c0_i32 = arith.constant 0 : i32
    %c0_i32_0 = arith.constant 0 : i32
    %c0_i32_1 = arith.constant 0 : i32
    return %c0_i32, %c0_i32_0 : i32, i32
  }
  func.func @transform_5(%arg0: i32) -> (i32, i32) {
    %c0_i32 = arith.constant 0 : i32
    %c0_i32_0 = arith.constant 0 : i32
    %c0_i32_1 = arith.constant 0 : i32
    return %c0_i32, %c0_i32_0 : i32, i32
  }
  func.func @transform_6(%arg0: i32) -> (i32, i32) {
    %c0_i32 = arith.constant 0 : i32
    %c0_i32_0 = arith.constant 0 : i32
    %c0_i32_1 = arith.constant 0 : i32
    return %c0_i32, %c0_i32_0 : i32, i32
  }
  func.func @transform_7(%arg0: i32) -> (i32, i32) {
    %c0_i32 = arith.constant 0 : i32
    %c0_i32_0 = arith.constant 0 : i32
    %c0_i32_1 = arith.constant 0 : i32
    return %c0_i32, %c0_i32_0 : i32, i32
  }
  func.func @transform_8(%arg0: i32) -> (i32, i32) {
    %c0_i32 = arith.constant 0 : i32
    %c0_i32_0 = arith.constant 0 : i32
    %c0_i32_1 = arith.constant 0 : i32
    return %c0_i32, %c0_i32_0 : i32, i32
  }
  func.func @transform_9(%arg0: i32) -> (i32, i32) {
    %c0_i32 = arith.constant 0 : i32
    %c0_i32_0 = arith.constant 0 : i32
    %c0_i32_1 = arith.constant 0 : i32
    return %c0_i32, %c0_i32_0 : i32, i32
  }
  func.func @transform_10(%arg0: i32) -> (i32, i32) {
    %c0_i32 = arith.constant 0 : i32
    %c0_i32_0 = arith.constant 0 : i32
    %c0_i32_1 = arith.constant 0 : i32
    return %c0_i32, %c0_i32_0 : i32, i32
  }
  func.func @transform_11(%arg0: i32) -> (i32, i32) {
    %c0_i32 = arith.constant 0 : i32
    %c0_i32_0 = arith.constant 0 : i32
    %c0_i32_1 = arith.constant 0 : i32
    return %c0_i32, %c0_i32_0 : i32, i32
  }
  func.func @transform_12(%arg0: i32) -> (i32, i32) {
    %c0_i32 = arith.constant 0 : i32
    %c0_i32_0 = arith.constant 0 : i32
    %c0_i32_1 = arith.constant 0 : i32
    return %c0_i32, %c0_i32_0 : i32, i32
  }
  func.func @transform_13(%arg0: i32) -> (i32, i32) {
    %c0_i32 = arith.constant 0 : i32
    %c0_i32_0 = arith.constant 0 : i32
    %c0_i32_1 = arith.constant 0 : i32
    return %c0_i32, %c0_i32_0 : i32, i32
  }
  func.func @transform_14(%arg0: i32) -> (i32, i32) {
    %c0_i32 = arith.constant 0 : i32
    %c0_i32_0 = arith.constant 0 : i32
    %c0_i32_1 = arith.constant 0 : i32
    return %c0_i32, %c0_i32_0 : i32, i32
  }
  func.func @transform_15(%arg0: i32) -> (i32, i32) {
    %c0_i32 = arith.constant 0 : i32
    %c0_i32_0 = arith.constant 0 : i32
    %c0_i32_1 = arith.constant 0 : i32
    return %c0_i32, %c0_i32_0 : i32, i32
  }
  func.func @transform_16(%arg0: i32) -> (i32, i32) {
    %c0_i32 = arith.constant 0 : i32
    %c0_i32_0 = arith.constant 0 : i32
    %c0_i32_1 = arith.constant 0 : i32
    return %c0_i32, %c0_i32_0 : i32, i32
  }
  func.func @transform_17(%arg0: i32) -> (i32, i32, i32) {
    %c0_i32 = arith.constant 0 : i32
    %c0_i32_0 = arith.constant 0 : i32
    %c0_i32_1 = arith.constant 0 : i32
    return %arg0, %c0_i32, %c0_i32_0 : i32, i32, i32
  }
}

</mosaic_0001>

<llo_original>
// kernel: de_up_pallas.1
$region0: #{de_up_pallas.1}
  #allocation0 [shape = 'u32[]', space=smem, size = 0x4, offset = 0x4, fixed_abs, tag = 'smem constant byte address 0x4 - core index']
  #allocation1 [shape = 'u32[144,128]{1,0:T(1,128)}', space=vmem, size = 0x12000, scoped, tag = 'internal scratch']
  #allocation2 [shape = 'f32[8,512]{1,0:T(8,128)}', space=vmem, size = 0x4000, scoped, tag = 'scratch operand']
  #allocation3 [shape = 'f32[8,512]{1,0:T(8,128)}', space=vmem, size = 0x4000, scoped, tag = 'scratch operand']
  %s0 = inlined_call_operand.vmem [shape: f32[2,4,256], index: 0, kind: input, shape index: {}]
  %s1 = inlined_call_operand.vmem [shape: f32[2,4,64], index: 1, kind: input, shape index: {}]
  %s2 = inlined_call_operand.vmem [shape: f32[16,4], index: 2, kind: input, shape index: {}]
  %s3 = inlined_call_operand.vmem [shape: f32[4,64,256], index: 3, kind: input, shape index: {}]
  %s4 = inlined_call_operand.vmem [shape: f32[4,1], index: 4, kind: input, shape index: {}]
  %s5 = inlined_call_operand.vmem [shape: f32[8,1], index: 5, kind: input, shape index: {}]
  %s6 = inlined_call_operand.vmem [shape: f32[8,1], index: 6, kind: input, shape index: {}]
  %s7 = inlined_call_operand.vmem [shape: f32[8,36], index: 7, kind: input, shape index: {}]
  %s8 = inlined_call_operand.vmem [shape: f32[4,1], index: 8, kind: input, shape index: {}]
  %s9 = inlined_call_operand.vmem [shape: f32[4,1], index: 9, kind: input, shape index: {}]
  %s10 = inlined_call_operand.vmem [shape: f32[4,1], index: 10, kind: input, shape index: {}]
  %s11 = inlined_call_operand.vmem [shape: f32[4,36], index: 11, kind: input, shape index: {}]
  %s12 = inlined_call_operand.vmem [shape: f32[4,1], index: 12, kind: input, shape index: {}]
  %s13 = inlined_call_operand.vmem [shape: f32[8,1], index: 13, kind: input, shape index: {}]
  %s14 = inlined_call_operand.vmem [shape: f32[8,1], index: 14, kind: input, shape index: {}]
  %s15 = inlined_call_operand.vmem [shape: f32[8,36], index: 15, kind: input, shape index: {}]
  %s16 = inlined_call_operand.vmem [shape: f32[4,1], index: 16, kind: input, shape index: {}]
  %s17 = inlined_call_operand.vmem [shape: f32[2,4,256], index: 17, kind: output, shape index: {}]
  %s18 = sld [smem:[#allocation0]]
  $region101: #{de_up_pallas.1} parent=0
    _
  %s20 = ssub.s32 1, %s18
  %s21 = scalar_select 0, %s20, %s18
  loop: start=0, step=1, limit=4
  $region2: #{de_up_pallas.1} parent=0 // loop_pre_header
    _
  $region3: #{de_up_pallas.1} parent=0 // loop_header
    %s23 = sphi 0, %s27
    %p24 = scmp.ge.s32.totalorder %s23, 4
    %s33 = sphi 0, %s35
    %s36 = sphi 0, %s33
    %s37 = sphi 0, %s36
    %s53 = sphi 0, %s37
    %s59 = sphi 0, %s61
    %s62 = sphi 0, %s59
    %s63 = sphi 0, %s62
    %s79 = sphi 0, %s63
    %s83 = sphi 0, %s83
    %s85 = sphi 0, %s83
    %s86 = sphi 0, %s85
    %s100 = sphi 0, %s86
    %s104 = sphi 0, %s104
    %s106 = sphi 0, %s104
    %s107 = sphi 0, %s106
    %s121 = sphi 0, %s107
    %s125 = sphi 0, %s125
    %s127 = sphi 0, %s125
    %s128 = sphi 0, %s127
    %s142 = sphi 0, %s128
    %s146 = sphi 0, %s146
    %s148 = sphi 0, %s146
    %s149 = sphi 0, %s148
    %s163 = sphi 0, %s149
    %s167 = sphi 0, %s167
    %s169 = sphi 0, %s167
    %s170 = sphi 0, %s169
    %s184 = sphi 0, %s170
    %s188 = sphi 0, %s188
    %s190 = sphi 0, %s188
    %s191 = sphi 0, %s190
    %s205 = sphi 0, %s191
    %s209 = sphi 0, %s209
    %s211 = sphi 0, %s209
    %s212 = sphi 0, %s211
    %s226 = sphi 0, %s212
    %s230 = sphi 0, %s230
    %s232 = sphi 0, %s230
    %s233 = sphi 0, %s232
    %s247 = sphi 0, %s233
    %s251 = sphi 0, %s251
    %s253 = sphi 0, %s251
    %s254 = sphi 0, %s253
    %s268 = sphi 0, %s254
    %s272 = sphi 0, %s272
    %s274 = sphi 0, %s272
    %s275 = sphi 0, %s274
    %s289 = sphi 0, %s275
    %s293 = sphi 0, %s293
    %s295 = sphi 0, %s293
    %s296 = sphi 0, %s295
    %s310 = sphi 0, %s296
    %s314 = sphi 0, %s314
    %s316 = sphi 0, %s314
    %s317 = sphi 0, %s316
    %s331 = sphi 0, %s317
    %s335 = sphi 0, %s335
    %s337 = sphi 0, %s335
    %s338 = sphi 0, %s337
    %s352 = sphi 0, %s338
    %s356 = sphi 0, %s356
    %s358 = sphi 0, %s356
    %s359 = sphi 0, %s358
    %s373 = sphi 0, %s359
    %s377 = sphi 0, %s377
    %s379 = sphi 0, %s377
    %s380 = sphi 0, %s379
    %s394 = sphi 0, %s380
    %s400 = sphi 0, %s402
    %s403 = sphi 0, %s400
    %s404 = sphi 0, %s403
    %s420 = sphi 0, %s404
  $region4: #{de_up_pallas.1} parent=0 // loop_header_branch
    %26 = sbr.rel (%p24) target = $region8
  $region5: #{de_up_pallas.1} parent=0 // loop_body
    %s28 = ssub.s32 %s23, 1
    %s29 = ssub.s32 %s23, 2
    %s30 = sadd.s32 %s23, 1
    %s31 = ssub.s32 %s23, %s30
    %p32 = scmp.eq.s32.totalorder %s31, 0
    %s34 = sadd.s32 %s33, 1
    %s35 = scalar_select %p32, %s33, %s34
    %p38 = pneg %p32
    %p39 = scmp.eq.s32.totalorder %s23, 1
    %p40 = por %p38, %p39
    %p41 = scmp.ne.s32.totalorder %s33, %s36
    %p42 = scmp.eq.s32.totalorder %s23, 0
    %p43 = por %p41, %p42
    %p44 = scmp.ne.s32.totalorder %s33, %s36
    %p45 = scmp.eq.s32.totalorder %s28, 1
    %p46 = por %p44, %p45
    %p47 = scmp.ne.s32.totalorder %s36, %s37
    %p48 = scmp.eq.s32.totalorder %s28, 0
    %p49 = por %p47, %p48
    %p50 = scmp.ne.s32.totalorder %s36, %s37
    %p51 = scmp.eq.s32.totalorder %s29, 1
    %p52 = por %p50, %p51
    %p54 = scmp.ne.s32.totalorder %s37, %s53
    %p55 = scmp.eq.s32.totalorder %s29, 0
    %p56 = por %p54, %p55
    %s57 = ssub.s32 %s23, %s30
    %p58 = scmp.eq.s32.totalorder %s57, 0
    %s60 = sadd.s32 %s59, 1
    %s61 = scalar_select %p58, %s59, %s60
    %p64 = pneg %p58
    %p65 = scmp.eq.s32.totalorder %s23, 1
    %p66 = por %p64, %p65
    %p67 = scmp.ne.s32.totalorder %s59, %s62
    %p68 = scmp.eq.s32.totalorder %s23, 0
    %p69 = por %p67, %p68
    %p70 = scmp.ne.s32.totalorder %s59, %s62
    %p71 = scmp.eq.s32.totalorder %s28, 1
    %p72 = por %p70, %p71
    %p73 = scmp.ne.s32.totalorder %s62, %s63
    %p74 = scmp.eq.s32.totalorder %s28, 0
    %p75 = por %p73, %p74
    %p76 = scmp.ne.s32.totalorder %s62, %s63
    %p77 = scmp.eq.s32.totalorder %s29, 1
    %p78 = por %p76, %p77
    %p80 = scmp.ne.s32.totalorder %s63, %s79
    %p81 = scmp.eq.s32.totalorder %s29, 0
    %p82 = por %p80, %p81
    %s84 = sadd.s32 %s83, 1
    %p87 = scmp.eq.s32.totalorder %s23, 1
    %p88 = scmp.ne.s32.totalorder %s83, %s85
    %p89 = scmp.eq.s32.totalorder %s23, 0
    %p90 = por %p88, %p89
    %p91 = scmp.ne.s32.totalorder %s83, %s85
    %p92 = scmp.eq.s32.totalorder %s28, 1
    %p93 = por %p91, %p92
    %p94 = scmp.ne.s32.totalorder %s85, %s86
    %p95 = scmp.eq.s32.totalorder %s28, 0
    %p96 = por %p94, %p95
    %p97 = scmp.ne.s32.totalorder %s85, %s86
    %p98 = scmp.eq.s32.totalorder %s29, 1
    %p99 = por %p97, %p98
    %p101 = scmp.ne.s32.totalorder %s86, %s100
    %p102 = scmp.eq.s32.totalorder %s29, 0
    %p103 = por %p101, %p102
    %s105 = sadd.s32 %s104, 1
    %p108 = scmp.eq.s32.totalorder %s23, 1
    %p109 = scmp.ne.s32.totalorder %s104, %s106
    %p110 = scmp.eq.s32.totalorder %s23, 0
    %p111 = por %p109, %p110
    %p112 = scmp.ne.s32.totalorder %s104, %s106
    %p113 = scmp.eq.s32.totalorder %s28, 1
    %p114 = por %p112, %p113
    %p115 = scmp.ne.s32.totalorder %s106, %s107
    %p116 = scmp.eq.s32.totalorder %s28, 0
    %p117 = por %p115, %p116
    %p118 = scmp.ne.s32.totalorder %s106, %s107
    %p119 = scmp.eq.s32.totalorder %s29, 1
    %p120 = por %p118, %p119
    %p122 = scmp.ne.s32.totalorder %s107, %s121
    %p123 = scmp.eq.s32.totalorder %s29, 0
    %p124 = por %p122, %p123
    %s126 = sadd.s32 %s125, 1
    %p129 = scmp.eq.s32.totalorder %s23, 1
    %p130 = scmp.ne.s32.totalorder %s125, %s127
    %p131 = scmp.eq.s32.totalorder %s23, 0
    %p132 = por %p130, %p131
    %p133 = scmp.ne.s32.totalorder %s125, %s127
    %p134 = scmp.eq.s32.totalorder %s28, 1
    %p135 = por %p133, %p134
    %p136 = scmp.ne.s32.totalorder %s127, %s128
    %p137 = scmp.eq.s32.totalorder %s28, 0
    %p138 = por %p136, %p137
    %p139 = scmp.ne.s32.totalorder %s127, %s128
    %p140 = scmp.eq.s32.totalorder %s29, 1
    %p141 = por %p139, %p140
    %p143 = scmp.ne.s32.totalorder %s128, %s142
    %p144 = scmp.eq.s32.totalorder %s29, 0
    %p145 = por %p143, %p144
    %s147 = sadd.s32 %s146, 1
    %p150 = scmp.eq.s32.totalorder %s23, 1
    %p151 = scmp.ne.s32.totalorder %s146, %s148
    %p152 = scmp.eq.s32.totalorder %s23, 0
    %p153 = por %p151, %p152
    %p154 = scmp.ne.s32.totalorder %s146, %s148
    %p155 = scmp.eq.s32.totalorder %s28, 1
    %p156 = por %p154, %p155
    %p157 = scmp.ne.s32.totalorder %s148, %s149
    %p158 = scmp.eq.s32.totalorder %s28, 0
    %p159 = por %p157, %p158
    %p160 = scmp.ne.s32.totalorder %s148, %s149
    %p161 = scmp.eq.s32.totalorder %s29, 1
    %p162 = por %p160, %p161
    %p164 = scmp.ne.s32.totalorder %s149, %s163
    %p165 = scmp.eq.s32.totalorder %s29, 0
    %p166 = por %p164, %p165
    %s168 = sadd.s32 %s167, 1
    %p171 = scmp.eq.s32.totalorder %s23, 1
    %p172 = scmp.ne.s32.totalorder %s167, %s169
    %p173 = scmp.eq.s32.totalorder %s23, 0
    %p174 = por %p172, %p173
    %p175 = scmp.ne.s32.totalorder %s167, %s169
    %p176 = scmp.eq.s32.totalorder %s28, 1
    %p177 = por %p175, %p176
    %p178 = scmp.ne.s32.totalorder %s169, %s170
    %p179 = scmp.eq.s32.totalorder %s28, 0
    %p180 = por %p178, %p179
    %p181 = scmp.ne.s32.totalorder %s169, %s170
    %p182 = scmp.eq.s32.totalorder %s29, 1
    %p183 = por %p181, %p182
    %p185 = scmp.ne.s32.totalorder %s170, %s184
    %p186 = scmp.eq.s32.totalorder %s29, 0
    %p187 = por %p185, %p186
    %s189 = sadd.s32 %s188, 1
    %p192 = scmp.eq.s32.totalorder %s23, 1
    %p193 = scmp.ne.s32.totalorder %s188, %s190
    %p194 = scmp.eq.s32.totalorder %s23, 0
    %p195 = por %p193, %p194
    %p196 = scmp.ne.s32.totalorder %s188, %s190
    %p197 = scmp.eq.s32.totalorder %s28, 1
    %p198 = por %p196, %p197
    %p199 = scmp.ne.s32.totalorder %s190, %s191
    %p200 = scmp.eq.s32.totalorder %s28, 0
    %p201 = por %p199, %p200
    %p202 = scmp.ne.s32.totalorder %s190, %s191
    %p203 = scmp.eq.s32.totalorder %s29, 1
    %p204 = por %p202, %p203
    %p206 = scmp.ne.s32.totalorder %s191, %s205
    %p207 = scmp.eq.s32.totalorder %s29, 0
    %p208 = por %p206, %p207
    %s210 = sadd.s32 %s209, 1
    %p213 = scmp.eq.s32.totalorder %s23, 1
    %p214 = scmp.ne.s32.totalorder %s209, %s211
    %p215 = scmp.eq.s32.totalorder %s23, 0
    %p216 = por %p214, %p215
    %p217 = scmp.ne.s32.totalorder %s209, %s211
    %p218 = scmp.eq.s32.totalorder %s28, 1
    %p219 = por %p217, %p218
    %p220 = scmp.ne.s32.totalorder %s211, %s212
    %p221 = scmp.eq.s32.totalorder %s28, 0
    %p222 = por %p220, %p221
    %p223 = scmp.ne.s32.totalorder %s211, %s212
    %p224 = scmp.eq.s32.totalorder %s29, 1
    %p225 = por %p223, %p224
    %p227 = scmp.ne.s32.totalorder %s212, %s226
    %p228 = scmp.eq.s32.totalorder %s29, 0
    %p229 = por %p227, %p228
    %s231 = sadd.s32 %s230, 1
    %p234 = scmp.eq.s32.totalorder %s23, 1
    %p235 = scmp.ne.s32.totalorder %s230, %s232
    %p236 = scmp.eq.s32.totalorder %s23, 0
    %p237 = por %p235, %p236
    %p238 = scmp.ne.s32.totalorder %s230, %s232
    %p239 = scmp.eq.s32.totalorder %s28, 1
    %p240 = por %p238, %p239
    %p241 = scmp.ne.s32.totalorder %s232, %s233
    %p242 = scmp.eq.s32.totalorder %s28, 0
    %p243 = por %p241, %p242
    %p244 = scmp.ne.s32.totalorder %s232, %s233
    %p245 = scmp.eq.s32.totalorder %s29, 1
    %p246 = por %p244, %p245
    %p248 = scmp.ne.s32.totalorder %s233, %s247
    %p249 = scmp.eq.s32.totalorder %s29, 0
    %p250 = por %p248, %p249
    %s252 = sadd.s32 %s251, 1
    %p255 = scmp.eq.s32.totalorder %s23, 1
    %p256 = scmp.ne.s32.totalorder %s251, %s253
    %p257 = scmp.eq.s32.totalorder %s23, 0
    %p258 = por %p256, %p257
    %p259 = scmp.ne.s32.totalorder %s251, %s253
    %p260 = scmp.eq.s32.totalorder %s28, 1
    %p261 = por %p259, %p260
    %p262 = scmp.ne.s32.totalorder %s253, %s254
    %p263 = scmp.eq.s32.totalorder %s28, 0
    %p264 = por %p262, %p263
    %p265 = scmp.ne.s32.totalorder %s253, %s254
    %p266 = scmp.eq.s32.totalorder %s29, 1
    %p267 = por %p265, %p266
    %p269 = scmp.ne.s32.totalorder %s254, %s268
    %p270 = scmp.eq.s32.totalorder %s29, 0
    %p271 = por %p269, %p270
    %s273 = sadd.s32 %s272, 1
    %p276 = scmp.eq.s32.totalorder %s23, 1
    %p277 = scmp.ne.s32.totalorder %s272, %s274
    %p278 = scmp.eq.s32.totalorder %s23, 0
    %p279 = por %p277, %p278
    %p280 = scmp.ne.s32.totalorder %s272, %s274
    %p281 = scmp.eq.s32.totalorder %s28, 1
    %p282 = por %p280, %p281
    %p283 = scmp.ne.s32.totalorder %s274, %s275
    %p284 = scmp.eq.s32.totalorder %s28, 0
    %p285 = por %p283, %p284
    %p286 = scmp.ne.s32.totalorder %s274, %s275
    %p287 = scmp.eq.s32.totalorder %s29, 1
    %p288 = por %p286, %p287
    %p290 = scmp.ne.s32.totalorder %s275, %s289
    %p291 = scmp.eq.s32.totalorder %s29, 0
    %p292 = por %p290, %p291
    %s294 = sadd.s32 %s293, 1
    %p297 = scmp.eq.s32.totalorder %s23, 1
    %p298 = scmp.ne.s32.totalorder %s293, %s295
    %p299 = scmp.eq.s32.totalorder %s23, 0
    %p300 = por %p298, %p299
    %p301 = scmp.ne.s32.totalorder %s293, %s295
    %p302 = scmp.eq.s32.totalorder %s28, 1
    %p303 = por %p301, %p302
    %p304 = scmp.ne.s32.totalorder %s295, %s296
    %p305 = scmp.eq.s32.totalorder %s28, 0
    %p306 = por %p304, %p305
    %p307 = scmp.ne.s32.totalorder %s295, %s296
    %p308 = scmp.eq.s32.totalorder %s29, 1
    %p309 = por %p307, %p308
    %p311 = scmp.ne.s32.totalorder %s296, %s310
    %p312 = scmp.eq.s32.totalorder %s29, 0
    %p313 = por %p311, %p312
    %s315 = sadd.s32 %s314, 1
    %p318 = scmp.eq.s32.totalorder %s23, 1
    %p319 = scmp.ne.s32.totalorder %s314, %s316
    %p320 = scmp.eq.s32.totalorder %s23, 0
    %p321 = por %p319, %p320
    %p322 = scmp.ne.s32.totalorder %s314, %s316
    %p323 = scmp.eq.s32.totalorder %s28, 1
    %p324 = por %p322, %p323
    %p325 = scmp.ne.s32.totalorder %s316, %s317
    %p326 = scmp.eq.s32.totalorder %s28, 0
    %p327 = por %p325, %p326
    %p328 = scmp.ne.s32.totalorder %s316, %s317
    %p329 = scmp.eq.s32.totalorder %s29, 1
    %p330 = por %p328, %p329
    %p332 = scmp.ne.s32.totalorder %s317, %s331
    %p333 = scmp.eq.s32.totalorder %s29, 0
    %p334 = por %p332, %p333
    %s336 = sadd.s32 %s335, 1
    %p339 = scmp.eq.s32.totalorder %s23, 1
    %p340 = scmp.ne.s32.totalorder %s335, %s337
    %p341 = scmp.eq.s32.totalorder %s23, 0
    %p342 = por %p340, %p341
    %p343 = scmp.ne.s32.totalorder %s335, %s337
    %p344 = scmp.eq.s32.totalorder %s28, 1
    %p345 = por %p343, %p344
    %p346 = scmp.ne.s32.totalorder %s337, %s338
    %p347 = scmp.eq.s32.totalorder %s28, 0
    %p348 = por %p346, %p347
    %p349 = scmp.ne.s32.totalorder %s337, %s338
    %p350 = scmp.eq.s32.totalorder %s29, 1
    %p351 = por %p349, %p350
    %p353 = scmp.ne.s32.totalorder %s338, %s352
    %p354 = scmp.eq.s32.totalorder %s29, 0
    %p355 = por %p353, %p354
    %s357 = sadd.s32 %s356, 1
    %p360 = scmp.eq.s32.totalorder %s23, 1
    %p361 = scmp.ne.s32.totalorder %s356, %s358
    %p362 = scmp.eq.s32.totalorder %s23, 0
    %p363 = por %p361, %p362
    %p364 = scmp.ne.s32.totalorder %s356, %s358
    %p365 = scmp.eq.s32.totalorder %s28, 1
    %p366 = por %p364, %p365
    %p367 = scmp.ne.s32.totalorder %s358, %s359
    %p368 = scmp.eq.s32.totalorder %s28, 0
    %p369 = por %p367, %p368
    %p370 = scmp.ne.s32.totalorder %s358, %s359
    %p371 = scmp.eq.s32.totalorder %s29, 1
    %p372 = por %p370, %p371
    %p374 = scmp.ne.s32.totalorder %s359, %s373
    %p375 = scmp.eq.s32.totalorder %s29, 0
    %p376 = por %p374, %p375
    %s378 = sadd.s32 %s377, 1
    %p381 = scmp.eq.s32.totalorder %s23, 1
    %p382 = scmp.ne.s32.totalorder %s377, %s379
    %p383 = scmp.eq.s32.totalorder %s23, 0
    %p384 = por %p382, %p383
    %p385 = scmp.ne.s32.totalorder %s377, %s379
    %p386 = scmp.eq.s32.totalorder %s28, 1
    %p387 = por %p385, %p386
    %p388 = scmp.ne.s32.totalorder %s379, %s380
    %p389 = scmp.eq.s32.totalorder %s28, 0
    %p390 = por %p388, %p389
    %p391 = scmp.ne.s32.totalorder %s379, %s380
    %p392 = scmp.eq.s32.totalorder %s29, 1
    %p393 = por %p391, %p392
    %p395 = scmp.ne.s32.totalorder %s380, %s394
    %p396 = scmp.eq.s32.totalorder %s29, 0
    %p397 = por %p395, %p396
    %s398 = ssub.s32 %s23, %s30
    %p399 = scmp.eq.s32.totalorder %s398, 0
    %s401 = sadd.s32 %s400, 1
    %s402 = scalar_select %p399, %s400, %s401
    %p405 = pneg %p399
    %p406 = scmp.eq.s32.totalorder %s23, 1
    %p407 = por %p405, %p406
    %p408 = scmp.ne.s32.totalorder %s400, %s403
    %p409 = scmp.eq.s32.totalorder %s23, 0
    %p410 = por %p408, %p409
    %p411 = scmp.ne.s32.totalorder %s400, %s403
    %p412 = scmp.eq.s32.totalorder %s28, 1
    %p413 = por %p411, %p412
    %p414 = scmp.ne.s32.totalorder %s403, %s404
    %p415 = scmp.eq.s32.totalorder %s28, 0
    %p416 = por %p414, %p415
    %p417 = scmp.ne.s32.totalorder %s403, %s404
    %p418 = scmp.eq.s32.totalorder %s29, 1
    %p419 = por %p417, %p418
    %p421 = scmp.ne.s32.totalorder %s404, %s420
    %p422 = scmp.eq.s32.totalorder %s29, 0
    %p423 = por %p421, %p422
    %p424 = scmp.le.s32.totalorder 1, %s23
    %p425 = scmp.lt.s32.totalorder %s23, 3
    %p426 = pnand %p424, %p425
    %p427 = pneg %p426
    // Predicated region
    $region9: #{de_up_pallas.1} parent=5 // pred_check
      _
    $region10: #{de_up_pallas.1} parent=5 // pred_check_branch
      %429 = sbr.rel (%p426) target = $region12
    $region11: #{de_up_pallas.1} parent=5 // pred_region
      %s430 = ssub.s32 %s23, 1
      // Predicated region
      $region13: #{de_up_pallas.1} parent=11 // pred_check
        %p431 = pneg %p96
      $region14: #{de_up_pallas.1} parent=11 // pred_check_branch
        %433 = sbr.rel (%p431) target = $region16
      $region15: #{de_up_pallas.1} parent=11 // pred_region
        _
      $region16: #{de_up_pallas.1} parent=11 // pred_fallthru
        _
      // Predicated region
      $region17: #{de_up_pallas.1} parent=11 // pred_check
        %p434 = pneg %p117
      $region18: #{de_up_pallas.1} parent=11 // pred_check_branch
        %436 = sbr.rel (%p434) target = $region20
      $region19: #{de_up_pallas.1} parent=11 // pred_region
        _
      $region20: #{de_up_pallas.1} parent=11 // pred_fallthru
        _
      // Predicated region
      $region21: #{de_up_pallas.1} parent=11 // pred_check
        %p437 = pneg %p138
      $region22: #{de_up_pallas.1} parent=11 // pred_check_branch
        %439 = sbr.rel (%p437) target = $region24
      $region23: #{de_up_pallas.1} parent=11 // pred_region
        _
      $region24: #{de_up_pallas.1} parent=11 // pred_fallthru
        _
      // Predicated region
      $region25: #{de_up_pallas.1} parent=11 // pred_check
        %p440 = pneg %p159
      $region26: #{de_up_pallas.1} parent=11 // pred_check_branch
        %442 = sbr.rel (%p440) target = $region28
      $region27: #{de_up_pallas.1} parent=11 // pred_region
        _
      $region28: #{de_up_pallas.1} parent=11 // pred_fallthru
        _
      // Predicated region
      $region29: #{de_up_pallas.1} parent=11 // pred_check
        %p443 = pneg %p180
      $region30: #{de_up_pallas.1} parent=11 // pred_check_branch
        %445 = sbr.rel (%p443) target = $region32
      $region31: #{de_up_pallas.1} parent=11 // pred_region
        _
      $region32: #{de_up_pallas.1} parent=11 // pred_fallthru
        _
      // Predicated region
      $region33: #{de_up_pallas.1} parent=11 // pred_check
        %p446 = pneg %p201
      $region34: #{de_up_pallas.1} parent=11 // pred_check_branch
        %448 = sbr.rel (%p446) target = $region36
      $region35: #{de_up_pallas.1} parent=11 // pred_region
        _
      $region36: #{de_up_pallas.1} parent=11 // pred_fallthru
        _
      // Predicated region
      $region37: #{de_up_pallas.1} parent=11 // pred_check
        %p449 = pneg %p222
      $region38: #{de_up_pallas.1} parent=11 // pred_check_branch
        %451 = sbr.rel (%p449) target = $region40
      $region39: #{de_up_pallas.1} parent=11 // pred_region
        _
      $region40: #{de_up_pallas.1} parent=11 // pred_fallthru
        _
      // Predicated region
      $region41: #{de_up_pallas.1} parent=11 // pred_check
        %p452 = pneg %p243
      $region42: #{de_up_pallas.1} parent=11 // pred_check_branch
        %454 = sbr.rel (%p452) target = $region44
      $region43: #{de_up_pallas.1} parent=11 // pred_region
        _
      $region44: #{de_up_pallas.1} parent=11 // pred_fallthru
        _
      // Predicated region
      $region45: #{de_up_pallas.1} parent=11 // pred_check
        %p455 = pneg %p264
      $region46: #{de_up_pallas.1} parent=11 // pred_check_branch
        %457 = sbr.rel (%p455) target = $region48
      $region47: #{de_up_pallas.1} parent=11 // pred_region
        _
      $region48: #{de_up_pallas.1} parent=11 // pred_fallthru
        _
      // Predicated region
      $region49: #{de_up_pallas.1} parent=11 // pred_check
        %p458 = pneg %p285
      $region50: #{de_up_pallas.1} parent=11 // pred_check_branch
        %460 = sbr.rel (%p458) target = $region52
      $region51: #{de_up_pallas.1} parent=11 // pred_region
        _
      $region52: #{de_up_pallas.1} parent=11 // pred_fallthru
        _
      // Predicated region
      $region53: #{de_up_pallas.1} parent=11 // pred_check
        %p461 = pneg %p306
      $region54: #{de_up_pallas.1} parent=11 // pred_check_branch
        %463 = sbr.rel (%p461) target = $region56
      $region55: #{de_up_pallas.1} parent=11 // pred_region
        _
      $region56: #{de_up_pallas.1} parent=11 // pred_fallthru
        _
      // Predicated region
      $region57: #{de_up_pallas.1} parent=11 // pred_check
        %p464 = pneg %p327
      $region58: #{de_up_pallas.1} parent=11 // pred_check_branch
        %466 = sbr.rel (%p464) target = $region60
      $region59: #{de_up_pallas.1} parent=11 // pred_region
        _
      $region60: #{de_up_pallas.1} parent=11 // pred_fallthru
        _
      // Predicated region
      $region61: #{de_up_pallas.1} parent=11 // pred_check
        %p467 = pneg %p348
      $region62: #{de_up_pallas.1} parent=11 // pred_check_branch
        %469 = sbr.rel (%p467) target = $region64
      $region63: #{de_up_pallas.1} parent=11 // pred_region
        _
      $region64: #{de_up_pallas.1} parent=11 // pred_fallthru
        _
      // Predicated region
      $region65: #{de_up_pallas.1} parent=11 // pred_check
        %p470 = pneg %p369
      $region66: #{de_up_pallas.1} parent=11 // pred_check_branch
        %472 = sbr.rel (%p470) target = $region68
      $region67: #{de_up_pallas.1} parent=11 // pred_region
        _
      $region68: #{de_up_pallas.1} parent=11 // pred_fallthru
        _
      // Predicated region
      $region69: #{de_up_pallas.1} parent=11 // pred_check
        %p473 = pneg %p390
      $region70: #{de_up_pallas.1} parent=11 // pred_check_branch
        %475 = sbr.rel (%p473) target = $region72
      $region71: #{de_up_pallas.1} parent=11 // pred_region
        _
      $region72: #{de_up_pallas.1} parent=11 // pred_fallthru
        _
    $region12: #{de_up_pallas.1} parent=5 // pred_fallthru
      _
    %p476 = scmp.lt.s32.totalorder %s23, 2
    // Predicated region
    $region73: #{de_up_pallas.1} parent=5 // pred_check
      %p477 = pneg %p476
    $region74: #{de_up_pallas.1} parent=5 // pred_check_branch
      %479 = sbr.rel (%p477) target = $region76
    $region75: #{de_up_pallas.1} parent=5 // pred_region
      // Predicated region
      $region77: #{de_up_pallas.1} parent=75 // pred_check
        %p480 = pneg %p43
      $region78: #{de_up_pallas.1} parent=75 // pred_check_branch
        %482 = sbr.rel (%p480) target = $region80
      $region79: #{de_up_pallas.1} parent=75 // pred_region
        %p483 = scmp.lt.s32.totalorder %s23, 1
        %s484 = scalar_select %p483, %s23, 1
        %s485 = smul.addr %s484, 2
        %s486 = smul.addr %s485, 4
        %s487 = scalar_lea.vmem %s0, %s486
      $region80: #{de_up_pallas.1} parent=75 // pred_fallthru
        _
      // Predicated region
      $region81: #{de_up_pallas.1} parent=75 // pred_check
        %p488 = pneg %p69
      $region82: #{de_up_pallas.1} parent=75 // pred_check_branch
        %490 = sbr.rel (%p488) target = $region84
      $region83: #{de_up_pallas.1} parent=75 // pred_region
        %p491 = scmp.lt.s32.totalorder %s23, 1
        %s492 = scalar_select %p491, %s23, 1
        %s493 = smul.addr %s492, 4
        %s494 = scalar_lea.vmem %s1, %s493
      $region84: #{de_up_pallas.1} parent=75 // pred_fallthru
        _
    $region76: #{de_up_pallas.1} parent=5 // pred_fallthru
      _
    %p495 = scmp.le.s32.totalorder 1, %s23
    %p496 = scmp.lt.s32.totalorder %s23, 3
    %p497 = pnand %p495, %p496
    %p498 = pneg %p497
    // Predicated region
    $region85: #{de_up_pallas.1} parent=5 // pred_check
      _
    $region86: #{de_up_pallas.1} parent=5 // pred_check_branch
      %500 = sbr.rel (%p497) target = $region88
    $region87: #{de_up_pallas.1} parent=5 // pred_region
      %s501 = ssub.s32 %s23, 1
      %p502 = scmp.lt.s32.totalorder %s28, 1
      %s503 = scalar_select %p502, %s28, 1
      %s504 = smul.addr %s503, 2
      %s505 = smul.addr %s504, 4
      %s506 = scalar_lea.vmem %s0, %s505
      %p507 = pneg %p49
      %p508 = pneg %p46
      %p509 = scmp.lt.s32.totalorder %s28, 1
      %s510 = scalar_select %p509, %s28, 1
      %s511 = smul.addr %s510, 4
      %s512 = scalar_lea.vmem %s1, %s511
      %p513 = pneg %p75
      %p514 = pneg %p72
      %p515 = pneg %p96
      %p516 = pneg %p93
      %p517 = pneg %p117
      %p518 = pneg %p114
      %p519 = pneg %p138
      %p520 = pneg %p135
      %p521 = pneg %p159
      %p522 = pneg %p156
      %p523 = pneg %p180
      %p524 = pneg %p177
      %p525 = pneg %p201
      %p526 = pneg %p198
      %p527 = pneg %p222
      %p528 = pneg %p219
      %p529 = pneg %p243
      %p530 = pneg %p240
      %p531 = pneg %p264
      %p532 = pneg %p261
      %p533 = pneg %p285
      %p534 = pneg %p282
      %p535 = pneg %p306
      %p536 = pneg %p303
      %p537 = pneg %p327
      %p538 = pneg %p324
      %p539 = pneg %p348
      %p540 = pneg %p345
      %p541 = pneg %p369
      %p542 = pneg %p366
      %p543 = pneg %p390
      %p544 = pneg %p387
      %p545 = pneg %p416
      %p546 = pneg %p413
      %p547 = scmp.lt.s32.totalorder %s28, 1
      %s548 = scalar_select %p547, %s28, 1
      %s549 = smul.addr %s548, 2
      %s550 = smul.addr %s549, 4
      %s551 = scalar_lea.vmem %s17, %s550
      %p552 = scmp.lt.s32.totalorder %s28, 1
      %s553 = scalar_select %p552, %s28, 1
      %s554 = smul.addr %s553, 2
      %s555 = smul.addr %s554, 4
      %s556 = scalar_lea.vmem %s0, %s555
      %p557 = scmp.lt.s32.totalorder %s28, 1
      %s558 = scalar_select %p557, %s28, 1
      %s559 = smul.addr %s558, 4
      %s560 = scalar_lea.vmem %s1, %s559
      %p561 = scmp.lt.s32.totalorder %s28, 1
      %s562 = scalar_select %p561, %s28, 1
      %s563 = smul.addr %s562, 2
      %s564 = smul.addr %s563, 4
      %s565 = scalar_lea.vmem %s17, %s564
      %566 = vst [vmem:[#allocation2] sm:$0xff] 0.0
      %567 = vst [vmem:[#allocation2 + $0x18] sm:$0xff] 0.0
      %568 = vst [vmem:[#allocation3] sm:$0xff] 0.0
      %569 = vst [vmem:[#allocation3 + $0x18] sm:$0xff] 0.0
      %v570 = vld [vmem:[%s2] sm:$0xff]
      %v571 = vld [vmem:[%s2 + $0x8] sm:$0xff]
      %v572 = vld [vmem:[%s560] sm:$0xf]
      %vm573 = vcmask 31744
      %v575 = vsel %vm573, %v570, 0
      %v578 = vsel %vm573, %v571, 0
      %vm580 = vcmask 1043456
      %v582 = vsel %vm580, %v572, 0
      %584 = vmatprep.subr.mxu0 0.0
      %v585 = vand.u32 %v582, 4294901760
      %586 = vmatpush1.msra.mxu0 %v585
      %587 = vmatprep.subr.mxu0 0.0
      %588 = vmatpush1.msra.mxu0 0.0
      %589 = vmatprep.subr.mxu0 0.0
      %590 = vmatpush1.msra.mxu0 0.0
      %591 = vmatprep.subr.mxu0 0.0
      %592 = vmatpush1.msra.mxu0 0.0
      %593 = vmatprep.subr.mxu0 0.0
      %594 = vmatpush1.msra.mxu0 0.0
      %595 = vmatprep.subr.mxu0 0.0
      %596 = vmatpush1.msra.mxu0 0.0
      %597 = vmatprep.subr.mxu0 0.0
      %598 = vmatpush1.msra.mxu0 0.0
      %599 = vmatprep.subr.mxu0 0.0
      %600 = vmatpush1.msra.mxu0 0.0
      %601 = vmatprep.subr.mxu0 0.0
      %602 = vmatpush1.msra.mxu0 0.0
      %603 = vmatprep.subr.mxu0 0.0
      %604 = vmatpush1.msra.mxu0 0.0
      %605 = vmatprep.subr.mxu0 0.0
      %606 = vmatpush1.msra.mxu0 0.0
      %607 = vmatprep.subr.mxu0 0.0
      %608 = vmatpush1.msra.mxu0 0.0
      %609 = vmatprep.subr.mxu0 0.0
      %610 = vmatpush1.msra.mxu0 0.0
      %611 = vmatprep.subr.mxu0 0.0
      %612 = vmatpush1.msra.mxu0 0.0
      %613 = vmatprep.subr.mxu0 0.0
      %614 = vmatpush1.msra.mxu0 0.0
      %615 = vmatprep.subr.mxu0 0.0
      %616 = vmatpush1.msra.mxu0 0.0
      %617 = vmatprep.subr.mxu0 0.0
      %618 = vmatpush1.msra.mxu0 0.0
      %619 = vmatprep.subr.mxu0 0.0
      %620 = vmatpush1.msra.mxu0 0.0
      %621 = vmatprep.subr.mxu0 0.0
      %622 = vmatpush1.msra.mxu0 0.0
      %623 = vmatprep.subr.mxu0 0.0
      %624 = vmatpush1.msra.mxu0 0.0
      %625 = vmatprep.subr.mxu0 0.0
      %626 = vmatpush1.msra.mxu0 0.0
      %627 = vmatprep.subr.mxu0 0.0
      %628 = vmatpush1.msra.mxu0 0.0
      %629 = vmatprep.subr.mxu0 0.0
      %630 = vmatpush1.msra.mxu0 0.0
      %631 = vmatprep.subr.mxu0 0.0
      %632 = vmatpush1.msra.mxu0 0.0
      %633 = vmatprep.subr.mxu0 0.0
      %634 = vmatpush1.msra.mxu0 0.0
      %635 = vmatprep.subr.mxu0 0.0
      %636 = vmatpush1.msra.mxu0 0.0
      %637 = vmatprep.subr.mxu0 0.0
      %638 = vmatpush1.msra.mxu0 0.0
      %639 = vmatprep.subr.mxu0 0.0
      %640 = vmatpush1.msra.mxu0 0.0
      %641 = vmatprep.subr.mxu0 0.0
      %642 = vmatpush1.msra.mxu0 0.0
      %643 = vmatprep.subr.mxu0 0.0
      %644 = vmatpush1.msra.mxu0 0.0
      %645 = vmatprep.subr.mxu0 0.0
      %646 = vmatpush1.msra.mxu0 0.0
      %647 = vmatprep.subr.mxu0 0.0
      %648 = vmatpush1.msra.mxu0 0.0
      %649 = vmatprep.mubr.f32.mxu0 0.0
      %v650 = vand.u32 %v575, 4294901760
      %v651 = vsub.f32 %v575, %v650
      %v652 = vand.u32 %v651, 4294901760
      %v653 = vsub.f32 %v651, %v652
      %v654 = vand.u32 %v653, 4294901760
      %655 = vmatmul.mubr.f32.gmra.mrb[0].mxu0 %v654
      %v656 = vpop.f32.mrb[0].mxu0
      %v657 = vadd.f32 0.0, %v656
      %v658 = vpop.f32.mrb[0].mxu0
      %659 = vmatprep.mubr.f32.mxu0 0.0
      %v660 = vand.u32 %v578, 4294901760
      %v661 = vsub.f32 %v578, %v660
      %v662 = vand.u32 %v661, 4294901760
      %v663 = vsub.f32 %v661, %v662
      %v664 = vand.u32 %v663, 4294901760
      %665 = vmatmul.mubr.f32.gmra.mrb[0].mxu0 %v664
      %v666 = vpop.f32.mrb[0].mxu0
      %v667 = vadd.f32 0.0, %v666
      %v668 = vpop.f32.mrb[0].mxu0
      %669 = vdwg.mxu0
      %670 = vmatprep.subr.mxu0 0.0
      %v671 = vand.u32 %v582, 4294901760
      %v672 = vsub.f32 %v582, %v671
      %v673 = vand.u32 %v672, 4294901760
      %v674 = vsub.f32 %v672, %v673
      %v675 = vand.u32 %v674, 4294901760
      %676 = vmatpush1.msra.mxu0 %v675
      %677 = vmatprep.subr.mxu0 0.0
      %678 = vmatpush1.msra.mxu0 0.0
      %679 = vmatprep.subr.mxu0 0.0
      %680 = vmatpush1.msra.mxu0 0.0
      %681 = vmatprep.subr.mxu0 0.0
      %682 = vmatpush1.msra.mxu0 0.0
      %683 = vmatprep.subr.mxu0 0.0
      %684 = vmatpush1.msra.mxu0 0.0
      %685 = vmatprep.subr.mxu0 0.0
      %686 = vmatpush1.msra.mxu0 0.0
      %687 = vmatprep.subr.mxu0 0.0
      %688 = vmatpush1.msra.mxu0 0.0
      %689 = vmatprep.subr.mxu0 0.0
      %690 = vmatpush1.msra.mxu0 0.0
      %691 = vmatprep.subr.mxu0 0.0
      %692 = vmatpush1.msra.mxu0 0.0
      %693 = vmatprep.subr.mxu0 0.0
      %694 = vmatpush1.msra.mxu0 0.0
      %695 = vmatprep.subr.mxu0 0.0
      %696 = vmatpush1.msra.mxu0 0.0
      %697 = vmatprep.subr.mxu0 0.0
      %698 = vmatpush1.msra.mxu0 0.0
      %699 = vmatprep.subr.mxu0 0.0
      %700 = vmatpush1.msra.mxu0 0.0
      %701 = vmatprep.subr.mxu0 0.0
      %702 = vmatpush1.msra.mxu0 0.0
      %703 = vmatprep.subr.mxu0 0.0
      %704 = vmatpush1.msra.mxu0 0.0
      %705 = vmatprep.subr.mxu0 0.0
      %706 = vmatpush1.msra.mxu0 0.0
      %707 = vmatprep.subr.mxu0 0.0
      %708 = vmatpush1.msra.mxu0 0.0
      %709 = vmatprep.subr.mxu0 0.0
      %710 = vmatpush1.msra.mxu0 0.0
      %711 = vmatprep.subr.mxu0 0.0
      %712 = vmatpush1.msra.mxu0 0.0
      %713 = vmatprep.subr.mxu0 0.0
      %714 = vmatpush1.msra.mxu0 0.0
      %715 = vmatprep.subr.mxu0 0.0
      %716 = vmatpush1.msra.mxu0 0.0
      %717 = vmatprep.subr.mxu0 0.0
      %718 = vmatpush1.msra.mxu0 0.0
      %719 = vmatprep.subr.mxu0 0.0
      %720 = vmatpush1.msra.mxu0 0.0
      %721 = vmatprep.subr.mxu0 0.0
      %722 = vmatpush1.msra.mxu0 0.0
      %723 = vmatprep.subr.mxu0 0.0
      %724 = vmatpush1.msra.mxu0 0.0
      %725 = vmatprep.subr.mxu0 0.0
      %726 = vmatpush1.msra.mxu0 0.0
      %727 = vmatprep.subr.mxu0 0.0
      %728 = vmatpush1.msra.mxu0 0.0
      %729 = vmatprep.subr.mxu0 0.0
      %730 = vmatpush1.msra.mxu0 0.0
      %731 = vmatprep.subr.mxu0 0.0
      %732 = vmatpush1.msra.mxu0 0.0
      %733 = vmatprep.subr.mxu0 0.0
      %734 = vmatpush1.msra.mxu0 0.0
      %735 = vmatprep.subr.mxu0 0.0
      %736 = vmatpush1.msra.mxu0 0.0
      %737 = vmatprep.subr.mxu0 0.0
      %738 = vmatpush1.msra.mxu0 0.0
      %739 = vmatprep.mubr.f32.mxu0 0.0
      %v740 = vand.u32 %v575, 4294901760
      %741 = vmatmul.mubr.f32.gmra.mrb[0].mxu0 %v740
      %v742 = vpop.f32.mrb[0].mxu0
      %v743 = vadd.f32 %v657, %v742
      %v744 = vpop.f32.mrb[0].mxu0
      %745 = vmatprep.mubr.f32.mxu0 0.0
      %v746 = vand.u32 %v578, 4294901760
      %747 = vmatmul.mubr.f32.gmra.mrb[0].mxu0 %v746
      %v748 = vpop.f32.mrb[0].mxu0
      %v749 = vadd.f32 %v667, %v748
      %v750 = vpop.f32.mrb[0].mxu0
      %751 = vdwg.mxu0
      %752 = vmatprep.subr.mxu0 0.0
      %v753 = vand.u32 %v582, 4294901760
      %v754 = vsub.f32 %v582, %v753
      %755 = vmatpush1.msra.mxu0 %v754
      %756 = vmatprep.subr.mxu0 0.0
      %757 = vmatpush1.msra.mxu0 0.0
      %758 = vmatprep.subr.mxu0 0.0
      %759 = vmatpush1.msra.mxu0 0.0
      %760 = vmatprep.subr.mxu0 0.0
      %761 = vmatpush1.msra.mxu0 0.0
      %762 = vmatprep.subr.mxu0 0.0
      %763 = vmatpush1.msra.mxu0 0.0
      %764 = vmatprep.subr.mxu0 0.0
      %765 = vmatpush1.msra.mxu0 0.0
      %766 = vmatprep.subr.mxu0 0.0
      %767 = vmatpush1.msra.mxu0 0.0
      %768 = vmatprep.subr.mxu0 0.0
      %769 = vmatpush1.msra.mxu0 0.0
      %770 = vmatprep.subr.mxu0 0.0
      %771 = vmatpush1.msra.mxu0 0.0
      %772 = vmatprep.subr.mxu0 0.0
      %773 = vmatpush1.msra.mxu0 0.0
      %774 = vmatprep.subr.mxu0 0.0
      %775 = vmatpush1.msra.mxu0 0.0
      %776 = vmatprep.subr.mxu0 0.0
      %777 = vmatpush1.msra.mxu0 0.0
      %778 = vmatprep.subr.mxu0 0.0
      %779 = vmatpush1.msra.mxu0 0.0
      %780 = vmatprep.subr.mxu0 0.0
      %781 = vmatpush1.msra.mxu0 0.0
      %782 = vmatprep.subr.mxu0 0.0
      %783 = vmatpush1.msra.mxu0 0.0
      %784 = vmatprep.subr.mxu0 0.0
      %785 = vmatpush1.msra.mxu0 0.0
      %786 = vmatprep.subr.mxu0 0.0
      %787 = vmatpush1.msra.mxu0 0.0
      %788 = vmatprep.subr.mxu0 0.0
      %789 = vmatpush1.msra.mxu0 0.0
      %790 = vmatprep.subr.mxu0 0.0
      %791 = vmatpush1.msra.mxu0 0.0
      %792 = vmatprep.subr.mxu0 0.0
      %793 = vmatpush1.msra.mxu0 0.0
      %794 = vmatprep.subr.mxu0 0.0
      %795 = vmatpush1.msra.mxu0 0.0
      %796 = vmatprep.subr.mxu0 0.0
      %797 = vmatpush1.msra.mxu0 0.0
      %798 = vmatprep.subr.mxu0 0.0
      %799 = vmatpush1.msra.mxu0 0.0
      %800 = vmatprep.subr.mxu0 0.0
      %801 = vmatpush1.msra.mxu0 0.0
      %802 = vmatprep.subr.mxu0 0.0
      %803 = vmatpush1.msra.mxu0 0.0
      %804 = vmatprep.subr.mxu0 0.0
      %805 = vmatpush1.msra.mxu0 0.0
      %806 = vmatprep.subr.mxu0 0.0
      %807 = vmatpush1.msra.mxu0 0.0
      %808 = vmatprep.subr.mxu0 0.0
      %809 = vmatpush1.msra.mxu0 0.0
      %810 = vmatprep.subr.mxu0 0.0
      %811 = vmatpush1.msra.mxu0 0.0
      %812 = vmatprep.subr.mxu0 0.0
      %813 = vmatpush1.msra.mxu0 0.0
      %814 = vmatprep.subr.mxu0 0.0
      %815 = vmatpush1.msra.mxu0 0.0
      %816 = vmatprep.subr.mxu0 0.0
      %817 = vmatpush1.msra.mxu0 0.0
      %818 = vmatprep.mubr.f32.mxu0 0.0
      %v819 = vand.u32 %v575, 4294901760
      %v820 = vsub.f32 %v575, %v819
      %821 = vmatmul.mubr.f32.gmra.mrb[0].mxu0 %v820
      %v822 = vpop.f32.mrb[0].mxu0
      %v823 = vadd.f32 %v743, %v822
      %v824 = vpop.f32.mrb[0].mxu0
      %825 = vmatprep.mubr.f32.mxu0 0.0
      %v826 = vand.u32 %v578, 4294901760
      %v827 = vsub.f32 %v578, %v826
      %828 = vmatmul.mubr.f32.gmra.mrb[0].mxu0 %v827
      %v829 = vpop.f32.mrb[0].mxu0
      %v830 = vadd.f32 %v749, %v829
      %v831 = vpop.f32.mrb[0].mxu0
      %832 = vdwg.mxu0
      %833 = vmatprep.subr.mxu0 0.0
      %v834 = vand.u32 %v582, 4294901760
      %835 = vmatpush1.msra.mxu0 %v834
      %836 = vmatprep.subr.mxu0 0.0
      %837 = vmatpush1.msra.mxu0 0.0
      %838 = vmatprep.subr.mxu0 0.0
      %839 = vmatpush1.msra.mxu0 0.0
      %840 = vmatprep.subr.mxu0 0.0
      %841 = vmatpush1.msra.mxu0 0.0
      %842 = vmatprep.subr.mxu0 0.0
      %843 = vmatpush1.msra.mxu0 0.0
      %844 = vmatprep.subr.mxu0 0.0
      %845 = vmatpush1.msra.mxu0 0.0
      %846 = vmatprep.subr.mxu0 0.0
      %847 = vmatpush1.msra.mxu0 0.0
      %848 = vmatprep.subr.mxu0 0.0
      %849 = vmatpush1.msra.mxu0 0.0
      %850 = vmatprep.subr.mxu0 0.0
      %851 = vmatpush1.msra.mxu0 0.0
      %852 = vmatprep.subr.mxu0 0.0
      %853 = vmatpush1.msra.mxu0 0.0
      %854 = vmatprep.subr.mxu0 0.0
      %855 = vmatpush1.msra.mxu0 0.0
      %856 = vmatprep.subr.mxu0 0.0
      %857 = vmatpush1.msra.mxu0 0.0
      %858 = vmatprep.subr.mxu0 0.0
      %859 = vmatpush1.msra.mxu0 0.0
      %860 = vmatprep.subr.mxu0 0.0
      %861 = vmatpush1.msra.mxu0 0.0
      %862 = vmatprep.subr.mxu0 0.0
      %863 = vmatpush1.msra.mxu0 0.0
      %864 = vmatprep.subr.mxu0 0.0
      %865 = vmatpush1.msra.mxu0 0.0
      %866 = vmatprep.subr.mxu0 0.0
      %867 = vmatpush1.msra.mxu0 0.0
      %868 = vmatprep.subr.mxu0 0.0
      %869 = vmatpush1.msra.mxu0 0.0
      %870 = vmatprep.subr.mxu0 0.0
      %871 = vmatpush1.msra.mxu0 0.0
      %872 = vmatprep.subr.mxu0 0.0
      %873 = vmatpush1.msra.mxu0 0.0
      %874 = vmatprep.subr.mxu0 0.0
      %875 = vmatpush1.msra.mxu0 0.0
      %876 = vmatprep.subr.mxu0 0.0
      %877 = vmatpush1.msra.mxu0 0.0
      %878 = vmatprep.subr.mxu0 0.0
      %879 = vmatpush1.msra.mxu0 0.0
      %880 = vmatprep.subr.mxu0 0.0
      %881 = vmatpush1.msra.mxu0 0.0
      %882 = vmatprep.subr.mxu0 0.0
      %883 = vmatpush1.msra.mxu0 0.0
      %884 = vmatprep.subr.mxu0 0.0
      %885 = vmatpush1.msra.mxu0 0.0
      %886 = vmatprep.subr.mxu0 0.0
      %887 = vmatpush1.msra.mxu0 0.0
      %888 = vmatprep.subr.mxu0 0.0
      %889 = vmatpush1.msra.mxu0 0.0
      %890 = vmatprep.subr.mxu0 0.0
      %891 = vmatpush1.msra.mxu0 0.0
      %892 = vmatprep.subr.mxu0 0.0
      %893 = vmatpush1.msra.mxu0 0.0
      %894 = vmatprep.subr.mxu0 0.0
      %895 = vmatpush1.msra.mxu0 0.0
      %896 = vmatprep.subr.mxu0 0.0
      %897 = vmatpush1.msra.mxu0 0.0
      %898 = vmatprep.mubr.f32.mxu0 0.0
      %v899 = vand.u32 %v575, 4294901760
      %v900 = vsub.f32 %v575, %v899
      %v901 = vand.u32 %v900, 4294901760
      %902 = vmatmul.mubr.f32.gmra.mrb[0].mxu0 %v901
      %v903 = vpop.f32.mrb[0].mxu0
      %v904 = vadd.f32 %v823, %v903
      %v905 = vpop.f32.mrb[0].mxu0
      %906 = vmatprep.mubr.f32.mxu0 0.0
      %v907 = vand.u32 %v578, 4294901760
      %v908 = vsub.f32 %v578, %v907
      %v909 = vand.u32 %v908, 4294901760
      %910 = vmatmul.mubr.f32.gmra.mrb[0].mxu0 %v909
      %v911 = vpop.f32.mrb[0].mxu0
      %v912 = vadd.f32 %v830, %v911
      %v913 = vpop.f32.mrb[0].mxu0
      %914 = vdwg.mxu0
      %915 = vmatprep.subr.mxu0 0.0
      %v916 = vand.u32 %v582, 4294901760
      %v917 = vsub.f32 %v582, %v916
      %v918 = vand.u32 %v917, 4294901760
      %919 = vmatpush1.msra.mxu0 %v918
      %920 = vmatprep.subr.mxu0 0.0
      %921 = vmatpush1.msra.mxu0 0.0
      %922 = vmatprep.subr.mxu0 0.0
      %923 = vmatpush1.msra.mxu0 0.0
      %924 = vmatprep.subr.mxu0 0.0
      %925 = vmatpush1.msra.mxu0 0.0
      %926 = vmatprep.subr.mxu0 0.0
      %927 = vmatpush1.msra.mxu0 0.0
      %928 = vmatprep.subr.mxu0 0.0
      %929 = vmatpush1.msra.mxu0 0.0
      %930 = vmatprep.subr.mxu0 0.0
      %931 = vmatpush1.msra.mxu0 0.0
      %932 = vmatprep.subr.mxu0 0.0
      %933 = vmatpush1.msra.mxu0 0.0
      %934 = vmatprep.subr.mxu0 0.0
      %935 = vmatpush1.msra.mxu0 0.0
      %936 = vmatprep.subr.mxu0 0.0
      %937 = vmatpush1.msra.mxu0 0.0
      %938 = vmatprep.subr.mxu0 0.0
      %939 = vmatpush1.msra.mxu0 0.0
      %940 = vmatprep.subr.mxu0 0.0
      %941 = vmatpush1.msra.mxu0 0.0
      %942 = vmatprep.subr.mxu0 0.0
      %943 = vmatpush1.msra.mxu0 0.0
      %944 = vmatprep.subr.mxu0 0.0
      %945 = vmatpush1.msra.mxu0 0.0
      %946 = vmatprep.subr.mxu0 0.0
      %947 = vmatpush1.msra.mxu0 0.0
      %948 = vmatprep.subr.mxu0 0.0
      %949 = vmatpush1.msra.mxu0 0.0
      %950 = vmatprep.subr.mxu0 0.0
      %951 = vmatpush1.msra.mxu0 0.0
      %952 = vmatprep.subr.mxu0 0.0
      %953 = vmatpush1.msra.mxu0 0.0
      %954 = vmatprep.subr.mxu0 0.0
      %955 = vmatpush1.msra.mxu0 0.0
      %956 = vmatprep.subr.mxu0 0.0
      %957 = vmatpush1.msra.mxu0 0.0
      %958 = vmatprep.subr.mxu0 0.0
      %959 = vmatpush1.msra.mxu0 0.0
      %960 = vmatprep.subr.mxu0 0.0
      %961 = vmatpush1.msra.mxu0 0.0
      %962 = vmatprep.subr.mxu0 0.0
      %963 = vmatpush1.msra.mxu0 0.0
      %964 = vmatprep.subr.mxu0 0.0
      %965 = vmatpush1.msra.mxu0 0.0
      %966 = vmatprep.subr.mxu0 0.0
      %967 = vmatpush1.msra.mxu0 0.0
      %968 = vmatprep.subr.mxu0 0.0
      %969 = vmatpush1.msra.mxu0 0.0
      %970 = vmatprep.subr.mxu0 0.0
      %971 = vmatpush1.msra.mxu0 0.0
      %972 = vmatprep.subr.mxu0 0.0
      %973 = vmatpush1.msra.mxu0 0.0
      %974 = vmatprep.subr.mxu0 0.0
      %975 = vmatpush1.msra.mxu0 0.0
      %976 = vmatprep.subr.mxu0 0.0
      %977 = vmatpush1.msra.mxu0 0.0
      %978 = vmatprep.subr.mxu0 0.0
      %979 = vmatpush1.msra.mxu0 0.0
      %980 = vmatprep.subr.mxu0 0.0
      %981 = vmatpush1.msra.mxu0 0.0
      %982 = vmatprep.mubr.f32.mxu0 0.0
      %v983 = vand.u32 %v575, 4294901760
      %984 = vmatmul.mubr.f32.gmra.mrb[0].mxu0 %v983
      %v985 = vpop.f32.mrb[0].mxu0
      %v986 = vadd.f32 %v904, %v985
      %v987 = vpop.f32.mrb[0].mxu0
      %988 = vmatprep.mubr.f32.mxu0 0.0
      %v989 = vand.u32 %v578, 4294901760
      %990 = vmatmul.mubr.f32.gmra.mrb[0].mxu0 %v989
      %v991 = vpop.f32.mrb[0].mxu0
      %v992 = vadd.f32 %v912, %v991
      %v993 = vpop.f32.mrb[0].mxu0
      %994 = vdwg.mxu0
      %995 = vmatprep.subr.mxu0 0.0
      %v996 = vand.u32 %v582, 4294901760
      %997 = vmatpush1.msra.mxu0 %v996
      %998 = vmatprep.subr.mxu0 0.0
      %999 = vmatpush1.msra.mxu0 0.0
      %1000 = vmatprep.subr.mxu0 0.0
      %1001 = vmatpush1.msra.mxu0 0.0
      %1002 = vmatprep.subr.mxu0 0.0
      %1003 = vmatpush1.msra.mxu0 0.0
      %1004 = vmatprep.subr.mxu0 0.0
      %1005 = vmatpush1.msra.mxu0 0.0
      %1006 = vmatprep.subr.mxu0 0.0
      %1007 = vmatpush1.msra.mxu0 0.0
      %1008 = vmatprep.subr.mxu0 0.0
      %1009 = vmatpush1.msra.mxu0 0.0
      %1010 = vmatprep.subr.mxu0 0.0
      %1011 = vmatpush1.msra.mxu0 0.0
      %1012 = vmatprep.subr.mxu0 0.0
      %1013 = vmatpush1.msra.mxu0 0.0
      %1014 = vmatprep.subr.mxu0 0.0
      %1015 = vmatpush1.msra.mxu0 0.0
      %1016 = vmatprep.subr.mxu0 0.0
      %1017 = vmatpush1.msra.mxu0 0.0
      %1018 = vmatprep.subr.mxu0 0.0
      %1019 = vmatpush1.msra.mxu0 0.0
      %1020 = vmatprep.subr.mxu0 0.0
      %1021 = vmatpush1.msra.mxu0 0.0
      %1022 = vmatprep.subr.mxu0 0.0
      %1023 = vmatpush1.msra.mxu0 0.0
      %1024 = vmatprep.subr.mxu0 0.0
      %1025 = vmatpush1.msra.mxu0 0.0
      %1026 = vmatprep.subr.mxu0 0.0
      %1027 = vmatpush1.msra.mxu0 0.0
      %1028 = vmatprep.subr.mxu0 0.0
      %1029 = vmatpush1.msra.mxu0 0.0
      %1030 = vmatprep.subr.mxu0 0.0
      %1031 = vmatpush1.msra.mxu0 0.0
      %1032 = vmatprep.subr.mxu0 0.0
      %1033 = vmatpush1.msra.mxu0 0.0
      %1034 = vmatprep.subr.mxu0 0.0
      %1035 = vmatpush1.msra.mxu0 0.0
      %1036 = vmatprep.subr.mxu0 0.0
      %1037 = vmatpush1.msra.mxu0 0.0
      %1038 = vmatprep.subr.mxu0 0.0
      %1039 = vmatpush1.msra.mxu0 0.0
      %1040 = vmatprep.subr.mxu0 0.0
      %1041 = vmatpush1.msra.mxu0 0.0
      %1042 = vmatprep.subr.mxu0 0.0
      %1043 = vmatpush1.msra.mxu0 0.0
      %1044 = vmatprep.subr.mxu0 0.0
      %1045 = vmatpush1.msra.mxu0 0.0
      %1046 = vmatprep.subr.mxu0 0.0
      %1047 = vmatpush1.msra.mxu0 0.0
      %1048 = vmatprep.subr.mxu0 0.0
      %1049 = vmatpush1.msra.mxu0 0.0
      %1050 = vmatprep.subr.mxu0 0.0
      %1051 = vmatpush1.msra.mxu0 0.0
      %1052 = vmatprep.subr.mxu0 0.0
      %1053 = vmatpush1.msra.mxu0 0.0
      %1054 = vmatprep.subr.mxu0 0.0
      %1055 = vmatpush1.msra.mxu0 0.0
      %1056 = vmatprep.subr.mxu0 0.0
      %1057 = vmatpush1.msra.mxu0 0.0
      %1058 = vmatprep.subr.mxu0 0.0
      %1059 = vmatpush1.msra.mxu0 0.0
      %1060 = vmatprep.mubr.f32.mxu0 0.0
      %v1061 = vand.u32 %v575, 4294901760
      %1062 = vmatmul.mubr.f32.gmra.mrb[0].mxu0 %v1061
      %v1063 = vpop.f32.mrb[0].mxu0
      %v1064 = vadd.f32 %v986, %v1063
      %v1065 = vpop.f32.mrb[0].mxu0
      %1066 = vmatprep.mubr.f32.mxu0 0.0
      %v1067 = vand.u32 %v578, 4294901760
      %1068 = vmatmul.mubr.f32.gmra.mrb[0].mxu0 %v1067
      %v1069 = vpop.f32.mrb[0].mxu0
      %v1070 = vadd.f32 %v992, %v1069
      %v1071 = vpop.f32.mrb[0].mxu0
      %1072 = vdwg.mxu0
      %v1073 = vld [vmem:[%s3] sm:$0xff]
      %v1074 = vld [vmem:[%s3 + $0x8] sm:$0xff]
      %v1075 = vld [vmem:[%s3 + $0x10] sm:$0xff]
      %v1076 = vld [vmem:[%s3 + $0x18] sm:$0xff]
      %v1077 = vld [vmem:[%s3 + $0x20] sm:$0xff]
      %v1078 = vld [vmem:[%s3 + $0x28] sm:$0xff]
      %v1079 = vld [vmem:[%s3 + $0x30] sm:$0xff]
      %v1080 = vld [vmem:[%s3 + $0x38] sm:$0xff]
      %v1081 = vld [vmem:[%s3 + $0x40] sm:$0xff]
      %v1082 = vld [vmem:[%s3 + $0x48] sm:$0xff]
      %v1083 = vld [vmem:[%s3 + $0x50] sm:$0xff]
      %v1084 = vld [vmem:[%s3 + $0x58] sm:$0xff]
      %v1085 = vld [vmem:[%s3 + $0x60] sm:$0xff]
      %v1086 = vld [vmem:[%s3 + $0x68] sm:$0xff]
      %v1087 = vld [vmem:[%s3 + $0x70] sm:$0xff]
      %v1088 = vld [vmem:[%s3 + $0x78] sm:$0xff]
      %s1089 = scalar_lea.vmem %s3, 128
      %v1090 = vld [vmem:[%s1089] sm:$0xff]
      %v1091 = vld [vmem:[%s1089 + $0x8] sm:$0xff]
      %v1092 = vld [vmem:[%s1089 + $0x10] sm:$0xff]
      %v1093 = vld [vmem:[%s1089 + $0x18] sm:$0xff]
      %v1094 = vld [vmem:[%s1089 + $0x20] sm:$0xff]
      %v1095 = vld [vmem:[%s1089 + $0x28] sm:$0xff]
      %v1096 = vld [vmem:[%s1089 + $0x30] sm:$0xff]
      %v1097 = vld [vmem:[%s1089 + $0x38] sm:$0xff]
      %v1098 = vld [vmem:[%s1089 + $0x40] sm:$0xff]
      %v1099 = vld [vmem:[%s1089 + $0x48] sm:$0xff]
      %v1100 = vld [vmem:[%s1089 + $0x50] sm:$0xff]
      %v1101 = vld [vmem:[%s1089 + $0x58] sm:$0xff]
      %v1102 = vld [vmem:[%s1089 + $0x60] sm:$0xff]
      %v1103 = vld [vmem:[%s1089 + $0x68] sm:$0xff]
      %v1104 = vld [vmem:[%s1089 + $0x70] sm:$0xff]
      %v1105 = vld [vmem:[%s1089 + $0x78] sm:$0xff]
      %v1107 = vrot.slane %v1064, 4
      %vm1108 = vcmask 523264
      %v1109 = vsel %vm1108, %v1107, 0
      %v1111 = vand.u32 %v1091, 4294901760
      %1112 = vmatprep.subr.mxu0 %v1111
      %v1113 = vand.u32 %v1090, 4294901760
      %1114 = vmatpush1.msra.mxu0 %v1113
      %v1115 = vand.u32 %v1093, 4294901760
      %1116 = vmatprep.subr.mxu0 %v1115
      %v1117 = vand.u32 %v1092, 4294901760
      %1118 = vmatpush1.msra.mxu0 %v1117
      %v1119 = vand.u32 %v1095, 4294901760
      %1120 = vmatprep.subr.mxu0 %v1119
      %v1121 = vand.u32 %v1094, 4294901760
      %1122 = vmatpush1.msra.mxu0 %v1121
      %v1123 = vand.u32 %v1097, 4294901760
      %1124 = vmatprep.subr.mxu0 %v1123
      %v1125 = vand.u32 %v1096, 4294901760
      %1126 = vmatpush1.msra.mxu0 %v1125
      %v1127 = vand.u32 %v1099, 4294901760
      %1128 = vmatprep.subr.mxu0 %v1127
      %v1129 = vand.u32 %v1098, 4294901760
      %1130 = vmatpush1.msra.mxu0 %v1129
      %v1131 = vand.u32 %v1101, 4294901760
      %1132 = vmatprep.subr.mxu0 %v1131
      %v1133 = vand.u32 %v1100, 4294901760
      %1134 = vmatpush1.msra.mxu0 %v1133
      %v1135 = vand.u32 %v1103, 4294901760
      %1136 = vmatprep.subr.mxu0 %v1135
      %v1137 = vand.u32 %v1102, 4294901760
      %1138 = vmatpush1.msra.mxu0 %v1137
      %v1139 = vand.u32 %v1105, 4294901760
      %1140 = vmatprep.subr.mxu0 %v1139
      %v1141 = vand.u32 %v1104, 4294901760
      %1142 = vmatpush1.msra.mxu0 %v1141
      %1143 = vmatprep.subr.mxu0 0.0
      %1144 = vmatpush1.msra.mxu0 0.0
      %1145 = vmatprep.subr.mxu0 0.0
      %1146 = vmatpush1.msra.mxu0 0.0
      %1147 = vmatprep.subr.mxu0 0.0
      %1148 = vmatpush1.msra.mxu0 0.0
      %1149 = vmatprep.subr.mxu0 0.0
      %1150 = vmatpush1.msra.mxu0 0.0
      %1151 = vmatprep.subr.mxu0 0.0
      %1152 = vmatpush1.msra.mxu0 0.0
      %1153 = vmatprep.subr.mxu0 0.0
      %1154 = vmatpush1.msra.mxu0 0.0
      %1155 = vmatprep.subr.mxu0 0.0
      %1156 = vmatpush1.msra.mxu0 0.0
      %1157 = vmatprep.subr.mxu0 0.0
      %1158 = vmatpush1.msra.mxu0 0.0
      %1159 = vmatprep.subr.mxu0 0.0
      %1160 = vmatpush1.msra.mxu0 0.0
      %1161 = vmatprep.subr.mxu0 0.0
      %1162 = vmatpush1.msra.mxu0 0.0
      %1163 = vmatprep.subr.mxu0 0.0
      %1164 = vmatpush1.msra.mxu0 0.0
      %1165 = vmatprep.subr.mxu0 0.0
      %1166 = vmatpush1.msra.mxu0 0.0
      %1167 = vmatprep.subr.mxu0 0.0
      %1168 = vmatpush1.msra.mxu0 0.0
      %1169 = vmatprep.subr.mxu0 0.0
      %1170 = vmatpush1.msra.mxu0 0.0
      %1171 = vmatprep.subr.mxu0 0.0
      %1172 = vmatpush1.msra.mxu0 0.0
      %1173 = vmatprep.subr.mxu0 0.0
      %1174 = vmatpush1.msra.mxu0 0.0
      %1175 = vmatprep.subr.mxu0 0.0
      %1176 = vmatpush1.msra.mxu0 0.0
      %1177 = vmatprep.subr.mxu0 0.0
      %1178 = vmatpush1.msra.mxu0 0.0
      %1179 = vmatprep.subr.mxu0 0.0
      %1180 = vmatpush1.msra.mxu0 0.0
      %1181 = vmatprep.subr.mxu0 0.0
      %1182 = vmatpush1.msra.mxu0 0.0
      %1183 = vmatprep.subr.mxu0 0.0
      %1184 = vmatpush1.msra.mxu0 0.0
      %1185 = vmatprep.subr.mxu0 0.0
      %1186 = vmatpush1.msra.mxu0 0.0
      %1187 = vmatprep.subr.mxu0 0.0
      %1188 = vmatpush1.msra.mxu0 0.0
      %1189 = vmatprep.subr.mxu0 0.0
      %1190 = vmatpush1.msra.mxu0 0.0
      %1191 = vmatprep.mubr.f32.mxu0 0.0
      %v1192 = vand.u32 %v1109, 4294901760
      %v1193 = vsub.f32 %v1109, %v1192
      %v1194 = vand.u32 %v1193, 4294901760
      %v1195 = vsub.f32 %v1193, %v1194
      %v1196 = vand.u32 %v1195, 4294901760
      %1197 = vmatmul.mubr.f32.gmra.mrb[0].mxu0 %v1196
      %v1198 = vpop.f32.mrb[0].mxu0
      %v1199 = vadd.f32 0.0, %v1198
      %v1200 = vpop.f32.mrb[0].mxu0
      %v1201 = vadd.f32 0.0, %v1200
      %1202 = vdwg.mxu0
      %v1203 = vand.u32 %v1091, 4294901760
      %v1204 = vsub.f32 %v1091, %v1203
      %v1205 = vand.u32 %v1204, 4294901760
      %v1206 = vsub.f32 %v1204, %v1205
      %v1207 = vand.u32 %v1206, 4294901760
      %1208 = vmatprep.subr.mxu0 %v1207
      %v1209 = vand.u32 %v1090, 4294901760
      %v1210 = vsub.f32 %v1090, %v1209
      %v1211 = vand.u32 %v1210, 4294901760
      %v1212 = vsub.f32 %v1210, %v1211
      %v1213 = vand.u32 %v1212, 4294901760
      %1214 = vmatpush1.msra.mxu0 %v1213
      %v1215 = vand.u32 %v1093, 4294901760
      %v1216 = vsub.f32 %v1093, %v1215
      %v1217 = vand.u32 %v1216, 4294901760
      %v1218 = vsub.f32 %v1216, %v1217
      %v1219 = vand.u32 %v1218, 4294901760
      %1220 = vmatprep.subr.mxu0 %v1219
      %v1221 = vand.u32 %v1092, 4294901760
      %v1222 = vsub.f32 %v1092, %v1221
      %v1223 = vand.u32 %v1222, 4294901760
      %v1224 = vsub.f32 %v1222, %v1223
      %v1225 = vand.u32 %v1224, 4294901760
      %1226 = vmatpush1.msra.mxu0 %v1225
      %v1227 = vand.u32 %v1095, 4294901760
      %v1228 = vsub.f32 %v1095, %v1227
      %v1229 = vand.u32 %v1228, 4294901760
      %v1230 = vsub.f32 %v1228, %v1229
      %v1231 = vand.u32 %v1230, 4294901760
      %1232 = vmatprep.subr.mxu0 %v1231
      %v1233 = vand.u32 %v1094, 4294901760
      %v1234 = vsub.f32 %v1094, %v1233
      %v1235 = vand.u32 %v1234, 4294901760
      %v1236 = vsub.f32 %v1234, %v1235
      %v1237 = vand.u32 %v1236, 4294901760
      %1238 = vmatpush1.msra.mxu0 %v1237
      %v1239 = vand.u32 %v1097, 4294901760
      %v1240 = vsub.f32 %v1097, %v1239
      %v1241 = vand.u32 %v1240, 4294901760
      %v1242 = vsub.f32 %v1240, %v1241
      %v1243 = vand.u32 %v1242, 4294901760
      %1244 = vmatprep.subr.mxu0 %v1243
      %v1245 = vand.u32 %v1096, 4294901760
      %v1246 = vsub.f32 %v1096, %v1245
      %v1247 = vand.u32 %v1246, 4294901760
      %v1248 = vsub.f32 %v1246, %v1247
      %v1249 = vand.u32 %v1248, 4294901760
      %1250 = vmatpush1.msra.mxu0 %v1249
      %v1251 = vand.u32 %v1099, 4294901760
      %v1252 = vsub.f32 %v1099, %v1251
      %v1253 = vand.u32 %v1252, 4294901760
      %v1254 = vsub.f32 %v1252, %v1253
      %v1255 = vand.u32 %v1254, 4294901760
      %1256 = vmatprep.subr.mxu0 %v1255
      %v1257 = vand.u32 %v1098, 4294901760
      %v1258 = vsub.f32 %v1098, %v1257
      %v1259 = vand.u32 %v1258, 4294901760
      %v1260 = vsub.f32 %v1258, %v1259
      %v1261 = vand.u32 %v1260, 4294901760
      %1262 = vmatpush1.msra.mxu0 %v1261
      %v1263 = vand.u32 %v1101, 4294901760
      %v1264 = vsub.f32 %v1101, %v1263
      %v1265 = vand.u32 %v1264, 4294901760
      %v1266 = vsub.f32 %v1264, %v1265
      %v1267 = vand.u32 %v1266, 4294901760
      %1268 = vmatprep.subr.mxu0 %v1267
      %v1269 = vand.u32 %v1100, 4294901760
      %v1270 = vsub.f32 %v1100, %v1269
      %v1271 = vand.u32 %v1270, 4294901760
      %v1272 = vsub.f32 %v1270, %v1271
      %v1273 = vand.u32 %v1272, 4294901760
      %1274 = vmatpush1.msra.mxu0 %v1273
      %v1275 = vand.u32 %v1103, 4294901760
      %v1276 = vsub.f32 %v1103, %v1275
      %v1277 = vand.u32 %v1276, 4294901760
      %v1278 = vsub.f32 %v1276, %v1277
      %v1279 = vand.u32 %v1278, 4294901760
      %1280 = vmatprep.subr.mxu0 %v1279
      %v1281 = vand.u32 %v1102, 4294901760
      %v1282 = vsub.f32 %v1102, %v1281
      %v1283 = vand.u32 %v1282, 4294901760
      %v1284 = vsub.f32 %v1282, %v1283
      %v1285 = vand.u32 %v1284, 4294901760
      %1286 = vmatpush1.msra.mxu0 %v1285
      %v1287 = vand.u32 %v1105, 4294901760
      %v1288 = vsub.f32 %v1105, %v1287
      %v1289 = vand.u32 %v1288, 4294901760
      %v1290 = vsub.f32 %v1288, %v1289
      %v1291 = vand.u32 %v1290, 4294901760
      %1292 = vmatprep.subr.mxu0 %v1291
      %v1293 = vand.u32 %v1104, 4294901760
      %v1294 = vsub.f32 %v1104, %v1293
      %v1295 = vand.u32 %v1294, 4294901760
      %v1296 = vsub.f32 %v1294, %v1295
      %v1297 = vand.u32 %v1296, 4294901760
      %1298 = vmatpush1.msra.mxu0 %v1297
      %1299 = vmatprep.subr.mxu0 0.0
      %1300 = vmatpush1.msra.mxu0 0.0
      %1301 = vmatprep.subr.mxu0 0.0
      %1302 = vmatpush1.msra.mxu0 0.0
      %1303 = vmatprep.subr.mxu0 0.0
      %1304 = vmatpush1.msra.mxu0 0.0
      %1305 = vmatprep.subr.mxu0 0.0
      %1306 = vmatpush1.msra.mxu0 0.0
      %1307 = vmatprep.subr.mxu0 0.0
      %1308 = vmatpush1.msra.mxu0 0.0
      %1309 = vmatprep.subr.mxu0 0.0
      %1310 = vmatpush1.msra.mxu0 0.0
      %1311 = vmatprep.subr.mxu0 0.0
      %1312 = vmatpush1.msra.mxu0 0.0
      %1313 = vmatprep.subr.mxu0 0.0
      %1314 = vmatpush1.msra.mxu0 0.0
      %1315 = vmatprep.subr.mxu0 0.0
      %1316 = vmatpush1.msra.mxu0 0.0
      %1317 = vmatprep.subr.mxu0 0.0
      %1318 = vmatpush1.msra.mxu0 0.0
      %1319 = vmatprep.subr.mxu0 0.0
      %1320 = vmatpush1.msra.mxu0 0.0
      %1321 = vmatprep.subr.mxu0 0.0
      %1322 = vmatpush1.msra.mxu0 0.0
      %1323 = vmatprep.subr.mxu0 0.0
      %1324 = vmatpush1.msra.mxu0 0.0
      %1325 = vmatprep.subr.mxu0 0.0
      %1326 = vmatpush1.msra.mxu0 0.0
      %1327 = vmatprep.subr.mxu0 0.0
      %1328 = vmatpush1.msra.mxu0 0.0
      %1329 = vmatprep.subr.mxu0 0.0
      %1330 = vmatpush1.msra.mxu0 0.0
      %1331 = vmatprep.subr.mxu0 0.0
      %1332 = vmatpush1.msra.mxu0 0.0
      %1333 = vmatprep.subr.mxu0 0.0
      %1334 = vmatpush1.msra.mxu0 0.0
      %1335 = vmatprep.subr.mxu0 0.0
      %1336 = vmatpush1.msra.mxu0 0.0
      %1337 = vmatprep.subr.mxu0 0.0
      %1338 = vmatpush1.msra.mxu0 0.0
      %1339 = vmatprep.subr.mxu0 0.0
      %1340 = vmatpush1.msra.mxu0 0.0
      %1341 = vmatprep.subr.mxu0 0.0
      %1342 = vmatpush1.msra.mxu0 0.0
      %1343 = vmatprep.subr.mxu0 0.0
      %1344 = vmatpush1.msra.mxu0 0.0
      %1345 = vmatprep.subr.mxu0 0.0
      %1346 = vmatpush1.msra.mxu0 0.0
      %1347 = vmatprep.mubr.f32.mxu0 0.0
      %v1348 = vand.u32 %v1109, 4294901760
      %1349 = vmatmul.mubr.f32.gmra.mrb[0].mxu0 %v1348
      %v1350 = vpop.f32.mrb[0].mxu0
      %v1351 = vadd.f32 %v1199, %v1350
      %v1352 = vpop.f32.mrb[0].mxu0
      %v1353 = vadd.f32 %v1201, %v1352
      %1354 = vdwg.mxu0
      %v1355 = vand.u32 %v1091, 4294901760
      %v1356 = vsub.f32 %v1091, %v1355
      %1357 = vmatprep.subr.mxu0 %v1356
      %v1358 = vand.u32 %v1090, 4294901760
      %v1359 = vsub.f32 %v1090, %v1358
      %1360 = vmatpush1.msra.mxu0 %v1359
      %v1361 = vand.u32 %v1093, 4294901760
      %v1362 = vsub.f32 %v1093, %v1361
      %1363 = vmatprep.subr.mxu0 %v1362
      %v1364 = vand.u32 %v1092, 4294901760
      %v1365 = vsub.f32 %v1092, %v1364
      %1366 = vmatpush1.msra.mxu0 %v1365
      %v1367 = vand.u32 %v1095, 4294901760
      %v1368 = vsub.f32 %v1095, %v1367
      %1369 = vmatprep.subr.mxu0 %v1368
      %v1370 = vand.u32 %v1094, 4294901760
      %v1371 = vsub.f32 %v1094, %v1370
      %1372 = vmatpush1.msra.mxu0 %v1371
      %v1373 = vand.u32 %v1097, 4294901760
      %v1374 = vsub.f32 %v1097, %v1373
      %1375 = vmatprep.subr.mxu0 %v1374
      %v1376 = vand.u32 %v1096, 4294901760
      %v1377 = vsub.f32 %v1096, %v1376
      %1378 = vmatpush1.msra.mxu0 %v1377
      %v1379 = vand.u32 %v1099, 4294901760
      %v1380 = vsub.f32 %v1099, %v1379
      %1381 = vmatprep.subr.mxu0 %v1380
      %v1382 = vand.u32 %v1098, 4294901760
      %v1383 = vsub.f32 %v1098, %v1382
      %1384 = vmatpush1.msra.mxu0 %v1383
      %v1385 = vand.u32 %v1101, 4294901760
      %v1386 = vsub.f32 %v1101, %v1385
      %1387 = vmatprep.subr.mxu0 %v1386
      %v1388 = vand.u32 %v1100, 4294901760
      %v1389 = vsub.f32 %v1100, %v1388
      %1390 = vmatpush1.msra.mxu0 %v1389
      %v1391 = vand.u32 %v1103, 4294901760
      %v1392 = vsub.f32 %v1103, %v1391
      %1393 = vmatprep.subr.mxu0 %v1392
      %v1394 = vand.u32 %v1102, 4294901760
      %v1395 = vsub.f32 %v1102, %v1394
      %1396 = vmatpush1.msra.mxu0 %v1395
      %v1397 = vand.u32 %v1105, 4294901760
      %v1398 = vsub.f32 %v1105, %v1397
      %1399 = vmatprep.subr.mxu0 %v1398
      %v1400 = vand.u32 %v1104, 4294901760
      %v1401 = vsub.f32 %v1104, %v1400
      %1402 = vmatpush1.msra.mxu0 %v1401
      %1403 = vmatprep.subr.mxu0 0.0
      %1404 = vmatpush1.msra.mxu0 0.0
      %1405 = vmatprep.subr.mxu0 0.0
      %1406 = vmatpush1.msra.mxu0 0.0
      %1407 = vmatprep.subr.mxu0 0.0
      %1408 = vmatpush1.msra.mxu0 0.0
      %1409 = vmatprep.subr.mxu0 0.0
      %1410 = vmatpush1.msra.mxu0 0.0
      %1411 = vmatprep.subr.mxu0 0.0
      %1412 = vmatpush1.msra.mxu0 0.0
      %1413 = vmatprep.subr.mxu0 0.0
      %1414 = vmatpush1.msra.mxu0 0.0
      %1415 = vmatprep.subr.mxu0 0.0
      %1416 = vmatpush1.msra.mxu0 0.0
      %1417 = vmatprep.subr.mxu0 0.0
      %1418 = vmatpush1.msra.mxu0 0.0
      %1419 = vmatprep.subr.mxu0 0.0
      %1420 = vmatpush1.msra.mxu0 0.0
      %1421 = vmatprep.subr.mxu0 0.0
      %1422 = vmatpush1.msra.mxu0 0.0
      %1423 = vmatprep.subr.mxu0 0.0
      %1424 = vmatpush1.msra.mxu0 0.0
      %1425 = vmatprep.subr.mxu0 0.0
      %1426 = vmatpush1.msra.mxu0 0.0
      %1427 = vmatprep.subr.mxu0 0.0
      %1428 = vmatpush1.msra.mxu0 0.0
      %1429 = vmatprep.subr.mxu0 0.0
      %1430 = vmatpush1.msra.mxu0 0.0
      %1431 = vmatprep.subr.mxu0 0.0
      %1432 = vmatpush1.msra.mxu0 0.0
      %1433 = vmatprep.subr.mxu0 0.0
      %1434 = vmatpush1.msra.mxu0 0.0
      %1435 = vmatprep.subr.mxu0 0.0
      %1436 = vmatpush1.msra.mxu0 0.0
      %1437 = vmatprep.subr.mxu0 0.0
      %1438 = vmatpush1.msra.mxu0 0.0
      %1439 = vmatprep.subr.mxu0 0.0
      %1440 = vmatpush1.msra.mxu0 0.0
      %1441 = vmatprep.subr.mxu0 0.0
      %1442 = vmatpush1.msra.mxu0 0.0
      %1443 = vmatprep.subr.mxu0 0.0
      %1444 = vmatpush1.msra.mxu0 0.0
      %1445 = vmatprep.subr.mxu0 0.0
      %1446 = vmatpush1.msra.mxu0 0.0
      %1447 = vmatprep.subr.mxu0 0.0
      %1448 = vmatpush1.msra.mxu0 0.0
      %1449 = vmatprep.subr.mxu0 0.0
      %1450 = vmatpush1.msra.mxu0 0.0
      %1451 = vmatprep.mubr.f32.mxu0 0.0
      %v1452 = vand.u32 %v1109, 4294901760
      %v1453 = vsub.f32 %v1109, %v1452
      %1454 = vmatmul.mubr.f32.gmra.mrb[0].mxu0 %v1453
      %v1455 = vpop.f32.mrb[0].mxu0
      %v1456 = vadd.f32 %v1351, %v1455
      %v1457 = vpop.f32.mrb[0].mxu0
      %v1458 = vadd.f32 %v1353, %v1457
      %1459 = vdwg.mxu0
      %v1460 = vand.u32 %v1091, 4294901760
      %1461 = vmatprep.subr.mxu0 %v1460
      %v1462 = vand.u32 %v1090, 4294901760
      %1463 = vmatpush1.msra.mxu0 %v1462
      %v1464 = vand.u32 %v1093, 4294901760
      %1465 = vmatprep.subr.mxu0 %v1464
      %v1466 = vand.u32 %v1092, 4294901760
      %1467 = vmatpush1.msra.mxu0 %v1466
      %v1468 = vand.u32 %v1095, 4294901760
      %1469 = vmatprep.subr.mxu0 %v1468
      %v1470 = vand.u32 %v1094, 4294901760
      %1471 = vmatpush1.msra.mxu0 %v1470
      %v1472 = vand.u32 %v1097, 4294901760
      %1473 = vmatprep.subr.mxu0 %v1472
      %v1474 = vand.u32 %v1096, 4294901760
      %1475 = vmatpush1.msra.mxu0 %v1474
      %v1476 = vand.u32 %v1099, 4294901760
      %1477 = vmatprep.subr.mxu0 %v1476
      %v1478 = vand.u32 %v1098, 4294901760
      %1479 = vmatpush1.msra.mxu0 %v1478
      %v1480 = vand.u32 %v1101, 4294901760
      %1481 = vmatprep.subr.mxu0 %v1480
      %v1482 = vand.u32 %v1100, 4294901760
      %1483 = vmatpush1.msra.mxu0 %v1482
      %v1484 = vand.u32 %v1103, 4294901760
      %1485 = vmatprep.subr.mxu0 %v1484
      %v1486 = vand.u32 %v1102, 4294901760
      %1487 = vmatpush1.msra.mxu0 %v1486
      %v1488 = vand.u32 %v1105, 4294901760
      %1489 = vmatprep.subr.mxu0 %v1488
      %v1490 = vand.u32 %v1104, 4294901760
      %1491 = vmatpush1.msra.mxu0 %v1490
      %1492 = vmatprep.subr.mxu0 0.0
      %1493 = vmatpush1.msra.mxu0 0.0
      %1494 = vmatprep.subr.mxu0 0.0
      %1495 = vmatpush1.msra.mxu0 0.0
      %1496 = vmatprep.subr.mxu0 0.0
      %1497 = vmatpush1.msra.mxu0 0.0
      %1498 = vmatprep.subr.mxu0 0.0
      %1499 = vmatpush1.msra.mxu0 0.0
      %1500 = vmatprep.subr.mxu0 0.0
      %1501 = vmatpush1.msra.mxu0 0.0
      %1502 = vmatprep.subr.mxu0 0.0
      %1503 = vmatpush1.msra.mxu0 0.0
      %1504 = vmatprep.subr.mxu0 0.0
      %1505 = vmatpush1.msra.mxu0 0.0
      %1506 = vmatprep.subr.mxu0 0.0
      %1507 = vmatpush1.msra.mxu0 0.0
      %1508 = vmatprep.subr.mxu0 0.0
      %1509 = vmatpush1.msra.mxu0 0.0
      %1510 = vmatprep.subr.mxu0 0.0
      %1511 = vmatpush1.msra.mxu0 0.0
      %1512 = vmatprep.subr.mxu0 0.0
      %1513 = vmatpush1.msra.mxu0 0.0
      %1514 = vmatprep.subr.mxu0 0.0
      %1515 = vmatpush1.msra.mxu0 0.0
      %1516 = vmatprep.subr.mxu0 0.0
      %1517 = vmatpush1.msra.mxu0 0.0
      %1518 = vmatprep.subr.mxu0 0.0
      %1519 = vmatpush1.msra.mxu0 0.0
      %1520 = vmatprep.subr.mxu0 0.0
      %1521 = vmatpush1.msra.mxu0 0.0
      %1522 = vmatprep.subr.mxu0 0.0
      %1523 = vmatpush1.msra.mxu0 0.0
      %1524 = vmatprep.subr.mxu0 0.0
      %1525 = vmatpush1.msra.mxu0 0.0
      %1526 = vmatprep.subr.mxu0 0.0
      %1527 = vmatpush1.msra.mxu0 0.0
      %1528 = vmatprep.subr.mxu0 0.0
      %1529 = vmatpush1.msra.mxu0 0.0
      %1530 = vmatprep.subr.mxu0 0.0
      %1531 = vmatpush1.msra.mxu0 0.0
      %1532 = vmatprep.subr.mxu0 0.0
      %1533 = vmatpush1.msra.mxu0 0.0
      %1534 = vmatprep.subr.mxu0 0.0
      %1535 = vmatpush1.msra.mxu0 0.0
      %1536 = vmatprep.subr.mxu0 0.0
      %1537 = vmatpush1.msra.mxu0 0.0
      %1538 = vmatprep.subr.mxu0 0.0
      %1539 = vmatpush1.msra.mxu0 0.0
      %1540 = vmatprep.mubr.f32.mxu0 0.0
      %v1541 = vand.u32 %v1109, 4294901760
      %v1542 = vsub.f32 %v1109, %v1541
      %v1543 = vand.u32 %v1542, 4294901760
      %1544 = vmatmul.mubr.f32.gmra.mrb[0].mxu0 %v1543
      %v1545 = vpop.f32.mrb[0].mxu0
      %v1546 = vadd.f32 %v1456, %v1545
      %v1547 = vpop.f32.mrb[0].mxu0
      %v1548 = vadd.f32 %v1458, %v1547
      %1549 = vdwg.mxu0
      %v1550 = vand.u32 %v1091, 4294901760
      %v1551 = vsub.f32 %v1091, %v1550
      %v1552 = vand.u32 %v1551, 4294901760
      %1553 = vmatprep.subr.mxu0 %v1552
      %v1554 = vand.u32 %v1090, 4294901760
      %v1555 = vsub.f32 %v1090, %v1554
      %v1556 = vand.u32 %v1555, 4294901760
      %1557 = vmatpush1.msra.mxu0 %v1556
      %v1558 = vand.u32 %v1093, 4294901760
      %v1559 = vsub.f32 %v1093, %v1558
      %v1560 = vand.u32 %v1559, 4294901760
      %1561 = vmatprep.subr.mxu0 %v1560
      %v1562 = vand.u32 %v1092, 4294901760
      %v1563 = vsub.f32 %v1092, %v1562
      %v1564 = vand.u32 %v1563, 4294901760
      %1565 = vmatpush1.msra.mxu0 %v1564
      %v1566 = vand.u32 %v1095, 4294901760
      %v1567 = vsub.f32 %v1095, %v1566
      %v1568 = vand.u32 %v1567, 4294901760
      %1569 = vmatprep.subr.mxu0 %v1568
      %v1570 = vand.u32 %v1094, 4294901760
      %v1571 = vsub.f32 %v1094, %v1570
      %v1572 = vand.u32 %v1571, 4294901760
      %1573 = vmatpush1.msra.mxu0 %v1572
      %v1574 = vand.u32 %v1097, 4294901760
      %v1575 = vsub.f32 %v1097, %v1574
      %v1576 = vand.u32 %v1575, 4294901760
      %1577 = vmatprep.subr.mxu0 %v1576
      %v1578 = vand.u32 %v1096, 4294901760
      %v1579 = vsub.f32 %v1096, %v1578
      %v1580 = vand.u32 %v1579, 4294901760
      %1581 = vmatpush1.msra.mxu0 %v1580
      %v1582 = vand.u32 %v1099, 4294901760
      %v1583 = vsub.f32 %v1099, %v1582
      %v1584 = vand.u32 %v1583, 4294901760
      %1585 = vmatprep.subr.mxu0 %v1584
      %v1586 = vand.u32 %v1098, 4294901760
      %v1587 = vsub.f32 %v1098, %v1586
      %v1588 = vand.u32 %v1587, 4294901760
      %1589 = vmatpush1.msra.mxu0 %v1588
      %v1590 = vand.u32 %v1101, 4294901760
      %v1591 = vsub.f32 %v1101, %v1590
      %v1592 = vand.u32 %v1591, 4294901760
      %1593 = vmatprep.subr.mxu0 %v1592
      %v1594 = vand.u32 %v1100, 4294901760
      %v1595 = vsub.f32 %v1100, %v1594
      %v1596 = vand.u32 %v1595, 4294901760
      %1597 = vmatpush1.msra.mxu0 %v1596
      %v1598 = vand.u32 %v1103, 4294901760
      %v1599 = vsub.f32 %v1103, %v1598
      %v1600 = vand.u32 %v1599, 4294901760
      %1601 = vmatprep.subr.mxu0 %v1600
      %v1602 = vand.u32 %v1102, 4294901760
      %v1603 = vsub.f32 %v1102, %v1602
      %v1604 = vand.u32 %v1603, 4294901760
      %1605 = vmatpush1.msra.mxu0 %v1604
      %v1606 = vand.u32 %v1105, 4294901760
      %v1607 = vsub.f32 %v1105, %v1606
      %v1608 = vand.u32 %v1607, 4294901760
      %1609 = vmatprep.subr.mxu0 %v1608
      %v1610 = vand.u32 %v1104, 4294901760
      %v1611 = vsub.f32 %v1104, %v1610
      %v1612 = vand.u32 %v1611, 4294901760
      %1613 = vmatpush1.msra.mxu0 %v1612
      %1614 = vmatprep.subr.mxu0 0.0
      %1615 = vmatpush1.msra.mxu0 0.0
      %1616 = vmatprep.subr.mxu0 0.0
      %1617 = vmatpush1.msra.mxu0 0.0
      %1618 = vmatprep.subr.mxu0 0.0
      %1619 = vmatpush1.msra.mxu0 0.0
      %1620 = vmatprep.subr.mxu0 0.0
      %1621 = vmatpush1.msra.mxu0 0.0
      %1622 = vmatprep.subr.mxu0 0.0
      %1623 = vmatpush1.msra.mxu0 0.0
      %1624 = vmatprep.subr.mxu0 0.0
      %1625 = vmatpush1.msra.mxu0 0.0
      %1626 = vmatprep.subr.mxu0 0.0
      %1627 = vmatpush1.msra.mxu0 0.0
      %1628 = vmatprep.subr.mxu0 0.0
      %1629 = vmatpush1.msra.mxu0 0.0
      %1630 = vmatprep.subr.mxu0 0.0
      %1631 = vmatpush1.msra.mxu0 0.0
      %1632 = vmatprep.subr.mxu0 0.0
      %1633 = vmatpush1.msra.mxu0 0.0
      %1634 = vmatprep.subr.mxu0 0.0
      %1635 = vmatpush1.msra.mxu0 0.0
      %1636 = vmatprep.subr.mxu0 0.0
      %1637 = vmatpush1.msra.mxu0 0.0
      %1638 = vmatprep.subr.mxu0 0.0
      %1639 = vmatpush1.msra.mxu0 0.0
      %1640 = vmatprep.subr.mxu0 0.0
      %1641 = vmatpush1.msra.mxu0 0.0
      %1642 = vmatprep.subr.mxu0 0.0
      %1643 = vmatpush1.msra.mxu0 0.0
      %1644 = vmatprep.subr.mxu0 0.0
      %1645 = vmatpush1.msra.mxu0 0.0
      %1646 = vmatprep.subr.mxu0 0.0
      %1647 = vmatpush1.msra.mxu0 0.0
      %1648 = vmatprep.subr.mxu0 0.0
      %1649 = vmatpush1.msra.mxu0 0.0
      %1650 = vmatprep.subr.mxu0 0.0
      %1651 = vmatpush1.msra.mxu0 0.0
      %1652 = vmatprep.subr.mxu0 0.0
      %1653 = vmatpush1.msra.mxu0 0.0
      %1654 = vmatprep.subr.mxu0 0.0
      %1655 = vmatpush1.msra.mxu0 0.0
      %1656 = vmatprep.subr.mxu0 0.0
      %1657 = vmatpush1.msra.mxu0 0.0
      %1658 = vmatprep.subr.mxu0 0.0
      %1659 = vmatpush1.msra.mxu0 0.0
      %1660 = vmatprep.subr.mxu0 0.0
      %1661 = vmatpush1.msra.mxu0 0.0
      %1662 = vmatprep.mubr.f32.mxu0 0.0
      %v1663 = vand.u32 %v1109, 4294901760
      %1664 = vmatmul.mubr.f32.gmra.mrb[0].mxu0 %v1663
      %v1665 = vpop.f32.mrb[0].mxu0
      %v1666 = vadd.f32 %v1546, %v1665
      %v1667 = vpop.f32.mrb[0].mxu0
      %v1668 = vadd.f32 %v1548, %v1667
      %1669 = vdwg.mxu0
      %v1670 = vand.u32 %v1091, 4294901760
      %1671 = vmatprep.subr.mxu0 %v1670
      %v1672 = vand.u32 %v1090, 4294901760
      %1673 = vmatpush1.msra.mxu0 %v1672
      %v1674 = vand.u32 %v1093, 4294901760
      %1675 = vmatprep.subr.mxu0 %v1674
      %v1676 = vand.u32 %v1092, 4294901760
      %1677 = vmatpush1.msra.mxu0 %v1676
      %v1678 = vand.u32 %v1095, 4294901760
      %1679 = vmatprep.subr.mxu0 %v1678
      %v1680 = vand.u32 %v1094, 4294901760
      %1681 = vmatpush1.msra.mxu0 %v1680
      %v1682 = vand.u32 %v1097, 4294901760
      %1683 = vmatprep.subr.mxu0 %v1682
      %v1684 = vand.u32 %v1096, 4294901760
      %1685 = vmatpush1.msra.mxu0 %v1684
      %v1686 = vand.u32 %v1099, 4294901760
      %1687 = vmatprep.subr.mxu0 %v1686
      %v1688 = vand.u32 %v1098, 4294901760
      %1689 = vmatpush1.msra.mxu0 %v1688
      %v1690 = vand.u32 %v1101, 4294901760
      %1691 = vmatprep.subr.mxu0 %v1690
      %v1692 = vand.u32 %v1100, 4294901760
      %1693 = vmatpush1.msra.mxu0 %v1692
      %v1694 = vand.u32 %v1103, 4294901760
      %1695 = vmatprep.subr.mxu0 %v1694
      %v1696 = vand.u32 %v1102, 4294901760
      %1697 = vmatpush1.msra.mxu0 %v1696
      %v1698 = vand.u32 %v1105, 4294901760
      %1699 = vmatprep.subr.mxu0 %v1698
      %v1700 = vand.u32 %v1104, 4294901760
      %1701 = vmatpush1.msra.mxu0 %v1700
      %1702 = vmatprep.subr.mxu0 0.0
      %1703 = vmatpush1.msra.mxu0 0.0
      %1704 = vmatprep.subr.mxu0 0.0
      %1705 = vmatpush1.msra.mxu0 0.0
      %1706 = vmatprep.subr.mxu0 0.0
      %1707 = vmatpush1.msra.mxu0 0.0
      %1708 = vmatprep.subr.mxu0 0.0
      %1709 = vmatpush1.msra.mxu0 0.0
      %1710 = vmatprep.subr.mxu0 0.0
      %1711 = vmatpush1.msra.mxu0 0.0
      %1712 = vmatprep.subr.mxu0 0.0
      %1713 = vmatpush1.msra.mxu0 0.0
      %1714 = vmatprep.subr.mxu0 0.0
      %1715 = vmatpush1.msra.mxu0 0.0
      %1716 = vmatprep.subr.mxu0 0.0
      %1717 = vmatpush1.msra.mxu0 0.0
      %1718 = vmatprep.subr.mxu0 0.0
      %1719 = vmatpush1.msra.mxu0 0.0
      %1720 = vmatprep.subr.mxu0 0.0
      %1721 = vmatpush1.msra.mxu0 0.0
      %1722 = vmatprep.subr.mxu0 0.0
      %1723 = vmatpush1.msra.mxu0 0.0
      %1724 = vmatprep.subr.mxu0 0.0
      %1725 = vmatpush1.msra.mxu0 0.0
      %1726 = vmatprep.subr.mxu0 0.0
      %1727 = vmatpush1.msra.mxu0 0.0
      %1728 = vmatprep.subr.mxu0 0.0
      %1729 = vmatpush1.msra.mxu0 0.0
      %1730 = vmatprep.subr.mxu0 0.0
      %1731 = vmatpush1.msra.mxu0 0.0
      %1732 = vmatprep.subr.mxu0 0.0
      %1733 = vmatpush1.msra.mxu0 0.0
      %1734 = vmatprep.subr.mxu0 0.0
      %1735 = vmatpush1.msra.mxu0 0.0
      %1736 = vmatprep.subr.mxu0 0.0
      %1737 = vmatpush1.msra.mxu0 0.0
      %1738 = vmatprep.subr.mxu0 0.0
      %1739 = vmatpush1.msra.mxu0 0.0
      %1740 = vmatprep.subr.mxu0 0.0
      %1741 = vmatpush1.msra.mxu0 0.0
      %1742 = vmatprep.subr.mxu0 0.0
      %1743 = vmatpush1.msra.mxu0 0.0
      %1744 = vmatprep.subr.mxu0 0.0
      %1745 = vmatpush1.msra.mxu0 0.0
      %1746 = vmatprep.subr.mxu0 0.0
      %1747 = vmatpush1.msra.mxu0 0.0
      %1748 = vmatprep.subr.mxu0 0.0
      %1749 = vmatpush1.msra.mxu0 0.0
      %1750 = vmatprep.mubr.f32.mxu0 0.0
      %v1751 = vand.u32 %v1109, 4294901760
      %1752 = vmatmul.mubr.f32.gmra.mrb[0].mxu0 %v1751
      %v1753 = vpop.f32.mrb[0].mxu0
      %v1754 = vadd.f32 %v1666, %v1753
      %v1755 = vpop.f32.mrb[0].mxu0
      %v1756 = vadd.f32 %v1668, %v1755
      %1757 = vdwg.mxu0
      %s1758 = scalar_lea.vmem %s3, 256
      %v1759 = vld [vmem:[%s1758] sm:$0xff]
      %v1760 = vld [vmem:[%s1758 + $0x8] sm:$0xff]
      %v1761 = vld [vmem:[%s1758 + $0x10] sm:$0xff]
      %v1762 = vld [vmem:[%s1758 + $0x18] sm:$0xff]
      %v1763 = vld [vmem:[%s1758 + $0x20] sm:$0xff]
      %v1764 = vld [vmem:[%s1758 + $0x28] sm:$0xff]
      %v1765 = vld [vmem:[%s1758 + $0x30] sm:$0xff]
      %v1766 = vld [vmem:[%s1758 + $0x38] sm:$0xff]
      %v1767 = vld [vmem:[%s1758 + $0x40] sm:$0xff]
      %v1768 = vld [vmem:[%s1758 + $0x48] sm:$0xff]
      %v1769 = vld [vmem:[%s1758 + $0x50] sm:$0xff]
      %v1770 = vld [vmem:[%s1758 + $0x58] sm:$0xff]
      %v1771 = vld [vmem:[%s1758 + $0x60] sm:$0xff]
      %v1772 = vld [vmem:[%s1758 + $0x68] sm:$0xff]
      %v1773 = vld [vmem:[%s1758 + $0x70] sm:$0xff]
      %v1774 = vld [vmem:[%s1758 + $0x78] sm:$0xff]
      %s1775 = scalar_lea.vmem %s3, 384
      %v1776 = vld [vmem:[%s1775] sm:$0xff]
      %v1777 = vld [vmem:[%s1775 + $0x8] sm:$0xff]
      %v1778 = vld [vmem:[%s1775 + $0x10] sm:$0xff]
      %v1779 = vld [vmem:[%s1775 + $0x18] sm:$0xff]
      %v1780 = vld [vmem:[%s1775 + $0x20] sm:$0xff]
      %v1781 = vld [vmem:[%s1775 + $0x28] sm:$0xff]
      %v1782 = vld [vmem:[%s1775 + $0x30] sm:$0xff]
      %v1783 = vld [vmem:[%s1775 + $0x38] sm:$0xff]
      %v1784 = vld [vmem:[%s1775 + $0x40] sm:$0xff]
      %v1785 = vld [vmem:[%s1775 + $0x48] sm:$0xff]
      %v1786 = vld [vmem:[%s1775 + $0x50] sm:$0xff]
      %v1787 = vld [vmem:[%s1775 + $0x58] sm:$0xff]
      %v1788 = vld [vmem:[%s1775 + $0x60] sm:$0xff]
      %v1789 = vld [vmem:[%s1775 + $0x68] sm:$0xff]
      %v1790 = vld [vmem:[%s1775 + $0x70] sm:$0xff]
      %v1791 = vld [vmem:[%s1775 + $0x78] sm:$0xff]
      %v1793 = vrot.slane %v1070, 4
      %v1794 = vsel %vm1108, %v1793, 0
      %v1796 = vand.u32 %v1777, 4294901760
      %1797 = vmatprep.subr.mxu0 %v1796
      %v1798 = vand.u32 %v1776, 4294901760
      %1799 = vmatpush1.msra.mxu0 %v1798
      %v1800 = vand.u32 %v1779, 4294901760
      %1801 = vmatprep.subr.mxu0 %v1800
      %v1802 = vand.u32 %v1778, 4294901760
      %1803 = vmatpush1.msra.mxu0 %v1802
      %v1804 = vand.u32 %v1781, 4294901760
      %1805 = vmatprep.subr.mxu0 %v1804
      %v1806 = vand.u32 %v1780, 4294901760
      %1807 = vmatpush1.msra.mxu0 %v1806
      %v1808 = vand.u32 %v1783, 4294901760
      %1809 = vmatprep.subr.mxu0 %v1808
      %v1810 = vand.u32 %v1782, 4294901760
      %1811 = vmatpush1.msra.mxu0 %v1810
      %v1812 = vand.u32 %v1785, 4294901760
      %1813 = vmatprep.subr.mxu0 %v1812
      %v1814 = vand.u32 %v1784, 4294901760
      %1815 = vmatpush1.msra.mxu0 %v1814
      %v1816 = vand.u32 %v1787, 4294901760
      %1817 = vmatprep.subr.mxu0 %v1816
      %v1818 = vand.u32 %v1786, 4294901760
      %1819 = vmatpush1.msra.mxu0 %v1818
      %v1820 = vand.u32 %v1789, 4294901760
      %1821 = vmatprep.subr.mxu0 %v1820
      %v1822 = vand.u32 %v1788, 4294901760
      %1823 = vmatpush1.msra.mxu0 %v1822
      %v1824 = vand.u32 %v1791, 4294901760
      %1825 = vmatprep.subr.mxu0 %v1824
      %v1826 = vand.u32 %v1790, 4294901760
      %1827 = vmatpush1.msra.mxu0 %v1826
      %1828 = vmatprep.subr.mxu0 0.0
      %1829 = vmatpush1.msra.mxu0 0.0
      %1830 = vmatprep.subr.mxu0 0.0
      %1831 = vmatpush1.msra.mxu0 0.0
      %1832 = vmatprep.subr.mxu0 0.0
      %1833 = vmatpush1.msra.mxu0 0.0
      %1834 = vmatprep.subr.mxu0 0.0
      %1835 = vmatpush1.msra.mxu0 0.0
      %1836 = vmatprep.subr.mxu0 0.0
      %1837 = vmatpush1.msra.mxu0 0.0
      %1838 = vmatprep.subr.mxu0 0.0
      %1839 = vmatpush1.msra.mxu0 0.0
      %1840 = vmatprep.subr.mxu0 0.0
      %1841 = vmatpush1.msra.mxu0 0.0
      %1842 = vmatprep.subr.mxu0 0.0
      %1843 = vmatpush1.msra.mxu0 0.0
      %1844 = vmatprep.subr.mxu0 0.0
      %1845 = vmatpush1.msra.mxu0 0.0
      %1846 = vmatprep.subr.mxu0 0.0
      %1847 = vmatpush1.msra.mxu0 0.0
      %1848 = vmatprep.subr.mxu0 0.0
      %1849 = vmatpush1.msra.mxu0 0.0
      %1850 = vmatprep.subr.mxu0 0.0
      %1851 = vmatpush1.msra.mxu0 0.0
      %1852 = vmatprep.subr.mxu0 0.0
      %1853 = vmatpush1.msra.mxu0 0.0
      %1854 = vmatprep.subr.mxu0 0.0
      %1855 = vmatpush1.msra.mxu0 0.0
      %1856 = vmatprep.subr.mxu0 0.0
      %1857 = vmatpush1.msra.mxu0 0.0
      %1858 = vmatprep.subr.mxu0 0.0
      %1859 = vmatpush1.msra.mxu0 0.0
      %1860 = vmatprep.subr.mxu0 0.0
      %1861 = vmatpush1.msra.mxu0 0.0
      %1862 = vmatprep.subr.mxu0 0.0
      %1863 = vmatpush1.msra.mxu0 0.0
      %1864 = vmatprep.subr.mxu0 0.0
      %1865 = vmatpush1.msra.mxu0 0.0
      %1866 = vmatprep.subr.mxu0 0.0
      %1867 = vmatpush1.msra.mxu0 0.0
      %1868 = vmatprep.subr.mxu0 0.0
      %1869 = vmatpush1.msra.mxu0 0.0
      %1870 = vmatprep.subr.mxu0 0.0
      %1871 = vmatpush1.msra.mxu0 0.0
      %1872 = vmatprep.subr.mxu0 0.0
      %1873 = vmatpush1.msra.mxu0 0.0
      %1874 = vmatprep.subr.mxu0 0.0
      %1875 = vmatpush1.msra.mxu0 0.0
      %1876 = vmatprep.mubr.f32.mxu0 0.0
      %v1877 = vand.u32 %v1794, 4294901760
      %v1878 = vsub.f32 %v1794, %v1877
      %v1879 = vand.u32 %v1878, 4294901760
      %v1880 = vsub.f32 %v1878, %v1879
      %v1881 = vand.u32 %v1880, 4294901760
      %1882 = vmatmul.mubr.f32.gmra.mrb[0].mxu0 %v1881
      %v1883 = vpop.f32.mrb[0].mxu0
      %v1884 = vadd.f32 0.0, %v1883
      %v1885 = vpop.f32.mrb[0].mxu0
      %v1886 = vadd.f32 0.0, %v1885
      %1887 = vdwg.mxu0
      %v1888 = vand.u32 %v1777, 4294901760
      %v1889 = vsub.f32 %v1777, %v1888
      %v1890 = vand.u32 %v1889, 4294901760
      %v1891 = vsub.f32 %v1889, %v1890
      %v1892 = vand.u32 %v1891, 4294901760
      %1893 = vmatprep.subr.mxu0 %v1892
      %v1894 = vand.u32 %v1776, 4294901760
      %v1895 = vsub.f32 %v1776, %v1894
      %v1896 = vand.u32 %v1895, 4294901760
      %v1897 = vsub.f32 %v1895, %v1896
      %v1898 = vand.u32 %v1897, 4294901760
      %1899 = vmatpush1.msra.mxu0 %v1898
      %v1900 = vand.u32 %v1779, 4294901760
      %v1901 = vsub.f32 %v1779, %v1900
      %v1902 = vand.u32 %v1901, 4294901760
      %v1903 = vsub.f32 %v1901, %v1902
      %v1904 = vand.u32 %v1903, 4294901760
      %1905 = vmatprep.subr.mxu0 %v1904
      %v1906 = vand.u32 %v1778, 4294901760
      %v1907 = vsub.f32 %v1778, %v1906
      %v1908 = vand.u32 %v1907, 4294901760
      %v1909 = vsub.f32 %v1907, %v1908
      %v1910 = vand.u32 %v1909, 4294901760
      %1911 = vmatpush1.msra.mxu0 %v1910
      %v1912 = vand.u32 %v1781, 4294901760
      %v1913 = vsub.f32 %v1781, %v1912
      %v1914 = vand.u32 %v1913, 4294901760
      %v1915 = vsub.f32 %v1913, %v1914
      %v1916 = vand.u32 %v1915, 4294901760
      %1917 = vmatprep.subr.mxu0 %v1916
      %v1918 = vand.u32 %v1780, 4294901760
      %v1919 = vsub.f32 %v1780, %v1918
      %v1920 = vand.u32 %v1919, 4294901760
      %v1921 = vsub.f32 %v1919, %v1920
      %v1922 = vand.u32 %v1921, 4294901760
      %1923 = vmatpush1.msra.mxu0 %v1922
      %v1924 = vand.u32 %v1783, 4294901760
      %v1925 = vsub.f32 %v1783, %v1924
      %v1926 = vand.u32 %v1925, 4294901760
      %v1927 = vsub.f32 %v1925, %v1926
      %v1928 = vand.u32 %v1927, 4294901760
      %1929 = vmatprep.subr.mxu0 %v1928
      %v1930 = vand.u32 %v1782, 4294901760
      %v1931 = vsub.f32 %v1782, %v1930
      %v1932 = vand.u32 %v1931, 4294901760
      %v1933 = vsub.f32 %v1931, %v1932
      %v1934 = vand.u32 %v1933, 4294901760
      %1935 = vmatpush1.msra.mxu0 %v1934
      %v1936 = vand.u32 %v1785, 4294901760
      %v1937 = vsub.f32 %v1785, %v1936
      %v1938 = vand.u32 %v1937, 4294901760
      %v1939 = vsub.f32 %v1937, %v1938
      %v1940 = vand.u32 %v1939, 4294901760
      %1941 = vmatprep.subr.mxu0 %v1940
      %v1942 = vand.u32 %v1784, 4294901760
      %v1943 = vsub.f32 %v1784, %v1942
      %v1944 = vand.u32 %v1943, 4294901760
      %v1945 = vsub.f32 %v1943, %v1944
      %v1946 = vand.u32 %v1945, 4294901760
      %1947 = vmatpush1.msra.mxu0 %v1946
      %v1948 = vand.u32 %v1787, 4294901760
      %v1949 = vsub.f32 %v1787, %v1948
      %v1950 = vand.u32 %v1949, 4294901760
      %v1951 = vsub.f32 %v1949, %v1950
      %v1952 = vand.u32 %v1951, 4294901760
      %1953 = vmatprep.subr.mxu0 %v1952
      %v1954 = vand.u32 %v1786, 4294901760
      %v1955 = vsub.f32 %v1786, %v1954
      %v1956 = vand.u32 %v1955, 4294901760
      %v1957 = vsub.f32 %v1955, %v1956
      %v1958 = vand.u32 %v1957, 4294901760
      %1959 = vmatpush1.msra.mxu0 %v1958
      %v1960 = vand.u32 %v1789, 4294901760
      %v1961 = vsub.f32 %v1789, %v1960
      %v1962 = vand.u32 %v1961, 4294901760
      %v1963 = vsub.f32 %v1961, %v1962
      %v1964 = vand.u32 %v1963, 4294901760
      %1965 = vmatprep.subr.mxu0 %v1964
      %v1966 = vand.u32 %v1788, 4294901760
      %v1967 = vsub.f32 %v1788, %v1966
      %v1968 = vand.u32 %v1967, 4294901760
      %v1969 = vsub.f32 %v1967, %v1968
      %v1970 = vand.u32 %v1969, 4294901760
      %1971 = vmatpush1.msra.mxu0 %v1970
      %v1972 = vand.u32 %v1791, 4294901760
      %v1973 = vsub.f32 %v1791, %v1972
      %v1974 = vand.u32 %v1973, 4294901760
      %v1975 = vsub.f32 %v1973, %v1974
      %v1976 = vand.u32 %v1975, 4294901760
      %1977 = vmatprep.subr.mxu0 %v1976
      %v1978 = vand.u32 %v1790, 4294901760
      %v1979 = vsub.f32 %v1790, %v1978
      %v1980 = vand.u32 %v1979, 4294901760
      %v1981 = vsub.f32 %v1979, %v1980
      %v1982 = vand.u32 %v1981, 4294901760
      %1983 = vmatpush1.msra.mxu0 %v1982
      %1984 = vmatprep.subr.mxu0 0.0
      %1985 = vmatpush1.msra.mxu0 0.0
      %1986 = vmatprep.subr.mxu0 0.0
      %1987 = vmatpush1.msra.mxu0 0.0
      %1988 = vmatprep.subr.mxu0 0.0
      %1989 = vmatpush1.msra.mxu0 0.0
      %1990 = vmatprep.subr.mxu0 0.0
      %1991 = vmatpush1.msra.mxu0 0.0
      %1992 = vmatprep.subr.mxu0 0.0
      %1993 = vmatpush1.msra.mxu0 0.0
      %1994 = vmatprep.subr.mxu0 0.0
      %1995 = vmatpush1.msra.mxu0 0.0
      %1996 = vmatprep.subr.mxu0 0.0
      %1997 = vmatpush1.msra.mxu0 0.0
      %1998 = vmatprep.subr.mxu0 0.0
      %1999 = vmatpush1.msra.mxu0 0.0
      %2000 = vmatprep.subr.mxu0 0.0
      %2001 = vmatpush1.msra.mxu0 0.0
      %2002 = vmatprep.subr.mxu0 0.0
      %2003 = vmatpush1.msra.mxu0 0.0
      %2004 = vmatprep.subr.mxu0 0.0
      %2005 = vmatpush1.msra.mxu0 0.0
      %2006 = vmatprep.subr.mxu0 0.0
      %2007 = vmatpush1.msra.mxu0 0.0
      %2008 = vmatprep.subr.mxu0 0.0
      %2009 = vmatpush1.msra.mxu0 0.0
      %2010 = vmatprep.subr.mxu0 0.0
      %2011 = vmatpush1.msra.mxu0 0.0
      %2012 = vmatprep.subr.mxu0 0.0
      %2013 = vmatpush1.msra.mxu0 0.0
      %2014 = vmatprep.subr.mxu0 0.0
      %2015 = vmatpush1.msra.mxu0 0.0
      %2016 = vmatprep.subr.mxu0 0.0
      %2017 = vmatpush1.msra.mxu0 0.0
      %2018 = vmatprep.subr.mxu0 0.0
      %2019 = vmatpush1.msra.mxu0 0.0
      %2020 = vmatprep.subr.mxu0 0.0
      %2021 = vmatpush1.msra.mxu0 0.0
      %2022 = vmatprep.subr.mxu0 0.0
      %2023 = vmatpush1.msra.mxu0 0.0
      %2024 = vmatprep.subr.mxu0 0.0
      %2025 = vmatpush1.msra.mxu0 0.0
      %2026 = vmatprep.subr.mxu0 0.0
      %2027 = vmatpush1.msra.mxu0 0.0
      %2028 = vmatprep.subr.mxu0 0.0
      %2029 = vmatpush1.msra.mxu0 0.0
      %2030 = vmatprep.subr.mxu0 0.0
      %2031 = vmatpush1.msra.mxu0 0.0
      %2032 = vmatprep.mubr.f32.mxu0 0.0
      %v2033 = vand.u32 %v1794, 4294901760
      %2034 = vmatmul.mubr.f32.gmra.mrb[0].mxu0 %v2033
      %v2035 = vpop.f32.mrb[0].mxu0
      %v2036 = vadd.f32 %v1884, %v2035
      %v2037 = vpop.f32.mrb[0].mxu0
      %v2038 = vadd.f32 %v1886, %v2037
      %2039 = vdwg.mxu0
      %v2040 = vand.u32 %v1777, 4294901760
      %v2041 = vsub.f32 %v1777, %v2040
      %2042 = vmatprep.subr.mxu0 %v2041
      %v2043 = vand.u32 %v1776, 4294901760
      %v2044 = vsub.f32 %v1776, %v2043
      %2045 = vmatpush1.msra.mxu0 %v2044
      %v2046 = vand.u32 %v1779, 4294901760
      %v2047 = vsub.f32 %v1779, %v2046
      %2048 = vmatprep.subr.mxu0 %v2047
      %v2049 = vand.u32 %v1778, 4294901760
      %v2050 = vsub.f32 %v1778, %v2049
      %2051 = vmatpush1.msra.mxu0 %v2050
      %v2052 = vand.u32 %v1781, 4294901760
      %v2053 = vsub.f32 %v1781, %v2052
      %2054 = vmatprep.subr.mxu0 %v2053
      %v2055 = vand.u32 %v1780, 4294901760
      %v2056 = vsub.f32 %v1780, %v2055
      %2057 = vmatpush1.msra.mxu0 %v2056
      %v2058 = vand.u32 %v1783, 4294901760
      %v2059 = vsub.f32 %v1783, %v2058
      %2060 = vmatprep.subr.mxu0 %v2059
      %v2061 = vand.u32 %v1782, 4294901760
      %v2062 = vsub.f32 %v1782, %v2061
      %2063 = vmatpush1.msra.mxu0 %v2062
      %v2064 = vand.u32 %v1785, 4294901760
      %v2065 = vsub.f32 %v1785, %v2064
      %2066 = vmatprep.subr.mxu0 %v2065
      %v2067 = vand.u32 %v1784, 4294901760
      %v2068 = vsub.f32 %v1784, %v2067
      %2069 = vmatpush1.msra.mxu0 %v2068
      %v2070 = vand.u32 %v1787, 4294901760
      %v2071 = vsub.f32 %v1787, %v2070
      %2072 = vmatprep.subr.mxu0 %v2071
      %v2073 = vand.u32 %v1786, 4294901760
      %v2074 = vsub.f32 %v1786, %v2073
      %2075 = vmatpush1.msra.mxu0 %v2074
      %v2076 = vand.u32 %v1789, 4294901760
      %v2077 = vsub.f32 %v1789, %v2076
      %2078 = vmatprep.subr.mxu0 %v2077
      %v2079 = vand.u32 %v1788, 4294901760
      %v2080 = vsub.f32 %v1788, %v2079
      %2081 = vmatpush1.msra.mxu0 %v2080
      %v2082 = vand.u32 %v1791, 4294901760
      %v2083 = vsub.f32 %v1791, %v2082
      %2084 = vmatprep.subr.mxu0 %v2083
      %v2085 = vand.u32 %v1790, 4294901760
      %v2086 = vsub.f32 %v1790, %v2085
      %2087 = vmatpush1.msra.mxu0 %v2086
      %2088 = vmatprep.subr.mxu0 0.0
      %2089 = vmatpush1.msra.mxu0 0.0
      %2090 = vmatprep.subr.mxu0 0.0
      %2091 = vmatpush1.msra.mxu0 0.0
      %2092 = vmatprep.subr.mxu0 0.0
      %2093 = vmatpush1.msra.mxu0 0.0
      %2094 = vmatprep.subr.mxu0 0.0
      %2095 = vmatpush1.msra.mxu0 0.0
      %2096 = vmatprep.subr.mxu0 0.0
      %2097 = vmatpush1.msra.mxu0 0.0
      %2098 = vmatprep.subr.mxu0 0.0
      %2099 = vmatpush1.msra.mxu0 0.0
      %2100 = vmatprep.subr.mxu0 0.0
      %2101 = vmatpush1.msra.mxu0 0.0
      %2102 = vmatprep.subr.mxu0 0.0
      %2103 = vmatpush1.msra.mxu0 0.0
      %2104 = vmatprep.subr.mxu0 0.0
      %2105 = vmatpush1.msra.mxu0 0.0
      %2106 = vmatprep.subr.mxu0 0.0
      %2107 = vmatpush1.msra.mxu0 0.0
      %2108 = vmatprep.subr.mxu0 0.0
      %2109 = vmatpush1.msra.mxu0 0.0
      %2110 = vmatprep.subr.mxu0 0.0
      %2111 = vmatpush1.msra.mxu0 0.0
      %2112 = vmatprep.subr.mxu0 0.0
      %2113 = vmatpush1.msra.mxu0 0.0
      %2114 = vmatprep.subr.mxu0 0.0
      %2115 = vmatpush1.msra.mxu0 0.0
      %2116 = vmatprep.subr.mxu0 0.0
      %2117 = vmatpush1.msra.mxu0 0.0
      %2118 = vmatprep.subr.mxu0 0.0
      %2119 = vmatpush1.msra.mxu0 0.0
      %2120 = vmatprep.subr.mxu0 0.0
      %2121 = vmatpush1.msra.mxu0 0.0
      %2122 = vmatprep.subr.mxu0 0.0
      %2123 = vmatpush1.msra.mxu0 0.0
      %2124 = vmatprep.subr.mxu0 0.0
      %2125 = vmatpush1.msra.mxu0 0.0
      %2126 = vmatprep.subr.mxu0 0.0
      %2127 = vmatpush1.msra.mxu0 0.0
      %2128 = vmatprep.subr.mxu0 0.0
      %2129 = vmatpush1.msra.mxu0 0.0
      %2130 = vmatprep.subr.mxu0 0.0
      %2131 = vmatpush1.msra.mxu0 0.0
      %2132 = vmatprep.subr.mxu0 0.0
      %2133 = vmatpush1.msra.mxu0 0.0
      %2134 = vmatprep.subr.mxu0 0.0
      %2135 = vmatpush1.msra.mxu0 0.0
      %2136 = vmatprep.mubr.f32.mxu0 0.0
      %v2137 = vand.u32 %v1794, 4294901760
      %v2138 = vsub.f32 %v1794, %v2137
      %2139 = vmatmul.mubr.f32.gmra.mrb[0].mxu0 %v2138
      %v2140 = vpop.f32.mrb[0].mxu0
      %v2141 = vadd.f32 %v2036, %v2140
      %v2142 = vpop.f32.mrb[0].mxu0
      %v2143 = vadd.f32 %v2038, %v2142
      %2144 = vdwg.mxu0
      %v2145 = vand.u32 %v1777, 4294901760
      %2146 = vmatprep.subr.mxu0 %v2145
      %v2147 = vand.u32 %v1776, 4294901760
      %2148 = vmatpush1.msra.mxu0 %v2147
      %v2149 = vand.u32 %v1779, 4294901760
      %2150 = vmatprep.subr.mxu0 %v2149
      %v2151 = vand.u32 %v1778, 4294901760
      %2152 = vmatpush1.msra.mxu0 %v2151
      %v2153 = vand.u32 %v1781, 4294901760
      %2154 = vmatprep.subr.mxu0 %v2153
      %v2155 = vand.u32 %v1780, 4294901760
      %2156 = vmatpush1.msra.mxu0 %v2155
      %v2157 = vand.u32 %v1783, 4294901760
      %2158 = vmatprep.subr.mxu0 %v2157
      %v2159 = vand.u32 %v1782, 4294901760
      %2160 = vmatpush1.msra.mxu0 %v2159
      %v2161 = vand.u32 %v1785, 4294901760
      %2162 = vmatprep.subr.mxu0 %v2161
      %v2163 = vand.u32 %v1784, 4294901760
      %2164 = vmatpush1.msra.mxu0 %v2163
      %v2165 = vand.u32 %v1787, 4294901760
      %2166 = vmatprep.subr.mxu0 %v2165
      %v2167 = vand.u32 %v1786, 4294901760
      %2168 = vmatpush1.msra.mxu0 %v2167
      %v2169 = vand.u32 %v1789, 4294901760
      %2170 = vmatprep.subr.mxu0 %v2169
      %v2171 = vand.u32 %v1788, 4294901760
      %2172 = vmatpush1.msra.mxu0 %v2171
      %v2173 = vand.u32 %v1791, 4294901760
      %2174 = vmatprep.subr.mxu0 %v2173
      %v2175 = vand.u32 %v1790, 4294901760
      %2176 = vmatpush1.msra.mxu0 %v2175
      %2177 = vmatprep.subr.mxu0 0.0
      %2178 = vmatpush1.msra.mxu0 0.0
      %2179 = vmatprep.subr.mxu0 0.0
      %2180 = vmatpush1.msra.mxu0 0.0
      %2181 = vmatprep.subr.mxu0 0.0
      %2182 = vmatpush1.msra.mxu0 0.0
      %2183 = vmatprep.subr.mxu0 0.0
      %2184 = vmatpush1.msra.mxu0 0.0
      %2185 = vmatprep.subr.mxu0 0.0
      %2186 = vmatpush1.msra.mxu0 0.0
      %2187 = vmatprep.subr.mxu0 0.0
      %2188 = vmatpush1.msra.mxu0 0.0
      %2189 = vmatprep.subr.mxu0 0.0
      %2190 = vmatpush1.msra.mxu0 0.0
      %2191 = vmatprep.subr.mxu0 0.0
      %2192 = vmatpush1.msra.mxu0 0.0
      %2193 = vmatprep.subr.mxu0 0.0
      %2194 = vmatpush1.msra.mxu0 0.0
      %2195 = vmatprep.subr.mxu0 0.0
      %2196 = vmatpush1.msra.mxu0 0.0
      %2197 = vmatprep.subr.mxu0 0.0
      %2198 = vmatpush1.msra.mxu0 0.0
      %2199 = vmatprep.subr.mxu0 0.0
      %2200 = vmatpush1.msra.mxu0 0.0
      %2201 = vmatprep.subr.mxu0 0.0
      %2202 = vmatpush1.msra.mxu0 0.0
      %2203 = vmatprep.subr.mxu0 0.0
      %2204 = vmatpush1.msra.mxu0 0.0
      %2205 = vmatprep.subr.mxu0 0.0
      %2206 = vmatpush1.msra.mxu0 0.0
      %2207 = vmatprep.subr.mxu0 0.0
      %2208 = vmatpush1.msra.mxu0 0.0
      %2209 = vmatprep.subr.mxu0 0.0
      %2210 = vmatpush1.msra.mxu0 0.0
      %2211 = vmatprep.subr.mxu0 0.0
      %2212 = vmatpush1.msra.mxu0 0.0
      %2213 = vmatprep.subr.mxu0 0.0
      %2214 = vmatpush1.msra.mxu0 0.0
      %2215 = vmatprep.subr.mxu0 0.0
      %2216 = vmatpush1.msra.mxu0 0.0
      %2217 = vmatprep.subr.mxu0 0.0
      %2218 = vmatpush1.msra.mxu0 0.0
      %2219 = vmatprep.subr.mxu0 0.0
      %2220 = vmatpush1.msra.mxu0 0.0
      %2221 = vmatprep.subr.mxu0 0.0
      %2222 = vmatpush1.msra.mxu0 0.0
      %2223 = vmatprep.subr.mxu0 0.0
      %2224 = vmatpush1.msra.mxu0 0.0
      %2225 = vmatprep.mubr.f32.mxu0 0.0
      %v2226 = vand.u32 %v1794, 4294901760
      %v2227 = vsub.f32 %v1794, %v2226
      %v2228 = vand.u32 %v2227, 4294901760
      %2229 = vmatmul.mubr.f32.gmra.mrb[0].mxu0 %v2228
      %v2230 = vpop.f32.mrb[0].mxu0
      %v2231 = vadd.f32 %v2141, %v2230
      %v2232 = vpop.f32.mrb[0].mxu0
      %v2233 = vadd.f32 %v2143, %v2232
      %2234 = vdwg.mxu0
      %v2235 = vand.u32 %v1777, 4294901760
      %v2236 = vsub.f32 %v1777, %v2235
      %v2237 = vand.u32 %v2236, 4294901760
      %2238 = vmatprep.subr.mxu0 %v2237
      %v2239 = vand.u32 %v1776, 4294901760
      %v2240 = vsub.f32 %v1776, %v2239
      %v2241 = vand.u32 %v2240, 4294901760
      %2242 = vmatpush1.msra.mxu0 %v2241
      %v2243 = vand.u32 %v1779, 4294901760
      %v2244 = vsub.f32 %v1779, %v2243
      %v2245 = vand.u32 %v2244, 4294901760
      %2246 = vmatprep.subr.mxu0 %v2245
      %v2247 = vand.u32 %v1778, 4294901760
      %v2248 = vsub.f32 %v1778, %v2247
      %v2249 = vand.u32 %v2248, 4294901760
      %2250 = vmatpush1.msra.mxu0 %v2249
      %v2251 = vand.u32 %v1781, 4294901760
      %v2252 = vsub.f32 %v1781, %v2251
      %v2253 = vand.u32 %v2252, 4294901760
      %2254 = vmatprep.subr.mxu0 %v2253
      %v2255 = vand.u32 %v1780, 4294901760
      %v2256 = vsub.f32 %v1780, %v2255
      %v2257 = vand.u32 %v2256, 4294901760
      %2258 = vmatpush1.msra.mxu0 %v2257
      %v2259 = vand.u32 %v1783, 4294901760
      %v2260 = vsub.f32 %v1783, %v2259
      %v2261 = vand.u32 %v2260, 4294901760
      %2262 = vmatprep.subr.mxu0 %v2261
      %v2263 = vand.u32 %v1782, 4294901760
      %v2264 = vsub.f32 %v1782, %v2263
      %v2265 = vand.u32 %v2264, 4294901760
      %2266 = vmatpush1.msra.mxu0 %v2265
      %v2267 = vand.u32 %v1785, 4294901760
      %v2268 = vsub.f32 %v1785, %v2267
      %v2269 = vand.u32 %v2268, 4294901760
      %2270 = vmatprep.subr.mxu0 %v2269
      %v2271 = vand.u32 %v1784, 4294901760
      %v2272 = vsub.f32 %v1784, %v2271
      %v2273 = vand.u32 %v2272, 4294901760
      %2274 = vmatpush1.msra.mxu0 %v2273
      %v2275 = vand.u32 %v1787, 4294901760
      %v2276 = vsub.f32 %v1787, %v2275
      %v2277 = vand.u32 %v2276, 4294901760
      %2278 = vmatprep.subr.mxu0 %v2277
      %v2279 = vand.u32 %v1786, 4294901760
      %v2280 = vsub.f32 %v1786, %v2279
      %v2281 = vand.u32 %v2280, 4294901760
      %2282 = vmatpush1.msra.mxu0 %v2281
      %v2283 = vand.u32 %v1789, 4294901760
      %v2284 = vsub.f32 %v1789, %v2283
      %v2285 = vand.u32 %v2284, 4294901760
      %2286 = vmatprep.subr.mxu0 %v2285
      %v2287 = vand.u32 %v1788, 4294901760
      %v2288 = vsub.f32 %v1788, %v2287
      %v2289 = vand.u32 %v2288, 4294901760
      %2290 = vmatpush1.msra.mxu0 %v2289
      %v2291 = vand.u32 %v1791, 4294901760
      %v2292 = vsub.f32 %v1791, %v2291
      %v2293 = vand.u32 %v2292, 4294901760
      %2294 = vmatprep.subr.mxu0 %v2293
      %v2295 = vand.u32 %v1790, 4294901760
      %v2296 = vsub.f32 %v1790, %v2295
      %v2297 = vand.u32 %v2296, 4294901760
      %2298 = vmatpush1.msra.mxu0 %v2297
      %2299 = vmatprep.subr.mxu0 0.0
      %2300 = vmatpush1.msra.mxu0 0.0
      %2301 = vmatprep.subr.mxu0 0.0
      %2302 = vmatpush1.msra.mxu0 0.0
      %2303 = vmatprep.subr.mxu0 0.0
      %2304 = vmatpush1.msra.mxu0 0.0
      %2305 = vmatprep.subr.mxu0 0.0
      %2306 = vmatpush1.msra.mxu0 0.0
      %2307 = vmatprep.subr.mxu0 0.0
      %2308 = vmatpush1.msra.mxu0 0.0
      %2309 = vmatprep.subr.mxu0 0.0
      %2310 = vmatpush1.msra.mxu0 0.0
      %2311 = vmatprep.subr.mxu0 0.0
      %2312 = vmatpush1.msra.mxu0 0.0
      %2313 = vmatprep.subr.mxu0 0.0
      %2314 = vmatpush1.msra.mxu0 0.0
      %2315 = vmatprep.subr.mxu0 0.0
      %2316 = vmatpush1.msra.mxu0 0.0
      %2317 = vmatprep.subr.mxu0 0.0
      %2318 = vmatpush1.msra.mxu0 0.0
      %2319 = vmatprep.subr.mxu0 0.0
      %2320 = vmatpush1.msra.mxu0 0.0
      %2321 = vmatprep.subr.mxu0 0.0
      %2322 = vmatpush1.msra.mxu0 0.0
      %2323 = vmatprep.subr.mxu0 0.0
      %2324 = vmatpush1.msra.mxu0 0.0
      %2325 = vmatprep.subr.mxu0 0.0
      %2326 = vmatpush1.msra.mxu0 0.0
      %2327 = vmatprep.subr.mxu0 0.0
      %2328 = vmatpush1.msra.mxu0 0.0
      %2329 = vmatprep.subr.mxu0 0.0
      %2330 = vmatpush1.msra.mxu0 0.0
      %2331 = vmatprep.subr.mxu0 0.0
      %2332 = vmatpush1.msra.mxu0 0.0
      %2333 = vmatprep.subr.mxu0 0.0
      %2334 = vmatpush1.msra.mxu0 0.0
      %2335 = vmatprep.subr.mxu0 0.0
      %2336 = vmatpush1.msra.mxu0 0.0
      %2337 = vmatprep.subr.mxu0 0.0
      %2338 = vmatpush1.msra.mxu0 0.0
      %2339 = vmatprep.subr.mxu0 0.0
      %2340 = vmatpush1.msra.mxu0 0.0
      %2341 = vmatprep.subr.mxu0 0.0
      %2342 = vmatpush1.msra.mxu0 0.0
      %2343 = vmatprep.subr.mxu0 0.0
      %2344 = vmatpush1.msra.mxu0 0.0
      %2345 = vmatprep.subr.mxu0 0.0
      %2346 = vmatpush1.msra.mxu0 0.0
      %2347 = vmatprep.mubr.f32.mxu0 0.0
      %v2348 = vand.u32 %v1794, 4294901760
      %2349 = vmatmul.mubr.f32.gmra.mrb[0].mxu0 %v2348
      %v2350 = vpop.f32.mrb[0].mxu0
      %v2351 = vadd.f32 %v2231, %v2350
      %v2352 = vpop.f32.mrb[0].mxu0
      %v2353 = vadd.f32 %v2233, %v2352
      %2354 = vdwg.mxu0
      %v2355 = vand.u32 %v1777, 4294901760
      %2356 = vmatprep.subr.mxu0 %v2355
      %v2357 = vand.u32 %v1776, 4294901760
      %2358 = vmatpush1.msra.mxu0 %v2357
      %v2359 = vand.u32 %v1779, 4294901760
      %2360 = vmatprep.subr.mxu0 %v2359
      %v2361 = vand.u32 %v1778, 4294901760
      %2362 = vmatpush1.msra.mxu0 %v2361
      %v2363 = vand.u32 %v1781, 4294901760
      %2364 = vmatprep.subr.mxu0 %v2363
      %v2365 = vand.u32 %v1780, 4294901760
      %2366 = vmatpush1.msra.mxu0 %v2365
      %v2367 = vand.u32 %v1783, 4294901760
      %2368 = vmatprep.subr.mxu0 %v2367
      %v2369 = vand.u32 %v1782, 4294901760
      %2370 = vmatpush1.msra.mxu0 %v2369
      %v2371 = vand.u32 %v1785, 4294901760
      %2372 = vmatprep.subr.mxu0 %v2371
      %v2373 = vand.u32 %v1784, 4294901760
      %2374 = vmatpush1.msra.mxu0 %v2373
      %v2375 = vand.u32 %v1787, 4294901760
      %2376 = vmatprep.subr.mxu0 %v2375
      %v2377 = vand.u32 %v1786, 4294901760
      %2378 = vmatpush1.msra.mxu0 %v2377
      %v2379 = vand.u32 %v1789, 4294901760
      %2380 = vmatprep.subr.mxu0 %v2379
      %v2381 = vand.u32 %v1788, 4294901760
      %2382 = vmatpush1.msra.mxu0 %v2381
      %v2383 = vand.u32 %v1791, 4294901760
      %2384 = vmatprep.subr.mxu0 %v2383
      %v2385 = vand.u32 %v1790, 4294901760
      %2386 = vmatpush1.msra.mxu0 %v2385
      %2387 = vmatprep.subr.mxu0 0.0
      %2388 = vmatpush1.msra.mxu0 0.0
      %2389 = vmatprep.subr.mxu0 0.0
      %2390 = vmatpush1.msra.mxu0 0.0
      %2391 = vmatprep.subr.mxu0 0.0
      %2392 = vmatpush1.msra.mxu0 0.0
      %2393 = vmatprep.subr.mxu0 0.0
      %2394 = vmatpush1.msra.mxu0 0.0
      %2395 = vmatprep.subr.mxu0 0.0
      %2396 = vmatpush1.msra.mxu0 0.0
      %2397 = vmatprep.subr.mxu0 0.0
      %2398 = vmatpush1.msra.mxu0 0.0
      %2399 = vmatprep.subr.mxu0 0.0
      %2400 = vmatpush1.msra.mxu0 0.0
      %2401 = vmatprep.subr.mxu0 0.0
      %2402 = vmatpush1.msra.mxu0 0.0
      %2403 = vmatprep.subr.mxu0 0.0
      %2404 = vmatpush1.msra.mxu0 0.0
      %2405 = vmatprep.subr.mxu0 0.0
      %2406 = vmatpush1.msra.mxu0 0.0
      %2407 = vmatprep.subr.mxu0 0.0
      %2408 = vmatpush1.msra.mxu0 0.0
      %2409 = vmatprep.subr.mxu0 0.0
      %2410 = vmatpush1.msra.mxu0 0.0
      %2411 = vmatprep.subr.mxu0 0.0
      %2412 = vmatpush1.msra.mxu0 0.0
      %2413 = vmatprep.subr.mxu0 0.0
      %2414 = vmatpush1.msra.mxu0 0.0
      %2415 = vmatprep.subr.mxu0 0.0
      %2416 = vmatpush1.msra.mxu0 0.0
      %2417 = vmatprep.subr.mxu0 0.0
      %2418 = vmatpush1.msra.mxu0 0.0
      %2419 = vmatprep.subr.mxu0 0.0
      %2420 = vmatpush1.msra.mxu0 0.0
      %2421 = vmatprep.subr.mxu0 0.0
      %2422 = vmatpush1.msra.mxu0 0.0
      %2423 = vmatprep.subr.mxu0 0.0
      %2424 = vmatpush1.msra.mxu0 0.0
      %2425 = vmatprep.subr.mxu0 0.0
      %2426 = vmatpush1.msra.mxu0 0.0
      %2427 = vmatprep.subr.mxu0 0.0
      %2428 = vmatpush1.msra.mxu0 0.0
      %2429 = vmatprep.subr.mxu0 0.0
      %2430 = vmatpush1.msra.mxu0 0.0
      %2431 = vmatprep.subr.mxu0 0.0
      %2432 = vmatpush1.msra.mxu0 0.0
      %2433 = vmatprep.subr.mxu0 0.0
      %2434 = vmatpush1.msra.mxu0 0.0
      %2435 = vmatprep.mubr.f32.mxu0 0.0
      %v2436 = vand.u32 %v1794, 4294901760
      %2437 = vmatmul.mubr.f32.gmra.mrb[0].mxu0 %v2436
      %v2438 = vpop.f32.mrb[0].mxu0
      %v2439 = vadd.f32 %v2351, %v2438
      %v2440 = vpop.f32.mrb[0].mxu0
      %v2441 = vadd.f32 %v2353, %v2440
      %2442 = vdwg.mxu0
      %v2443 = vsel %vm1108, %v1064, 0
      %v2445 = vand.u32 %v1074, 4294901760
      %2446 = vmatprep.subr.mxu0 %v2445
      %v2447 = vand.u32 %v1073, 4294901760
      %2448 = vmatpush1.msra.mxu0 %v2447
      %v2449 = vand.u32 %v1076, 4294901760
      %2450 = vmatprep.subr.mxu0 %v2449
      %v2451 = vand.u32 %v1075, 4294901760
      %2452 = vmatpush1.msra.mxu0 %v2451
      %v2453 = vand.u32 %v1078, 4294901760
      %2454 = vmatprep.subr.mxu0 %v2453
      %v2455 = vand.u32 %v1077, 4294901760
      %2456 = vmatpush1.msra.mxu0 %v2455
      %v2457 = vand.u32 %v1080, 4294901760
      %2458 = vmatprep.subr.mxu0 %v2457
      %v2459 = vand.u32 %v1079, 4294901760
      %2460 = vmatpush1.msra.mxu0 %v2459
      %v2461 = vand.u32 %v1082, 4294901760
      %2462 = vmatprep.subr.mxu0 %v2461
      %v2463 = vand.u32 %v1081, 4294901760
      %2464 = vmatpush1.msra.mxu0 %v2463
      %v2465 = vand.u32 %v1084, 4294901760
      %2466 = vmatprep.subr.mxu0 %v2465
      %v2467 = vand.u32 %v1083, 4294901760
      %2468 = vmatpush1.msra.mxu0 %v2467
      %v2469 = vand.u32 %v1086, 4294901760
      %2470 = vmatprep.subr.mxu0 %v2469
      %v2471 = vand.u32 %v1085, 4294901760
      %2472 = vmatpush1.msra.mxu0 %v2471
      %v2473 = vand.u32 %v1088, 4294901760
      %2474 = vmatprep.subr.mxu0 %v2473
      %v2475 = vand.u32 %v1087, 4294901760
      %2476 = vmatpush1.msra.mxu0 %v2475
      %2477 = vmatprep.subr.mxu0 0.0
      %2478 = vmatpush1.msra.mxu0 0.0
      %2479 = vmatprep.subr.mxu0 0.0
      %2480 = vmatpush1.msra.mxu0 0.0
      %2481 = vmatprep.subr.mxu0 0.0
      %2482 = vmatpush1.msra.mxu0 0.0
      %2483 = vmatprep.subr.mxu0 0.0
      %2484 = vmatpush1.msra.mxu0 0.0
      %2485 = vmatprep.subr.mxu0 0.0
      %2486 = vmatpush1.msra.mxu0 0.0
      %2487 = vmatprep.subr.mxu0 0.0
      %2488 = vmatpush1.msra.mxu0 0.0
      %2489 = vmatprep.subr.mxu0 0.0
      %2490 = vmatpush1.msra.mxu0 0.0
      %2491 = vmatprep.subr.mxu0 0.0
      %2492 = vmatpush1.msra.mxu0 0.0
      %2493 = vmatprep.subr.mxu0 0.0
      %2494 = vmatpush1.msra.mxu0 0.0
      %2495 = vmatprep.subr.mxu0 0.0
      %2496 = vmatpush1.msra.mxu0 0.0
      %2497 = vmatprep.subr.mxu0 0.0
      %2498 = vmatpush1.msra.mxu0 0.0
      %2499 = vmatprep.subr.mxu0 0.0
      %2500 = vmatpush1.msra.mxu0 0.0
      %2501 = vmatprep.subr.mxu0 0.0
      %2502 = vmatpush1.msra.mxu0 0.0
      %2503 = vmatprep.subr.mxu0 0.0
      %2504 = vmatpush1.msra.mxu0 0.0
      %2505 = vmatprep.subr.mxu0 0.0
      %2506 = vmatpush1.msra.mxu0 0.0
      %2507 = vmatprep.subr.mxu0 0.0
      %2508 = vmatpush1.msra.mxu0 0.0
      %2509 = vmatprep.subr.mxu0 0.0
      %2510 = vmatpush1.msra.mxu0 0.0
      %2511 = vmatprep.subr.mxu0 0.0
      %2512 = vmatpush1.msra.mxu0 0.0
      %2513 = vmatprep.subr.mxu0 0.0
      %2514 = vmatpush1.msra.mxu0 0.0
      %2515 = vmatprep.subr.mxu0 0.0
      %2516 = vmatpush1.msra.mxu0 0.0
      %2517 = vmatprep.subr.mxu0 0.0
      %2518 = vmatpush1.msra.mxu0 0.0
      %2519 = vmatprep.subr.mxu0 0.0
      %2520 = vmatpush1.msra.mxu0 0.0
      %2521 = vmatprep.subr.mxu0 0.0
      %2522 = vmatpush1.msra.mxu0 0.0
      %2523 = vmatprep.subr.mxu0 0.0
      %2524 = vmatpush1.msra.mxu0 0.0
      %2525 = vmatprep.mubr.f32.mxu0 0.0
      %v2526 = vand.u32 %v2443, 4294901760
      %v2527 = vsub.f32 %v2443, %v2526
      %v2528 = vand.u32 %v2527, 4294901760
      %v2529 = vsub.f32 %v2527, %v2528
      %v2530 = vand.u32 %v2529, 4294901760
      %2531 = vmatmul.mubr.f32.gmra.mrb[0].mxu0 %v2530
      %v2532 = vpop.f32.mrb[0].mxu0
      %v2533 = vadd.f32 %v1754, %v2532
      %v2534 = vpop.f32.mrb[0].mxu0
      %v2535 = vadd.f32 %v1756, %v2534
      %2536 = vdwg.mxu0
      %v2537 = vand.u32 %v1074, 4294901760
      %v2538 = vsub.f32 %v1074, %v2537
      %v2539 = vand.u32 %v2538, 4294901760
      %v2540 = vsub.f32 %v2538, %v2539
      %v2541 = vand.u32 %v2540, 4294901760
      %2542 = vmatprep.subr.mxu0 %v2541
      %v2543 = vand.u32 %v1073, 4294901760
      %v2544 = vsub.f32 %v1073, %v2543
      %v2545 = vand.u32 %v2544, 4294901760
      %v2546 = vsub.f32 %v2544, %v2545
      %v2547 = vand.u32 %v2546, 4294901760
      %2548 = vmatpush1.msra.mxu0 %v2547
      %v2549 = vand.u32 %v1076, 4294901760
      %v2550 = vsub.f32 %v1076, %v2549
      %v2551 = vand.u32 %v2550, 4294901760
      %v2552 = vsub.f32 %v2550, %v2551
      %v2553 = vand.u32 %v2552, 4294901760
      %2554 = vmatprep.subr.mxu0 %v2553
      %v2555 = vand.u32 %v1075, 4294901760
      %v2556 = vsub.f32 %v1075, %v2555
      %v2557 = vand.u32 %v2556, 4294901760
      %v2558 = vsub.f32 %v2556, %v2557
      %v2559 = vand.u32 %v2558, 4294901760
      %2560 = vmatpush1.msra.mxu0 %v2559
      %v2561 = vand.u32 %v1078, 4294901760
      %v2562 = vsub.f32 %v1078, %v2561
      %v2563 = vand.u32 %v2562, 4294901760
      %v2564 = vsub.f32 %v2562, %v2563
      %v2565 = vand.u32 %v2564, 4294901760
      %2566 = vmatprep.subr.mxu0 %v2565
      %v2567 = vand.u32 %v1077, 4294901760
      %v2568 = vsub.f32 %v1077, %v2567
      %v2569 = vand.u32 %v2568, 4294901760
      %v2570 = vsub.f32 %v2568, %v2569
      %v2571 = vand.u32 %v2570, 4294901760
      %2572 = vmatpush1.msra.mxu0 %v2571
      %v2573 = vand.u32 %v1080, 4294901760
      %v2574 = vsub.f32 %v1080, %v2573
      %v2575 = vand.u32 %v2574, 4294901760
      %v2576 = vsub.f32 %v2574, %v2575
      %v2577 = vand.u32 %v2576, 4294901760
      %2578 = vmatprep.subr.mxu0 %v2577
      %v2579 = vand.u32 %v1079, 4294901760
      %v2580 = vsub.f32 %v1079, %v2579
      %v2581 = vand.u32 %v2580, 4294901760
      %v2582 = vsub.f32 %v2580, %v2581
      %v2583 = vand.u32 %v2582, 4294901760
      %2584 = vmatpush1.msra.mxu0 %v2583
      %v2585 = vand.u32 %v1082, 4294901760
      %v2586 = vsub.f32 %v1082, %v2585
      %v2587 = vand.u32 %v2586, 4294901760
      %v2588 = vsub.f32 %v2586, %v2587
      %v2589 = vand.u32 %v2588, 4294901760
      %2590 = vmatprep.subr.mxu0 %v2589
      %v2591 = vand.u32 %v1081, 4294901760
      %v2592 = vsub.f32 %v1081, %v2591
      %v2593 = vand.u32 %v2592, 4294901760
      %v2594 = vsub.f32 %v2592, %v2593
      %v2595 = vand.u32 %v2594, 4294901760
      %2596 = vmatpush1.msra.mxu0 %v2595
      %v2597 = vand.u32 %v1084, 4294901760
      %v2598 = vsub.f32 %v1084, %v2597
      %v2599 = vand.u32 %v2598, 4294901760
      %v2600 = vsub.f32 %v2598, %v2599
      %v2601 = vand.u32 %v2600, 4294901760
      %2602 = vmatprep.subr.mxu0 %v2601
      %v2603 = vand.u32 %v1083, 4294901760
      %v2604 = vsub.f32 %v1083, %v2603
      %v2605 = vand.u32 %v2604, 4294901760
      %v2606 = vsub.f32 %v2604, %v2605
      %v2607 = vand.u32 %v2606, 4294901760
      %2608 = vmatpush1.msra.mxu0 %v2607
      %v2609 = vand.u32 %v1086, 4294901760
      %v2610 = vsub.f32 %v1086, %v2609
      %v2611 = vand.u32 %v2610, 4294901760
      %v2612 = vsub.f32 %v2610, %v2611
      %v2613 = vand.u32 %v2612, 4294901760
      %2614 = vmatprep.subr.mxu0 %v2613
      %v2615 = vand.u32 %v1085, 4294901760
      %v2616 = vsub.f32 %v1085, %v2615
      %v2617 = vand.u32 %v2616, 4294901760
      %v2618 = vsub.f32 %v2616, %v2617
      %v2619 = vand.u32 %v2618, 4294901760
      %2620 = vmatpush1.msra.mxu0 %v2619
      %v2621 = vand.u32 %v1088, 4294901760
      %v2622 = vsub.f32 %v1088, %v2621
      %v2623 = vand.u32 %v2622, 4294901760
      %v2624 = vsub.f32 %v2622, %v2623
      %v2625 = vand.u32 %v2624, 4294901760
      %2626 = vmatprep.subr.mxu0 %v2625
      %v2627 = vand.u32 %v1087, 4294901760
      %v2628 = vsub.f32 %v1087, %v2627
      %v2629 = vand.u32 %v2628, 4294901760
      %v2630 = vsub.f32 %v2628, %v2629
      %v2631 = vand.u32 %v2630, 4294901760
      %2632 = vmatpush1.msra.mxu0 %v2631
      %2633 = vmatprep.subr.mxu0 0.0
      %2634 = vmatpush1.msra.mxu0 0.0
      %2635 = vmatprep.subr.mxu0 0.0
      %2636 = vmatpush1.msra.mxu0 0.0
      %2637 = vmatprep.subr.mxu0 0.0
      %2638 = vmatpush1.msra.mxu0 0.0
      %2639 = vmatprep.subr.mxu0 0.0
      %2640 = vmatpush1.msra.mxu0 0.0
      %2641 = vmatprep.subr.mxu0 0.0
      %2642 = vmatpush1.msra.mxu0 0.0
      %2643 = vmatprep.subr.mxu0 0.0
      %2644 = vmatpush1.msra.mxu0 0.0
      %2645 = vmatprep.subr.mxu0 0.0
      %2646 = vmatpush1.msra.mxu0 0.0
      %2647 = vmatprep.subr.mxu0 0.0
      %2648 = vmatpush1.msra.mxu0 0.0
      %2649 = vmatprep.subr.mxu0 0.0
      %2650 = vmatpush1.msra.mxu0 0.0
      %2651 = vmatprep.subr.mxu0 0.0
      %2652 = vmatpush1.msra.mxu0 0.0
      %2653 = vmatprep.subr.mxu0 0.0
      %2654 = vmatpush1.msra.mxu0 0.0
      %2655 = vmatprep.subr.mxu0 0.0
      %2656 = vmatpush1.msra.mxu0 0.0
      %2657 = vmatprep.subr.mxu0 0.0
      %2658 = vmatpush1.msra.mxu0 0.0
      %2659 = vmatprep.subr.mxu0 0.0
      %2660 = vmatpush1.msra.mxu0 0.0
      %2661 = vmatprep.subr.mxu0 0.0
      %2662 = vmatpush1.msra.mxu0 0.0
      %2663 = vmatprep.subr.mxu0 0.0
      %2664 = vmatpush1.msra.mxu0 0.0
      %2665 = vmatprep.subr.mxu0 0.0
      %2666 = vmatpush1.msra.mxu0 0.0
      %2667 = vmatprep.subr.mxu0 0.0
      %2668 = vmatpush1.msra.mxu0 0.0
      %2669 = vmatprep.subr.mxu0 0.0
      %2670 = vmatpush1.msra.mxu0 0.0
      %2671 = vmatprep.subr.mxu0 0.0
      %2672 = vmatpush1.msra.mxu0 0.0
      %2673 = vmatprep.subr.mxu0 0.0
      %2674 = vmatpush1.msra.mxu0 0.0
      %2675 = vmatprep.subr.mxu0 0.0
      %2676 = vmatpush1.msra.mxu0 0.0
      %2677 = vmatprep.subr.mxu0 0.0
      %2678 = vmatpush1.msra.mxu0 0.0
      %2679 = vmatprep.subr.mxu0 0.0
      %2680 = vmatpush1.msra.mxu0 0.0
      %2681 = vmatprep.mubr.f32.mxu0 0.0
      %v2682 = vand.u32 %v2443, 4294901760
      %2683 = vmatmul.mubr.f32.gmra.mrb[0].mxu0 %v2682
      %v2684 = vpop.f32.mrb[0].mxu0
      %v2685 = vadd.f32 %v2533, %v2684
      %v2686 = vpop.f32.mrb[0].mxu0
      %v2687 = vadd.f32 %v2535, %v2686
      %2688 = vdwg.mxu0
      %v2689 = vand.u32 %v1074, 4294901760
      %v2690 = vsub.f32 %v1074, %v2689
      %2691 = vmatprep.subr.mxu0 %v2690
      %v2692 = vand.u32 %v1073, 4294901760
      %v2693 = vsub.f32 %v1073, %v2692
      %2694 = vmatpush1.msra.mxu0 %v2693
      %v2695 = vand.u32 %v1076, 4294901760
      %v2696 = vsub.f32 %v1076, %v2695
      %2697 = vmatprep.subr.mxu0 %v2696
      %v2698 = vand.u32 %v1075, 4294901760
      %v2699 = vsub.f32 %v1075, %v2698
      %2700 = vmatpush1.msra.mxu0 %v2699
      %v2701 = vand.u32 %v1078, 4294901760
      %v2702 = vsub.f32 %v1078, %v2701
      %2703 = vmatprep.subr.mxu0 %v2702
      %v2704 = vand.u32 %v1077, 4294901760
      %v2705 = vsub.f32 %v1077, %v2704
      %2706 = vmatpush1.msra.mxu0 %v2705
      %v2707 = vand.u32 %v1080, 4294901760
      %v2708 = vsub.f32 %v1080, %v2707
      %2709 = vmatprep.subr.mxu0 %v2708
      %v2710 = vand.u32 %v1079, 4294901760
      %v2711 = vsub.f32 %v1079, %v2710
      %2712 = vmatpush1.msra.mxu0 %v2711
      %v2713 = vand.u32 %v1082, 4294901760
      %v2714 = vsub.f32 %v1082, %v2713
      %2715 = vmatprep.subr.mxu0 %v2714
      %v2716 = vand.u32 %v1081, 4294901760
      %v2717 = vsub.f32 %v1081, %v2716
      %2718 = vmatpush1.msra.mxu0 %v2717
      %v2719 = vand.u32 %v1084, 4294901760
      %v2720 = vsub.f32 %v1084, %v2719
      %2721 = vmatprep.subr.mxu0 %v2720
      %v2722 = vand.u32 %v1083, 4294901760
      %v2723 = vsub.f32 %v1083, %v2722
      %2724 = vmatpush1.msra.mxu0 %v2723
      %v2725 = vand.u32 %v1086, 4294901760
      %v2726 = vsub.f32 %v1086, %v2725
      %2727 = vmatprep.subr.mxu0 %v2726
      %v2728 = vand.u32 %v1085, 4294901760
      %v2729 = vsub.f32 %v1085, %v2728
      %2730 = vmatpush1.msra.mxu0 %v2729
      %v2731 = vand.u32 %v1088, 4294901760
      %v2732 = vsub.f32 %v1088, %v2731
      %2733 = vmatprep.subr.mxu0 %v2732
      %v2734 = vand.u32 %v1087, 4294901760
      %v2735 = vsub.f32 %v1087, %v2734
      %2736 = vmatpush1.msra.mxu0 %v2735
      %2737 = vmatprep.subr.mxu0 0.0
      %2738 = vmatpush1.msra.mxu0 0.0
      %2739 = vmatprep.subr.mxu0 0.0
      %2740 = vmatpush1.msra.mxu0 0.0
      %2741 = vmatprep.subr.mxu0 0.0
      %2742 = vmatpush1.msra.mxu0 0.0
      %2743 = vmatprep.subr.mxu0 0.0
      %2744 = vmatpush1.msra.mxu0 0.0
      %2745 = vmatprep.subr.mxu0 0.0
      %2746 = vmatpush1.msra.mxu0 0.0
      %2747 = vmatprep.subr.mxu0 0.0
      %2748 = vmatpush1.msra.mxu0 0.0
      %2749 = vmatprep.subr.mxu0 0.0
      %2750 = vmatpush1.msra.mxu0 0.0
      %2751 = vmatprep.subr.mxu0 0.0
      %2752 = vmatpush1.msra.mxu0 0.0
      %2753 = vmatprep.subr.mxu0 0.0
      %2754 = vmatpush1.msra.mxu0 0.0
      %2755 = vmatprep.subr.mxu0 0.0
      %2756 = vmatpush1.msra.mxu0 0.0
      %2757 = vmatprep.subr.mxu0 0.0
      %2758 = vmatpush1.msra.mxu0 0.0
      %2759 = vmatprep.subr.mxu0 0.0
      %2760 = vmatpush1.msra.mxu0 0.0
      %2761 = vmatprep.subr.mxu0 0.0
      %2762 = vmatpush1.msra.mxu0 0.0
      %2763 = vmatprep.subr.mxu0 0.0
      %2764 = vmatpush1.msra.mxu0 0.0
      %2765 = vmatprep.subr.mxu0 0.0
      %2766 = vmatpush1.msra.mxu0 0.0
      %2767 = vmatprep.subr.mxu0 0.0
      %2768 = vmatpush1.msra.mxu0 0.0
      %2769 = vmatprep.subr.mxu0 0.0
      %2770 = vmatpush1.msra.mxu0 0.0
      %2771 = vmatprep.subr.mxu0 0.0
      %2772 = vmatpush1.msra.mxu0 0.0
      %2773 = vmatprep.subr.mxu0 0.0
      %2774 = vmatpush1.msra.mxu0 0.0
      %2775 = vmatprep.subr.mxu0 0.0
      %2776 = vmatpush1.msra.mxu0 0.0
      %2777 = vmatprep.subr.mxu0 0.0
      %2778 = vmatpush1.msra.mxu0 0.0
      %2779 = vmatprep.subr.mxu0 0.0
      %2780 = vmatpush1.msra.mxu0 0.0
      %2781 = vmatprep.subr.mxu0 0.0
      %2782 = vmatpush1.msra.mxu0 0.0
      %2783 = vmatprep.subr.mxu0 0.0
      %2784 = vmatpush1.msra.mxu0 0.0
      %2785 = vmatprep.mubr.f32.mxu0 0.0
      %v2786 = vand.u32 %v2443, 4294901760
      %v2787 = vsub.f32 %v2443, %v2786
      %2788 = vmatmul.mubr.f32.gmra.mrb[0].mxu0 %v2787
      %v2789 = vpop.f32.mrb[0].mxu0
      %v2790 = vadd.f32 %v2685, %v2789
      %v2791 = vpop.f32.mrb[0].mxu0
      %v2792 = vadd.f32 %v2687, %v2791
      %2793 = vdwg.mxu0
      %v2794 = vand.u32 %v1074, 4294901760
      %2795 = vmatprep.subr.mxu0 %v2794
      %v2796 = vand.u32 %v1073, 4294901760
      %2797 = vmatpush1.msra.mxu0 %v2796
      %v2798 = vand.u32 %v1076, 4294901760
      %2799 = vmatprep.subr.mxu0 %v2798
      %v2800 = vand.u32 %v1075, 4294901760
      %2801 = vmatpush1.msra.mxu0 %v2800
      %v2802 = vand.u32 %v1078, 4294901760
      %2803 = vmatprep.subr.mxu0 %v2802
      %v2804 = vand.u32 %v1077, 4294901760
      %2805 = vmatpush1.msra.mxu0 %v2804
      %v2806 = vand.u32 %v1080, 4294901760
      %2807 = vmatprep.subr.mxu0 %v2806
      %v2808 = vand.u32 %v1079, 4294901760
      %2809 = vmatpush1.msra.mxu0 %v2808
      %v2810 = vand.u32 %v1082, 4294901760
      %2811 = vmatprep.subr.mxu0 %v2810
      %v2812 = vand.u32 %v1081, 4294901760
      %2813 = vmatpush1.msra.mxu0 %v2812
      %v2814 = vand.u32 %v1084, 4294901760
      %2815 = vmatprep.subr.mxu0 %v2814
      %v2816 = vand.u32 %v1083, 4294901760
      %2817 = vmatpush1.msra.mxu0 %v2816
      %v2818 = vand.u32 %v1086, 4294901760
      %2819 = vmatprep.subr.mxu0 %v2818
      %v2820 = vand.u32 %v1085, 4294901760
      %2821 = vmatpush1.msra.mxu0 %v2820
      %v2822 = vand.u32 %v1088, 4294901760
      %2823 = vmatprep.subr.mxu0 %v2822
      %v2824 = vand.u32 %v1087, 4294901760
      %2825 = vmatpush1.msra.mxu0 %v2824
      %2826 = vmatprep.subr.mxu0 0.0
      %2827 = vmatpush1.msra.mxu0 0.0
      %2828 = vmatprep.subr.mxu0 0.0
      %2829 = vmatpush1.msra.mxu0 0.0
      %2830 = vmatprep.subr.mxu0 0.0
      %2831 = vmatpush1.msra.mxu0 0.0
      %2832 = vmatprep.subr.mxu0 0.0
      %2833 = vmatpush1.msra.mxu0 0.0
      %2834 = vmatprep.subr.mxu0 0.0
      %2835 = vmatpush1.msra.mxu0 0.0
      %2836 = vmatprep.subr.mxu0 0.0
      %2837 = vmatpush1.msra.mxu0 0.0
      %2838 = vmatprep.subr.mxu0 0.0
      %2839 = vmatpush1.msra.mxu0 0.0
      %2840 = vmatprep.subr.mxu0 0.0
      %2841 = vmatpush1.msra.mxu0 0.0
      %2842 = vmatprep.subr.mxu0 0.0
      %2843 = vmatpush1.msra.mxu0 0.0
      %2844 = vmatprep.subr.mxu0 0.0
      %2845 = vmatpush1.msra.mxu0 0.0
      %2846 = vmatprep.subr.mxu0 0.0
      %2847 = vmatpush1.msra.mxu0 0.0
      %2848 = vmatprep.subr.mxu0 0.0
      %2849 = vmatpush1.msra.mxu0 0.0
      %2850 = vmatprep.subr.mxu0 0.0
      %2851 = vmatpush1.msra.mxu0 0.0
      %2852 = vmatprep.subr.mxu0 0.0
      %2853 = vmatpush1.msra.mxu0 0.0
      %2854 = vmatprep.subr.mxu0 0.0
      %2855 = vmatpush1.msra.mxu0 0.0
      %2856 = vmatprep.subr.mxu0 0.0
      %2857 = vmatpush1.msra.mxu0 0.0
      %2858 = vmatprep.subr.mxu0 0.0
      %2859 = vmatpush1.msra.mxu0 0.0
      %2860 = vmatprep.subr.mxu0 0.0
      %2861 = vmatpush1.msra.mxu0 0.0
      %2862 = vmatprep.subr.mxu0 0.0
      %2863 = vmatpush1.msra.mxu0 0.0
      %2864 = vmatprep.subr.mxu0 0.0
      %2865 = vmatpush1.msra.mxu0 0.0
      %2866 = vmatprep.subr.mxu0 0.0
      %2867 = vmatpush1.msra.mxu0 0.0
      %2868 = vmatprep.subr.mxu0 0.0
      %2869 = vmatpush1.msra.mxu0 0.0
      %2870 = vmatprep.subr.mxu0 0.0
      %2871 = vmatpush1.msra.mxu0 0.0
      %2872 = vmatprep.subr.mxu0 0.0
      %2873 = vmatpush1.msra.mxu0 0.0
      %2874 = vmatprep.mubr.f32.mxu0 0.0
      %v2875 = vand.u32 %v2443, 4294901760
      %v2876 = vsub.f32 %v2443, %v2875
      %v2877 = vand.u32 %v2876, 4294901760
      %2878 = vmatmul.mubr.f32.gmra.mrb[0].mxu0 %v2877
      %v2879 = vpop.f32.mrb[0].mxu0
      %v2880 = vadd.f32 %v2790, %v2879
      %v2881 = vpop.f32.mrb[0].mxu0
      %v2882 = vadd.f32 %v2792, %v2881
      %2883 = vdwg.mxu0
      %v2884 = vand.u32 %v1074, 4294901760
      %v2885 = vsub.f32 %v1074, %v2884
      %v2886 = vand.u32 %v2885, 4294901760
      %2887 = vmatprep.subr.mxu0 %v2886
      %v2888 = vand.u32 %v1073, 4294901760
      %v2889 = vsub.f32 %v1073, %v2888
      %v2890 = vand.u32 %v2889, 4294901760
      %2891 = vmatpush1.msra.mxu0 %v2890
      %v2892 = vand.u32 %v1076, 4294901760
      %v2893 = vsub.f32 %v1076, %v2892
      %v2894 = vand.u32 %v2893, 4294901760
      %2895 = vmatprep.subr.mxu0 %v2894
      %v2896 = vand.u32 %v1075, 4294901760
      %v2897 = vsub.f32 %v1075, %v2896
      %v2898 = vand.u32 %v2897, 4294901760
      %2899 = vmatpush1.msra.mxu0 %v2898
      %v2900 = vand.u32 %v1078, 4294901760
      %v2901 = vsub.f32 %v1078, %v2900
      %v2902 = vand.u32 %v2901, 4294901760
      %2903 = vmatprep.subr.mxu0 %v2902
      %v2904 = vand.u32 %v1077, 4294901760
      %v2905 = vsub.f32 %v1077, %v2904
      %v2906 = vand.u32 %v2905, 4294901760
      %2907 = vmatpush1.msra.mxu0 %v2906
      %v2908 = vand.u32 %v1080, 4294901760
      %v2909 = vsub.f32 %v1080, %v2908
      %v2910 = vand.u32 %v2909, 4294901760
      %2911 = vmatprep.subr.mxu0 %v2910
      %v2912 = vand.u32 %v1079, 4294901760
      %v2913 = vsub.f32 %v1079, %v2912
      %v2914 = vand.u32 %v2913, 4294901760
      %2915 = vmatpush1.msra.mxu0 %v2914
      %v2916 = vand.u32 %v1082, 4294901760
      %v2917 = vsub.f32 %v1082, %v2916
      %v2918 = vand.u32 %v2917, 4294901760
      %2919 = vmatprep.subr.mxu0 %v2918
      %v2920 = vand.u32 %v1081, 4294901760
      %v2921 = vsub.f32 %v1081, %v2920
      %v2922 = vand.u32 %v2921, 4294901760
      %2923 = vmatpush1.msra.mxu0 %v2922
      %v2924 = vand.u32 %v1084, 4294901760
      %v2925 = vsub.f32 %v1084, %v2924
      %v2926 = vand.u32 %v2925, 4294901760
      %2927 = vmatprep.subr.mxu0 %v2926
      %v2928 = vand.u32 %v1083, 4294901760
      %v2929 = vsub.f32 %v1083, %v2928
      %v2930 = vand.u32 %v2929, 4294901760
      %2931 = vmatpush1.msra.mxu0 %v2930
      %v2932 = vand.u32 %v1086, 4294901760
      %v2933 = vsub.f32 %v1086, %v2932
      %v2934 = vand.u32 %v2933, 4294901760
      %2935 = vmatprep.subr.mxu0 %v2934
      %v2936 = vand.u32 %v1085, 4294901760
      %v2937 = vsub.f32 %v1085, %v2936
      %v2938 = vand.u32 %v2937, 4294901760
      %2939 = vmatpush1.msra.mxu0 %v2938
      %v2940 = vand.u32 %v1088, 4294901760
      %v2941 = vsub.f32 %v1088, %v2940
      %v2942 = vand.u32 %v2941, 4294901760
      %2943 = vmatprep.subr.mxu0 %v2942
      %v2944 = vand.u32 %v1087, 4294901760
      %v2945 = vsub.f32 %v1087, %v2944
      %v2946 = vand.u32 %v2945, 4294901760
      %2947 = vmatpush1.msra.mxu0 %v2946
      %2948 = vmatprep.subr.mxu0 0.0
      %2949 = vmatpush1.msra.mxu0 0.0
      %2950 = vmatprep.subr.mxu0 0.0
      %2951 = vmatpush1.msra.mxu0 0.0
      %2952 = vmatprep.subr.mxu0 0.0
      %2953 = vmatpush1.msra.mxu0 0.0
      %2954 = vmatprep.subr.mxu0 0.0
      %2955 = vmatpush1.msra.mxu0 0.0
      %2956 = vmatprep.subr.mxu0 0.0
      %2957 = vmatpush1.msra.mxu0 0.0
      %2958 = vmatprep.subr.mxu0 0.0
      %2959 = vmatpush1.msra.mxu0 0.0
      %2960 = vmatprep.subr.mxu0 0.0
      %2961 = vmatpush1.msra.mxu0 0.0
      %2962 = vmatprep.subr.mxu0 0.0
      %2963 = vmatpush1.msra.mxu0 0.0
      %2964 = vmatprep.subr.mxu0 0.0
      %2965 = vmatpush1.msra.mxu0 0.0
      %2966 = vmatprep.subr.mxu0 0.0
      %2967 = vmatpush1.msra.mxu0 0.0
      %2968 = vmatprep.subr.mxu0 0.0
      %2969 = vmatpush1.msra.mxu0 0.0
      %2970 = vmatprep.subr.mxu0 0.0
      %2971 = vmatpush1.msra.mxu0 0.0
      %2972 = vmatprep.subr.mxu0 0.0
      %2973 = vmatpush1.msra.mxu0 0.0
      %2974 = vmatprep.subr.mxu0 0.0
      %2975 = vmatpush1.msra.mxu0 0.0
      %2976 = vmatprep.subr.mxu0 0.0
      %2977 = vmatpush1.msra.mxu0 0.0
      %2978 = vmatprep.subr.mxu0 0.0
      %2979 = vmatpush1.msra.mxu0 0.0
      %2980 = vmatprep.subr.mxu0 0.0
      %2981 = vmatpush1.msra.mxu0 0.0
      %2982 = vmatprep.subr.mxu0 0.0
      %2983 = vmatpush1.msra.mxu0 0.0
      %2984 = vmatprep.subr.mxu0 0.0
      %2985 = vmatpush1.msra.mxu0 0.0
      %2986 = vmatprep.subr.mxu0 0.0
      %2987 = vmatpush1.msra.mxu0 0.0
      %2988 = vmatprep.subr.mxu0 0.0
      %2989 = vmatpush1.msra.mxu0 0.0
      %2990 = vmatprep.subr.mxu0 0.0
      %2991 = vmatpush1.msra.mxu0 0.0
      %2992 = vmatprep.subr.mxu0 0.0
      %2993 = vmatpush1.msra.mxu0 0.0
      %2994 = vmatprep.subr.mxu0 0.0
      %2995 = vmatpush1.msra.mxu0 0.0
      %2996 = vmatprep.mubr.f32.mxu0 0.0
      %v2997 = vand.u32 %v2443, 4294901760
      %2998 = vmatmul.mubr.f32.gmra.mrb[0].mxu0 %v2997
      %v2999 = vpop.f32.mrb[0].mxu0
      %v3000 = vadd.f32 %v2880, %v2999
      %v3001 = vpop.f32.mrb[0].mxu0
      %v3002 = vadd.f32 %v2882, %v3001
      %3003 = vdwg.mxu0
      %v3004 = vand.u32 %v1074, 4294901760
      %3005 = vmatprep.subr.mxu0 %v3004
      %v3006 = vand.u32 %v1073, 4294901760
      %3007 = vmatpush1.msra.mxu0 %v3006
      %v3008 = vand.u32 %v1076, 4294901760
      %3009 = vmatprep.subr.mxu0 %v3008
      %v3010 = vand.u32 %v1075, 4294901760
      %3011 = vmatpush1.msra.mxu0 %v3010
      %v3012 = vand.u32 %v1078, 4294901760
      %3013 = vmatprep.subr.mxu0 %v3012
      %v3014 = vand.u32 %v1077, 4294901760
      %3015 = vmatpush1.msra.mxu0 %v3014
      %v3016 = vand.u32 %v1080, 4294901760
      %3017 = vmatprep.subr.mxu0 %v3016
      %v3018 = vand.u32 %v1079, 4294901760
      %3019 = vmatpush1.msra.mxu0 %v3018
      %v3020 = vand.u32 %v1082, 4294901760
      %3021 = vmatprep.subr.mxu0 %v3020
      %v3022 = vand.u32 %v1081, 4294901760
      %3023 = vmatpush1.msra.mxu0 %v3022
      %v3024 = vand.u32 %v1084, 4294901760
      %3025 = vmatprep.subr.mxu0 %v3024
      %v3026 = vand.u32 %v1083, 4294901760
      %3027 = vmatpush1.msra.mxu0 %v3026
      %v3028 = vand.u32 %v1086, 4294901760
      %3029 = vmatprep.subr.mxu0 %v3028
      %v3030 = vand.u32 %v1085, 4294901760
      %3031 = vmatpush1.msra.mxu0 %v3030
      %v3032 = vand.u32 %v1088, 4294901760
      %3033 = vmatprep.subr.mxu0 %v3032
      %v3034 = vand.u32 %v1087, 4294901760
      %3035 = vmatpush1.msra.mxu0 %v3034
      %3036 = vmatprep.subr.mxu0 0.0
      %3037 = vmatpush1.msra.mxu0 0.0
      %3038 = vmatprep.subr.mxu0 0.0
      %3039 = vmatpush1.msra.mxu0 0.0
      %3040 = vmatprep.subr.mxu0 0.0
      %3041 = vmatpush1.msra.mxu0 0.0
      %3042 = vmatprep.subr.mxu0 0.0
      %3043 = vmatpush1.msra.mxu0 0.0
      %3044 = vmatprep.subr.mxu0 0.0
      %3045 = vmatpush1.msra.mxu0 0.0
      %3046 = vmatprep.subr.mxu0 0.0
      %3047 = vmatpush1.msra.mxu0 0.0
      %3048 = vmatprep.subr.mxu0 0.0
      %3049 = vmatpush1.msra.mxu0 0.0
      %3050 = vmatprep.subr.mxu0 0.0
      %3051 = vmatpush1.msra.mxu0 0.0
      %3052 = vmatprep.subr.mxu0 0.0
      %3053 = vmatpush1.msra.mxu0 0.0
      %3054 = vmatprep.subr.mxu0 0.0
      %3055 = vmatpush1.msra.mxu0 0.0
      %3056 = vmatprep.subr.mxu0 0.0
      %3057 = vmatpush1.msra.mxu0 0.0
      %3058 = vmatprep.subr.mxu0 0.0
      %3059 = vmatpush1.msra.mxu0 0.0
      %3060 = vmatprep.subr.mxu0 0.0
      %3061 = vmatpush1.msra.mxu0 0.0
      %3062 = vmatprep.subr.mxu0 0.0
      %3063 = vmatpush1.msra.mxu0 0.0
      %3064 = vmatprep.subr.mxu0 0.0
      %3065 = vmatpush1.msra.mxu0 0.0
      %3066 = vmatprep.subr.mxu0 0.0
      %3067 = vmatpush1.msra.mxu0 0.0
      %3068 = vmatprep.subr.mxu0 0.0
      %3069 = vmatpush1.msra.mxu0 0.0
      %3070 = vmatprep.subr.mxu0 0.0
      %3071 = vmatpush1.msra.mxu0 0.0
      %3072 = vmatprep.subr.mxu0 0.0
      %3073 = vmatpush1.msra.mxu0 0.0
      %3074 = vmatprep.subr.mxu0 0.0
      %3075 = vmatpush1.msra.mxu0 0.0
      %3076 = vmatprep.subr.mxu0 0.0
      %3077 = vmatpush1.msra.mxu0 0.0
      %3078 = vmatprep.subr.mxu0 0.0
      %3079 = vmatpush1.msra.mxu0 0.0
      %3080 = vmatprep.subr.mxu0 0.0
      %3081 = vmatpush1.msra.mxu0 0.0
      %3082 = vmatprep.subr.mxu0 0.0
      %3083 = vmatpush1.msra.mxu0 0.0
      %3084 = vmatprep.mubr.f32.mxu0 0.0
      %v3085 = vand.u32 %v2443, 4294901760
      %3086 = vmatmul.mubr.f32.gmra.mrb[0].mxu0 %v3085
      %v3087 = vpop.f32.mrb[0].mxu0
      %v3088 = vadd.f32 %v3000, %v3087
      %v3089 = vpop.f32.mrb[0].mxu0
      %v3090 = vadd.f32 %v3002, %v3089
      %3091 = vdwg.mxu0
      %v3092 = vsel %vm1108, %v1070, 0
      %v3094 = vand.u32 %v1760, 4294901760
      %3095 = vmatprep.subr.mxu0 %v3094
      %v3096 = vand.u32 %v1759, 4294901760
      %3097 = vmatpush1.msra.mxu0 %v3096
      %v3098 = vand.u32 %v1762, 4294901760
      %3099 = vmatprep.subr.mxu0 %v3098
      %v3100 = vand.u32 %v1761, 4294901760
      %3101 = vmatpush1.msra.mxu0 %v3100
      %v3102 = vand.u32 %v1764, 4294901760
      %3103 = vmatprep.subr.mxu0 %v3102
      %v3104 = vand.u32 %v1763, 4294901760
      %3105 = vmatpush1.msra.mxu0 %v3104
      %v3106 = vand.u32 %v1766, 4294901760
      %3107 = vmatprep.subr.mxu0 %v3106
      %v3108 = vand.u32 %v1765, 4294901760
      %3109 = vmatpush1.msra.mxu0 %v3108
      %v3110 = vand.u32 %v1768, 4294901760
      %3111 = vmatprep.subr.mxu0 %v3110
      %v3112 = vand.u32 %v1767, 4294901760
      %3113 = vmatpush1.msra.mxu0 %v3112
      %v3114 = vand.u32 %v1770, 4294901760
      %3115 = vmatprep.subr.mxu0 %v3114
      %v3116 = vand.u32 %v1769, 4294901760
      %3117 = vmatpush1.msra.mxu0 %v3116
      %v3118 = vand.u32 %v1772, 4294901760
      %3119 = vmatprep.subr.mxu0 %v3118
      %v3120 = vand.u32 %v1771, 4294901760
      %3121 = vmatpush1.msra.mxu0 %v3120
      %v3122 = vand.u32 %v1774, 4294901760
      %3123 = vmatprep.subr.mxu0 %v3122
      %v3124 = vand.u32 %v1773, 4294901760
      %3125 = vmatpush1.msra.mxu0 %v3124
      %3126 = vmatprep.subr.mxu0 0.0
      %3127 = vmatpush1.msra.mxu0 0.0
      %3128 = vmatprep.subr.mxu0 0.0
      %3129 = vmatpush1.msra.mxu0 0.0
      %3130 = vmatprep.subr.mxu0 0.0
      %3131 = vmatpush1.msra.mxu0 0.0
      %3132 = vmatprep.subr.mxu0 0.0
      %3133 = vmatpush1.msra.mxu0 0.0
      %3134 = vmatprep.subr.mxu0 0.0
      %3135 = vmatpush1.msra.mxu0 0.0
      %3136 = vmatprep.subr.mxu0 0.0
      %3137 = vmatpush1.msra.mxu0 0.0
      %3138 = vmatprep.subr.mxu0 0.0
      %3139 = vmatpush1.msra.mxu0 0.0
      %3140 = vmatprep.subr.mxu0 0.0
      %3141 = vmatpush1.msra.mxu0 0.0
      %3142 = vmatprep.subr.mxu0 0.0
      %3143 = vmatpush1.msra.mxu0 0.0
      %3144 = vmatprep.subr.mxu0 0.0
      %3145 = vmatpush1.msra.mxu0 0.0
      %3146 = vmatprep.subr.mxu0 0.0
      %3147 = vmatpush1.msra.mxu0 0.0
      %3148 = vmatprep.subr.mxu0 0.0
      %3149 = vmatpush1.msra.mxu0 0.0
      %3150 = vmatprep.subr.mxu0 0.0
      %3151 = vmatpush1.msra.mxu0 0.0
      %3152 = vmatprep.subr.mxu0 0.0
      %3153 = vmatpush1.msra.mxu0 0.0
      %3154 = vmatprep.subr.mxu0 0.0
      %3155 = vmatpush1.msra.mxu0 0.0
      %3156 = vmatprep.subr.mxu0 0.0
      %3157 = vmatpush1.msra.mxu0 0.0
      %3158 = vmatprep.subr.mxu0 0.0
      %3159 = vmatpush1.msra.mxu0 0.0
      %3160 = vmatprep.subr.mxu0 0.0
      %3161 = vmatpush1.msra.mxu0 0.0
      %3162 = vmatprep.subr.mxu0 0.0
      %3163 = vmatpush1.msra.mxu0 0.0
      %3164 = vmatprep.subr.mxu0 0.0
      %3165 = vmatpush1.msra.mxu0 0.0
      %3166 = vmatprep.subr.mxu0 0.0
      %3167 = vmatpush1.msra.mxu0 0.0
      %3168 = vmatprep.subr.mxu0 0.0
      %3169 = vmatpush1.msra.mxu0 0.0
      %3170 = vmatprep.subr.mxu0 0.0
      %3171 = vmatpush1.msra.mxu0 0.0
      %3172 = vmatprep.subr.mxu0 0.0
      %3173 = vmatpush1.msra.mxu0 0.0
      %3174 = vmatprep.mubr.f32.mxu0 0.0
      %v3175 = vand.u32 %v3092, 4294901760
      %v3176 = vsub.f32 %v3092, %v3175
      %v3177 = vand.u32 %v3176, 4294901760
      %v3178 = vsub.f32 %v3176, %v3177
      %v3179 = vand.u32 %v3178, 4294901760
      %3180 = vmatmul.mubr.f32.gmra.mrb[0].mxu0 %v3179
      %v3181 = vpop.f32.mrb[0].mxu0
      %v3182 = vadd.f32 %v2439, %v3181
      %v3183 = vpop.f32.mrb[0].mxu0
      %v3184 = vadd.f32 %v2441, %v3183
      %3185 = vdwg.mxu0
      %v3186 = vand.u32 %v1760, 4294901760
      %v3187 = vsub.f32 %v1760, %v3186
      %v3188 = vand.u32 %v3187, 4294901760
      %v3189 = vsub.f32 %v3187, %v3188
      %v3190 = vand.u32 %v3189, 4294901760
      %3191 = vmatprep.subr.mxu0 %v3190
      %v3192 = vand.u32 %v1759, 4294901760
      %v3193 = vsub.f32 %v1759, %v3192
      %v3194 = vand.u32 %v3193, 4294901760
      %v3195 = vsub.f32 %v3193, %v3194
      %v3196 = vand.u32 %v3195, 4294901760
      %3197 = vmatpush1.msra.mxu0 %v3196
      %v3198 = vand.u32 %v1762, 4294901760
      %v3199 = vsub.f32 %v1762, %v3198
      %v3200 = vand.u32 %v3199, 4294901760
      %v3201 = vsub.f32 %v3199, %v3200
      %v3202 = vand.u32 %v3201, 4294901760
      %3203 = vmatprep.subr.mxu0 %v3202
      %v3204 = vand.u32 %v1761, 4294901760
      %v3205 = vsub.f32 %v1761, %v3204
      %v3206 = vand.u32 %v3205, 4294901760
      %v3207 = vsub.f32 %v3205, %v3206
      %v3208 = vand.u32 %v3207, 4294901760
      %3209 = vmatpush1.msra.mxu0 %v3208
      %v3210 = vand.u32 %v1764, 4294901760
      %v3211 = vsub.f32 %v1764, %v3210
      %v3212 = vand.u32 %v3211, 4294901760
      %v3213 = vsub.f32 %v3211, %v3212
      %v3214 = vand.u32 %v3213, 4294901760
      %3215 = vmatprep.subr.mxu0 %v3214
      %v3216 = vand.u32 %v1763, 4294901760
      %v3217 = vsub.f32 %v1763, %v3216
      %v3218 = vand.u32 %v3217, 4294901760
      %v3219 = vsub.f32 %v3217, %v3218
      %v3220 = vand.u32 %v3219, 4294901760
      %3221 = vmatpush1.msra.mxu0 %v3220
      %v3222 = vand.u32 %v1766, 4294901760
      %v3223 = vsub.f32 %v1766, %v3222
      %v3224 = vand.u32 %v3223, 4294901760
      %v3225 = vsub.f32 %v3223, %v3224
      %v3226 = vand.u32 %v3225, 4294901760
      %3227 = vmatprep.subr.mxu0 %v3226
      %v3228 = vand.u32 %v1765, 4294901760
      %v3229 = vsub.f32 %v1765, %v3228
      %v3230 = vand.u32 %v3229, 4294901760
      %v3231 = vsub.f32 %v3229, %v3230
      %v3232 = vand.u32 %v3231, 4294901760
      %3233 = vmatpush1.msra.mxu0 %v3232
      %v3234 = vand.u32 %v1768, 4294901760
      %v3235 = vsub.f32 %v1768, %v3234
      %v3236 = vand.u32 %v3235, 4294901760
      %v3237 = vsub.f32 %v3235, %v3236
      %v3238 = vand.u32 %v3237, 4294901760
      %3239 = vmatprep.subr.mxu0 %v3238
      %v3240 = vand.u32 %v1767, 4294901760
      %v3241 = vsub.f32 %v1767, %v3240
      %v3242 = vand.u32 %v3241, 4294901760
      %v3243 = vsub.f32 %v3241, %v3242
      %v3244 = vand.u32 %v3243, 4294901760
      %3245 = vmatpush1.msra.mxu0 %v3244
      %v3246 = vand.u32 %v1770, 4294901760
      %v3247 = vsub.f32 %v1770, %v3246
      %v3248 = vand.u32 %v3247, 4294901760
      %v3249 = vsub.f32 %v3247, %v3248
      %v3250 = vand.u32 %v3249, 4294901760
      %3251 = vmatprep.subr.mxu0 %v3250
      %v3252 = vand.u32 %v1769, 4294901760
      %v3253 = vsub.f32 %v1769, %v3252
      %v3254 = vand.u32 %v3253, 4294901760
      %v3255 = vsub.f32 %v3253, %v3254
      %v3256 = vand.u32 %v3255, 4294901760
      %3257 = vmatpush1.msra.mxu0 %v3256
      %v3258 = vand.u32 %v1772, 4294901760
      %v3259 = vsub.f32 %v1772, %v3258
      %v3260 = vand.u32 %v3259, 4294901760
      %v3261 = vsub.f32 %v3259, %v3260
      %v3262 = vand.u32 %v3261, 4294901760
      %3263 = vmatprep.subr.mxu0 %v3262
      %v3264 = vand.u32 %v1771, 4294901760
      %v3265 = vsub.f32 %v1771, %v3264
      %v3266 = vand.u32 %v3265, 4294901760
      %v3267 = vsub.f32 %v3265, %v3266
      %v3268 = vand.u32 %v3267, 4294901760
      %3269 = vmatpush1.msra.mxu0 %v3268
      %v3270 = vand.u32 %v1774, 4294901760
      %v3271 = vsub.f32 %v1774, %v3270
      %v3272 = vand.u32 %v3271, 4294901760
      %v3273 = vsub.f32 %v3271, %v3272
      %v3274 = vand.u32 %v3273, 4294901760
      %3275 = vmatprep.subr.mxu0 %v3274
      %v3276 = vand.u32 %v1773, 4294901760
      %v3277 = vsub.f32 %v1773, %v3276
      %v3278 = vand.u32 %v3277, 4294901760
      %v3279 = vsub.f32 %v3277, %v3278
      %v3280 = vand.u32 %v3279, 4294901760
      %3281 = vmatpush1.msra.mxu0 %v3280
      %3282 = vmatprep.subr.mxu0 0.0
      %3283 = vmatpush1.msra.mxu0 0.0
      %3284 = vmatprep.subr.mxu0 0.0
      %3285 = vmatpush1.msra.mxu0 0.0
      %3286 = vmatprep.subr.mxu0 0.0
      %3287 = vmatpush1.msra.mxu0 0.0
      %3288 = vmatprep.subr.mxu0 0.0
      %3289 = vmatpush1.msra.mxu0 0.0
      %3290 = vmatprep.subr.mxu0 0.0
      %3291 = vmatpush1.msra.mxu0 0.0
      %3292 = vmatprep.subr.mxu0 0.0
      %3293 = vmatpush1.msra.mxu0 0.0
      %3294 = vmatprep.subr.mxu0 0.0
      %3295 = vmatpush1.msra.mxu0 0.0
      %3296 = vmatprep.subr.mxu0 0.0
      %3297 = vmatpush1.msra.mxu0 0.0
      %3298 = vmatprep.subr.mxu0 0.0
      %3299 = vmatpush1.msra.mxu0 0.0
      %3300 = vmatprep.subr.mxu0 0.0
      %3301 = vmatpush1.msra.mxu0 0.0
      %3302 = vmatprep.subr.mxu0 0.0
      %3303 = vmatpush1.msra.mxu0 0.0
      %3304 = vmatprep.subr.mxu0 0.0
      %3305 = vmatpush1.msra.mxu0 0.0
      %3306 = vmatprep.subr.mxu0 0.0
      %3307 = vmatpush1.msra.mxu0 0.0
      %3308 = vmatprep.subr.mxu0 0.0
      %3309 = vmatpush1.msra.mxu0 0.0
      %3310 = vmatprep.subr.mxu0 0.0
      %3311 = vmatpush1.msra.mxu0 0.0
      %3312 = vmatprep.subr.mxu0 0.0
      %3313 = vmatpush1.msra.mxu0 0.0
      %3314 = vmatprep.subr.mxu0 0.0
      %3315 = vmatpush1.msra.mxu0 0.0
      %3316 = vmatprep.subr.mxu0 0.0
      %3317 = vmatpush1.msra.mxu0 0.0
      %3318 = vmatprep.subr.mxu0 0.0
      %3319 = vmatpush1.msra.mxu0 0.0
      %3320 = vmatprep.subr.mxu0 0.0
      %3321 = vmatpush1.msra.mxu0 0.0
      %3322 = vmatprep.subr.mxu0 0.0
      %3323 = vmatpush1.msra.mxu0 0.0
      %3324 = vmatprep.subr.mxu0 0.0
      %3325 = vmatpush1.msra.mxu0 0.0
      %3326 = vmatprep.subr.mxu0 0.0
      %3327 = vmatpush1.msra.mxu0 0.0
      %3328 = vmatprep.subr.mxu0 0.0
      %3329 = vmatpush1.msra.mxu0 0.0
      %3330 = vmatprep.mubr.f32.mxu0 0.0
      %v3331 = vand.u32 %v3092, 4294901760
      %3332 = vmatmul.mubr.f32.gmra.mrb[0].mxu0 %v3331
      %v3333 = vpop.f32.mrb[0].mxu0
      %v3334 = vadd.f32 %v3182, %v3333
      %v3335 = vpop.f32.mrb[0].mxu0
      %v3336 = vadd.f32 %v3184, %v3335
      %3337 = vdwg.mxu0
      %v3338 = vand.u32 %v1760, 4294901760
      %v3339 = vsub.f32 %v1760, %v3338
      %3340 = vmatprep.subr.mxu0 %v3339
      %v3341 = vand.u32 %v1759, 4294901760
      %v3342 = vsub.f32 %v1759, %v3341
      %3343 = vmatpush1.msra.mxu0 %v3342
      %v3344 = vand.u32 %v1762, 4294901760
      %v3345 = vsub.f32 %v1762, %v3344
      %3346 = vmatprep.subr.mxu0 %v3345
      %v3347 = vand.u32 %v1761, 4294901760
      %v3348 = vsub.f32 %v1761, %v3347
      %3349 = vmatpush1.msra.mxu0 %v3348
      %v3350 = vand.u32 %v1764, 4294901760
      %v3351 = vsub.f32 %v1764, %v3350
      %3352 = vmatprep.subr.mxu0 %v3351
      %v3353 = vand.u32 %v1763, 4294901760
      %v3354 = vsub.f32 %v1763, %v3353
      %3355 = vmatpush1.msra.mxu0 %v3354
      %v3356 = vand.u32 %v1766, 4294901760
      %v3357 = vsub.f32 %v1766, %v3356
      %3358 = vmatprep.subr.mxu0 %v3357
      %v3359 = vand.u32 %v1765, 4294901760
      %v3360 = vsub.f32 %v1765, %v3359
      %3361 = vmatpush1.msra.mxu0 %v3360
      %v3362 = vand.u32 %v1768, 4294901760
      %v3363 = vsub.f32 %v1768, %v3362
      %3364 = vmatprep.subr.mxu0 %v3363
      %v3365 = vand.u32 %v1767, 4294901760
      %v3366 = vsub.f32 %v1767, %v3365
      %3367 = vmatpush1.msra.mxu0 %v3366
      %v3368 = vand.u32 %v1770, 4294901760
      %v3369 = vsub.f32 %v1770, %v3368
      %3370 = vmatprep.subr.mxu0 %v3369
      %v3371 = vand.u32 %v1769, 4294901760
      %v3372 = vsub.f32 %v1769, %v3371
      %3373 = vmatpush1.msra.mxu0 %v3372
      %v3374 = vand.u32 %v1772, 4294901760
      %v3375 = vsub.f32 %v1772, %v3374
      %3376 = vmatprep.subr.mxu0 %v3375
      %v3377 = vand.u32 %v1771, 4294901760
      %v3378 = vsub.f32 %v1771, %v3377
      %3379 = vmatpush1.msra.mxu0 %v3378
      %v3380 = vand.u32 %v1774, 4294901760
      %v3381 = vsub.f32 %v1774, %v3380
      %3382 = vmatprep.subr.mxu0 %v3381
      %v3383 = vand.u32 %v1773, 4294901760
      %v3384 = vsub.f32 %v1773, %v3383
      %3385 = vmatpush1.msra.mxu0 %v3384
      %3386 = vmatprep.subr.mxu0 0.0
      %3387 = vmatpush1.msra.mxu0 0.0
      %3388 = vmatprep.subr.mxu0 0.0
      %3389 = vmatpush1.msra.mxu0 0.0
      %3390 = vmatprep.subr.mxu0 0.0
      %3391 = vmatpush1.msra.mxu0 0.0
      %3392 = vmatprep.subr.mxu0 0.0
      %3393 = vmatpush1.msra.mxu0 0.0
      %3394 = vmatprep.subr.mxu0 0.0
      %3395 = vmatpush1.msra.mxu0 0.0
      %3396 = vmatprep.subr.mxu0 0.0
      %3397 = vmatpush1.msra.mxu0 0.0
      %3398 = vmatprep.subr.mxu0 0.0
      %3399 = vmatpush1.msra.mxu0 0.0
      %3400 = vmatprep.subr.mxu0 0.0
      %3401 = vmatpush1.msra.mxu0 0.0
      %3402 = vmatprep.subr.mxu0 0.0
      %3403 = vmatpush1.msra.mxu0 0.0
      %3404 = vmatprep.subr.mxu0 0.0
      %3405 = vmatpush1.msra.mxu0 0.0
      %3406 = vmatprep.subr.mxu0 0.0
      %3407 = vmatpush1.msra.mxu0 0.0
      %3408 = vmatprep.subr.mxu0 0.0
      %3409 = vmatpush1.msra.mxu0 0.0
      %3410 = vmatprep.subr.mxu0 0.0
      %3411 = vmatpush1.msra.mxu0 0.0
      %3412 = vmatprep.subr.mxu0 0.0
      %3413 = vmatpush1.msra.mxu0 0.0
      %3414 = vmatprep.subr.mxu0 0.0
      %3415 = vmatpush1.msra.mxu0 0.0
      %3416 = vmatprep.subr.mxu0 0.0
      %3417 = vmatpush1.msra.mxu0 0.0
      %3418 = vmatprep.subr.mxu0 0.0
      %3419 = vmatpush1.msra.mxu0 0.0
      %3420 = vmatprep.subr.mxu0 0.0
      %3421 = vmatpush1.msra.mxu0 0.0
      %3422 = vmatprep.subr.mxu0 0.0
      %3423 = vmatpush1.msra.mxu0 0.0
      %3424 = vmatprep.subr.mxu0 0.0
      %3425 = vmatpush1.msra.mxu0 0.0
      %3426 = vmatprep.subr.mxu0 0.0
      %3427 = vmatpush1.msra.mxu0 0.0
      %3428 = vmatprep.subr.mxu0 0.0
      %3429 = vmatpush1.msra.mxu0 0.0
      %3430 = vmatprep.subr.mxu0 0.0
      %3431 = vmatpush1.msra.mxu0 0.0
      %3432 = vmatprep.subr.mxu0 0.0
      %3433 = vmatpush1.msra.mxu0 0.0
      %3434 = vmatprep.mubr.f32.mxu0 0.0
      %v3435 = vand.u32 %v3092, 4294901760
      %v3436 = vsub.f32 %v3092, %v3435
      %3437 = vmatmul.mubr.f32.gmra.mrb[0].mxu0 %v3436
      %v3438 = vpop.f32.mrb[0].mxu0
      %v3439 = vadd.f32 %v3334, %v3438
      %v3440 = vpop.f32.mrb[0].mxu0
      %v3441 = vadd.f32 %v3336, %v3440
      %3442 = vdwg.mxu0
      %v3443 = vand.u32 %v1760, 4294901760
      %3444 = vmatprep.subr.mxu0 %v3443
      %v3445 = vand.u32 %v1759, 4294901760
      %3446 = vmatpush1.msra.mxu0 %v3445
      %v3447 = vand.u32 %v1762, 4294901760
      %3448 = vmatprep.subr.mxu0 %v3447
      %v3449 = vand.u32 %v1761, 4294901760
      %3450 = vmatpush1.msra.mxu0 %v3449
      %v3451 = vand.u32 %v1764, 4294901760
      %3452 = vmatprep.subr.mxu0 %v3451
      %v3453 = vand.u32 %v1763, 4294901760
      %3454 = vmatpush1.msra.mxu0 %v3453
      %v3455 = vand.u32 %v1766, 4294901760
      %3456 = vmatprep.subr.mxu0 %v3455
      %v3457 = vand.u32 %v1765, 4294901760
      %3458 = vmatpush1.msra.mxu0 %v3457
      %v3459 = vand.u32 %v1768, 4294901760
      %3460 = vmatprep.subr.mxu0 %v3459
      %v3461 = vand.u32 %v1767, 4294901760
      %3462 = vmatpush1.msra.mxu0 %v3461
      %v3463 = vand.u32 %v1770, 4294901760
      %3464 = vmatprep.subr.mxu0 %v3463
      %v3465 = vand.u32 %v1769, 4294901760
      %3466 = vmatpush1.msra.mxu0 %v3465
      %v3467 = vand.u32 %v1772, 4294901760
      %3468 = vmatprep.subr.mxu0 %v3467
      %v3469 = vand.u32 %v1771, 4294901760
      %3470 = vmatpush1.msra.mxu0 %v3469
      %v3471 = vand.u32 %v1774, 4294901760
      %3472 = vmatprep.subr.mxu0 %v3471
      %v3473 = vand.u32 %v1773, 4294901760
      %3474 = vmatpush1.msra.mxu0 %v3473
      %3475 = vmatprep.subr.mxu0 0.0
      %3476 = vmatpush1.msra.mxu0 0.0
      %3477 = vmatprep.subr.mxu0 0.0
      %3478 = vmatpush1.msra.mxu0 0.0
      %3479 = vmatprep.subr.mxu0 0.0
      %3480 = vmatpush1.msra.mxu0 0.0
      %3481 = vmatprep.subr.mxu0 0.0
      %3482 = vmatpush1.msra.mxu0 0.0
      %3483 = vmatprep.subr.mxu0 0.0
      %3484 = vmatpush1.msra.mxu0 0.0
      %3485 = vmatprep.subr.mxu0 0.0
      %3486 = vmatpush1.msra.mxu0 0.0
      %3487 = vmatprep.subr.mxu0 0.0
      %3488 = vmatpush1.msra.mxu0 0.0
      %3489 = vmatprep.subr.mxu0 0.0
      %3490 = vmatpush1.msra.mxu0 0.0
      %3491 = vmatprep.subr.mxu0 0.0
      %3492 = vmatpush1.msra.mxu0 0.0
      %3493 = vmatprep.subr.mxu0 0.0
      %3494 = vmatpush1.msra.mxu0 0.0
      %3495 = vmatprep.subr.mxu0 0.0
      %3496 = vmatpush1.msra.mxu0 0.0
      %3497 = vmatprep.subr.mxu0 0.0
      %3498 = vmatpush1.msra.mxu0 0.0
      %3499 = vmatprep.subr.mxu0 0.0
      %3500 = vmatpush1.msra.mxu0 0.0
      %3501 = vmatprep.subr.mxu0 0.0
      %3502 = vmatpush1.msra.mxu0 0.0
      %3503 = vmatprep.subr.mxu0 0.0
      %3504 = vmatpush1.msra.mxu0 0.0
      %3505 = vmatprep.subr.mxu0 0.0
      %3506 = vmatpush1.msra.mxu0 0.0
      %3507 = vmatprep.subr.mxu0 0.0
      %3508 = vmatpush1.msra.mxu0 0.0
      %3509 = vmatprep.subr.mxu0 0.0
      %3510 = vmatpush1.msra.mxu0 0.0
      %3511 = vmatprep.subr.mxu0 0.0
      %3512 = vmatpush1.msra.mxu0 0.0
      %3513 = vmatprep.subr.mxu0 0.0
      %3514 = vmatpush1.msra.mxu0 0.0
      %3515 = vmatprep.subr.mxu0 0.0
      %3516 = vmatpush1.msra.mxu0 0.0
      %3517 = vmatprep.subr.mxu0 0.0
      %3518 = vmatpush1.msra.mxu0 0.0
      %3519 = vmatprep.subr.mxu0 0.0
      %3520 = vmatpush1.msra.mxu0 0.0
      %3521 = vmatprep.subr.mxu0 0.0
      %3522 = vmatpush1.msra.mxu0 0.0
      %3523 = vmatprep.mubr.f32.mxu0 0.0
      %v3524 = vand.u32 %v3092, 4294901760
      %v3525 = vsub.f32 %v3092, %v3524
      %v3526 = vand.u32 %v3525, 4294901760
      %3527 = vmatmul.mubr.f32.gmra.mrb[0].mxu0 %v3526
      %v3528 = vpop.f32.mrb[0].mxu0
      %v3529 = vadd.f32 %v3439, %v3528
      %v3530 = vpop.f32.mrb[0].mxu0
      %v3531 = vadd.f32 %v3441, %v3530
      %3532 = vdwg.mxu0
      %v3533 = vand.u32 %v1760, 4294901760
      %v3534 = vsub.f32 %v1760, %v3533
      %v3535 = vand.u32 %v3534, 4294901760
      %3536 = vmatprep.subr.mxu0 %v3535
      %v3537 = vand.u32 %v1759, 4294901760
      %v3538 = vsub.f32 %v1759, %v3537
      %v3539 = vand.u32 %v3538, 4294901760
      %3540 = vmatpush1.msra.mxu0 %v3539
      %v3541 = vand.u32 %v1762, 4294901760
      %v3542 = vsub.f32 %v1762, %v3541
      %v3543 = vand.u32 %v3542, 4294901760
      %3544 = vmatprep.subr.mxu0 %v3543
      %v3545 = vand.u32 %v1761, 4294901760
      %v3546 = vsub.f32 %v1761, %v3545
      %v3547 = vand.u32 %v3546, 4294901760
      %3548 = vmatpush1.msra.mxu0 %v3547
      %v3549 = vand.u32 %v1764, 4294901760
      %v3550 = vsub.f32 %v1764, %v3549
      %v3551 = vand.u32 %v3550, 4294901760
      %3552 = vmatprep.subr.mxu0 %v3551
      %v3553 = vand.u32 %v1763, 4294901760
      %v3554 = vsub.f32 %v1763, %v3553
      %v3555 = vand.u32 %v3554, 4294901760
      %3556 = vmatpush1.msra.mxu0 %v3555
      %v3557 = vand.u32 %v1766, 4294901760
      %v3558 = vsub.f32 %v1766, %v3557
      %v3559 = vand.u32 %v3558, 4294901760
      %3560 = vmatprep.subr.mxu0 %v3559
      %v3561 = vand.u32 %v1765, 4294901760
      %v3562 = vsub.f32 %v1765, %v3561
      %v3563 = vand.u32 %v3562, 4294901760
      %3564 = vmatpush1.msra.mxu0 %v3563
      %v3565 = vand.u32 %v1768, 4294901760
      %v3566 = vsub.f32 %v1768, %v3565
      %v3567 = vand.u32 %v3566, 4294901760
      %3568 = vmatprep.subr.mxu0 %v3567
      %v3569 = vand.u32 %v1767, 4294901760
      %v3570 = vsub.f32 %v1767, %v3569
      %v3571 = vand.u32 %v3570, 4294901760
      %3572 = vmatpush1.msra.mxu0 %v3571
      %v3573 = vand.u32 %v1770, 4294901760
      %v3574 = vsub.f32 %v1770, %v3573
      %v3575 = vand.u32 %v3574, 4294901760
      %3576 = vmatprep.subr.mxu0 %v3575
      %v3577 = vand.u32 %v1769, 4294901760
      %v3578 = vsub.f32 %v1769, %v3577
      %v3579 = vand.u32 %v3578, 4294901760
      %3580 = vmatpush1.msra.mxu0 %v3579
      %v3581 = vand.u32 %v1772, 4294901760
      %v3582 = vsub.f32 %v1772, %v3581
      %v3583 = vand.u32 %v3582, 4294901760
      %3584 = vmatprep.subr.mxu0 %v3583
      %v3585 = vand.u32 %v1771, 4294901760
      %v3586 = vsub.f32 %v1771, %v3585
      %v3587 = vand.u32 %v3586, 4294901760
      %3588 = vmatpush1.msra.mxu0 %v3587
      %v3589 = vand.u32 %v1774, 4294901760
      %v3590 = vsub.f32 %v1774, %v3589
      %v3591 = vand.u32 %v3590, 4294901760
      %3592 = vmatprep.subr.mxu0 %v3591
      %v3593 = vand.u32 %v1773, 4294901760
      %v3594 = vsub.f32 %v1773, %v3593
      %v3595 = vand.u32 %v3594, 4294901760
      %3596 = vmatpush1.msra.mxu0 %v3595
      %3597 = vmatprep.subr.mxu0 0.0
      %3598 = vmatpush1.msra.mxu0 0.0
      %3599 = vmatprep.subr.mxu0 0.0
      %3600 = vmatpush1.msra.mxu0 0.0
      %3601 = vmatprep.subr.mxu0 0.0
      %3602 = vmatpush1.msra.mxu0 0.0
      %3603 = vmatprep.subr.mxu0 0.0
      %3604 = vmatpush1.msra.mxu0 0.0
      %3605 = vmatprep.subr.mxu0 0.0
      %3606 = vmatpush1.msra.mxu0 0.0
      %3607 = vmatprep.subr.mxu0 0.0
      %3608 = vmatpush1.msra.mxu0 0.0
      %3609 = vmatprep.subr.mxu0 0.0
      %3610 = vmatpush1.msra.mxu0 0.0
      %3611 = vmatprep.subr.mxu0 0.0
      %3612 = vmatpush1.msra.mxu0 0.0
      %3613 = vmatprep.subr.mxu0 0.0
      %3614 = vmatpush1.msra.mxu0 0.0
      %3615 = vmatprep.subr.mxu0 0.0
      %3616 = vmatpush1.msra.mxu0 0.0
      %3617 = vmatprep.subr.mxu0 0.0
      %3618 = vmatpush1.msra.mxu0 0.0
      %3619 = vmatprep.subr.mxu0 0.0
      %3620 = vmatpush1.msra.mxu0 0.0
      %3621 = vmatprep.subr.mxu0 0.0
      %3622 = vmatpush1.msra.mxu0 0.0
      %3623 = vmatprep.subr.mxu0 0.0
      %3624 = vmatpush1.msra.mxu0 0.0
      %3625 = vmatprep.subr.mxu0 0.0
      %3626 = vmatpush1.msra.mxu0 0.0
      %3627 = vmatprep.subr.mxu0 0.0
      %3628 = vmatpush1.msra.mxu0 0.0
      %3629 = vmatprep.subr.mxu0 0.0
      %3630 = vmatpush1.msra.mxu0 0.0
      %3631 = vmatprep.subr.mxu0 0.0
      %3632 = vmatpush1.msra.mxu0 0.0
      %3633 = vmatprep.subr.mxu0 0.0
      %3634 = vmatpush1.msra.mxu0 0.0
      %3635 = vmatprep.subr.mxu0 0.0
      %3636 = vmatpush1.msra.mxu0 0.0
      %3637 = vmatprep.subr.mxu0 0.0
      %3638 = vmatpush1.msra.mxu0 0.0
      %3639 = vmatprep.subr.mxu0 0.0
      %3640 = vmatpush1.msra.mxu0 0.0
      %3641 = vmatprep.subr.mxu0 0.0
      %3642 = vmatpush1.msra.mxu0 0.0
      %3643 = vmatprep.subr.mxu0 0.0
      %3644 = vmatpush1.msra.mxu0 0.0
      %3645 = vmatprep.mubr.f32.mxu0 0.0
      %v3646 = vand.u32 %v3092, 4294901760
      %3647 = vmatmul.mubr.f32.gmra.mrb[0].mxu0 %v3646
      %v3648 = vpop.f32.mrb[0].mxu0
      %v3649 = vadd.f32 %v3529, %v3648
      %v3650 = vpop.f32.mrb[0].mxu0
      %v3651 = vadd.f32 %v3531, %v3650
      %3652 = vdwg.mxu0
      %v3653 = vand.u32 %v1760, 4294901760
      %3654 = vmatprep.subr.mxu0 %v3653
      %v3655 = vand.u32 %v1759, 4294901760
      %3656 = vmatpush1.msra.mxu0 %v3655
      %v3657 = vand.u32 %v1762, 4294901760
      %3658 = vmatprep.subr.mxu0 %v3657
      %v3659 = vand.u32 %v1761, 4294901760
      %3660 = vmatpush1.msra.mxu0 %v3659
      %v3661 = vand.u32 %v1764, 4294901760
      %3662 = vmatprep.subr.mxu0 %v3661
      %v3663 = vand.u32 %v1763, 4294901760
      %3664 = vmatpush1.msra.mxu0 %v3663
      %v3665 = vand.u32 %v1766, 4294901760
      %3666 = vmatprep.subr.mxu0 %v3665
      %v3667 = vand.u32 %v1765, 4294901760
      %3668 = vmatpush1.msra.mxu0 %v3667
      %v3669 = vand.u32 %v1768, 4294901760
      %3670 = vmatprep.subr.mxu0 %v3669
      %v3671 = vand.u32 %v1767, 4294901760
      %3672 = vmatpush1.msra.mxu0 %v3671
      %v3673 = vand.u32 %v1770, 4294901760
      %3674 = vmatprep.subr.mxu0 %v3673
      %v3675 = vand.u32 %v1769, 4294901760
      %3676 = vmatpush1.msra.mxu0 %v3675
      %v3677 = vand.u32 %v1772, 4294901760
      %3678 = vmatprep.subr.mxu0 %v3677
      %v3679 = vand.u32 %v1771, 4294901760
      %3680 = vmatpush1.msra.mxu0 %v3679
      %v3681 = vand.u32 %v1774, 4294901760
      %3682 = vmatprep.subr.mxu0 %v3681
      %v3683 = vand.u32 %v1773, 4294901760
      %3684 = vmatpush1.msra.mxu0 %v3683
      %3685 = vmatprep.subr.mxu0 0.0
      %3686 = vmatpush1.msra.mxu0 0.0
      %3687 = vmatprep.subr.mxu0 0.0
      %3688 = vmatpush1.msra.mxu0 0.0
      %3689 = vmatprep.subr.mxu0 0.0
      %3690 = vmatpush1.msra.mxu0 0.0
      %3691 = vmatprep.subr.mxu0 0.0
      %3692 = vmatpush1.msra.mxu0 0.0
      %3693 = vmatprep.subr.mxu0 0.0
      %3694 = vmatpush1.msra.mxu0 0.0
      %3695 = vmatprep.subr.mxu0 0.0
      %3696 = vmatpush1.msra.mxu0 0.0
      %3697 = vmatprep.subr.mxu0 0.0
      %3698 = vmatpush1.msra.mxu0 0.0
      %3699 = vmatprep.subr.mxu0 0.0
      %3700 = vmatpush1.msra.mxu0 0.0
      %3701 = vmatprep.subr.mxu0 0.0
      %3702 = vmatpush1.msra.mxu0 0.0
      %3703 = vmatprep.subr.mxu0 0.0
      %3704 = vmatpush1.msra.mxu0 0.0
      %3705 = vmatprep.subr.mxu0 0.0
      %3706 = vmatpush1.msra.mxu0 0.0
      %3707 = vmatprep.subr.mxu0 0.0
      %3708 = vmatpush1.msra.mxu0 0.0
      %3709 = vmatprep.subr.mxu0 0.0
      %3710 = vmatpush1.msra.mxu0 0.0
      %3711 = vmatprep.subr.mxu0 0.0
      %3712 = vmatpush1.msra.mxu0 0.0
      %3713 = vmatprep.subr.mxu0 0.0
      %3714 = vmatpush1.msra.mxu0 0.0
      %3715 = vmatprep.subr.mxu0 0.0
      %3716 = vmatpush1.msra.mxu0 0.0
      %3717 = vmatprep.subr.mxu0 0.0
      %3718 = vmatpush1.msra.mxu0 0.0
      %3719 = vmatprep.subr.mxu0 0.0
      %3720 = vmatpush1.msra.mxu0 0.0
      %3721 = vmatprep.subr.mxu0 0.0
      %3722 = vmatpush1.msra.mxu0 0.0
      %3723 = vmatprep.subr.mxu0 0.0
      %3724 = vmatpush1.msra.mxu0 0.0
      %3725 = vmatprep.subr.mxu0 0.0
      %3726 = vmatpush1.msra.mxu0 0.0
      %3727 = vmatprep.subr.mxu0 0.0
      %3728 = vmatpush1.msra.mxu0 0.0
      %3729 = vmatprep.subr.mxu0 0.0
      %3730 = vmatpush1.msra.mxu0 0.0
      %3731 = vmatprep.subr.mxu0 0.0
      %3732 = vmatpush1.msra.mxu0 0.0
      %3733 = vmatprep.mubr.f32.mxu0 0.0
      %v3734 = vand.u32 %v3092, 4294901760
      %3735 = vmatmul.mubr.f32.gmra.mrb[0].mxu0 %v3734
      %v3736 = vpop.f32.mrb[0].mxu0
      %v3737 = vadd.f32 %v3649, %v3736
      %v3738 = vpop.f32.mrb[0].mxu0
      %v3739 = vadd.f32 %v3651, %v3738
      %3740 = vdwg.mxu0
      %v3741 = vadd.f32 %v3088, %v3737
      %v3742 = vadd.f32 %v3090, %v3739
      %v3743 = vld [vmem:[%s4] sm:$0xf]
      %3745 = vset.pattern.permute.xlu0 0
      %3746 = vperm.xlu0 %3745, %v3743
      %v3747 = vpop.permute.xlu0 %3746
      %v3749 = vadd.f32 %v3741, %v3747
      %v3750 = vadd.f32 %v3742, %v3747
      %v3751 = vld [vmem:[%s556] sm:$0xff]
      %v3752 = vld [vmem:[%s5] sm:$0xf]
      %3754 = vset.pattern.permute.xlu0 0
      %3755 = vperm.xlu0 %3754, %v3752
      %v3756 = vpop.permute.xlu0 %3755
      %v3758 = vunpack.c.l.s4 839922192
      %v3759 = vunpack.c.0.s8 %v3758
      %v3760 = vlaneseq
      %v3761 = vshrl.u32 %v3760, 7
      %v3762 = vsub.s32 %v3759, %v3761
      %v3763 = vrot.slane %v3756, %v3762
      %v3765 = vmul.f32 %v3751, %v3763
      %v3766 = vld [vmem:[%s6] sm:$0xf]
      %3768 = vset.pattern.permute.xlu0 0
      %3769 = vperm.xlu0 %3768, %v3766
      %v3770 = vpop.permute.xlu0 %3769
      %v3772 = vunpack.c.l.s4 839922192
      %v3773 = vunpack.c.0.s8 %v3772
      %v3774 = vlaneseq
      %v3775 = vshrl.u32 %v3774, 7
      %v3776 = vsub.s32 %v3773, %v3775
      %v3777 = vrot.slane %v3770, %v3776
      %v3779 = vadd.f32 %v3765, %v3777
      %v3780 = vmax.f32 %v3779, 0.0
      %v3782 = vcombine.high %v3780, %v3780
      %3784 = vst [vmem:[#allocation2 + $0x8] sm:$0xf] %v3780
      %3785 = vst [vmem:[#allocation2 + $0x10] sm:$0xf] %v3782
      %v3786 = vld [vmem:[%s5 + $0x4] sm:$0xf]
      %3788 = vset.pattern.permute.xlu0 0
      %3789 = vperm.xlu0 %3788, %v3786
      %v3790 = vpop.permute.xlu0 %3789
      %v3792 = vmul.f32 %v3749, %v3790
      %v3793 = vmul.f32 %v3750, %v3790
      %v3794 = vld [vmem:[%s6 + $0x4] sm:$0xf]
      %3796 = vset.pattern.permute.xlu0 0
      %3797 = vperm.xlu0 %3796, %v3794
      %v3798 = vpop.permute.xlu0 %3797
      %v3800 = vadd.f32 %v3792, %v3798
      %v3801 = vadd.f32 %v3793, %v3798
      %v3802 = vmax.f32 %v3800, 0.0
      %v3803 = vmax.f32 %v3801, 0.0
      %v3806 = vrot.slane %v3802, 4
      %v3807 = vrot.slane %v3803, 4
      %3810 = vst [vmem:[#allocation2 + $0x8] sm:$0xf0] %v3806
      %3811 = vst [vmem:[#allocation2 + $0x10] sm:$0xf0] %v3807
      %v3812 = vld [vmem:[%s13] sm:$0xf]
      %3814 = vset.pattern.permute.xlu0 0
      %3815 = vperm.xlu0 %3814, %v3812
      %v3816 = vpop.permute.xlu0 %3815
      %v3818 = vunpack.c.l.s4 839922192
      %v3819 = vunpack.c.0.s8 %v3818
      %v3820 = vlaneseq
      %v3821 = vshrl.u32 %v3820, 7
      %v3822 = vsub.s32 %v3819, %v3821
      %v3823 = vrot.slane %v3816, %v3822
      %v3825 = vmul.f32 %v3751, %v3823
      %v3826 = vld [vmem:[%s14] sm:$0xf]
      %3828 = vset.pattern.permute.xlu0 0
      %3829 = vperm.xlu0 %3828, %v3826
      %v3830 = vpop.permute.xlu0 %3829
      %v3832 = vunpack.c.l.s4 839922192
      %v3833 = vunpack.c.0.s8 %v3832
      %v3834 = vlaneseq
      %v3835 = vshrl.u32 %v3834, 7
      %v3836 = vsub.s32 %v3833, %v3835
      %v3837 = vrot.slane %v3830, %v3836
      %v3839 = vadd.f32 %v3825, %v3837
      %v3840 = vmax.f32 %v3839, 0.0
      %v3842 = vcombine.high %v3840, %v3840
      %3844 = vst [vmem:[#allocation3 + $0x8] sm:$0xf] %v3840
      %3845 = vst [vmem:[#allocation3 + $0x10] sm:$0xf] %v3842
      %v3846 = vld [vmem:[%s13 + $0x4] sm:$0xf]
      %3848 = vset.pattern.permute.xlu0 0
      %3849 = vperm.xlu0 %3848, %v3846
      %v3850 = vpop.permute.xlu0 %3849
      %v3852 = vmul.f32 %v3749, %v3850
      %v3853 = vmul.f32 %v3750, %v3850
      %v3854 = vld [vmem:[%s14 + $0x4] sm:$0xf]
      %3856 = vset.pattern.permute.xlu0 0
      %3857 = vperm.xlu0 %3856, %v3854
      %v3858 = vpop.permute.xlu0 %3857
      %v3860 = vadd.f32 %v3852, %v3858
      %v3861 = vadd.f32 %v3853, %v3858
      %v3862 = vmax.f32 %v3860, 0.0
      %v3863 = vmax.f32 %v3861, 0.0
      %v3866 = vrot.slane %v3862, 4
      %v3867 = vrot.slane %v3863, 4
      %3870 = vst [vmem:[#allocation3 + $0x8] sm:$0xf0] %v3866
      %3871 = vst [vmem:[#allocation3 + $0x10] sm:$0xf0] %v3867
      %v3872 = vlaneseq
      %v3873 = vand.u32 %v3872, 127
      %v3874 = vadd.s32 %v3873, 128
      %vm3875 = vcmp.lt.s32.totalorder %v3873, 0
      %v3876 = vsub.s32 0, %v3873
      %v3877 = vsel %vm3875, %v3876, %v3873
      %v3878 = vshrl.u32 %v3877, 4
      %v3879 = vand.u32 %v3877, 15
      %v3880 = vsub.s32 0, %v3879
      %v3881 = vsel %vm3875, %v3880, %v3879
      %vm3882 = vcmp.lt.s32.totalorder %v3874, 0
      %v3883 = vsub.s32 0, %v3874
      %v3884 = vsel %vm3882, %v3883, %v3874
      %v3885 = vshrl.u32 %v3884, 4
      %v3886 = vand.u32 %v3884, 15
      %v3887 = vsub.s32 0, %v3886
      %v3888 = vsel %vm3882, %v3887, %v3886
      %vm3889 = vcmp.ne.s32.totalorder %v3881, 0
      %vm3890 = vcmp.ne.s32.totalorder %v3888, 0
      %vm3891 = vcmp.lt.s32.totalorder %v3881, 0
      %vm3892 = vcmp.lt.s32.totalorder %v3888, 0
      %vm3893 = vmand %vm3891, %vm3889
      %vm3894 = vmand %vm3892, %vm3890
      %v3895 = vadd.s32 %v3881, 16
      %v3896 = vadd.s32 %v3888, 16
      %v3897 = vsel %vm3893, %v3895, %v3881
      %v3898 = vsel %vm3894, %v3896, %v3888
      %vm3899 = vcmp.ge.s32.totalorder %v3897, 1
      %vm3900 = vcmp.ge.s32.totalorder %v3898, 1
      %vm3901 = vcmp.le.s32.totalorder %v3897, 14
      %vm3902 = vcmp.le.s32.totalorder %v3898, 14
      %v3903 = vld [vmem:[#allocation2] sm:$0xff]
      %v3904 = vld [vmem:[#allocation2 + $0x8] sm:$0xff]
      %v3905 = vld [vmem:[#allocation2 + $0x10] sm:$0xff]
      %v3906 = vsel %vm3899, 1, 0
      %v3907 = vsel %vm3900, 1, 0
      %vm3908 = vcmp.eq.s32.totalorder %v3906, 1
      %vm3909 = vcmp.eq.s32.totalorder %v3907, 1
      %3913 = vrot.lane.b32.xlu0 %v3903, 17
      %v3914 = vpop.permute.xlu0 %3913
      %3915 = vrot.lane.b32.xlu0 %v3904, 17
      %v3916 = vpop.permute.xlu0 %3915
      %3917 = vrot.lane.b32.xlu0 %v3905, 17
      %v3918 = vpop.permute.xlu0 %3917
      %vm3919 = vcmask 138240
      %v3920 = vsel %vm3919, %v3914, %v3916
      %v3921 = vsel %vm3919, %v3916, %v3918
      %v3924 = vsel %vm3908, %v3920, 0.0
      %v3925 = vsel %vm3909, %v3921, 0.0
      %v3926 = vld [vmem:[%s7] sm:$0xff]
      %3928 = vset.pattern.permute.xlu0 0
      %3929 = vperm.xlu0 %3928, %v3926
      %v3930 = vpop.permute.xlu0 %3929
      %v3932 = vmul.f32 %v3924, %v3930
      %v3933 = vmul.f32 %v3925, %v3930
      %v3934 = vadd.f32 %v3932, 0.0
      %v3935 = vadd.f32 %v3933, 0.0
      %3936 = vset.pattern.permute.xlu0 1
      %3937 = vperm.xlu0 %3936, %v3926
      %v3938 = vpop.permute.xlu0 %3937
      %v3940 = vmul.f32 %v3924, %v3938
      %v3941 = vmul.f32 %v3925, %v3938
      %v3942 = vadd.f32 %v3940, 0.0
      %v3943 = vadd.f32 %v3941, 0.0
      %3944 = vset.pattern.permute.xlu0 2
      %3945 = vperm.xlu0 %3944, %v3926
      %v3946 = vpop.permute.xlu0 %3945
      %v3948 = vmul.f32 %v3924, %v3946
      %v3949 = vmul.f32 %v3925, %v3946
      %v3950 = vadd.f32 %v3948, 0.0
      %v3951 = vadd.f32 %v3949, 0.0
      %3952 = vset.pattern.permute.xlu0 3
      %3953 = vperm.xlu0 %3952, %v3926
      %v3954 = vpop.permute.xlu0 %3953
      %v3956 = vmul.f32 %v3924, %v3954
      %v3957 = vmul.f32 %v3925, %v3954
      %v3958 = vadd.f32 %v3956, 0.0
      %v3959 = vadd.f32 %v3957, 0.0
      %3960 = vset.pattern.permute.xlu0 4
      %3961 = vperm.xlu0 %3960, %v3926
      %v3962 = vpop.permute.xlu0 %3961
      %v3964 = vmul.f32 %v3903, %v3962
      %v3965 = vmul.f32 %v3904, %v3962
      %v3966 = vmul.f32 %v3905, %v3962
      %3970 = vrot.lane.b32.xlu0 %v3964, 16
      %v3971 = vpop.permute.xlu0 %3970
      %3972 = vrot.lane.b32.xlu0 %v3965, 16
      %v3973 = vpop.permute.xlu0 %3972
      %3974 = vrot.lane.b32.xlu0 %v3966, 16
      %v3975 = vpop.permute.xlu0 %3974
      %vm3976 = vcmask 130048
      %v3977 = vsel %vm3976, %v3971, %v3973
      %v3978 = vsel %vm3976, %v3973, %v3975
      %v3981 = vadd.f32 %v3934, %v3977
      %v3982 = vadd.f32 %v3935, %v3978
      %3983 = vset.pattern.permute.xlu0 5
      %3984 = vperm.xlu0 %3983, %v3926
      %v3985 = vpop.permute.xlu0 %3984
      %v3987 = vmul.f32 %v3903, %v3985
      %v3988 = vmul.f32 %v3904, %v3985
      %v3989 = vmul.f32 %v3905, %v3985
      %3993 = vrot.lane.b32.xlu0 %v3987, 16
      %v3994 = vpop.permute.xlu0 %3993
      %3995 = vrot.lane.b32.xlu0 %v3988, 16
      %v3996 = vpop.permute.xlu0 %3995
      %3997 = vrot.lane.b32.xlu0 %v3989, 16
      %v3998 = vpop.permute.xlu0 %3997
      %v3999 = vsel %vm3976, %v3994, %v3996
      %v4000 = vsel %vm3976, %v3996, %v3998
      %v4003 = vadd.f32 %v3942, %v3999
      %v4004 = vadd.f32 %v3943, %v4000
      %4005 = vset.pattern.permute.xlu0 6
      %4006 = vperm.xlu0 %4005, %v3926
      %v4007 = vpop.permute.xlu0 %4006
      %v4009 = vmul.f32 %v3903, %v4007
      %v4010 = vmul.f32 %v3904, %v4007
      %v4011 = vmul.f32 %v3905, %v4007
      %4015 = vrot.lane.b32.xlu0 %v4009, 16
      %v4016 = vpop.permute.xlu0 %4015
      %4017 = vrot.lane.b32.xlu0 %v4010, 16
      %v4018 = vpop.permute.xlu0 %4017
      %4019 = vrot.lane.b32.xlu0 %v4011, 16
      %v4020 = vpop.permute.xlu0 %4019
      %v4021 = vsel %vm3976, %v4016, %v4018
      %v4022 = vsel %vm3976, %v4018, %v4020
      %v4025 = vadd.f32 %v3950, %v4021
      %v4026 = vadd.f32 %v3951, %v4022
      %4027 = vset.pattern.permute.xlu0 7
      %4028 = vperm.xlu0 %4027, %v3926
      %v4029 = vpop.permute.xlu0 %4028
      %v4031 = vmul.f32 %v3903, %v4029
      %v4032 = vmul.f32 %v3904, %v4029
      %v4033 = vmul.f32 %v3905, %v4029
      %4037 = vrot.lane.b32.xlu0 %v4031, 16
      %v4038 = vpop.permute.xlu0 %4037
      %4039 = vrot.lane.b32.xlu0 %v4032, 16
      %v4040 = vpop.permute.xlu0 %4039
      %4041 = vrot.lane.b32.xlu0 %v4033, 16
      %v4042 = vpop.permute.xlu0 %4041
      %v4043 = vsel %vm3976, %v4038, %v4040
      %v4044 = vsel %vm3976, %v4040, %v4042
      %v4047 = vadd.f32 %v3958, %v4043
      %v4048 = vadd.f32 %v3959, %v4044
      %v4049 = vsel %vm3901, 1, 0
      %v4050 = vsel %vm3902, 1, 0
      %vm4051 = vcmp.eq.s32.totalorder %v4049, 1
      %vm4052 = vcmp.eq.s32.totalorder %v4050, 1
      %4053 = vrot.lane.b32.xlu0 %v3903, 15
      %v4054 = vpop.permute.xlu0 %4053
      %4055 = vrot.lane.b32.xlu0 %v3904, 15
      %v4056 = vpop.permute.xlu0 %4055
      %4057 = vrot.lane.b32.xlu0 %v3905, 15
      %v4058 = vpop.permute.xlu0 %4057
      %vm4059 = vcmask 121856
      %v4060 = vsel %vm4059, %v4054, %v4056
      %v4061 = vsel %vm4059, %v4056, %v4058
      %v4064 = vsel %vm4051, %v4060, 0.0
      %v4065 = vsel %vm4052, %v4061, 0.0
      %4066 = vset.pattern.permute.xlu0 8
      %4067 = vperm.xlu0 %4066, %v3926
      %v4068 = vpop.permute.xlu0 %4067
      %v4070 = vmul.f32 %v4064, %v4068
      %v4071 = vmul.f32 %v4065, %v4068
      %v4072 = vadd.f32 %v3981, %v4070
      %v4073 = vadd.f32 %v3982, %v4071
      %4074 = vset.pattern.permute.xlu0 9
      %4075 = vperm.xlu0 %4074, %v3926
      %v4076 = vpop.permute.xlu0 %4075
      %v4078 = vmul.f32 %v4064, %v4076
      %v4079 = vmul.f32 %v4065, %v4076
      %v4080 = vadd.f32 %v4003, %v4078
      %v4081 = vadd.f32 %v4004, %v4079
      %4082 = vset.pattern.permute.xlu0 10
      %4083 = vperm.xlu0 %4082, %v3926
      %v4084 = vpop.permute.xlu0 %4083
      %v4086 = vmul.f32 %v4064, %v4084
      %v4087 = vmul.f32 %v4065, %v4084
      %v4088 = vadd.f32 %v4025, %v4086
      %v4089 = vadd.f32 %v4026, %v4087
      %4090 = vset.pattern.permute.xlu0 11
      %4091 = vperm.xlu0 %4090, %v3926
      %v4092 = vpop.permute.xlu0 %4091
      %v4094 = vmul.f32 %v4064, %v4092
      %v4095 = vmul.f32 %v4065, %v4092
      %v4096 = vadd.f32 %v4047, %v4094
      %v4097 = vadd.f32 %v4048, %v4095
      %4098 = vrot.lane.b32.xlu0 %v3903, 1
      %v4099 = vpop.permute.xlu0 %4098
      %4100 = vrot.lane.b32.xlu0 %v3904, 1
      %v4101 = vpop.permute.xlu0 %4100
      %4102 = vrot.lane.b32.xlu0 %v3905, 1
      %v4103 = vpop.permute.xlu0 %4102
      %vm4104 = vcmask 7168
      %v4105 = vsel %vm4104, %v4099, %v4101
      %v4106 = vsel %vm4104, %v4101, %v4103
      %v4109 = vsel %vm3908, %v4105, 0.0
      %v4110 = vsel %vm3909, %v4106, 0.0
      %4111 = vset.pattern.permute.xlu0 12
      %4112 = vperm.xlu0 %4111, %v3926
      %v4113 = vpop.permute.xlu0 %4112
      %v4115 = vmul.f32 %v4109, %v4113
      %v4116 = vmul.f32 %v4110, %v4113
      %v4117 = vadd.f32 %v4072, %v4115
      %v4118 = vadd.f32 %v4073, %v4116
      %4119 = vset.pattern.permute.xlu0 13
      %4120 = vperm.xlu0 %4119, %v3926
      %v4121 = vpop.permute.xlu0 %4120
      %v4123 = vmul.f32 %v4109, %v4121
      %v4124 = vmul.f32 %v4110, %v4121
      %v4125 = vadd.f32 %v4080, %v4123
      %v4126 = vadd.f32 %v4081, %v4124
      %4127 = vset.pattern.permute.xlu0 14
      %4128 = vperm.xlu0 %4127, %v3926
      %v4129 = vpop.permute.xlu0 %4128
      %v4131 = vmul.f32 %v4109, %v4129
      %v4132 = vmul.f32 %v4110, %v4129
      %v4133 = vadd.f32 %v4088, %v4131
      %v4134 = vadd.f32 %v4089, %v4132
      %4135 = vset.pattern.permute.xlu0 15
      %4136 = vperm.xlu0 %4135, %v3926
      %v4137 = vpop.permute.xlu0 %4136
      %v4139 = vmul.f32 %v4109, %v4137
      %v4140 = vmul.f32 %v4110, %v4137
      %v4141 = vadd.f32 %v4096, %v4139
      %v4142 = vadd.f32 %v4097, %v4140
      %4143 = vset.pattern.permute.xlu0 16
      %4144 = vperm.xlu0 %4143, %v3926
      %v4145 = vpop.permute.xlu0 %4144
      %v4147 = vmul.f32 %v3904, %v4145
      %v4148 = vmul.f32 %v3905, %v4145
      %v4149 = vadd.f32 %v4117, %v4147
      %v4150 = vadd.f32 %v4118, %v4148
      %4151 = vset.pattern.permute.xlu0 17
      %4152 = vperm.xlu0 %4151, %v3926
      %v4153 = vpop.permute.xlu0 %4152
      %v4155 = vmul.f32 %v3904, %v4153
      %v4156 = vmul.f32 %v3905, %v4153
      %v4157 = vadd.f32 %v4125, %v4155
      %v4158 = vadd.f32 %v4126, %v4156
      %4159 = vset.pattern.permute.xlu0 18
      %4160 = vperm.xlu0 %4159, %v3926
      %v4161 = vpop.permute.xlu0 %4160
      %v4163 = vmul.f32 %v3904, %v4161
      %v4164 = vmul.f32 %v3905, %v4161
      %v4165 = vadd.f32 %v4133, %v4163
      %v4166 = vadd.f32 %v4134, %v4164
      %4167 = vset.pattern.permute.xlu0 19
      %4168 = vperm.xlu0 %4167, %v3926
      %v4169 = vpop.permute.xlu0 %4168
      %v4171 = vmul.f32 %v3904, %v4169
      %v4172 = vmul.f32 %v3905, %v4169
      %v4173 = vadd.f32 %v4141, %v4171
      %v4174 = vadd.f32 %v4142, %v4172
      %v4175 = vld [vmem:[#allocation2 + $0x8] sm:$0xff]
      %v4176 = vld [vmem:[#allocation2 + $0x10] sm:$0xff]
      %v4177 = vld [vmem:[#allocation2 + $0x18] sm:$0xff]
      %4181 = vrot.lane.b32.xlu0 %v4175, 127
      %v4182 = vpop.permute.xlu0 %4181
      %4183 = vrot.lane.b32.xlu0 %v4176, 127
      %v4184 = vpop.permute.xlu0 %4183
      %4185 = vrot.lane.b32.xlu0 %v4177, 127
      %v4186 = vpop.permute.xlu0 %4185
      %vm4187 = vcmask 1039360
      %v4188 = vsel %vm4187, %v4182, %v4184
      %v4189 = vsel %vm4187, %v4184, %v4186
      %v4192 = vsel %vm4051, %v4188, 0.0
      %v4193 = vsel %vm4052, %v4189, 0.0
      %4194 = vset.pattern.permute.xlu0 20
      %4195 = vperm.xlu0 %4194, %v3926
      %v4196 = vpop.permute.xlu0 %4195
      %v4198 = vmul.f32 %v4192, %v4196
      %v4199 = vmul.f32 %v4193, %v4196
      %v4200 = vadd.f32 %v4149, %v4198
      %v4201 = vadd.f32 %v4150, %v4199
      %4202 = vset.pattern.permute.xlu0 21
      %4203 = vperm.xlu0 %4202, %v3926
      %v4204 = vpop.permute.xlu0 %4203
      %v4206 = vmul.f32 %v4192, %v4204
      %v4207 = vmul.f32 %v4193, %v4204
      %v4208 = vadd.f32 %v4157, %v4206
      %v4209 = vadd.f32 %v4158, %v4207
      %4210 = vset.pattern.permute.xlu0 22
      %4211 = vperm.xlu0 %4210, %v3926
      %v4212 = vpop.permute.xlu0 %4211
      %v4214 = vmul.f32 %v4192, %v4212
      %v4215 = vmul.f32 %v4193, %v4212
      %v4216 = vadd.f32 %v4165, %v4214
      %v4217 = vadd.f32 %v4166, %v4215
      %4218 = vset.pattern.permute.xlu0 23
      %4219 = vperm.xlu0 %4218, %v3926
      %v4220 = vpop.permute.xlu0 %4219
      %v4222 = vmul.f32 %v4192, %v4220
      %v4223 = vmul.f32 %v4193, %v4220
      %v4224 = vadd.f32 %v4173, %v4222
      %v4225 = vadd.f32 %v4174, %v4223
      %4226 = vrot.lane.b32.xlu0 %v4175, 113
      %v4227 = vpop.permute.xlu0 %4226
      %4228 = vrot.lane.b32.xlu0 %v4176, 113
      %v4229 = vpop.permute.xlu0 %4228
      %4230 = vrot.lane.b32.xlu0 %v4177, 113
      %v4231 = vpop.permute.xlu0 %4230
      %vm4232 = vcmask 924672
      %v4233 = vsel %vm4232, %v4227, %v4229
      %v4234 = vsel %vm4232, %v4229, %v4231
      %v4237 = vsel %vm3908, %v4233, 0.0
      %v4238 = vsel %vm3909, %v4234, 0.0
      %4239 = vset.pattern.permute.xlu0 24
      %4240 = vperm.xlu0 %4239, %v3926
      %v4241 = vpop.permute.xlu0 %4240
      %v4243 = vmul.f32 %v4237, %v4241
      %v4244 = vmul.f32 %v4238, %v4241
      %v4245 = vadd.f32 %v4200, %v4243
      %v4246 = vadd.f32 %v4201, %v4244
      %4247 = vset.pattern.permute.xlu0 25
      %4248 = vperm.xlu0 %4247, %v3926
      %v4249 = vpop.permute.xlu0 %4248
      %v4251 = vmul.f32 %v4237, %v4249
      %v4252 = vmul.f32 %v4238, %v4249
      %v4253 = vadd.f32 %v4208, %v4251
      %v4254 = vadd.f32 %v4209, %v4252
      %4255 = vset.pattern.permute.xlu0 26
      %4256 = vperm.xlu0 %4255, %v3926
      %v4257 = vpop.permute.xlu0 %4256
      %v4259 = vmul.f32 %v4237, %v4257
      %v4260 = vmul.f32 %v4238, %v4257
      %v4261 = vadd.f32 %v4216, %v4259
      %v4262 = vadd.f32 %v4217, %v4260
      %4263 = vset.pattern.permute.xlu0 27
      %4264 = vperm.xlu0 %4263, %v3926
      %v4265 = vpop.permute.xlu0 %4264
      %v4267 = vmul.f32 %v4237, %v4265
      %v4268 = vmul.f32 %v4238, %v4265
      %v4269 = vadd.f32 %v4224, %v4267
      %v4270 = vadd.f32 %v4225, %v4268
      %4271 = vset.pattern.permute.xlu0 28
      %4272 = vperm.xlu0 %4271, %v3926
      %v4273 = vpop.permute.xlu0 %4272
      %v4275 = vmul.f32 %v4175, %v4273
      %v4276 = vmul.f32 %v4176, %v4273
      %v4277 = vmul.f32 %v4177, %v4273
      %4281 = vrot.lane.b32.xlu0 %v4275, 112
      %v4282 = vpop.permute.xlu0 %4281
      %4283 = vrot.lane.b32.xlu0 %v4276, 112
      %v4284 = vpop.permute.xlu0 %4283
      %4285 = vrot.lane.b32.xlu0 %v4277, 112
      %v4286 = vpop.permute.xlu0 %4285
      %vm4287 = vcmask 916480
      %v4288 = vsel %vm4287, %v4282, %v4284
      %v4289 = vsel %vm4287, %v4284, %v4286
      %v4292 = vadd.f32 %v4245, %v4288
      %v4293 = vadd.f32 %v4246, %v4289
      %4294 = vset.pattern.permute.xlu0 29
      %4295 = vperm.xlu0 %4294, %v3926
      %v4296 = vpop.permute.xlu0 %4295
      %v4298 = vmul.f32 %v4175, %v4296
      %v4299 = vmul.f32 %v4176, %v4296
      %v4300 = vmul.f32 %v4177, %v4296
      %4304 = vrot.lane.b32.xlu0 %v4298, 112
      %v4305 = vpop.permute.xlu0 %4304
      %4306 = vrot.lane.b32.xlu0 %v4299, 112
      %v4307 = vpop.permute.xlu0 %4306
      %4308 = vrot.lane.b32.xlu0 %v4300, 112
      %v4309 = vpop.permute.xlu0 %4308
      %v4310 = vsel %vm4287, %v4305, %v4307
      %v4311 = vsel %vm4287, %v4307, %v4309
      %v4314 = vadd.f32 %v4253, %v4310
      %v4315 = vadd.f32 %v4254, %v4311
      %4316 = vset.pattern.permute.xlu0 30
      %4317 = vperm.xlu0 %4316, %v3926
      %v4318 = vpop.permute.xlu0 %4317
      %v4320 = vmul.f32 %v4175, %v4318
      %v4321 = vmul.f32 %v4176, %v4318
      %v4322 = vmul.f32 %v4177, %v4318
      %4326 = vrot.lane.b32.xlu0 %v4320, 112
      %v4327 = vpop.permute.xlu0 %4326
      %4328 = vrot.lane.b32.xlu0 %v4321, 112
      %v4329 = vpop.permute.xlu0 %4328
      %4330 = vrot.lane.b32.xlu0 %v4322, 112
      %v4331 = vpop.permute.xlu0 %4330
      %v4332 = vsel %vm4287, %v4327, %v4329
      %v4333 = vsel %vm4287, %v4329, %v4331
      %v4336 = vadd.f32 %v4261, %v4332
      %v4337 = vadd.f32 %v4262, %v4333
      %4338 = vset.pattern.permute.xlu0 31
      %4339 = vperm.xlu0 %4338, %v3926
      %v4340 = vpop.permute.xlu0 %4339
      %v4342 = vmul.f32 %v4175, %v4340
      %v4343 = vmul.f32 %v4176, %v4340
      %v4344 = vmul.f32 %v4177, %v4340
      %4348 = vrot.lane.b32.xlu0 %v4342, 112
      %v4349 = vpop.permute.xlu0 %4348
      %4350 = vrot.lane.b32.xlu0 %v4343, 112
      %v4351 = vpop.permute.xlu0 %4350
      %4352 = vrot.lane.b32.xlu0 %v4344, 112
      %v4353 = vpop.permute.xlu0 %4352
      %v4354 = vsel %vm4287, %v4349, %v4351
      %v4355 = vsel %vm4287, %v4351, %v4353
      %v4358 = vadd.f32 %v4269, %v4354
      %v4359 = vadd.f32 %v4270, %v4355
      %4360 = vrot.lane.b32.xlu0 %v4175, 111
      %v4361 = vpop.permute.xlu0 %4360
      %4362 = vrot.lane.b32.xlu0 %v4176, 111
      %v4363 = vpop.permute.xlu0 %4362
      %4364 = vrot.lane.b32.xlu0 %v4177, 111
      %v4365 = vpop.permute.xlu0 %4364
      %vm4366 = vcmask 908288
      %v4367 = vsel %vm4366, %v4361, %v4363
      %v4368 = vsel %vm4366, %v4363, %v4365
      %v4371 = vsel %vm4051, %v4367, 0.0
      %v4372 = vsel %vm4052, %v4368, 0.0
      %4373 = vset.pattern.permute.xlu0 32
      %4374 = vperm.xlu0 %4373, %v3926
      %v4375 = vpop.permute.xlu0 %4374
      %v4377 = vmul.f32 %v4371, %v4375
      %v4378 = vmul.f32 %v4372, %v4375
      %v4379 = vadd.f32 %v4292, %v4377
      %v4380 = vadd.f32 %v4293, %v4378
      %4381 = vset.pattern.permute.xlu0 33
      %4382 = vperm.xlu0 %4381, %v3926
      %v4383 = vpop.permute.xlu0 %4382
      %v4385 = vmul.f32 %v4371, %v4383
      %v4386 = vmul.f32 %v4372, %v4383
      %v4387 = vadd.f32 %v4314, %v4385
      %v4388 = vadd.f32 %v4315, %v4386
      %4389 = vset.pattern.permute.xlu0 34
      %4390 = vperm.xlu0 %4389, %v3926
      %v4391 = vpop.permute.xlu0 %4390
      %v4393 = vmul.f32 %v4371, %v4391
      %v4394 = vmul.f32 %v4372, %v4391
      %v4395 = vadd.f32 %v4336, %v4393
      %v4396 = vadd.f32 %v4337, %v4394
      %4397 = vset.pattern.permute.xlu0 35
      %4398 = vperm.xlu0 %4397, %v3926
      %v4399 = vpop.permute.xlu0 %4398
      %v4401 = vmul.f32 %v4371, %v4399
      %v4402 = vmul.f32 %v4372, %v4399
      %v4403 = vadd.f32 %v4358, %v4401
      %v4404 = vadd.f32 %v4359, %v4402
      %v4405 = vrot.slane %v4379, 4
      %v4406 = vadd.f32 %v4379, %v4405
      %v4407 = vrot.slane %v4406, 2
      %v4408 = vadd.f32 %v4406, %v4407
      %v4409 = vrot.slane %v4408, 1
      %v4410 = vadd.f32 %v4408, %v4409
      %v4411 = vrot.slane %v4380, 4
      %v4412 = vadd.f32 %v4380, %v4411
      %v4413 = vrot.slane %v4412, 2
      %v4414 = vadd.f32 %v4412, %v4413
      %v4415 = vrot.slane %v4414, 1
      %v4416 = vadd.f32 %v4414, %v4415
      %v4417 = vrot.slane %v4387, 4
      %v4418 = vadd.f32 %v4387, %v4417
      %v4419 = vrot.slane %v4418, 2
      %v4420 = vadd.f32 %v4418, %v4419
      %v4421 = vrot.slane %v4420, 1
      %v4422 = vadd.f32 %v4420, %v4421
      %v4423 = vrot.slane %v4388, 4
      %v4424 = vadd.f32 %v4388, %v4423
      %v4425 = vrot.slane %v4424, 2
      %v4426 = vadd.f32 %v4424, %v4425
      %v4427 = vrot.slane %v4426, 1
      %v4428 = vadd.f32 %v4426, %v4427
      %v4429 = vrot.slane %v4395, 4
      %v4430 = vadd.f32 %v4395, %v4429
      %v4431 = vrot.slane %v4430, 2
      %v4432 = vadd.f32 %v4430, %v4431
      %v4433 = vrot.slane %v4432, 1
      %v4434 = vadd.f32 %v4432, %v4433
      %v4435 = vrot.slane %v4396, 4
      %v4436 = vadd.f32 %v4396, %v4435
      %v4437 = vrot.slane %v4436, 2
      %v4438 = vadd.f32 %v4436, %v4437
      %v4439 = vrot.slane %v4438, 1
      %v4440 = vadd.f32 %v4438, %v4439
      %v4441 = vrot.slane %v4403, 4
      %v4442 = vadd.f32 %v4403, %v4441
      %v4443 = vrot.slane %v4442, 2
      %v4444 = vadd.f32 %v4442, %v4443
      %v4445 = vrot.slane %v4444, 1
      %v4446 = vadd.f32 %v4444, %v4445
      %v4447 = vrot.slane %v4404, 4
      %v4448 = vadd.f32 %v4404, %v4447
      %v4449 = vrot.slane %v4448, 2
      %v4450 = vadd.f32 %v4448, %v4449
      %v4451 = vrot.slane %v4450, 1
      %v4452 = vadd.f32 %v4450, %v4451
      %vm4453 = vcmask 1040384
      %v4454 = vsel %vm4453, %v4410, %v4422
      %v4455 = vsel %vm4453, %v4416, %v4428
      %vm4456 = vcmask 1041408
      %v4457 = vsel %vm4456, %v4454, %v4434
      %v4458 = vsel %vm4456, %v4455, %v4440
      %vm4459 = vcmask 1042432
      %v4460 = vsel %vm4459, %v4457, %v4446
      %v4461 = vsel %vm4459, %v4458, %v4452
      %v4462 = vld [vmem:[%s8] sm:$0xf]
      %4464 = vset.pattern.permute.xlu0 0
      %4465 = vperm.xlu0 %4464, %v4462
      %v4466 = vpop.permute.xlu0 %4465
      %v4468 = vadd.f32 %v4460, %v4466
      %v4469 = vadd.f32 %v4461, %v4466
      %v4470 = vld [vmem:[%s9] sm:$0xf]
      %4472 = vset.pattern.permute.xlu0 0
      %4473 = vperm.xlu0 %4472, %v4470
      %v4474 = vpop.permute.xlu0 %4473
      %v4476 = vmul.f32 %v4468, %v4474
      %v4477 = vmul.f32 %v4469, %v4474
      %v4478 = vld [vmem:[%s10] sm:$0xf]
      %4480 = vset.pattern.permute.xlu0 0
      %4481 = vperm.xlu0 %4480, %v4478
      %v4482 = vpop.permute.xlu0 %4481
      %v4484 = vadd.f32 %v4476, %v4482
      %v4485 = vadd.f32 %v4477, %v4482
      %v4486 = vmax.f32 %v4484, 0.0
      %v4487 = vmax.f32 %v4485, 0.0
      %4488 = vst [vmem:[#allocation2 + $0x8] sm:$0xf] %v4486
      %4489 = vst [vmem:[#allocation2 + $0x10] sm:$0xf] %v4487
      %v4490 = vld [vmem:[#allocation2] sm:$0xf]
      %v4491 = vld [vmem:[#allocation2 + $0x8] sm:$0xf]
      %v4492 = vld [vmem:[#allocation2 + $0x10] sm:$0xf]
      %4496 = vrot.lane.b32.xlu0 %v4490, 17
      %v4497 = vpop.permute.xlu0 %4496
      %4498 = vrot.lane.b32.xlu0 %v4491, 17
      %v4499 = vpop.permute.xlu0 %4498
      %4500 = vrot.lane.b32.xlu0 %v4492, 17
      %v4501 = vpop.permute.xlu0 %4500
      %v4502 = vsel %vm3919, %v4497, %v4499
      %v4503 = vsel %vm3919, %v4499, %v4501
      %v4506 = vsel %vm3908, %v4502, 0.0
      %v4507 = vsel %vm3909, %v4503, 0.0
      %v4508 = vld [vmem:[%s11] sm:$0xf]
      %4510 = vset.pattern.permute.xlu0 0
      %4511 = vperm.xlu0 %4510, %v4508
      %v4512 = vpop.permute.xlu0 %4511
      %v4514 = vmul.f32 %v4506, %v4512
      %v4515 = vmul.f32 %v4507, %v4512
      %v4516 = vadd.f32 %v4514, 0.0
      %v4517 = vadd.f32 %v4515, 0.0
      %4518 = vset.pattern.permute.xlu0 1
      %4519 = vperm.xlu0 %4518, %v4508
      %v4520 = vpop.permute.xlu0 %4519
      %v4522 = vmul.f32 %v4506, %v4520
      %v4523 = vmul.f32 %v4507, %v4520
      %v4524 = vadd.f32 %v4522, 0.0
      %v4525 = vadd.f32 %v4523, 0.0
      %4526 = vset.pattern.permute.xlu0 2
      %4527 = vperm.xlu0 %4526, %v4508
      %v4528 = vpop.permute.xlu0 %4527
      %v4530 = vmul.f32 %v4506, %v4528
      %v4531 = vmul.f32 %v4507, %v4528
      %v4532 = vadd.f32 %v4530, 0.0
      %v4533 = vadd.f32 %v4531, 0.0
      %4534 = vset.pattern.permute.xlu0 3
      %4535 = vperm.xlu0 %4534, %v4508
      %v4536 = vpop.permute.xlu0 %4535
      %v4538 = vmul.f32 %v4506, %v4536
      %v4539 = vmul.f32 %v4507, %v4536
      %v4540 = vadd.f32 %v4538, 0.0
      %v4541 = vadd.f32 %v4539, 0.0
      %4542 = vset.pattern.permute.xlu0 4
      %4543 = vperm.xlu0 %4542, %v4508
      %v4544 = vpop.permute.xlu0 %4543
      %v4546 = vmul.f32 %v4490, %v4544
      %v4547 = vmul.f32 %v4491, %v4544
      %v4548 = vmul.f32 %v4492, %v4544
      %4552 = vrot.lane.b32.xlu0 %v4546, 16
      %v4553 = vpop.permute.xlu0 %4552
      %4554 = vrot.lane.b32.xlu0 %v4547, 16
      %v4555 = vpop.permute.xlu0 %4554
      %4556 = vrot.lane.b32.xlu0 %v4548, 16
      %v4557 = vpop.permute.xlu0 %4556
      %v4558 = vsel %vm3976, %v4553, %v4555
      %v4559 = vsel %vm3976, %v4555, %v4557
      %v4562 = vadd.f32 %v4516, %v4558
      %v4563 = vadd.f32 %v4517, %v4559
      %4564 = vset.pattern.permute.xlu0 5
      %4565 = vperm.xlu0 %4564, %v4508
      %v4566 = vpop.permute.xlu0 %4565
      %v4568 = vmul.f32 %v4490, %v4566
      %v4569 = vmul.f32 %v4491, %v4566
      %v4570 = vmul.f32 %v4492, %v4566
      %4574 = vrot.lane.b32.xlu0 %v4568, 16
      %v4575 = vpop.permute.xlu0 %4574
      %4576 = vrot.lane.b32.xlu0 %v4569, 16
      %v4577 = vpop.permute.xlu0 %4576
      %4578 = vrot.lane.b32.xlu0 %v4570, 16
      %v4579 = vpop.permute.xlu0 %4578
      %v4580 = vsel %vm3976, %v4575, %v4577
      %v4581 = vsel %vm3976, %v4577, %v4579
      %v4584 = vadd.f32 %v4524, %v4580
      %v4585 = vadd.f32 %v4525, %v4581
      %4586 = vset.pattern.permute.xlu0 6
      %4587 = vperm.xlu0 %4586, %v4508
      %v4588 = vpop.permute.xlu0 %4587
      %v4590 = vmul.f32 %v4490, %v4588
      %v4591 = vmul.f32 %v4491, %v4588
      %v4592 = vmul.f32 %v4492, %v4588
      %4596 = vrot.lane.b32.xlu0 %v4590, 16
      %v4597 = vpop.permute.xlu0 %4596
      %4598 = vrot.lane.b32.xlu0 %v4591, 16
      %v4599 = vpop.permute.xlu0 %4598
      %4600 = vrot.lane.b32.xlu0 %v4592, 16
      %v4601 = vpop.permute.xlu0 %4600
      %v4602 = vsel %vm3976, %v4597, %v4599
      %v4603 = vsel %vm3976, %v4599, %v4601
      %v4606 = vadd.f32 %v4532, %v4602
      %v4607 = vadd.f32 %v4533, %v4603
      %4608 = vset.pattern.permute.xlu0 7
      %4609 = vperm.xlu0 %4608, %v4508
      %v4610 = vpop.permute.xlu0 %4609
      %v4612 = vmul.f32 %v4490, %v4610
      %v4613 = vmul.f32 %v4491, %v4610
      %v4614 = vmul.f32 %v4492, %v4610
      %4618 = vrot.lane.b32.xlu0 %v4612, 16
      %v4619 = vpop.permute.xlu0 %4618
      %4620 = vrot.lane.b32.xlu0 %v4613, 16
      %v4621 = vpop.permute.xlu0 %4620
      %4622 = vrot.lane.b32.xlu0 %v4614, 16
      %v4623 = vpop.permute.xlu0 %4622
      %v4624 = vsel %vm3976, %v4619, %v4621
      %v4625 = vsel %vm3976, %v4621, %v4623
      %v4628 = vadd.f32 %v4540, %v4624
      %v4629 = vadd.f32 %v4541, %v4625
      %4630 = vrot.lane.b32.xlu0 %v4490, 15
      %v4631 = vpop.permute.xlu0 %4630
      %4632 = vrot.lane.b32.xlu0 %v4491, 15
      %v4633 = vpop.permute.xlu0 %4632
      %4634 = vrot.lane.b32.xlu0 %v4492, 15
      %v4635 = vpop.permute.xlu0 %4634
      %v4636 = vsel %vm4059, %v4631, %v4633
      %v4637 = vsel %vm4059, %v4633, %v4635
      %v4640 = vsel %vm4051, %v4636, 0.0
      %v4641 = vsel %vm4052, %v4637, 0.0
      %4642 = vset.pattern.permute.xlu0 8
      %4643 = vperm.xlu0 %4642, %v4508
      %v4644 = vpop.permute.xlu0 %4643
      %v4646 = vmul.f32 %v4640, %v4644
      %v4647 = vmul.f32 %v4641, %v4644
      %v4648 = vadd.f32 %v4562, %v4646
      %v4649 = vadd.f32 %v4563, %v4647
      %4650 = vset.pattern.permute.xlu0 9
      %4651 = vperm.xlu0 %4650, %v4508
      %v4652 = vpop.permute.xlu0 %4651
      %v4654 = vmul.f32 %v4640, %v4652
      %v4655 = vmul.f32 %v4641, %v4652
      %v4656 = vadd.f32 %v4584, %v4654
      %v4657 = vadd.f32 %v4585, %v4655
      %4658 = vset.pattern.permute.xlu0 10
      %4659 = vperm.xlu0 %4658, %v4508
      %v4660 = vpop.permute.xlu0 %4659
      %v4662 = vmul.f32 %v4640, %v4660
      %v4663 = vmul.f32 %v4641, %v4660
      %v4664 = vadd.f32 %v4606, %v4662
      %v4665 = vadd.f32 %v4607, %v4663
      %4666 = vset.pattern.permute.xlu0 11
      %4667 = vperm.xlu0 %4666, %v4508
      %v4668 = vpop.permute.xlu0 %4667
      %v4670 = vmul.f32 %v4640, %v4668
      %v4671 = vmul.f32 %v4641, %v4668
      %v4672 = vadd.f32 %v4628, %v4670
      %v4673 = vadd.f32 %v4629, %v4671
      %4674 = vrot.lane.b32.xlu0 %v4490, 1
      %v4675 = vpop.permute.xlu0 %4674
      %4676 = vrot.lane.b32.xlu0 %v4491, 1
      %v4677 = vpop.permute.xlu0 %4676
      %4678 = vrot.lane.b32.xlu0 %v4492, 1
      %v4679 = vpop.permute.xlu0 %4678
      %v4680 = vsel %vm4104, %v4675, %v4677
      %v4681 = vsel %vm4104, %v4677, %v4679
      %v4684 = vsel %vm3908, %v4680, 0.0
      %v4685 = vsel %vm3909, %v4681, 0.0
      %4686 = vset.pattern.permute.xlu0 12
      %4687 = vperm.xlu0 %4686, %v4508
      %v4688 = vpop.permute.xlu0 %4687
      %v4690 = vmul.f32 %v4684, %v4688
      %v4691 = vmul.f32 %v4685, %v4688
      %v4692 = vadd.f32 %v4648, %v4690
      %v4693 = vadd.f32 %v4649, %v4691
      %4694 = vset.pattern.permute.xlu0 13
      %4695 = vperm.xlu0 %4694, %v4508
      %v4696 = vpop.permute.xlu0 %4695
      %v4698 = vmul.f32 %v4684, %v4696
      %v4699 = vmul.f32 %v4685, %v4696
      %v4700 = vadd.f32 %v4656, %v4698
      %v4701 = vadd.f32 %v4657, %v4699
      %4702 = vset.pattern.permute.xlu0 14
      %4703 = vperm.xlu0 %4702, %v4508
      %v4704 = vpop.permute.xlu0 %4703
      %v4706 = vmul.f32 %v4684, %v4704
      %v4707 = vmul.f32 %v4685, %v4704
      %v4708 = vadd.f32 %v4664, %v4706
      %v4709 = vadd.f32 %v4665, %v4707
      %4710 = vset.pattern.permute.xlu0 15
      %4711 = vperm.xlu0 %4710, %v4508
      %v4712 = vpop.permute.xlu0 %4711
      %v4714 = vmul.f32 %v4684, %v4712
      %v4715 = vmul.f32 %v4685, %v4712
      %v4716 = vadd.f32 %v4672, %v4714
      %v4717 = vadd.f32 %v4673, %v4715
      %4718 = vset.pattern.permute.xlu0 16
      %4719 = vperm.xlu0 %4718, %v4508
      %v4720 = vpop.permute.xlu0 %4719
      %v4722 = vmul.f32 %v4491, %v4720
      %v4723 = vmul.f32 %v4492, %v4720
      %v4724 = vadd.f32 %v4692, %v4722
      %v4725 = vadd.f32 %v4693, %v4723
      %4726 = vset.pattern.permute.xlu0 17
      %4727 = vperm.xlu0 %4726, %v4508
      %v4728 = vpop.permute.xlu0 %4727
      %v4730 = vmul.f32 %v4491, %v4728
      %v4731 = vmul.f32 %v4492, %v4728
      %v4732 = vadd.f32 %v4700, %v4730
      %v4733 = vadd.f32 %v4701, %v4731
      %4734 = vset.pattern.permute.xlu0 18
      %4735 = vperm.xlu0 %4734, %v4508
      %v4736 = vpop.permute.xlu0 %4735
      %v4738 = vmul.f32 %v4491, %v4736
      %v4739 = vmul.f32 %v4492, %v4736
      %v4740 = vadd.f32 %v4708, %v4738
      %v4741 = vadd.f32 %v4709, %v4739
      %4742 = vset.pattern.permute.xlu0 19
      %4743 = vperm.xlu0 %4742, %v4508
      %v4744 = vpop.permute.xlu0 %4743
      %v4746 = vmul.f32 %v4491, %v4744
      %v4747 = vmul.f32 %v4492, %v4744
      %v4748 = vadd.f32 %v4716, %v4746
      %v4749 = vadd.f32 %v4717, %v4747
      %v4750 = vld [vmem:[#allocation2 + $0x8] sm:$0xf]
      %v4751 = vld [vmem:[#allocation2 + $0x10] sm:$0xf]
      %v4752 = vld [vmem:[#allocation2 + $0x18] sm:$0xf]
      %4756 = vrot.lane.b32.xlu0 %v4750, 127
      %v4757 = vpop.permute.xlu0 %4756
      %4758 = vrot.lane.b32.xlu0 %v4751, 127
      %v4759 = vpop.permute.xlu0 %4758
      %4760 = vrot.lane.b32.xlu0 %v4752, 127
      %v4761 = vpop.permute.xlu0 %4760
      %v4762 = vsel %vm4187, %v4757, %v4759
      %v4763 = vsel %vm4187, %v4759, %v4761
      %v4766 = vsel %vm4051, %v4762, 0.0
      %v4767 = vsel %vm4052, %v4763, 0.0
      %4768 = vset.pattern.permute.xlu0 20
      %4769 = vperm.xlu0 %4768, %v4508
      %v4770 = vpop.permute.xlu0 %4769
      %v4772 = vmul.f32 %v4766, %v4770
      %v4773 = vmul.f32 %v4767, %v4770
      %v4774 = vadd.f32 %v4724, %v4772
      %v4775 = vadd.f32 %v4725, %v4773
      %4776 = vset.pattern.permute.xlu0 21
      %4777 = vperm.xlu0 %4776, %v4508
      %v4778 = vpop.permute.xlu0 %4777
      %v4780 = vmul.f32 %v4766, %v4778
      %v4781 = vmul.f32 %v4767, %v4778
      %v4782 = vadd.f32 %v4732, %v4780
      %v4783 = vadd.f32 %v4733, %v4781
      %4784 = vset.pattern.permute.xlu0 22
      %4785 = vperm.xlu0 %4784, %v4508
      %v4786 = vpop.permute.xlu0 %4785
      %v4788 = vmul.f32 %v4766, %v4786
      %v4789 = vmul.f32 %v4767, %v4786
      %v4790 = vadd.f32 %v4740, %v4788
      %v4791 = vadd.f32 %v4741, %v4789
      %4792 = vset.pattern.permute.xlu0 23
      %4793 = vperm.xlu0 %4792, %v4508
      %v4794 = vpop.permute.xlu0 %4793
      %v4796 = vmul.f32 %v4766, %v4794
      %v4797 = vmul.f32 %v4767, %v4794
      %v4798 = vadd.f32 %v4748, %v4796
      %v4799 = vadd.f32 %v4749, %v4797
      %4800 = vrot.lane.b32.xlu0 %v4750, 113
      %v4801 = vpop.permute.xlu0 %4800
      %4802 = vrot.lane.b32.xlu0 %v4751, 113
      %v4803 = vpop.permute.xlu0 %4802
      %4804 = vrot.lane.b32.xlu0 %v4752, 113
      %v4805 = vpop.permute.xlu0 %4804
      %v4806 = vsel %vm4232, %v4801, %v4803
      %v4807 = vsel %vm4232, %v4803, %v4805
      %v4810 = vsel %vm3908, %v4806, 0.0
      %v4811 = vsel %vm3909, %v4807, 0.0
      %4812 = vset.pattern.permute.xlu0 24
      %4813 = vperm.xlu0 %4812, %v4508
      %v4814 = vpop.permute.xlu0 %4813
      %v4816 = vmul.f32 %v4810, %v4814
      %v4817 = vmul.f32 %v4811, %v4814
      %v4818 = vadd.f32 %v4774, %v4816
      %v4819 = vadd.f32 %v4775, %v4817
      %4820 = vset.pattern.permute.xlu0 25
      %4821 = vperm.xlu0 %4820, %v4508
      %v4822 = vpop.permute.xlu0 %4821
      %v4824 = vmul.f32 %v4810, %v4822
      %v4825 = vmul.f32 %v4811, %v4822
      %v4826 = vadd.f32 %v4782, %v4824
      %v4827 = vadd.f32 %v4783, %v4825
      %4828 = vset.pattern.permute.xlu0 26
      %4829 = vperm.xlu0 %4828, %v4508
      %v4830 = vpop.permute.xlu0 %4829
      %v4832 = vmul.f32 %v4810, %v4830
      %v4833 = vmul.f32 %v4811, %v4830
      %v4834 = vadd.f32 %v4790, %v4832
      %v4835 = vadd.f32 %v4791, %v4833
      %4836 = vset.pattern.permute.xlu0 27
      %4837 = vperm.xlu0 %4836, %v4508
      %v4838 = vpop.permute.xlu0 %4837
      %v4840 = vmul.f32 %v4810, %v4838
      %v4841 = vmul.f32 %v4811, %v4838
      %v4842 = vadd.f32 %v4798, %v4840
      %v4843 = vadd.f32 %v4799, %v4841
      %4844 = vset.pattern.permute.xlu0 28
      %4845 = vperm.xlu0 %4844, %v4508
      %v4846 = vpop.permute.xlu0 %4845
      %v4848 = vmul.f32 %v4750, %v4846
      %v4849 = vmul.f32 %v4751, %v4846
      %v4850 = vmul.f32 %v4752, %v4846
      %4854 = vrot.lane.b32.xlu0 %v4848, 112
      %v4855 = vpop.permute.xlu0 %4854
      %4856 = vrot.lane.b32.xlu0 %v4849, 112
      %v4857 = vpop.permute.xlu0 %4856
      %4858 = vrot.lane.b32.xlu0 %v4850, 112
      %v4859 = vpop.permute.xlu0 %4858
      %v4860 = vsel %vm4287, %v4855, %v4857
      %v4861 = vsel %vm4287, %v4857, %v4859
      %v4864 = vadd.f32 %v4818, %v4860
      %v4865 = vadd.f32 %v4819, %v4861
      %4866 = vset.pattern.permute.xlu0 29
      %4867 = vperm.xlu0 %4866, %v4508
      %v4868 = vpop.permute.xlu0 %4867
      %v4870 = vmul.f32 %v4750, %v4868
      %v4871 = vmul.f32 %v4751, %v4868
      %v4872 = vmul.f32 %v4752, %v4868
      %4876 = vrot.lane.b32.xlu0 %v4870, 112
      %v4877 = vpop.permute.xlu0 %4876
      %4878 = vrot.lane.b32.xlu0 %v4871, 112
      %v4879 = vpop.permute.xlu0 %4878
      %4880 = vrot.lane.b32.xlu0 %v4872, 112
      %v4881 = vpop.permute.xlu0 %4880
      %v4882 = vsel %vm4287, %v4877, %v4879
      %v4883 = vsel %vm4287, %v4879, %v4881
      %v4886 = vadd.f32 %v4826, %v4882
      %v4887 = vadd.f32 %v4827, %v4883
      %4888 = vset.pattern.permute.xlu0 30
      %4889 = vperm.xlu0 %4888, %v4508
      %v4890 = vpop.permute.xlu0 %4889
      %v4892 = vmul.f32 %v4750, %v4890
      %v4893 = vmul.f32 %v4751, %v4890
      %v4894 = vmul.f32 %v4752, %v4890
      %4898 = vrot.lane.b32.xlu0 %v4892, 112
      %v4899 = vpop.permute.xlu0 %4898
      %4900 = vrot.lane.b32.xlu0 %v4893, 112
      %v4901 = vpop.permute.xlu0 %4900
      %4902 = vrot.lane.b32.xlu0 %v4894, 112
      %v4903 = vpop.permute.xlu0 %4902
      %v4904 = vsel %vm4287, %v4899, %v4901
      %v4905 = vsel %vm4287, %v4901, %v4903
      %v4908 = vadd.f32 %v4834, %v4904
      %v4909 = vadd.f32 %v4835, %v4905
      %4910 = vset.pattern.permute.xlu0 31
      %4911 = vperm.xlu0 %4910, %v4508
      %v4912 = vpop.permute.xlu0 %4911
      %v4914 = vmul.f32 %v4750, %v4912
      %v4915 = vmul.f32 %v4751, %v4912
      %v4916 = vmul.f32 %v4752, %v4912
      %4920 = vrot.lane.b32.xlu0 %v4914, 112
      %v4921 = vpop.permute.xlu0 %4920
      %4922 = vrot.lane.b32.xlu0 %v4915, 112
      %v4923 = vpop.permute.xlu0 %4922
      %4924 = vrot.lane.b32.xlu0 %v4916, 112
      %v4925 = vpop.permute.xlu0 %4924
      %v4926 = vsel %vm4287, %v4921, %v4923
      %v4927 = vsel %vm4287, %v4923, %v4925
      %v4930 = vadd.f32 %v4842, %v4926
      %v4931 = vadd.f32 %v4843, %v4927
      %4932 = vrot.lane.b32.xlu0 %v4750, 111
      %v4933 = vpop.permute.xlu0 %4932
      %4934 = vrot.lane.b32.xlu0 %v4751, 111
      %v4935 = vpop.permute.xlu0 %4934
      %4936 = vrot.lane.b32.xlu0 %v4752, 111
      %v4937 = vpop.permute.xlu0 %4936
      %v4938 = vsel %vm4366, %v4933, %v4935
      %v4939 = vsel %vm4366, %v4935, %v4937
      %v4942 = vsel %vm4051, %v4938, 0.0
      %v4943 = vsel %vm4052, %v4939, 0.0
      %4944 = vset.pattern.permute.xlu0 32
      %4945 = vperm.xlu0 %4944, %v4508
      %v4946 = vpop.permute.xlu0 %4945
      %v4948 = vmul.f32 %v4942, %v4946
      %v4949 = vmul.f32 %v4943, %v4946
      %v4950 = vadd.f32 %v4864, %v4948
      %v4951 = vadd.f32 %v4865, %v4949
      %4952 = vset.pattern.permute.xlu0 33
      %4953 = vperm.xlu0 %4952, %v4508
      %v4954 = vpop.permute.xlu0 %4953
      %v4956 = vmul.f32 %v4942, %v4954
      %v4957 = vmul.f32 %v4943, %v4954
      %v4958 = vadd.f32 %v4886, %v4956
      %v4959 = vadd.f32 %v4887, %v4957
      %4960 = vset.pattern.permute.xlu0 34
      %4961 = vperm.xlu0 %4960, %v4508
      %v4962 = vpop.permute.xlu0 %4961
      %v4964 = vmul.f32 %v4942, %v4962
      %v4965 = vmul.f32 %v4943, %v4962
      %v4966 = vadd.f32 %v4908, %v4964
      %v4967 = vadd.f32 %v4909, %v4965
      %4968 = vset.pattern.permute.xlu0 35
      %4969 = vperm.xlu0 %4968, %v4508
      %v4970 = vpop.permute.xlu0 %4969
      %v4972 = vmul.f32 %v4942, %v4970
      %v4973 = vmul.f32 %v4943, %v4970
      %v4974 = vadd.f32 %v4930, %v4972
      %v4975 = vadd.f32 %v4931, %v4973
      %v4976 = vsel %vm580, %v4950, 0.0
      %v4977 = vrot.slane %v4976, 4
      %v4978 = vadd.f32 %v4976, %v4977
      %v4979 = vrot.slane %v4978, 2
      %v4980 = vadd.f32 %v4978, %v4979
      %v4981 = vrot.slane %v4980, 1
      %v4982 = vadd.f32 %v4980, %v4981
      %v4983 = vsel %vm580, %v4951, 0.0
      %v4984 = vrot.slane %v4983, 4
      %v4985 = vadd.f32 %v4983, %v4984
      %v4986 = vrot.slane %v4985, 2
      %v4987 = vadd.f32 %v4985, %v4986
      %v4988 = vrot.slane %v4987, 1
      %v4989 = vadd.f32 %v4987, %v4988
      %v4990 = vsel %vm580, %v4958, 0.0
      %v4991 = vrot.slane %v4990, 4
      %v4992 = vadd.f32 %v4990, %v4991
      %v4993 = vrot.slane %v4992, 2
      %v4994 = vadd.f32 %v4992, %v4993
      %v4995 = vrot.slane %v4994, 1
      %v4996 = vadd.f32 %v4994, %v4995
      %v4997 = vsel %vm580, %v4959, 0.0
      %v4998 = vrot.slane %v4997, 4
      %v4999 = vadd.f32 %v4997, %v4998
      %v5000 = vrot.slane %v4999, 2
      %v5001 = vadd.f32 %v4999, %v5000
      %v5002 = vrot.slane %v5001, 1
      %v5003 = vadd.f32 %v5001, %v5002
      %v5004 = vsel %vm580, %v4966, 0.0
      %v5005 = vrot.slane %v5004, 4
      %v5006 = vadd.f32 %v5004, %v5005
      %v5007 = vrot.slane %v5006, 2
      %v5008 = vadd.f32 %v5006, %v5007
      %v5009 = vrot.slane %v5008, 1
      %v5010 = vadd.f32 %v5008, %v5009
      %v5011 = vsel %vm580, %v4967, 0.0
      %v5012 = vrot.slane %v5011, 4
      %v5013 = vadd.f32 %v5011, %v5012
      %v5014 = vrot.slane %v5013, 2
      %v5015 = vadd.f32 %v5013, %v5014
      %v5016 = vrot.slane %v5015, 1
      %v5017 = vadd.f32 %v5015, %v5016
      %v5018 = vsel %vm580, %v4974, 0.0
      %v5019 = vrot.slane %v5018, 4
      %v5020 = vadd.f32 %v5018, %v5019
      %v5021 = vrot.slane %v5020, 2
      %v5022 = vadd.f32 %v5020, %v5021
      %v5023 = vrot.slane %v5022, 1
      %v5024 = vadd.f32 %v5022, %v5023
      %v5025 = vsel %vm580, %v4975, 0.0
      %v5026 = vrot.slane %v5025, 4
      %v5027 = vadd.f32 %v5025, %v5026
      %v5028 = vrot.slane %v5027, 2
      %v5029 = vadd.f32 %v5027, %v5028
      %v5030 = vrot.slane %v5029, 1
      %v5031 = vadd.f32 %v5029, %v5030
      %v5032 = vsel %vm4453, %v4982, %v4996
      %v5033 = vsel %vm4453, %v4989, %v5003
      %v5034 = vsel %vm4456, %v5032, %v5010
      %v5035 = vsel %vm4456, %v5033, %v5017
      %v5036 = vsel %vm4459, %v5034, %v5024
      %v5037 = vsel %vm4459, %v5035, %v5031
      %v5038 = vld [vmem:[%s12] sm:$0xf]
      %5040 = vset.pattern.permute.xlu0 0
      %5041 = vperm.xlu0 %5040, %v5038
      %v5042 = vpop.permute.xlu0 %5041
      %v5044 = vadd.f32 %v5036, %v5042
      %v5045 = vadd.f32 %v5037, %v5042
      %v5046 = vld [vmem:[#allocation3] sm:$0xff]
      %v5047 = vld [vmem:[#allocation3 + $0x8] sm:$0xff]
      %v5048 = vld [vmem:[#allocation3 + $0x10] sm:$0xff]
      %5052 = vrot.lane.b32.xlu0 %v5046, 17
      %v5053 = vpop.permute.xlu0 %5052
      %5054 = vrot.lane.b32.xlu0 %v5047, 17
      %v5055 = vpop.permute.xlu0 %5054
      %5056 = vrot.lane.b32.xlu0 %v5048, 17
      %v5057 = vpop.permute.xlu0 %5056
      %v5058 = vsel %vm3919, %v5053, %v5055
      %v5059 = vsel %vm3919, %v5055, %v5057
      %v5062 = vsel %vm3908, %v5058, 0.0
      %v5063 = vsel %vm3909, %v5059, 0.0
      %v5064 = vld [vmem:[%s15] sm:$0xff]
      %5066 = vset.pattern.permute.xlu0 0
      %5067 = vperm.xlu0 %5066, %v5064
      %v5068 = vpop.permute.xlu0 %5067
      %v5070 = vmul.f32 %v5062, %v5068
      %v5071 = vmul.f32 %v5063, %v5068
      %v5072 = vadd.f32 %v5070, 0.0
      %v5073 = vadd.f32 %v5071, 0.0
      %5074 = vset.pattern.permute.xlu0 1
      %5075 = vperm.xlu0 %5074, %v5064
      %v5076 = vpop.permute.xlu0 %5075
      %v5078 = vmul.f32 %v5062, %v5076
      %v5079 = vmul.f32 %v5063, %v5076
      %v5080 = vadd.f32 %v5078, 0.0
      %v5081 = vadd.f32 %v5079, 0.0
      %5082 = vset.pattern.permute.xlu0 2
      %5083 = vperm.xlu0 %5082, %v5064
      %v5084 = vpop.permute.xlu0 %5083
      %v5086 = vmul.f32 %v5062, %v5084
      %v5087 = vmul.f32 %v5063, %v5084
      %v5088 = vadd.f32 %v5086, 0.0
      %v5089 = vadd.f32 %v5087, 0.0
      %5090 = vset.pattern.permute.xlu0 3
      %5091 = vperm.xlu0 %5090, %v5064
      %v5092 = vpop.permute.xlu0 %5091
      %v5094 = vmul.f32 %v5062, %v5092
      %v5095 = vmul.f32 %v5063, %v5092
      %v5096 = vadd.f32 %v5094, 0.0
      %v5097 = vadd.f32 %v5095, 0.0
      %5098 = vset.pattern.permute.xlu0 4
      %5099 = vperm.xlu0 %5098, %v5064
      %v5100 = vpop.permute.xlu0 %5099
      %v5102 = vmul.f32 %v5046, %v5100
      %v5103 = vmul.f32 %v5047, %v5100
      %v5104 = vmul.f32 %v5048, %v5100
      %5108 = vrot.lane.b32.xlu0 %v5102, 16
      %v5109 = vpop.permute.xlu0 %5108
      %5110 = vrot.lane.b32.xlu0 %v5103, 16
      %v5111 = vpop.permute.xlu0 %5110
      %5112 = vrot.lane.b32.xlu0 %v5104, 16
      %v5113 = vpop.permute.xlu0 %5112
      %v5114 = vsel %vm3976, %v5109, %v5111
      %v5115 = vsel %vm3976, %v5111, %v5113
      %v5118 = vadd.f32 %v5072, %v5114
      %v5119 = vadd.f32 %v5073, %v5115
      %5120 = vset.pattern.permute.xlu0 5
      %5121 = vperm.xlu0 %5120, %v5064
      %v5122 = vpop.permute.xlu0 %5121
      %v5124 = vmul.f32 %v5046, %v5122
      %v5125 = vmul.f32 %v5047, %v5122
      %v5126 = vmul.f32 %v5048, %v5122
      %5130 = vrot.lane.b32.xlu0 %v5124, 16
      %v5131 = vpop.permute.xlu0 %5130
      %5132 = vrot.lane.b32.xlu0 %v5125, 16
      %v5133 = vpop.permute.xlu0 %5132
      %5134 = vrot.lane.b32.xlu0 %v5126, 16
      %v5135 = vpop.permute.xlu0 %5134
      %v5136 = vsel %vm3976, %v5131, %v5133
      %v5137 = vsel %vm3976, %v5133, %v5135
      %v5140 = vadd.f32 %v5080, %v5136
      %v5141 = vadd.f32 %v5081, %v5137
      %5142 = vset.pattern.permute.xlu0 6
      %5143 = vperm.xlu0 %5142, %v5064
      %v5144 = vpop.permute.xlu0 %5143
      %v5146 = vmul.f32 %v5046, %v5144
      %v5147 = vmul.f32 %v5047, %v5144
      %v5148 = vmul.f32 %v5048, %v5144
      %5152 = vrot.lane.b32.xlu0 %v5146, 16
      %v5153 = vpop.permute.xlu0 %5152
      %5154 = vrot.lane.b32.xlu0 %v5147, 16
      %v5155 = vpop.permute.xlu0 %5154
      %5156 = vrot.lane.b32.xlu0 %v5148, 16
      %v5157 = vpop.permute.xlu0 %5156
      %v5158 = vsel %vm3976, %v5153, %v5155
      %v5159 = vsel %vm3976, %v5155, %v5157
      %v5162 = vadd.f32 %v5088, %v5158
      %v5163 = vadd.f32 %v5089, %v5159
      %5164 = vset.pattern.permute.xlu0 7
      %5165 = vperm.xlu0 %5164, %v5064
      %v5166 = vpop.permute.xlu0 %5165
      %v5168 = vmul.f32 %v5046, %v5166
      %v5169 = vmul.f32 %v5047, %v5166
      %v5170 = vmul.f32 %v5048, %v5166
      %5174 = vrot.lane.b32.xlu0 %v5168, 16
      %v5175 = vpop.permute.xlu0 %5174
      %5176 = vrot.lane.b32.xlu0 %v5169, 16
      %v5177 = vpop.permute.xlu0 %5176
      %5178 = vrot.lane.b32.xlu0 %v5170, 16
      %v5179 = vpop.permute.xlu0 %5178
      %v5180 = vsel %vm3976, %v5175, %v5177
      %v5181 = vsel %vm3976, %v5177, %v5179
      %v5184 = vadd.f32 %v5096, %v5180
      %v5185 = vadd.f32 %v5097, %v5181
      %5186 = vrot.lane.b32.xlu0 %v5046, 15
      %v5187 = vpop.permute.xlu0 %5186
      %5188 = vrot.lane.b32.xlu0 %v5047, 15
      %v5189 = vpop.permute.xlu0 %5188
      %5190 = vrot.lane.b32.xlu0 %v5048, 15
      %v5191 = vpop.permute.xlu0 %5190
      %v5192 = vsel %vm4059, %v5187, %v5189
      %v5193 = vsel %vm4059, %v5189, %v5191
      %v5196 = vsel %vm4051, %v5192, 0.0
      %v5197 = vsel %vm4052, %v5193, 0.0
      %5198 = vset.pattern.permute.xlu0 8
      %5199 = vperm.xlu0 %5198, %v5064
      %v5200 = vpop.permute.xlu0 %5199
      %v5202 = vmul.f32 %v5196, %v5200
      %v5203 = vmul.f32 %v5197, %v5200
      %v5204 = vadd.f32 %v5118, %v5202
      %v5205 = vadd.f32 %v5119, %v5203
      %5206 = vset.pattern.permute.xlu0 9
      %5207 = vperm.xlu0 %5206, %v5064
      %v5208 = vpop.permute.xlu0 %5207
      %v5210 = vmul.f32 %v5196, %v5208
      %v5211 = vmul.f32 %v5197, %v5208
      %v5212 = vadd.f32 %v5140, %v5210
      %v5213 = vadd.f32 %v5141, %v5211
      %5214 = vset.pattern.permute.xlu0 10
      %5215 = vperm.xlu0 %5214, %v5064
      %v5216 = vpop.permute.xlu0 %5215
      %v5218 = vmul.f32 %v5196, %v5216
      %v5219 = vmul.f32 %v5197, %v5216
      %v5220 = vadd.f32 %v5162, %v5218
      %v5221 = vadd.f32 %v5163, %v5219
      %5222 = vset.pattern.permute.xlu0 11
      %5223 = vperm.xlu0 %5222, %v5064
      %v5224 = vpop.permute.xlu0 %5223
      %v5226 = vmul.f32 %v5196, %v5224
      %v5227 = vmul.f32 %v5197, %v5224
      %v5228 = vadd.f32 %v5184, %v5226
      %v5229 = vadd.f32 %v5185, %v5227
      %5230 = vrot.lane.b32.xlu0 %v5046, 1
      %v5231 = vpop.permute.xlu0 %5230
      %5232 = vrot.lane.b32.xlu0 %v5047, 1
      %v5233 = vpop.permute.xlu0 %5232
      %5234 = vrot.lane.b32.xlu0 %v5048, 1
      %v5235 = vpop.permute.xlu0 %5234
      %v5236 = vsel %vm4104, %v5231, %v5233
      %v5237 = vsel %vm4104, %v5233, %v5235
      %v5240 = vsel %vm3908, %v5236, 0.0
      %v5241 = vsel %vm3909, %v5237, 0.0
      %5242 = vset.pattern.permute.xlu0 12
      %5243 = vperm.xlu0 %5242, %v5064
      %v5244 = vpop.permute.xlu0 %5243
      %v5246 = vmul.f32 %v5240, %v5244
      %v5247 = vmul.f32 %v5241, %v5244
      %v5248 = vadd.f32 %v5204, %v5246
      %v5249 = vadd.f32 %v5205, %v5247
      %5250 = vset.pattern.permute.xlu0 13
      %5251 = vperm.xlu0 %5250, %v5064
      %v5252 = vpop.permute.xlu0 %5251
      %v5254 = vmul.f32 %v5240, %v5252
      %v5255 = vmul.f32 %v5241, %v5252
      %v5256 = vadd.f32 %v5212, %v5254
      %v5257 = vadd.f32 %v5213, %v5255
      %5258 = vset.pattern.permute.xlu0 14
      %5259 = vperm.xlu0 %5258, %v5064
      %v5260 = vpop.permute.xlu0 %5259
      %v5262 = vmul.f32 %v5240, %v5260
      %v5263 = vmul.f32 %v5241, %v5260
      %v5264 = vadd.f32 %v5220, %v5262
      %v5265 = vadd.f32 %v5221, %v5263
      %5266 = vset.pattern.permute.xlu0 15
      %5267 = vperm.xlu0 %5266, %v5064
      %v5268 = vpop.permute.xlu0 %5267
      %v5270 = vmul.f32 %v5240, %v5268
      %v5271 = vmul.f32 %v5241, %v5268
      %v5272 = vadd.f32 %v5228, %v5270
      %v5273 = vadd.f32 %v5229, %v5271
      %5274 = vset.pattern.permute.xlu0 16
      %5275 = vperm.xlu0 %5274, %v5064
      %v5276 = vpop.permute.xlu0 %5275
      %v5278 = vmul.f32 %v5047, %v5276
      %v5279 = vmul.f32 %v5048, %v5276
      %v5280 = vadd.f32 %v5248, %v5278
      %v5281 = vadd.f32 %v5249, %v5279
      %5282 = vset.pattern.permute.xlu0 17
      %5283 = vperm.xlu0 %5282, %v5064
      %v5284 = vpop.permute.xlu0 %5283
      %v5286 = vmul.f32 %v5047, %v5284
      %v5287 = vmul.f32 %v5048, %v5284
      %v5288 = vadd.f32 %v5256, %v5286
      %v5289 = vadd.f32 %v5257, %v5287
      %5290 = vset.pattern.permute.xlu0 18
      %5291 = vperm.xlu0 %5290, %v5064
      %v5292 = vpop.permute.xlu0 %5291
      %v5294 = vmul.f32 %v5047, %v5292
      %v5295 = vmul.f32 %v5048, %v5292
      %v5296 = vadd.f32 %v5264, %v5294
      %v5297 = vadd.f32 %v5265, %v5295
      %5298 = vset.pattern.permute.xlu0 19
      %5299 = vperm.xlu0 %5298, %v5064
      %v5300 = vpop.permute.xlu0 %5299
      %v5302 = vmul.f32 %v5047, %v5300
      %v5303 = vmul.f32 %v5048, %v5300
      %v5304 = vadd.f32 %v5272, %v5302
      %v5305 = vadd.f32 %v5273, %v5303
      %v5306 = vld [vmem:[#allocation3 + $0x8] sm:$0xff]
      %v5307 = vld [vmem:[#allocation3 + $0x10] sm:$0xff]
      %v5308 = vld [vmem:[#allocation3 + $0x18] sm:$0xff]
      %5312 = vrot.lane.b32.xlu0 %v5306, 127
      %v5313 = vpop.permute.xlu0 %5312
      %5314 = vrot.lane.b32.xlu0 %v5307, 127
      %v5315 = vpop.permute.xlu0 %5314
      %5316 = vrot.lane.b32.xlu0 %v5308, 127
      %v5317 = vpop.permute.xlu0 %5316
      %v5318 = vsel %vm4187, %v5313, %v5315
      %v5319 = vsel %vm4187, %v5315, %v5317
      %v5322 = vsel %vm4051, %v5318, 0.0
      %v5323 = vsel %vm4052, %v5319, 0.0
      %5324 = vset.pattern.permute.xlu0 20
      %5325 = vperm.xlu0 %5324, %v5064
      %v5326 = vpop.permute.xlu0 %5325
      %v5328 = vmul.f32 %v5322, %v5326
      %v5329 = vmul.f32 %v5323, %v5326
      %v5330 = vadd.f32 %v5280, %v5328
      %v5331 = vadd.f32 %v5281, %v5329
      %5332 = vset.pattern.permute.xlu0 21
      %5333 = vperm.xlu0 %5332, %v5064
      %v5334 = vpop.permute.xlu0 %5333
      %v5336 = vmul.f32 %v5322, %v5334
      %v5337 = vmul.f32 %v5323, %v5334
      %v5338 = vadd.f32 %v5288, %v5336
      %v5339 = vadd.f32 %v5289, %v5337
      %5340 = vset.pattern.permute.xlu0 22
      %5341 = vperm.xlu0 %5340, %v5064
      %v5342 = vpop.permute.xlu0 %5341
      %v5344 = vmul.f32 %v5322, %v5342
      %v5345 = vmul.f32 %v5323, %v5342
      %v5346 = vadd.f32 %v5296, %v5344
      %v5347 = vadd.f32 %v5297, %v5345
      %5348 = vset.pattern.permute.xlu0 23
      %5349 = vperm.xlu0 %5348, %v5064
      %v5350 = vpop.permute.xlu0 %5349
      %v5352 = vmul.f32 %v5322, %v5350
      %v5353 = vmul.f32 %v5323, %v5350
      %v5354 = vadd.f32 %v5304, %v5352
      %v5355 = vadd.f32 %v5305, %v5353
      %5356 = vrot.lane.b32.xlu0 %v5306, 113
      %v5357 = vpop.permute.xlu0 %5356
      %5358 = vrot.lane.b32.xlu0 %v5307, 113
      %v5359 = vpop.permute.xlu0 %5358
      %5360 = vrot.lane.b32.xlu0 %v5308, 113
      %v5361 = vpop.permute.xlu0 %5360
      %v5362 = vsel %vm4232, %v5357, %v5359
      %v5363 = vsel %vm4232, %v5359, %v5361
      %v5366 = vsel %vm3908, %v5362, 0.0
      %v5367 = vsel %vm3909, %v5363, 0.0
      %5368 = vset.pattern.permute.xlu0 24
      %5369 = vperm.xlu0 %5368, %v5064
      %v5370 = vpop.permute.xlu0 %5369
      %v5372 = vmul.f32 %v5366, %v5370
      %v5373 = vmul.f32 %v5367, %v5370
      %v5374 = vadd.f32 %v5330, %v5372
      %v5375 = vadd.f32 %v5331, %v5373
      %5376 = vset.pattern.permute.xlu0 25
      %5377 = vperm.xlu0 %5376, %v5064
      %v5378 = vpop.permute.xlu0 %5377
      %v5380 = vmul.f32 %v5366, %v5378
      %v5381 = vmul.f32 %v5367, %v5378
      %v5382 = vadd.f32 %v5338, %v5380
      %v5383 = vadd.f32 %v5339, %v5381
      %5384 = vset.pattern.permute.xlu0 26
      %5385 = vperm.xlu0 %5384, %v5064
      %v5386 = vpop.permute.xlu0 %5385
      %v5388 = vmul.f32 %v5366, %v5386
      %v5389 = vmul.f32 %v5367, %v5386
      %v5390 = vadd.f32 %v5346, %v5388
      %v5391 = vadd.f32 %v5347, %v5389
      %5392 = vset.pattern.permute.xlu0 27
      %5393 = vperm.xlu0 %5392, %v5064
      %v5394 = vpop.permute.xlu0 %5393
      %v5396 = vmul.f32 %v5366, %v5394
      %v5397 = vmul.f32 %v5367, %v5394
      %v5398 = vadd.f32 %v5354, %v5396
      %v5399 = vadd.f32 %v5355, %v5397
      %5400 = vset.pattern.permute.xlu0 28
      %5401 = vperm.xlu0 %5400, %v5064
      %v5402 = vpop.permute.xlu0 %5401
      %v5404 = vmul.f32 %v5306, %v5402
      %v5405 = vmul.f32 %v5307, %v5402
      %v5406 = vmul.f32 %v5308, %v5402
      %5410 = vrot.lane.b32.xlu0 %v5404, 112
      %v5411 = vpop.permute.xlu0 %5410
      %5412 = vrot.lane.b32.xlu0 %v5405, 112
      %v5413 = vpop.permute.xlu0 %5412
      %5414 = vrot.lane.b32.xlu0 %v5406, 112
      %v5415 = vpop.permute.xlu0 %5414
      %v5416 = vsel %vm4287, %v5411, %v5413
      %v5417 = vsel %vm4287, %v5413, %v5415
      %v5420 = vadd.f32 %v5374, %v5416
      %v5421 = vadd.f32 %v5375, %v5417
      %5422 = vset.pattern.permute.xlu0 29
      %5423 = vperm.xlu0 %5422, %v5064
      %v5424 = vpop.permute.xlu0 %5423
      %v5426 = vmul.f32 %v5306, %v5424
      %v5427 = vmul.f32 %v5307, %v5424
      %v5428 = vmul.f32 %v5308, %v5424
      %5432 = vrot.lane.b32.xlu0 %v5426, 112
      %v5433 = vpop.permute.xlu0 %5432
      %5434 = vrot.lane.b32.xlu0 %v5427, 112
      %v5435 = vpop.permute.xlu0 %5434
      %5436 = vrot.lane.b32.xlu0 %v5428, 112
      %v5437 = vpop.permute.xlu0 %5436
      %v5438 = vsel %vm4287, %v5433, %v5435
      %v5439 = vsel %vm4287, %v5435, %v5437
      %v5442 = vadd.f32 %v5382, %v5438
      %v5443 = vadd.f32 %v5383, %v5439
      %5444 = vset.pattern.permute.xlu0 30
      %5445 = vperm.xlu0 %5444, %v5064
      %v5446 = vpop.permute.xlu0 %5445
      %v5448 = vmul.f32 %v5306, %v5446
      %v5449 = vmul.f32 %v5307, %v5446
      %v5450 = vmul.f32 %v5308, %v5446
      %5454 = vrot.lane.b32.xlu0 %v5448, 112
      %v5455 = vpop.permute.xlu0 %5454
      %5456 = vrot.lane.b32.xlu0 %v5449, 112
      %v5457 = vpop.permute.xlu0 %5456
      %5458 = vrot.lane.b32.xlu0 %v5450, 112
      %v5459 = vpop.permute.xlu0 %5458
      %v5460 = vsel %vm4287, %v5455, %v5457
      %v5461 = vsel %vm4287, %v5457, %v5459
      %v5464 = vadd.f32 %v5390, %v5460
      %v5465 = vadd.f32 %v5391, %v5461
      %5466 = vset.pattern.permute.xlu0 31
      %5467 = vperm.xlu0 %5466, %v5064
      %v5468 = vpop.permute.xlu0 %5467
      %v5470 = vmul.f32 %v5306, %v5468
      %v5471 = vmul.f32 %v5307, %v5468
      %v5472 = vmul.f32 %v5308, %v5468
      %5476 = vrot.lane.b32.xlu0 %v5470, 112
      %v5477 = vpop.permute.xlu0 %5476
      %5478 = vrot.lane.b32.xlu0 %v5471, 112
      %v5479 = vpop.permute.xlu0 %5478
      %5480 = vrot.lane.b32.xlu0 %v5472, 112
      %v5481 = vpop.permute.xlu0 %5480
      %v5482 = vsel %vm4287, %v5477, %v5479
      %v5483 = vsel %vm4287, %v5479, %v5481
      %v5486 = vadd.f32 %v5398, %v5482
      %v5487 = vadd.f32 %v5399, %v5483
      %5488 = vrot.lane.b32.xlu0 %v5306, 111
      %v5489 = vpop.permute.xlu0 %5488
      %5490 = vrot.lane.b32.xlu0 %v5307, 111
      %v5491 = vpop.permute.xlu0 %5490
      %5492 = vrot.lane.b32.xlu0 %v5308, 111
      %v5493 = vpop.permute.xlu0 %5492
      %v5494 = vsel %vm4366, %v5489, %v5491
      %v5495 = vsel %vm4366, %v5491, %v5493
      %v5498 = vsel %vm4051, %v5494, 0.0
      %v5499 = vsel %vm4052, %v5495, 0.0
      %5500 = vset.pattern.permute.xlu0 32
      %5501 = vperm.xlu0 %5500, %v5064
      %v5502 = vpop.permute.xlu0 %5501
      %v5504 = vmul.f32 %v5498, %v5502
      %v5505 = vmul.f32 %v5499, %v5502
      %v5506 = vadd.f32 %v5420, %v5504
      %v5507 = vadd.f32 %v5421, %v5505
      %5508 = vset.pattern.permute.xlu0 33
      %5509 = vperm.xlu0 %5508, %v5064
      %v5510 = vpop.permute.xlu0 %5509
      %v5512 = vmul.f32 %v5498, %v5510
      %v5513 = vmul.f32 %v5499, %v5510
      %v5514 = vadd.f32 %v5442, %v5512
      %v5515 = vadd.f32 %v5443, %v5513
      %5516 = vset.pattern.permute.xlu0 34
      %5517 = vperm.xlu0 %5516, %v5064
      %v5518 = vpop.permute.xlu0 %5517
      %v5520 = vmul.f32 %v5498, %v5518
      %v5521 = vmul.f32 %v5499, %v5518
      %v5522 = vadd.f32 %v5464, %v5520
      %v5523 = vadd.f32 %v5465, %v5521
      %5524 = vset.pattern.permute.xlu0 35
      %5525 = vperm.xlu0 %5524, %v5064
      %v5526 = vpop.permute.xlu0 %5525
      %v5528 = vmul.f32 %v5498, %v5526
      %v5529 = vmul.f32 %v5499, %v5526
      %v5530 = vadd.f32 %v5486, %v5528
      %v5531 = vadd.f32 %v5487, %v5529
      %v5532 = vrot.slane %v5506, 4
      %v5533 = vadd.f32 %v5506, %v5532
      %v5534 = vrot.slane %v5533, 2
      %v5535 = vadd.f32 %v5533, %v5534
      %v5536 = vrot.slane %v5535, 1
      %v5537 = vadd.f32 %v5535, %v5536
      %v5538 = vrot.slane %v5507, 4
      %v5539 = vadd.f32 %v5507, %v5538
      %v5540 = vrot.slane %v5539, 2
      %v5541 = vadd.f32 %v5539, %v5540
      %v5542 = vrot.slane %v5541, 1
      %v5543 = vadd.f32 %v5541, %v5542
      %v5544 = vrot.slane %v5514, 4
      %v5545 = vadd.f32 %v5514, %v5544
      %v5546 = vrot.slane %v5545, 2
      %v5547 = vadd.f32 %v5545, %v5546
      %v5548 = vrot.slane %v5547, 1
      %v5549 = vadd.f32 %v5547, %v5548
      %v5550 = vrot.slane %v5515, 4
      %v5551 = vadd.f32 %v5515, %v5550
      %v5552 = vrot.slane %v5551, 2
      %v5553 = vadd.f32 %v5551, %v5552
      %v5554 = vrot.slane %v5553, 1
      %v5555 = vadd.f32 %v5553, %v5554
      %v5556 = vrot.slane %v5522, 4
      %v5557 = vadd.f32 %v5522, %v5556
      %v5558 = vrot.slane %v5557, 2
      %v5559 = vadd.f32 %v5557, %v5558
      %v5560 = vrot.slane %v5559, 1
      %v5561 = vadd.f32 %v5559, %v5560
      %v5562 = vrot.slane %v5523, 4
      %v5563 = vadd.f32 %v5523, %v5562
      %v5564 = vrot.slane %v5563, 2
      %v5565 = vadd.f32 %v5563, %v5564
      %v5566 = vrot.slane %v5565, 1
      %v5567 = vadd.f32 %v5565, %v5566
      %v5568 = vrot.slane %v5530, 4
      %v5569 = vadd.f32 %v5530, %v5568
      %v5570 = vrot.slane %v5569, 2
      %v5571 = vadd.f32 %v5569, %v5570
      %v5572 = vrot.slane %v5571, 1
      %v5573 = vadd.f32 %v5571, %v5572
      %v5574 = vrot.slane %v5531, 4
      %v5575 = vadd.f32 %v5531, %v5574
      %v5576 = vrot.slane %v5575, 2
      %v5577 = vadd.f32 %v5575, %v5576
      %v5578 = vrot.slane %v5577, 1
      %v5579 = vadd.f32 %v5577, %v5578
      %v5580 = vsel %vm4453, %v5537, %v5549
      %v5581 = vsel %vm4453, %v5543, %v5555
      %v5582 = vsel %vm4456, %v5580, %v5561
      %v5583 = vsel %vm4456, %v5581, %v5567
      %v5584 = vsel %vm4459, %v5582, %v5573
      %v5585 = vsel %vm4459, %v5583, %v5579
      %v5586 = vld [vmem:[%s16] sm:$0xf]
      %5588 = vset.pattern.permute.xlu0 0
      %5589 = vperm.xlu0 %5588, %v5586
      %v5590 = vpop.permute.xlu0 %5589
      %v5592 = vadd.f32 %v5584, %v5590
      %v5593 = vadd.f32 %v5585, %v5590
      %v5594 = vadd.f32 %v5044, %v5592
      %v5595 = vadd.f32 %v5045, %v5593
      %v5598 = vcombine.low %v5594, %v5595
      %5600 = vst [vmem:[%s565] sm:$0xff] %v5598
      %p5601 = scmp.lt.s32.totalorder %s28, 1
      %s5602 = scalar_select %p5601, %s28, 1
      %s5603 = smul.addr %s5602, 2
      %s5604 = smul.addr %s5603, 4
      %s5605 = scalar_lea.vmem %s17, %s5604
      // Predicated region
      $region89: #{de_up_pallas.1} parent=87 // pred_check
        %p5606 = pneg %p413
      $region90: #{de_up_pallas.1} parent=87 // pred_check_branch
        %5608 = sbr.rel (%p5606) target = $region92
      $region91: #{de_up_pallas.1} parent=87 // pred_region
        _
      $region92: #{de_up_pallas.1} parent=87 // pred_fallthru
        _
    $region88: #{de_up_pallas.1} parent=5 // pred_fallthru
      _
    %p5609 = scmp.le.s32.totalorder 2, %s23
    // Predicated region
    $region93: #{de_up_pallas.1} parent=5 // pred_check
      %p5610 = pneg %p5609
    $region94: #{de_up_pallas.1} parent=5 // pred_check_branch
      %5612 = sbr.rel (%p5610) target = $region96
    $region95: #{de_up_pallas.1} parent=5 // pred_region
      %s5613 = ssub.s32 %s23, 2
      // Predicated region
      $region97: #{de_up_pallas.1} parent=95 // pred_check
        %p5614 = pneg %p419
      $region98: #{de_up_pallas.1} parent=95 // pred_check_branch
        %5616 = sbr.rel (%p5614) target = $region100
      $region99: #{de_up_pallas.1} parent=95 // pred_region
        %p5617 = scmp.lt.s32.totalorder %s29, 1
        %s5618 = scalar_select %p5617, %s29, 1
        %s5619 = smul.addr %s5618, 2
        %s5620 = smul.addr %s5619, 4
        %s5621 = scalar_lea.vmem %s17, %s5620
      $region100: #{de_up_pallas.1} parent=95 // pred_fallthru
        _
    $region96: #{de_up_pallas.1} parent=5 // pred_fallthru
      _
  $region6: #{de_up_pallas.1} parent=0 // loop_footer
    %s27 = sadd.s32 1, %s23
  $region7: #{de_up_pallas.1} parent=0 // loop_footer_branch
    %22 = sbr.rel target = $region3
  $region8: #{de_up_pallas.1} parent=0 // loop_exit
    _

</llo_original>
